<compile_context>
chip_gen: v7x
topology: tpu7x:2x2x1
jax: 0.10.0
libtpu: 0.0.40
codegen_flags: <defaults>
</compile_context>

<pallas_src>
import functools

import jax
import jax.numpy as jnp
from jax.experimental import pallas as pl
from jax.experimental.pallas import tpu as pltpu


# ---------------------------------------------------------------------------
# Hardware / tile-size helpers
# ---------------------------------------------------------------------------
def _vmem_limit_bytes():
    """Chip-aware scoped-VMEM request: 3/4 of physical (96MiB v6e, 48MiB v7x)."""
    try:
        info = pltpu.get_tpu_info()
        for name in ("vmem_capacity_bytes", "vmem_size_bytes", "vmem_bytes"):
            cap = getattr(info, name, None)
            if cap:
                return int(cap) * 3 // 4
    except Exception:
        pass
    return 64 * 1024 * 1024


def _divisor_tiles(c, target):
    """Channel-tile candidates: multiples of 128 dividing c, descending."""
    if c <= target:
        return [c]
    opts = [t for t in range(target, 127, -128) if c % t == 0]
    return opts if opts else [c]


def _largest_divisor_leq(n, limit):
    for d in range(max(1, min(n, limit)), 0, -1):
        if n % d == 0:
            return d
    return 1


def _batch_block(n, hw, target_rows=512, max_rows=4096):
    """Pack batch elements so nb*H*W fills the MXU M dimension (~512 rows)."""
    nb = 1
    for d in range(1, n + 1):
        if n % d:
            continue
        if d * hw > max_rows:
            break
        nb = d
        if nb * hw >= target_rows:
            break
    return nb


def _pick_conv_tiles(n, h, w, cin, cout, dilation, vmem_limit,
                     acc1_cols=0, out_cols=None, max_nb=None):
    """Choose (nb, tci, tco) so the per-grid-step VMEM working set fits."""
    pad_w = dilation + (dilation % 2)
    hp, wps = h + 2 * dilation, w + pad_w + dilation
    tco_target = 1024 if vmem_limit >= (90 << 20) else 512   # v6e/v5e vs v7x
    tci_opts = _divisor_tiles(cin, 512)
    tco_opts = _divisor_tiles(cout, tco_target)
    nb = _batch_block(n, h * w)
    if max_nb is not None:
        nb = _largest_divisor_leq(n, min(nb, max_nb))
    budget = int(0.6 * vmem_limit)

    def working_set(nb_, tci, tco):
        m = nb_ * h * w
        oc = tco if out_cols is None else out_cols
        b = m * 9 * tci * 2                 # im2col slab (bf16)
        b += nb_ * hp * wps * tci * 2       # zero-halo scratch (bf16)
        b += m * tco * 4                    # f32 conv accumulator
        b += 2 * nb_ * h * w * tci * 2      # double-buffered x block
        b += 2 * 9 * tci * tco * 2          # double-buffered weight block
        b += 2 * nb_ * h * w * oc * 2       # double-buffered output block
        if acc1_cols:
            b += m * acc1_cols * 4 + 2 * tco * acc1_cols * 2
        return b

    ti = to = 0
    while working_set(nb, tci_opts[ti], tco_opts[to]) > budget:
        if to + 1 < len(tco_opts):
            to += 1
        elif ti + 1 < len(tci_opts):
            ti += 1
        elif nb > 1:
            nb = _largest_divisor_leq(n, nb - 1)
        else:
            break
    return nb, tci_opts[ti], tco_opts[to]


def _pick_h_tile(h, w, c, in_bytes, out_bytes, budget=8 * 1024 * 1024):
    """Largest divisor of h whose DOUBLE-BUFFERED in+out blocks fit the budget."""
    best = 1
    per_row = w * c * 2 * (in_bytes + out_bytes)   # x2: double-buffered blocks
    for t in range(1, h + 1):
        if h % t == 0 and t * per_row <= budget:
            best = t
    return best


# ---------------------------------------------------------------------------
# Kernel 1: tiled 3x3 (dilated) conv + folded-BN + ReLU
#   grid = (N//nb, Cout//tCo, Cin//tCi)   (Cin reduction last, "arbitrary")
# ---------------------------------------------------------------------------
def _conv3x3_bn_relu_kernel(x_ref, w_ref, scale_ref, bias_ref, o_ref,
                            xpad_ref, acc_ref, *, H, W, dil, nb, pad_w):
    # x_ref:    (nb, H, W, tCi)   bf16 UNPADDED activation block
    # w_ref:    (9, tCi, tCo)     bf16 taps, t = 3*dy + dx
    # scale_ref, bias_ref: (1, tCo) f32 folded BN affine
    # o_ref:    (nb, H, W, tCo)   bf16
    # xpad_ref: (nb, H+2*dil, pad_w+W+dil, tCi) bf16 zero-bordered halo scratch
    # acc_ref:  (nb*H*W, tCo)     f32, resident across the Cin axis
    ci = pl.program_id(2)
    tci = w_ref.shape[1]
    tco = w_ref.shape[2]

    @pl.when(ci == 0)
    def _():
        acc_ref[...] = jnp.zeros_like(acc_ref)
        # zero once per Cin sweep: the halo border then stays 0 for every ci
        xpad_ref[...] = jnp.zeros_like(xpad_ref)

    # place the unpadded block inside the zero halo (no HBM pad round trip);
    # the W (sublane) offset pad_w is even so the packed-bf16 store is aligned.
    xpad_ref[:, dil:dil + H, pad_w:pad_w + W, :] = x_ref[...]

    # one im2col matmul per grid step -> a single accumulator RMW (not 9)
    taps = []
    for dy in range(3):
        for dx in range(3):
            r0 = dy * dil
            c0 = pad_w + (dx - 1) * dil
            taps.append(xpad_ref[:, r0:r0 + H, c0:c0 + W, :])
    patch = jnp.concatenate(taps, axis=-1).reshape(nb * H * W, 9 * tci)
    acc_ref[...] += jnp.dot(patch, w_ref[...].reshape(9 * tci, tco),
                            preferred_element_type=jnp.float32)

    @pl.when(ci == pl.num_programs(2) - 1)
    def _():
        y = jnp.maximum(acc_ref[...] * scale_ref[0] + bias_ref[0], 0.0)
        o_ref[...] = y.reshape(o_ref.shape).astype(o_ref.dtype)


def conv3x3_bn_relu(x, w9, scale, bias, *, dilation, nb, tci, tco, vmem_limit):
    # x: (N, H, W, Cin) bf16; w9: (9, Cin, Cout) bf16; scale/bias: (1, Cout) f32
    N, H, W, Cin = x.shape
    Cout = w9.shape[-1]
    assert N % nb == 0 and Cin % tci == 0 and Cout % tco == 0
    pad_w = dilation + (dilation % 2)
    Hp = H + 2 * dilation
    Wps = pad_w + W + dilation
    kernel = functools.partial(_conv3x3_bn_relu_kernel,
                               H=H, W=W, dil=dilation, nb=nb, pad_w=pad_w)
    return pl.pallas_call(
        kernel,
        out_shape=jax.ShapeDtypeStruct((N, H, W, Cout), jnp.bfloat16),
        grid_spec=pltpu.PrefetchScalarGridSpec(
            num_scalar_prefetch=0,
            grid=(N // nb, Cout // tco, Cin // tci),
            in_specs=[
                pl.BlockSpec((nb, H, W, tci), lambda n, co, ci: (n, 0, 0, ci)),
                pl.BlockSpec((9, tci, tco), lambda n, co, ci: (0, ci, co)),
                pl.BlockSpec((1, tco), lambda n, co, ci: (0, co)),
                pl.BlockSpec((1, tco), lambda n, co, ci: (0, co)),
            ],
            out_specs=pl.BlockSpec((nb, H, W, tco),
                                   lambda n, co, ci: (n, 0, 0, co)),
            scratch_shapes=[pltpu.VMEM((nb, Hp, Wps, tci), jnp.bfloat16),
                            pltpu.VMEM((nb * H * W, tco), jnp.float32)],
        ),
        compiler_params=pltpu.CompilerParams(
            dimension_semantics=("parallel", "parallel", "arbitrary"),
            vmem_limit_bytes=vmem_limit),
    )(x, w9, scale, bias)


# ---------------------------------------------------------------------------
# Kernel 2: last 3x3 conv + folded-BN + ReLU fused with the 1x1 conv_last.
#   The class-logit accumulator stays resident across BOTH the Cout and Cin
#   axes; Cp = num_class padded to a lane-dense multiple of 128 (internal
#   only -- the kernel emits bf16 logits num_class lanes wide).
# ---------------------------------------------------------------------------
def _conv3x3_bn_relu_conv1x1_kernel(x_ref, w_ref, scale_ref, bias_ref, wl_ref,
                                    o_ref, xpad_ref, acc3_ref, acc1_ref,
                                    *, H, W, dil, nb, pad_w, num_class):
    co = pl.program_id(1)
    ci = pl.program_id(2)
    n_co = pl.num_programs(1)
    n_ci = pl.num_programs(2)
    tci = w_ref.shape[1]
    tco = w_ref.shape[2]

    @pl.when(ci == 0)
    def _():
        acc3_ref[...] = jnp.zeros_like(acc3_ref)
        xpad_ref[...] = jnp.zeros_like(xpad_ref)

    @pl.when(jnp.logical_and(co == 0, ci == 0))
    def _():
        acc1_ref[...] = jnp.zeros_like(acc1_ref)

    xpad_ref[:, dil:dil + H, pad_w:pad_w + W, :] = x_ref[...]

    taps = []
    for dy in range(3):
        for dx in range(3):
            r0 = dy * dil
            c0 = pad_w + (dx - 1) * dil
            taps.append(xpad_ref[:, r0:r0 + H, c0:c0 + W, :])
    patch = jnp.concatenate(taps, axis=-1).reshape(nb * H * W, 9 * tci)
    acc3_ref[...] += jnp.dot(patch, w_ref[...].reshape(9 * tci, tco),
                             preferred_element_type=jnp.float32)

    @pl.when(ci == n_ci - 1)
    def _():
        # conv4 epilogue (BN + ReLU) for this Cout tile, then feed the still-hot
        # MXU with the 1x1 conv_last partial product.
        y = jnp.maximum(acc3_ref[...] * scale_ref[0] + bias_ref[0], 0.0)
        acc1_ref[...] += jnp.dot(y.astype(wl_ref.dtype), wl_ref[...],
                                 preferred_element_type=jnp.float32)

    @pl.when(jnp.logical_and(ci == n_ci - 1, co == n_co - 1))
    def _():
        logits = acc1_ref[:, :num_class]        # drop internal lane padding
        o_ref[...] = logits.reshape(o_ref.shape).astype(o_ref.dtype)


def conv3x3_bn_relu_conv1x1(x, w9, scale, bias, w_last_p, *, num_class,
                            dilation, nb, tci, tco, vmem_limit):
    # x: (N, H, W, Cin) bf16; w9: (9, Cin, Cout) bf16; w_last_p: (Cout, Cp) bf16
    N, H, W, Cin = x.shape
    Cout = w9.shape[-1]
    Cp = w_last_p.shape[-1]
    assert N % nb == 0 and Cin % tci == 0 and Cout % tco == 0
    pad_w = dilation + (dilation % 2)
    Hp = H + 2 * dilation
    Wps = pad_w + W + dilation
    kernel = functools.partial(_conv3x3_bn_relu_conv1x1_kernel,
                               H=H, W=W, dil=dilation, nb=nb, pad_w=pad_w,
                               num_class=num_class)
    return pl.pallas_call(
        kernel,
        out_shape=jax.ShapeDtypeStruct((N, H, W, num_class), jnp.bfloat16),
        grid_spec=pltpu.PrefetchScalarGridSpec(
            num_scalar_prefetch=0,
            grid=(N // nb, Cout // tco, Cin // tci),
            in_specs=[
                pl.BlockSpec((nb, H, W, tci), lambda n, co, ci: (n, 0, 0, ci)),
                pl.BlockSpec((9, tci, tco), lambda n, co, ci: (0, ci, co)),
                pl.BlockSpec((1, tco), lambda n, co, ci: (0, co)),
                pl.BlockSpec((1, tco), lambda n, co, ci: (0, co)),
                pl.BlockSpec((tco, Cp), lambda n, co, ci: (co, 0)),
            ],
            out_specs=pl.BlockSpec((nb, H, W, num_class),
                                   lambda n, co, ci: (n, 0, 0, 0)),
            scratch_shapes=[pltpu.VMEM((nb, Hp, Wps, tci), jnp.bfloat16),
                            pltpu.VMEM((nb * H * W, tco), jnp.float32),
                            pltpu.VMEM((nb * H * W, Cp), jnp.float32)],
        ),
        compiler_params=pltpu.CompilerParams(
            # output accumulates over the Cout axis too -> only batch parallel;
            # nb is capped at N//2 so dual-core parts still split this kernel.
            dimension_semantics=("parallel", "arbitrary", "arbitrary"),
            vmem_limit_bytes=vmem_limit),
    )(x, w9, scale, bias, w_last_p)


# ---------------------------------------------------------------------------
# Kernel 3: spatially tiled log_softmax over the (real, unpadded) class axis
# ---------------------------------------------------------------------------
def _log_softmax_kernel(x_ref, o_ref):
    v = x_ref[...].astype(jnp.float32)                     # (1, tH, W, C)
    m = jnp.max(v, axis=-1, keepdims=True)
    s = jnp.sum(jnp.exp(v - m), axis=-1, keepdims=True)
    o_ref[...] = (v - m - jnp.log(s)).astype(o_ref.dtype)


def log_softmax_channels(x):
    # x: (N, H, W, C) with C = num_class (full-dim block, no padding needed)
    N, H, W, C = x.shape
    tH = _pick_h_tile(H, W, C, in_bytes=x.dtype.itemsize, out_bytes=4)
    return pl.pallas_call(
        _log_softmax_kernel,
        out_shape=jax.ShapeDtypeStruct((N, H, W, C), jnp.float32),
        grid_spec=pltpu.PrefetchScalarGridSpec(
            num_scalar_prefetch=0,
            grid=(N, H // tH),
            in_specs=[pl.BlockSpec((1, tH, W, C), lambda n, h: (n, h, 0, 0))],
            out_specs=pl.BlockSpec((1, tH, W, C), lambda n, h: (n, h, 0, 0)),
        ),
        compiler_params=pltpu.CompilerParams(
            dimension_semantics=("parallel", "parallel")),
    )(x)


# ---------------------------------------------------------------------------
# Glue: bilinear resize with align_corners=True (legacy F.upsample convention)
# TODO(synk): gather-heavy resize kept in plain JAX (no clean rectangular-tile
# Pallas formulation); it now runs on bf16 num_class-wide logits.
# ---------------------------------------------------------------------------
def _bilinear_align_corners(x, out_hw):
    N, H, W, C = x.shape
    oh, ow = out_hw
    dt = x.dtype

    def coords(in_size, out_size):
        if out_size == 1 or in_size == 1:
            pos = jnp.zeros((out_size,), jnp.float32)
        else:
            pos = jnp.arange(out_size, dtype=jnp.float32) * (
                (in_size - 1) / (out_size - 1))
        lo = jnp.floor(pos).astype(jnp.int32)
        hi = jnp.minimum(lo + 1, in_size - 1)
        return lo, hi, (pos - lo.astype(jnp.float32)).astype(dt)

    y0, y1, fy = coords(H, oh)
    x0, x1, fx = coords(W, ow)
    top = jnp.take(x, y0, axis=1)
    bot = jnp.take(x, y1, axis=1)
    rows = top + (bot - top) * fy[None, :, None, None]
    left = jnp.take(rows, x0, axis=2)
    right = jnp.take(rows, x1, axis=2)
    return left + (right - left) * fx[None, None, :, None]


# ---------------------------------------------------------------------------
# Parameters (deterministic; eval-mode BN folded to scale/bias)
# ---------------------------------------------------------------------------
def make_params(key, fc_dim, num_class, eps=1e-5):
    params = {}
    keys = jax.random.split(key, 4 * 5 + 1)
    ki = 0
    for i in range(1, 5):
        w = jax.random.normal(keys[ki], (3, 3, fc_dim, fc_dim), jnp.float32) * 0.05
        gamma = 0.5 + jax.random.uniform(keys[ki + 1], (fc_dim,), jnp.float32)
        beta = 0.1 * jax.random.normal(keys[ki + 2], (fc_dim,), jnp.float32)
        rmean = 0.1 * jax.random.normal(keys[ki + 3], (fc_dim,), jnp.float32)
        rvar = 0.5 + jax.random.uniform(keys[ki + 4], (fc_dim,), jnp.float32)
        ki += 5
        scale = gamma / jnp.sqrt(rvar + eps)
        bias = beta - rmean * scale
        params[f"w{i}"] = w                              # HWIO (3,3,Cin,Cout)
        params[f"scale{i}"] = scale
        params[f"bias{i}"] = bias
    params["w_last"] = (
        jax.random.normal(keys[ki], (fc_dim, num_class), jnp.float32) * 0.05)
    return params


def prepare_params(raw, num_class):
    """One-time (outside jit) weight cast/reshape so no per-call HBM cast pass."""
    prep = {}
    for i in range(1, 5):
        w = raw[f"w{i}"]
        prep[f"w{i}"] = w.reshape(9, w.shape[2], w.shape[3]).astype(jnp.bfloat16)
        prep[f"scale{i}"] = raw[f"scale{i}"].reshape(1, -1).astype(jnp.float32)
        prep[f"bias{i}"] = raw[f"bias{i}"].reshape(1, -1).astype(jnp.float32)
    wl = raw["w_last"]
    cp = ((num_class + 127) // 128) * 128                # lane-dense, internal
    wl_p = jnp.zeros((wl.shape[0], cp), jnp.float32).at[:, :num_class].set(wl)
    prep["wl_p"] = wl_p.astype(jnp.bfloat16)
    return prep


# ---------------------------------------------------------------------------
# Full forward (mirrors C5Bilinear.forward with use_softmax=False)
# ---------------------------------------------------------------------------
def c5_bilinear_forward(x_nchw, prep, seg_size, num_class):
    if isinstance(seg_size, int):
        seg_size = (seg_size, seg_size)
    vmem_limit = _vmem_limit_bytes()

    x = jnp.transpose(x_nchw, (0, 2, 3, 1)).astype(jnp.bfloat16)   # NCHW->NHWC
    N, H, W, _ = x.shape
    dilations = (2, 2, 1, 1)

    for i in (1, 2, 3):
        w9 = prep[f"w{i}"]
        Cin, Cout = w9.shape[1], w9.shape[2]
        nb, tci, tco = _pick_conv_tiles(N, H, W, Cin, Cout, dilations[i - 1],
                                        vmem_limit)
        x = conv3x3_bn_relu(x, w9, prep[f"scale{i}"], prep[f"bias{i}"],
                            dilation=dilations[i - 1], nb=nb, tci=tci, tco=tco,
                            vmem_limit=vmem_limit)

    # conv4 + BN + ReLU fused with conv_last (1x1); bf16 logits, num_class wide.
    w9 = prep["w4"]
    wl_p = prep["wl_p"]
    Cin, Cout = w9.shape[1], w9.shape[2]
    nb, tci, tco = _pick_conv_tiles(N, H, W, Cin, Cout, dilations[3], vmem_limit,
                                    acc1_cols=wl_p.shape[1], out_cols=num_class,
                                    max_nb=max(1, N // 2))
    x = conv3x3_bn_relu_conv1x1(x, w9, prep["scale4"], prep["bias4"], wl_p,
                                num_class=num_class, dilation=dilations[3],
                                nb=nb, tci=tci, tco=tco, vmem_limit=vmem_limit)

    if (x.shape[1], x.shape[2]) != tuple(seg_size):
        x = _bilinear_align_corners(x, seg_size)          # bf16 resize

    x = log_softmax_channels(x)                           # f32 out
    return jnp.transpose(x, (0, 3, 1, 2))                 # back to NCHW


# ---------------------------------------------------------------------------
# Pure-JAX reference (same bf16 rounding points) for validation
# ---------------------------------------------------------------------------
def reference_forward(x_nchw, params, seg_size):
    if isinstance(seg_size, int):
        seg_size = (seg_size, seg_size)
    x = jnp.transpose(x_nchw, (0, 2, 3, 1)).astype(jnp.bfloat16)
    dils = (2, 2, 1, 1)
    for i in range(1, 5):
        d = dils[i - 1]
        y = jax.lax.conv_general_dilated(
            x, params[f"w{i}"].astype(jnp.bfloat16),
            window_strides=(1, 1), padding=((d, d), (d, d)), rhs_dilation=(d, d),
            dimension_numbers=("NHWC", "HWIO", "NHWC"),
            preferred_element_type=jnp.float32)
        y = y * params[f"scale{i}"] + params[f"bias{i}"]
        x = jnp.maximum(y, 0.0).astype(jnp.bfloat16)
    logits = jnp.einsum("nhwc,cd->nhwd", x,
                        params["w_last"].astype(jnp.bfloat16),
                        preferred_element_type=jnp.float32)
    logits = logits.astype(jnp.bfloat16)                   # mirror kernel tail
    if logits.shape[1:3] != tuple(seg_size):
        logits = _bilinear_align_corners(logits, seg_size)
    out = jax.nn.log_softmax(logits.astype(jnp.float32), axis=-1)
    return jnp.transpose(out, (0, 3, 1, 2))


if __name__ == "__main__":
    # Small stand-in shapes: batch=2, fc_dim=32 (for 4096), num_class=8 (for
    # 150), input spatial 8x8, segSize=16.
    batch, fc_dim, num_class = 2, 32, 8
    H = W = 8
    seg_size = 16

    key = jax.random.PRNGKey(0)
    kx, kp = jax.random.split(key)
    x = jax.random.normal(kx, (batch, fc_dim, H, W), jnp.float32)  # NCHW input
    raw_params = make_params(kp, fc_dim, num_class)
    prep_params = prepare_params(raw_params, num_class)   # one-time, outside jit

    fwd = jax.jit(lambda x_, p_: c5_bilinear_forward(
        x_, p_, (seg_size, seg_size), num_class))
    out = jax.block_until_ready(fwd(x, prep_params))
    assert out.shape == (batch, num_class, seg_size, seg_size), out.shape

    ref = jax.block_until_ready(
        reference_forward(x, raw_params, (seg_size, seg_size)))
    max_err = float(jnp.max(jnp.abs(out - ref)))
    assert max_err < 5e-2, f"max abs err vs reference: {max_err}"

    # log_softmax sanity: channel-wise logsumexp == 0
    lse = jnp.log(jnp.sum(jnp.exp(out), axis=1))
    assert bool(jnp.all(jnp.abs(lse) < 1e-3))
    print("KERNEL_OK")
</pallas_src>

<mosaic_0001>
module attributes {stable_mosaic.version = 11 : i64} {
  func.func @_conv3x3_bn_relu_kernel(%arg0: i32, %arg1: i32, %arg2: i32, %arg3: memref<2x8x8x32xbf16, #tpu.memory_space<vmem>>, %arg4: memref<9x32x32xbf16, #tpu.memory_space<vmem>>, %arg5: memref<1x32xf32, #tpu.memory_space<vmem>>, %arg6: memref<1x32xf32, #tpu.memory_space<vmem>>, %arg7: memref<2x8x8x32xbf16, #tpu.memory_space<vmem>>, %arg8: memref<2x12x12x32xbf16, #tpu.memory_space<vmem>>, %arg9: memref<128x32xf32, #tpu.memory_space<vmem>>) attributes {dimension_semantics = [#tpu.dimension_semantics<parallel>, #tpu.dimension_semantics<parallel>, #tpu.dimension_semantics<arbitrary>], iteration_bounds = array<i64: 1, 1, 1>, scalar_prefetch = 0 : i64, scratch_operands = 2 : i64, tpu.core_type = #tpu.core_type<tc>, window_params = [{transform_indices = @transform_0, window_bounds = array<i64: 2, 8, 8, 32>}, {transform_indices = @transform_1, window_bounds = array<i64: 9, 32, 32>}, {transform_indices = @transform_2, window_bounds = array<i64: 1, 32>}, {transform_indices = @transform_3, window_bounds = array<i64: 1, 32>}, {transform_indices = @transform_4, window_bounds = array<i64: 2, 8, 8, 32>}]} {
    %c0_i32 = arith.constant 0 : i32
    %0 = arith.cmpi eq, %arg2, %c0_i32 : i32
    %1 = arith.extui %0 : i1 to i32
    %c0_i32_0 = arith.constant 0 : i32
    %2 = arith.cmpi ne, %1, %c0_i32_0 : i32
    scf.if %2 {
      %cst_51 = arith.constant 0.000000e+00 : f32
      %25 = vector.broadcast %cst_51 : f32 to vector<128x32xf32>
      %c0_52 = arith.constant 0 : index
      %c0_53 = arith.constant 0 : index
      %26 = vector.load %arg9[%c0_52, %c0_53] : memref<128x32xf32, #tpu.memory_space<vmem>>, vector<128x32xf32>
      tpu.vector_store %arg9[%c0_52, %c0_53], %25 {strides = array<i32>} : memref<128x32xf32, #tpu.memory_space<vmem>>, vector<128x32xf32>,
      %cst_54 = arith.constant 0.000000e+00 : bf16
      %27 = vector.broadcast %cst_54 : bf16 to vector<2x12x12x32xbf16>
      %c0_55 = arith.constant 0 : index
      %c0_56 = arith.constant 0 : index
      %c0_57 = arith.constant 0 : index
      %c0_58 = arith.constant 0 : index
      %28 = vector.load %arg8[%c0_55, %c0_56, %c0_57, %c0_58] : memref<2x12x12x32xbf16, #tpu.memory_space<vmem>>, vector<2x12x12x32xbf16>
      tpu.vector_store %arg8[%c0_55, %c0_56, %c0_57, %c0_58], %27 {strides = array<i32>} : memref<2x12x12x32xbf16, #tpu.memory_space<vmem>>, vector<2x12x12x32xbf16>,
    } else {
    }
    %c0 = arith.constant 0 : index
    %c0_1 = arith.constant 0 : index
    %c0_2 = arith.constant 0 : index
    %c0_3 = arith.constant 0 : index
    %3 = vector.load %arg3[%c0, %c0_1, %c0_2, %c0_3] : memref<2x8x8x32xbf16, #tpu.memory_space<vmem>>, vector<2x8x8x32xbf16>
    %c0_4 = arith.constant 0 : index
    %c2 = arith.constant 2 : index
    %c2_5 = arith.constant 2 : index
    %c0_6 = arith.constant 0 : index
    %4 = vector.load %arg8[%c0_4, %c2, %c2_5, %c0_6] : memref<2x12x12x32xbf16, #tpu.memory_space<vmem>>, vector<2x8x8x32xbf16>
    tpu.vector_store %arg8[%c0_4, %c2, %c2_5, %c0_6], %3 {strides = array<i32>} : memref<2x12x12x32xbf16, #tpu.memory_space<vmem>>, vector<2x8x8x32xbf16>,
    %c0_7 = arith.constant 0 : index
    %c0_8 = arith.constant 0 : index
    %c0_9 = arith.constant 0 : index
    %c0_10 = arith.constant 0 : index
    %5 = vector.load %arg8[%c0_7, %c0_8, %c0_9, %c0_10] : memref<2x12x12x32xbf16, #tpu.memory_space<vmem>>, vector<2x8x8x32xbf16>
    %c0_11 = arith.constant 0 : index
    %c0_12 = arith.constant 0 : index
    %c2_13 = arith.constant 2 : index
    %c0_14 = arith.constant 0 : index
    %6 = vector.load %arg8[%c0_11, %c0_12, %c2_13, %c0_14] : memref<2x12x12x32xbf16, #tpu.memory_space<vmem>>, vector<2x8x8x32xbf16>
    %c0_15 = arith.constant 0 : index
    %c0_16 = arith.constant 0 : index
    %c4 = arith.constant 4 : index
    %c0_17 = arith.constant 0 : index
    %7 = vector.load %arg8[%c0_15, %c0_16, %c4, %c0_17] : memref<2x12x12x32xbf16, #tpu.memory_space<vmem>>, vector<2x8x8x32xbf16>
    %c0_18 = arith.constant 0 : index
    %c2_19 = arith.constant 2 : index
    %c0_20 = arith.constant 0 : index
    %c0_21 = arith.constant 0 : index
    %8 = vector.load %arg8[%c0_18, %c2_19, %c0_20, %c0_21] : memref<2x12x12x32xbf16, #tpu.memory_space<vmem>>, vector<2x8x8x32xbf16>
    %c0_22 = arith.constant 0 : index
    %c2_23 = arith.constant 2 : index
    %c2_24 = arith.constant 2 : index
    %c0_25 = arith.constant 0 : index
    %9 = vector.load %arg8[%c0_22, %c2_23, %c2_24, %c0_25] : memref<2x12x12x32xbf16, #tpu.memory_space<vmem>>, vector<2x8x8x32xbf16>
    %c0_26 = arith.constant 0 : index
    %c2_27 = arith.constant 2 : index
    %c4_28 = arith.constant 4 : index
    %c0_29 = arith.constant 0 : index
    %10 = vector.load %arg8[%c0_26, %c2_27, %c4_28, %c0_29] : memref<2x12x12x32xbf16, #tpu.memory_space<vmem>>, vector<2x8x8x32xbf16>
    %c0_30 = arith.constant 0 : index
    %c4_31 = arith.constant 4 : index
    %c0_32 = arith.constant 0 : index
    %c0_33 = arith.constant 0 : index
    %11 = vector.load %arg8[%c0_30, %c4_31, %c0_32, %c0_33] : memref<2x12x12x32xbf16, #tpu.memory_space<vmem>>, vector<2x8x8x32xbf16>
    %c0_34 = arith.constant 0 : index
    %c4_35 = arith.constant 4 : index
    %c2_36 = arith.constant 2 : index
    %c0_37 = arith.constant 0 : index
    %12 = vector.load %arg8[%c0_34, %c4_35, %c2_36, %c0_37] : memref<2x12x12x32xbf16, #tpu.memory_space<vmem>>, vector<2x8x8x32xbf16>
    %c0_38 = arith.constant 0 : index
    %c4_39 = arith.constant 4 : index
    %c4_40 = arith.constant 4 : index
    %c0_41 = arith.constant 0 : index
    %13 = vector.load %arg8[%c0_38, %c4_39, %c4_40, %c0_41] : memref<2x12x12x32xbf16, #tpu.memory_space<vmem>>, vector<2x8x8x32xbf16>
    %14 = tpu.concatenate %5, %6, %7, %8, %9, %10, %11, %12, %13 in 3 : vector<2x8x8x32xbf16>, vector<2x8x8x32xbf16>, vector<2x8x8x32xbf16>, vector<2x8x8x32xbf16>, vector<2x8x8x32xbf16>, vector<2x8x8x32xbf16>, vector<2x8x8x32xbf16>, vector<2x8x8x32xbf16>, vector<2x8x8x32xbf16> -> vector<2x8x8x288xbf16>
    %15 = vector.shape_cast %14 : vector<2x8x8x288xbf16> to vector<128x288xbf16>
    %c0_42 = arith.constant 0 : index
    %c0_43 = arith.constant 0 : index
    %16 = vector.load %arg9[%c0_42, %c0_43] : memref<128x32xf32, #tpu.memory_space<vmem>>, vector<128x32xf32>
    %c0_44 = arith.constant 0 : index
    %c0_45 = arith.constant 0 : index
    %c0_46 = arith.constant 0 : index
    %17 = vector.load %arg4[%c0_44, %c0_45, %c0_46] : memref<9x32x32xbf16, #tpu.memory_space<vmem>>, vector<9x32x32xbf16>
    %18 = vector.shape_cast %17 : vector<9x32x32xbf16> to vector<288x32xbf16>
    %cst = arith.constant dense<0.000000e+00> : vector<128x32xf32>
    %19 = tpu.matmul %15, %18, %cst {dimension_numbers = #tpu.dot_dimension_numbers<[1], [0], [0], [1], [0, 0, 1, 1], [], []>} : vector<128x288xbf16>, vector<288x32xbf16>, vector<128x32xf32> -> vector<128x32xf32>
    %20 = arith.addf %16, %19 : vector<128x32xf32>
    %c0_47 = arith.constant 0 : index
    %c0_48 = arith.constant 0 : index
    %21 = vector.load %arg9[%c0_47, %c0_48] : memref<128x32xf32, #tpu.memory_space<vmem>>, vector<128x32xf32>
    tpu.vector_store %arg9[%c0_47, %c0_48], %20 {strides = array<i32>} : memref<128x32xf32, #tpu.memory_space<vmem>>, vector<128x32xf32>,
    %c0_i32_49 = arith.constant 0 : i32
    %22 = arith.cmpi eq, %arg2, %c0_i32_49 : i32
    %23 = arith.extui %22 : i1 to i32
    %c0_i32_50 = arith.constant 0 : i32
    %24 = arith.cmpi ne, %23, %c0_i32_50 : i32
    scf.if %24 {
      %c0_51 = arith.constant 0 : index
      %c0_52 = arith.constant 0 : index
      %25 = vector.load %arg9[%c0_51, %c0_52] : memref<128x32xf32, #tpu.memory_space<vmem>>, vector<128x32xf32>
      %c0_53 = arith.constant 0 : index
      %c0_54 = arith.constant 0 : index
      %26 = vector.load %arg5[%c0_53, %c0_54] : memref<1x32xf32, #tpu.memory_space<vmem>>, vector<1x32xf32>
      %27 = vector.shape_cast %26 : vector<1x32xf32> to vector<32xf32>
      %28 = vector.shape_cast %27 : vector<32xf32> to vector<1x32xf32>
      %29 = vector.broadcast %28 : vector<1x32xf32> to vector<128x32xf32>
      %30 = arith.mulf %25, %29 : vector<128x32xf32>
      %c0_55 = arith.constant 0 : index
      %c0_56 = arith.constant 0 : index
      %31 = vector.load %arg6[%c0_55, %c0_56] : memref<1x32xf32, #tpu.memory_space<vmem>>, vector<1x32xf32>
      %32 = vector.shape_cast %31 : vector<1x32xf32> to vector<32xf32>
      %33 = vector.shape_cast %32 : vector<32xf32> to vector<1x32xf32>
      %34 = vector.broadcast %33 : vector<1x32xf32> to vector<128x32xf32>
      %35 = arith.addf %30, %34 : vector<128x32xf32>
      %cst_57 = arith.constant 0.000000e+00 : f32
      %36 = vector.broadcast %cst_57 : f32 to vector<128x32xf32>
      %37 = arith.maximumf %35, %36 : vector<128x32xf32>
      %38 = vector.shape_cast %37 : vector<128x32xf32> to vector<2x8x8x32xf32>
      %39 = arith.truncf %38 : vector<2x8x8x32xf32> to vector<2x8x8x32xbf16>
      %c0_58 = arith.constant 0 : index
      %c0_59 = arith.constant 0 : index
      %c0_60 = arith.constant 0 : index
      %c0_61 = arith.constant 0 : index
      %40 = vector.load %arg7[%c0_58, %c0_59, %c0_60, %c0_61] : memref<2x8x8x32xbf16, #tpu.memory_space<vmem>>, vector<2x8x8x32xbf16>
      tpu.vector_store %arg7[%c0_58, %c0_59, %c0_60, %c0_61], %39 {strides = array<i32>} : memref<2x8x8x32xbf16, #tpu.memory_space<vmem>>, vector<2x8x8x32xbf16>,
    } else {
    }
    return
  }
  func.func @transform_0(%arg0: i32, %arg1: i32, %arg2: i32) -> (i32, i32, i32, i32) {
    %c0_i32 = arith.constant 0 : i32
    %c0_i32_0 = arith.constant 0 : i32
    %c0_i32_1 = arith.constant 0 : i32
    return %arg0, %c0_i32, %c0_i32_0, %arg2 : i32, i32, i32, i32
  }
  func.func @transform_1(%arg0: i32, %arg1: i32, %arg2: i32) -> (i32, i32, i32) {
    %c0_i32 = arith.constant 0 : i32
    %c0_i32_0 = arith.constant 0 : i32
    return %c0_i32, %arg2, %arg1 : i32, i32, i32
  }
  func.func @transform_2(%arg0: i32, %arg1: i32, %arg2: i32) -> (i32, i32) {
    %c0_i32 = arith.constant 0 : i32
    %c0_i32_0 = arith.constant 0 : i32
    return %c0_i32, %arg1 : i32, i32
  }
  func.func @transform_3(%arg0: i32, %arg1: i32, %arg2: i32) -> (i32, i32) {
    %c0_i32 = arith.constant 0 : i32
    %c0_i32_0 = arith.constant 0 : i32
    return %c0_i32, %arg1 : i32, i32
  }
  func.func @transform_4(%arg0: i32, %arg1: i32, %arg2: i32) -> (i32, i32, i32, i32) {
    %c0_i32 = arith.constant 0 : i32
    %c0_i32_0 = arith.constant 0 : i32
    %c0_i32_1 = arith.constant 0 : i32
    return %arg0, %c0_i32, %c0_i32_0, %arg1 : i32, i32, i32, i32
  }
}

module attributes {stable_mosaic.version = 11 : i64} {
  func.func @_conv3x3_bn_relu_kernel(%arg0: i32, %arg1: i32, %arg2: i32, %arg3: memref<2x8x8x32xbf16, #tpu.memory_space<vmem>>, %arg4: memref<9x32x32xbf16, #tpu.memory_space<vmem>>, %arg5: memref<1x32xf32, #tpu.memory_space<vmem>>, %arg6: memref<1x32xf32, #tpu.memory_space<vmem>>, %arg7: memref<2x8x8x32xbf16, #tpu.memory_space<vmem>>, %arg8: memref<2x10x11x32xbf16, #tpu.memory_space<vmem>>, %arg9: memref<128x32xf32, #tpu.memory_space<vmem>>) attributes {dimension_semantics = [#tpu.dimension_semantics<parallel>, #tpu.dimension_semantics<parallel>, #tpu.dimension_semantics<arbitrary>], iteration_bounds = array<i64: 1, 1, 1>, scalar_prefetch = 0 : i64, scratch_operands = 2 : i64, tpu.core_type = #tpu.core_type<tc>, window_params = [{transform_indices = @transform_0, window_bounds = array<i64: 2, 8, 8, 32>}, {transform_indices = @transform_1, window_bounds = array<i64: 9, 32, 32>}, {transform_indices = @transform_2, window_bounds = array<i64: 1, 32>}, {transform_indices = @transform_3, window_bounds = array<i64: 1, 32>}, {transform_indices = @transform_4, window_bounds = array<i64: 2, 8, 8, 32>}]} {
    %c0_i32 = arith.constant 0 : i32
    %0 = arith.cmpi eq, %arg2, %c0_i32 : i32
    %1 = arith.extui %0 : i1 to i32
    %c0_i32_0 = arith.constant 0 : i32
    %2 = arith.cmpi ne, %1, %c0_i32_0 : i32
    scf.if %2 {
      %cst_50 = arith.constant 0.000000e+00 : f32
      %25 = vector.broadcast %cst_50 : f32 to vector<128x32xf32>
      %c0_51 = arith.constant 0 : index
      %c0_52 = arith.constant 0 : index
      %26 = vector.load %arg9[%c0_51, %c0_52] : memref<128x32xf32, #tpu.memory_space<vmem>>, vector<128x32xf32>
      tpu.vector_store %arg9[%c0_51, %c0_52], %25 {strides = array<i32>} : memref<128x32xf32, #tpu.memory_space<vmem>>, vector<128x32xf32>,
      %cst_53 = arith.constant 0.000000e+00 : bf16
      %27 = vector.broadcast %cst_53 : bf16 to vector<2x10x11x32xbf16>
      %c0_54 = arith.constant 0 : index
      %c0_55 = arith.constant 0 : index
      %c0_56 = arith.constant 0 : index
      %c0_57 = arith.constant 0 : index
      %28 = vector.load %arg8[%c0_54, %c0_55, %c0_56, %c0_57] : memref<2x10x11x32xbf16, #tpu.memory_space<vmem>>, vector<2x10x11x32xbf16>
      tpu.vector_store %arg8[%c0_54, %c0_55, %c0_56, %c0_57], %27 {strides = array<i32>} : memref<2x10x11x32xbf16, #tpu.memory_space<vmem>>, vector<2x10x11x32xbf16>,
    } else {
    }
    %c0 = arith.constant 0 : index
    %c0_1 = arith.constant 0 : index
    %c0_2 = arith.constant 0 : index
    %c0_3 = arith.constant 0 : index
    %3 = vector.load %arg3[%c0, %c0_1, %c0_2, %c0_3] : memref<2x8x8x32xbf16, #tpu.memory_space<vmem>>, vector<2x8x8x32xbf16>
    %c0_4 = arith.constant 0 : index
    %c1 = arith.constant 1 : index
    %c2 = arith.constant 2 : index
    %c0_5 = arith.constant 0 : index
    %4 = vector.load %arg8[%c0_4, %c1, %c2, %c0_5] : memref<2x10x11x32xbf16, #tpu.memory_space<vmem>>, vector<2x8x8x32xbf16>
    tpu.vector_store %arg8[%c0_4, %c1, %c2, %c0_5], %3 {strides = array<i32>} : memref<2x10x11x32xbf16, #tpu.memory_space<vmem>>, vector<2x8x8x32xbf16>,
    %c0_6 = arith.constant 0 : index
    %c0_7 = arith.constant 0 : index
    %c1_8 = arith.constant 1 : index
    %c0_9 = arith.constant 0 : index
    %5 = vector.load %arg8[%c0_6, %c0_7, %c1_8, %c0_9] : memref<2x10x11x32xbf16, #tpu.memory_space<vmem>>, vector<2x8x8x32xbf16>
    %c0_10 = arith.constant 0 : index
    %c0_11 = arith.constant 0 : index
    %c2_12 = arith.constant 2 : index
    %c0_13 = arith.constant 0 : index
    %6 = vector.load %arg8[%c0_10, %c0_11, %c2_12, %c0_13] : memref<2x10x11x32xbf16, #tpu.memory_space<vmem>>, vector<2x8x8x32xbf16>
    %c0_14 = arith.constant 0 : index
    %c0_15 = arith.constant 0 : index
    %c3 = arith.constant 3 : index
    %c0_16 = arith.constant 0 : index
    %7 = vector.load %arg8[%c0_14, %c0_15, %c3, %c0_16] : memref<2x10x11x32xbf16, #tpu.memory_space<vmem>>, vector<2x8x8x32xbf16>
    %c0_17 = arith.constant 0 : index
    %c1_18 = arith.constant 1 : index
    %c1_19 = arith.constant 1 : index
    %c0_20 = arith.constant 0 : index
    %8 = vector.load %arg8[%c0_17, %c1_18, %c1_19, %c0_20] : memref<2x10x11x32xbf16, #tpu.memory_space<vmem>>, vector<2x8x8x32xbf16>
    %c0_21 = arith.constant 0 : index
    %c1_22 = arith.constant 1 : index
    %c2_23 = arith.constant 2 : index
    %c0_24 = arith.constant 0 : index
    %9 = vector.load %arg8[%c0_21, %c1_22, %c2_23, %c0_24] : memref<2x10x11x32xbf16, #tpu.memory_space<vmem>>, vector<2x8x8x32xbf16>
    %c0_25 = arith.constant 0 : index
    %c1_26 = arith.constant 1 : index
    %c3_27 = arith.constant 3 : index
    %c0_28 = arith.constant 0 : index
    %10 = vector.load %arg8[%c0_25, %c1_26, %c3_27, %c0_28] : memref<2x10x11x32xbf16, #tpu.memory_space<vmem>>, vector<2x8x8x32xbf16>
    %c0_29 = arith.constant 0 : index
    %c2_30 = arith.constant 2 : index
    %c1_31 = arith.constant 1 : index
    %c0_32 = arith.constant 0 : index
    %11 = vector.load %arg8[%c0_29, %c2_30, %c1_31, %c0_32] : memref<2x10x11x32xbf16, #tpu.memory_space<vmem>>, vector<2x8x8x32xbf16>
    %c0_33 = arith.constant 0 : index
    %c2_34 = arith.constant 2 : index
    %c2_35 = arith.constant 2 : index
    %c0_36 = arith.constant 0 : index
    %12 = vector.load %arg8[%c0_33, %c2_34, %c2_35, %c0_36] : memref<2x10x11x32xbf16, #tpu.memory_space<vmem>>, vector<2x8x8x32xbf16>
    %c0_37 = arith.constant 0 : index
    %c2_38 = arith.constant 2 : index
    %c3_39 = arith.constant 3 : index
    %c0_40 = arith.constant 0 : index
    %13 = vector.load %arg8[%c0_37, %c2_38, %c3_39, %c0_40] : memref<2x10x11x32xbf16, #tpu.memory_space<vmem>>, vector<2x8x8x32xbf16>
    %14 = tpu.concatenate %5, %6, %7, %8, %9, %10, %11, %12, %13 in 3 : vector<2x8x8x32xbf16>, vector<2x8x8x32xbf16>, vector<2x8x8x32xbf16>, vector<2x8x8x32xbf16>, vector<2x8x8x32xbf16>, vector<2x8x8x32xbf16>, vector<2x8x8x32xbf16>, vector<2x8x8x32xbf16>, vector<2x8x8x32xbf16> -> vector<2x8x8x288xbf16>
    %15 = vector.shape_cast %14 : vector<2x8x8x288xbf16> to vector<128x288xbf16>
    %c0_41 = arith.constant 0 : index
    %c0_42 = arith.constant 0 : index
    %16 = vector.load %arg9[%c0_41, %c0_42] : memref<128x32xf32, #tpu.memory_space<vmem>>, vector<128x32xf32>
    %c0_43 = arith.constant 0 : index
    %c0_44 = arith.constant 0 : index
    %c0_45 = arith.constant 0 : index
    %17 = vector.load %arg4[%c0_43, %c0_44, %c0_45] : memref<9x32x32xbf16, #tpu.memory_space<vmem>>, vector<9x32x32xbf16>
    %18 = vector.shape_cast %17 : vector<9x32x32xbf16> to vector<288x32xbf16>
    %cst = arith.constant dense<0.000000e+00> : vector<128x32xf32>
    %19 = tpu.matmul %15, %18, %cst {dimension_numbers = #tpu.dot_dimension_numbers<[1], [0], [0], [1], [0, 0, 1, 1], [], []>} : vector<128x288xbf16>, vector<288x32xbf16>, vector<128x32xf32> -> vector<128x32xf32>
    %20 = arith.addf %16, %19 : vector<128x32xf32>
    %c0_46 = arith.constant 0 : index
    %c0_47 = arith.constant 0 : index
    %21 = vector.load %arg9[%c0_46, %c0_47] : memref<128x32xf32, #tpu.memory_space<vmem>>, vector<128x32xf32>
    tpu.vector_store %arg9[%c0_46, %c0_47], %20 {strides = array<i32>} : memref<128x32xf32, #tpu.memory_space<vmem>>, vector<128x32xf32>,
    %c0_i32_48 = arith.constant 0 : i32
    %22 = arith.cmpi eq, %arg2, %c0_i32_48 : i32
    %23 = arith.extui %22 : i1 to i32
    %c0_i32_49 = arith.constant 0 : i32
    %24 = arith.cmpi ne, %23, %c0_i32_49 : i32
    scf.if %24 {
      %c0_50 = arith.constant 0 : index
      %c0_51 = arith.constant 0 : index
      %25 = vector.load %arg9[%c0_50, %c0_51] : memref<128x32xf32, #tpu.memory_space<vmem>>, vector<128x32xf32>
      %c0_52 = arith.constant 0 : index
      %c0_53 = arith.constant 0 : index
      %26 = vector.load %arg5[%c0_52, %c0_53] : memref<1x32xf32, #tpu.memory_space<vmem>>, vector<1x32xf32>
      %27 = vector.shape_cast %26 : vector<1x32xf32> to vector<32xf32>
      %28 = vector.shape_cast %27 : vector<32xf32> to vector<1x32xf32>
      %29 = vector.broadcast %28 : vector<1x32xf32> to vector<128x32xf32>
      %30 = arith.mulf %25, %29 : vector<128x32xf32>
      %c0_54 = arith.constant 0 : index
      %c0_55 = arith.constant 0 : index
      %31 = vector.load %arg6[%c0_54, %c0_55] : memref<1x32xf32, #tpu.memory_space<vmem>>, vector<1x32xf32>
      %32 = vector.shape_cast %31 : vector<1x32xf32> to vector<32xf32>
      %33 = vector.shape_cast %32 : vector<32xf32> to vector<1x32xf32>
      %34 = vector.broadcast %33 : vector<1x32xf32> to vector<128x32xf32>
      %35 = arith.addf %30, %34 : vector<128x32xf32>
      %cst_56 = arith.constant 0.000000e+00 : f32
      %36 = vector.broadcast %cst_56 : f32 to vector<128x32xf32>
      %37 = arith.maximumf %35, %36 : vector<128x32xf32>
      %38 = vector.shape_cast %37 : vector<128x32xf32> to vector<2x8x8x32xf32>
      %39 = arith.truncf %38 : vector<2x8x8x32xf32> to vector<2x8x8x32xbf16>
      %c0_57 = arith.constant 0 : index
      %c0_58 = arith.constant 0 : index
      %c0_59 = arith.constant 0 : index
      %c0_60 = arith.constant 0 : index
      %40 = vector.load %arg7[%c0_57, %c0_58, %c0_59, %c0_60] : memref<2x8x8x32xbf16, #tpu.memory_space<vmem>>, vector<2x8x8x32xbf16>
      tpu.vector_store %arg7[%c0_57, %c0_58, %c0_59, %c0_60], %39 {strides = array<i32>} : memref<2x8x8x32xbf16, #tpu.memory_space<vmem>>, vector<2x8x8x32xbf16>,
    } else {
    }
    return
  }
  func.func @transform_0(%arg0: i32, %arg1: i32, %arg2: i32) -> (i32, i32, i32, i32) {
    %c0_i32 = arith.constant 0 : i32
    %c0_i32_0 = arith.constant 0 : i32
    %c0_i32_1 = arith.constant 0 : i32
    return %arg0, %c0_i32, %c0_i32_0, %arg2 : i32, i32, i32, i32
  }
  func.func @transform_1(%arg0: i32, %arg1: i32, %arg2: i32) -> (i32, i32, i32) {
    %c0_i32 = arith.constant 0 : i32
    %c0_i32_0 = arith.constant 0 : i32
    return %c0_i32, %arg2, %arg1 : i32, i32, i32
  }
  func.func @transform_2(%arg0: i32, %arg1: i32, %arg2: i32) -> (i32, i32) {
    %c0_i32 = arith.constant 0 : i32
    %c0_i32_0 = arith.constant 0 : i32
    return %c0_i32, %arg1 : i32, i32
  }
  func.func @transform_3(%arg0: i32, %arg1: i32, %arg2: i32) -> (i32, i32) {
    %c0_i32 = arith.constant 0 : i32
    %c0_i32_0 = arith.constant 0 : i32
    return %c0_i32, %arg1 : i32, i32
  }
  func.func @transform_4(%arg0: i32, %arg1: i32, %arg2: i32) -> (i32, i32, i32, i32) {
    %c0_i32 = arith.constant 0 : i32
    %c0_i32_0 = arith.constant 0 : i32
    %c0_i32_1 = arith.constant 0 : i32
    return %arg0, %c0_i32, %c0_i32_0, %arg1 : i32, i32, i32, i32
  }
}

module attributes {stable_mosaic.version = 11 : i64} {
  func.func @_conv3x3_bn_relu_conv1x1_kernel(%arg0: i32, %arg1: i32, %arg2: i32, %arg3: memref<1x8x8x32xbf16, #tpu.memory_space<vmem>>, %arg4: memref<9x32x32xbf16, #tpu.memory_space<vmem>>, %arg5: memref<1x32xf32, #tpu.memory_space<vmem>>, %arg6: memref<1x32xf32, #tpu.memory_space<vmem>>, %arg7: memref<32x128xbf16, #tpu.memory_space<vmem>>, %arg8: memref<1x8x8x8xbf16, #tpu.memory_space<vmem>>, %arg9: memref<1x10x11x32xbf16, #tpu.memory_space<vmem>>, %arg10: memref<64x32xf32, #tpu.memory_space<vmem>>, %arg11: memref<64x128xf32, #tpu.memory_space<vmem>>) attributes {dimension_semantics = [#tpu.dimension_semantics<parallel>, #tpu.dimension_semantics<arbitrary>, #tpu.dimension_semantics<arbitrary>], iteration_bounds = array<i64: 2, 1, 1>, scalar_prefetch = 0 : i64, scratch_operands = 3 : i64, tpu.core_type = #tpu.core_type<tc>, window_params = [{transform_indices = @transform_0, window_bounds = array<i64: 1, 8, 8, 32>}, {transform_indices = @transform_1, window_bounds = array<i64: 9, 32, 32>}, {transform_indices = @transform_2, window_bounds = array<i64: 1, 32>}, {transform_indices = @transform_3, window_bounds = array<i64: 1, 32>}, {transform_indices = @transform_4, window_bounds = array<i64: 32, 128>}, {transform_indices = @transform_5, window_bounds = array<i64: 1, 8, 8, 8>}]} {
    %c0_i32 = arith.constant 0 : i32
    %0 = arith.cmpi eq, %arg2, %c0_i32 : i32
    %1 = arith.extui %0 : i1 to i32
    %c0_i32_0 = arith.constant 0 : i32
    %2 = arith.cmpi ne, %1, %c0_i32_0 : i32
    scf.if %2 {
      %cst_56 = arith.constant 0.000000e+00 : f32
      %35 = vector.broadcast %cst_56 : f32 to vector<64x32xf32>
      %c0_57 = arith.constant 0 : index
      %c0_58 = arith.constant 0 : index
      %36 = vector.load %arg10[%c0_57, %c0_58] : memref<64x32xf32, #tpu.memory_space<vmem>>, vector<64x32xf32>
      tpu.vector_store %arg10[%c0_57, %c0_58], %35 {strides = array<i32>} : memref<64x32xf32, #tpu.memory_space<vmem>>, vector<64x32xf32>,
      %cst_59 = arith.constant 0.000000e+00 : bf16
      %37 = vector.broadcast %cst_59 : bf16 to vector<1x10x11x32xbf16>
      %c0_60 = arith.constant 0 : index
      %c0_61 = arith.constant 0 : index
      %c0_62 = arith.constant 0 : index
      %c0_63 = arith.constant 0 : index
      %38 = vector.load %arg9[%c0_60, %c0_61, %c0_62, %c0_63] : memref<1x10x11x32xbf16, #tpu.memory_space<vmem>>, vector<1x10x11x32xbf16>
      tpu.vector_store %arg9[%c0_60, %c0_61, %c0_62, %c0_63], %37 {strides = array<i32>} : memref<1x10x11x32xbf16, #tpu.memory_space<vmem>>, vector<1x10x11x32xbf16>,
    } else {
    }
    %c0_i32_1 = arith.constant 0 : i32
    %3 = arith.cmpi eq, %arg1, %c0_i32_1 : i32
    %c0_i32_2 = arith.constant 0 : i32
    %4 = arith.cmpi eq, %arg2, %c0_i32_2 : i32
    %5 = arith.andi %3, %4 : i1
    %6 = arith.extui %5 : i1 to i32
    %c0_i32_3 = arith.constant 0 : i32
    %7 = arith.cmpi ne, %6, %c0_i32_3 : i32
    scf.if %7 {
      %cst_56 = arith.constant 0.000000e+00 : f32
      %35 = vector.broadcast %cst_56 : f32 to vector<64x128xf32>
      %c0_57 = arith.constant 0 : index
      %c0_58 = arith.constant 0 : index
      %36 = vector.load %arg11[%c0_57, %c0_58] : memref<64x128xf32, #tpu.memory_space<vmem>>, vector<64x128xf32>
      tpu.vector_store %arg11[%c0_57, %c0_58], %35 {strides = array<i32>} : memref<64x128xf32, #tpu.memory_space<vmem>>, vector<64x128xf32>,
    } else {
    }
    %c0 = arith.constant 0 : index
    %c0_4 = arith.constant 0 : index
    %c0_5 = arith.constant 0 : index
    %c0_6 = arith.constant 0 : index
    %8 = vector.load %arg3[%c0, %c0_4, %c0_5, %c0_6] : memref<1x8x8x32xbf16, #tpu.memory_space<vmem>>, vector<1x8x8x32xbf16>
    %c0_7 = arith.constant 0 : index
    %c1 = arith.constant 1 : index
    %c2 = arith.constant 2 : index
    %c0_8 = arith.constant 0 : index
    %9 = vector.load %arg9[%c0_7, %c1, %c2, %c0_8] : memref<1x10x11x32xbf16, #tpu.memory_space<vmem>>, vector<1x8x8x32xbf16>
    tpu.vector_store %arg9[%c0_7, %c1, %c2, %c0_8], %8 {strides = array<i32>} : memref<1x10x11x32xbf16, #tpu.memory_space<vmem>>, vector<1x8x8x32xbf16>,
    %c0_9 = arith.constant 0 : index
    %c0_10 = arith.constant 0 : index
    %c1_11 = arith.constant 1 : index
    %c0_12 = arith.constant 0 : index
    %10 = vector.load %arg9[%c0_9, %c0_10, %c1_11, %c0_12] : memref<1x10x11x32xbf16, #tpu.memory_space<vmem>>, vector<1x8x8x32xbf16>
    %c0_13 = arith.constant 0 : index
    %c0_14 = arith.constant 0 : index
    %c2_15 = arith.constant 2 : index
    %c0_16 = arith.constant 0 : index
    %11 = vector.load %arg9[%c0_13, %c0_14, %c2_15, %c0_16] : memref<1x10x11x32xbf16, #tpu.memory_space<vmem>>, vector<1x8x8x32xbf16>
    %c0_17 = arith.constant 0 : index
    %c0_18 = arith.constant 0 : index
    %c3 = arith.constant 3 : index
    %c0_19 = arith.constant 0 : index
    %12 = vector.load %arg9[%c0_17, %c0_18, %c3, %c0_19] : memref<1x10x11x32xbf16, #tpu.memory_space<vmem>>, vector<1x8x8x32xbf16>
    %c0_20 = arith.constant 0 : index
    %c1_21 = arith.constant 1 : index
    %c1_22 = arith.constant 1 : index
    %c0_23 = arith.constant 0 : index
    %13 = vector.load %arg9[%c0_20, %c1_21, %c1_22, %c0_23] : memref<1x10x11x32xbf16, #tpu.memory_space<vmem>>, vector<1x8x8x32xbf16>
    %c0_24 = arith.constant 0 : index
    %c1_25 = arith.constant 1 : index
    %c2_26 = arith.constant 2 : index
    %c0_27 = arith.constant 0 : index
    %14 = vector.load %arg9[%c0_24, %c1_25, %c2_26, %c0_27] : memref<1x10x11x32xbf16, #tpu.memory_space<vmem>>, vector<1x8x8x32xbf16>
    %c0_28 = arith.constant 0 : index
    %c1_29 = arith.constant 1 : index
    %c3_30 = arith.constant 3 : index
    %c0_31 = arith.constant 0 : index
    %15 = vector.load %arg9[%c0_28, %c1_29, %c3_30, %c0_31] : memref<1x10x11x32xbf16, #tpu.memory_space<vmem>>, vector<1x8x8x32xbf16>
    %c0_32 = arith.constant 0 : index
    %c2_33 = arith.constant 2 : index
    %c1_34 = arith.constant 1 : index
    %c0_35 = arith.constant 0 : index
    %16 = vector.load %arg9[%c0_32, %c2_33, %c1_34, %c0_35] : memref<1x10x11x32xbf16, #tpu.memory_space<vmem>>, vector<1x8x8x32xbf16>
    %c0_36 = arith.constant 0 : index
    %c2_37 = arith.constant 2 : index
    %c2_38 = arith.constant 2 : index
    %c0_39 = arith.constant 0 : index
    %17 = vector.load %arg9[%c0_36, %c2_37, %c2_38, %c0_39] : memref<1x10x11x32xbf16, #tpu.memory_space<vmem>>, vector<1x8x8x32xbf16>
    %c0_40 = arith.constant 0 : index
    %c2_41 = arith.constant 2 : index
    %c3_42 = arith.constant 3 : index
    %c0_43 = arith.constant 0 : index
    %18 = vector.load %arg9[%c0_40, %c2_41, %c3_42, %c0_43] : memref<1x10x11x32xbf16, #tpu.memory_space<vmem>>, vector<1x8x8x32xbf16>
    %19 = tpu.concatenate %10, %11, %12, %13, %14, %15, %16, %17, %18 in 3 : vector<1x8x8x32xbf16>, vector<1x8x8x32xbf16>, vector<1x8x8x32xbf16>, vector<1x8x8x32xbf16>, vector<1x8x8x32xbf16>, vector<1x8x8x32xbf16>, vector<1x8x8x32xbf16>, vector<1x8x8x32xbf16>, vector<1x8x8x32xbf16> -> vector<1x8x8x288xbf16>
    %20 = vector.shape_cast %19 : vector<1x8x8x288xbf16> to vector<64x288xbf16>
    %c0_44 = arith.constant 0 : index
    %c0_45 = arith.constant 0 : index
    %21 = vector.load %arg10[%c0_44, %c0_45] : memref<64x32xf32, #tpu.memory_space<vmem>>, vector<64x32xf32>
    %c0_46 = arith.constant 0 : index
    %c0_47 = arith.constant 0 : index
    %c0_48 = arith.constant 0 : index
    %22 = vector.load %arg4[%c0_46, %c0_47, %c0_48] : memref<9x32x32xbf16, #tpu.memory_space<vmem>>, vector<9x32x32xbf16>
    %23 = vector.shape_cast %22 : vector<9x32x32xbf16> to vector<288x32xbf16>
    %cst = arith.constant dense<0.000000e+00> : vector<64x32xf32>
    %24 = tpu.matmul %20, %23, %cst {dimension_numbers = #tpu.dot_dimension_numbers<[1], [0], [0], [1], [0, 0, 1, 1], [], []>} : vector<64x288xbf16>, vector<288x32xbf16>, vector<64x32xf32> -> vector<64x32xf32>
    %25 = arith.addf %21, %24 : vector<64x32xf32>
    %c0_49 = arith.constant 0 : index
    %c0_50 = arith.constant 0 : index
    %26 = vector.load %arg10[%c0_49, %c0_50] : memref<64x32xf32, #tpu.memory_space<vmem>>, vector<64x32xf32>
    tpu.vector_store %arg10[%c0_49, %c0_50], %25 {strides = array<i32>} : memref<64x32xf32, #tpu.memory_space<vmem>>, vector<64x32xf32>,
    %c0_i32_51 = arith.constant 0 : i32
    %27 = arith.cmpi eq, %arg2, %c0_i32_51 : i32
    %28 = arith.extui %27 : i1 to i32
    %c0_i32_52 = arith.constant 0 : i32
    %29 = arith.cmpi ne, %28, %c0_i32_52 : i32
    scf.if %29 {
      %c0_56 = arith.constant 0 : index
      %c0_57 = arith.constant 0 : index
      %35 = vector.load %arg10[%c0_56, %c0_57] : memref<64x32xf32, #tpu.memory_space<vmem>>, vector<64x32xf32>
      %c0_58 = arith.constant 0 : index
      %c0_59 = arith.constant 0 : index
      %36 = vector.load %arg5[%c0_58, %c0_59] : memref<1x32xf32, #tpu.memory_space<vmem>>, vector<1x32xf32>
      %37 = vector.shape_cast %36 : vector<1x32xf32> to vector<32xf32>
      %38 = vector.shape_cast %37 : vector<32xf32> to vector<1x32xf32>
      %39 = vector.broadcast %38 : vector<1x32xf32> to vector<64x32xf32>
      %40 = arith.mulf %35, %39 : vector<64x32xf32>
      %c0_60 = arith.constant 0 : index
      %c0_61 = arith.constant 0 : index
      %41 = vector.load %arg6[%c0_60, %c0_61] : memref<1x32xf32, #tpu.memory_space<vmem>>, vector<1x32xf32>
      %42 = vector.shape_cast %41 : vector<1x32xf32> to vector<32xf32>
      %43 = vector.shape_cast %42 : vector<32xf32> to vector<1x32xf32>
      %44 = vector.broadcast %43 : vector<1x32xf32> to vector<64x32xf32>
      %45 = arith.addf %40, %44 : vector<64x32xf32>
      %cst_62 = arith.constant 0.000000e+00 : f32
      %46 = vector.broadcast %cst_62 : f32 to vector<64x32xf32>
      %47 = arith.maximumf %45, %46 : vector<64x32xf32>
      %c0_63 = arith.constant 0 : index
      %c0_64 = arith.constant 0 : index
      %48 = vector.load %arg11[%c0_63, %c0_64] : memref<64x128xf32, #tpu.memory_space<vmem>>, vector<64x128xf32>
      %49 = arith.truncf %47 : vector<64x32xf32> to vector<64x32xbf16>
      %c0_65 = arith.constant 0 : index
      %c0_66 = arith.constant 0 : index
      %50 = vector.load %arg7[%c0_65, %c0_66] : memref<32x128xbf16, #tpu.memory_space<vmem>>, vector<32x128xbf16>
      %cst_67 = arith.constant dense<0.000000e+00> : vector<64x128xf32>
      %51 = tpu.matmul %49, %50, %cst_67 {dimension_numbers = #tpu.dot_dimension_numbers<[1], [0], [0], [1], [0, 0, 1, 1], [], []>} : vector<64x32xbf16>, vector<32x128xbf16>, vector<64x128xf32> -> vector<64x128xf32>
      %52 = arith.addf %48, %51 : vector<64x128xf32>
      %c0_68 = arith.constant 0 : index
      %c0_69 = arith.constant 0 : index
      %53 = vector.load %arg11[%c0_68, %c0_69] : memref<64x128xf32, #tpu.memory_space<vmem>>, vector<64x128xf32>
      tpu.vector_store %arg11[%c0_68, %c0_69], %52 {strides = array<i32>} : memref<64x128xf32, #tpu.memory_space<vmem>>, vector<64x128xf32>,
    } else {
    }
    %c0_i32_53 = arith.constant 0 : i32
    %30 = arith.cmpi eq, %arg2, %c0_i32_53 : i32
    %c0_i32_54 = arith.constant 0 : i32
    %31 = arith.cmpi eq, %arg1, %c0_i32_54 : i32
    %32 = arith.andi %30, %31 : i1
    %33 = arith.extui %32 : i1 to i32
    %c0_i32_55 = arith.constant 0 : i32
    %34 = arith.cmpi ne, %33, %c0_i32_55 : i32
    scf.if %34 {
      %c0_56 = arith.constant 0 : index
      %c0_57 = arith.constant 0 : index
      %35 = vector.load %arg11[%c0_56, %c0_57] : memref<64x128xf32, #tpu.memory_space<vmem>>, vector<64x8xf32>
      %36 = vector.shape_cast %35 : vector<64x8xf32> to vector<1x8x8x8xf32>
      %37 = arith.truncf %36 : vector<1x8x8x8xf32> to vector<1x8x8x8xbf16>
      %c0_58 = arith.constant 0 : index
      %c0_59 = arith.constant 0 : index
      %c0_60 = arith.constant 0 : index
      %c0_61 = arith.constant 0 : index
      %38 = vector.load %arg8[%c0_58, %c0_59, %c0_60, %c0_61] : memref<1x8x8x8xbf16, #tpu.memory_space<vmem>>, vector<1x8x8x8xbf16>
      tpu.vector_store %arg8[%c0_58, %c0_59, %c0_60, %c0_61], %37 {strides = array<i32>} : memref<1x8x8x8xbf16, #tpu.memory_space<vmem>>, vector<1x8x8x8xbf16>,
    } else {
    }
    return
  }
  func.func @transform_0(%arg0: i32, %arg1: i32, %arg2: i32) -> (i32, i32, i32, i32) {
    %c0_i32 = arith.constant 0 : i32
    %c0_i32_0 = arith.constant 0 : i32
    %c0_i32_1 = arith.constant 0 : i32
    return %arg0, %c0_i32, %c0_i32_0, %arg2 : i32, i32, i32, i32
  }
  func.func @transform_1(%arg0: i32, %arg1: i32, %arg2: i32) -> (i32, i32, i32) {
    %c0_i32 = arith.constant 0 : i32
    %c0_i32_0 = arith.constant 0 : i32
    return %c0_i32, %arg2, %arg1 : i32, i32, i32
  }
  func.func @transform_2(%arg0: i32, %arg1: i32, %arg2: i32) -> (i32, i32) {
    %c0_i32 = arith.constant 0 : i32
    %c0_i32_0 = arith.constant 0 : i32
    return %c0_i32, %arg1 : i32, i32
  }
  func.func @transform_3(%arg0: i32, %arg1: i32, %arg2: i32) -> (i32, i32) {
    %c0_i32 = arith.constant 0 : i32
    %c0_i32_0 = arith.constant 0 : i32
    return %c0_i32, %arg1 : i32, i32
  }
  func.func @transform_4(%arg0: i32, %arg1: i32, %arg2: i32) -> (i32, i32) {
    %c0_i32 = arith.constant 0 : i32
    %c0_i32_0 = arith.constant 0 : i32
    return %arg1, %c0_i32 : i32, i32
  }
  func.func @transform_5(%arg0: i32, %arg1: i32, %arg2: i32) -> (i32, i32, i32, i32) {
    %c0_i32 = arith.constant 0 : i32
    %c0_i32_0 = arith.constant 0 : i32
    %c0_i32_1 = arith.constant 0 : i32
    %c0_i32_2 = arith.constant 0 : i32
    return %arg0, %c0_i32, %c0_i32_0, %c0_i32_1 : i32, i32, i32, i32
  }
}

module attributes {stable_mosaic.version = 11 : i64} {
  func.func @_log_softmax_kernel(%arg0: i32, %arg1: i32, %arg2: memref<1x16x16x8xbf16, #tpu.memory_space<vmem>>, %arg3: memref<1x16x16x8xf32, #tpu.memory_space<vmem>>) attributes {dimension_semantics = [#tpu.dimension_semantics<parallel>, #tpu.dimension_semantics<parallel>], iteration_bounds = array<i64: 2, 1>, scalar_prefetch = 0 : i64, scratch_operands = 0 : i64, tpu.core_type = #tpu.core_type<tc>, window_params = [{transform_indices = @transform_0, window_bounds = array<i64: 1, 16, 16, 8>}, {transform_indices = @transform_1, window_bounds = array<i64: 1, 16, 16, 8>}]} {
    %c0 = arith.constant 0 : index
    %c0_0 = arith.constant 0 : index
    %c0_1 = arith.constant 0 : index
    %c0_2 = arith.constant 0 : index
    %0 = vector.load %arg2[%c0, %c0_0, %c0_1, %c0_2] : memref<1x16x16x8xbf16, #tpu.memory_space<vmem>>, vector<1x16x16x8xbf16>
    %1 = arith.extf %0 : vector<1x16x16x8xbf16> to vector<1x16x16x8xf32>
    %cst = arith.constant dense<0xFF800000> : vector<1x16x16xf32>
    %2 = vector.multi_reduction <maximumf>, %1, %cst [3] : vector<1x16x16x8xf32> to vector<1x16x16xf32>
    %3 = vector.shape_cast %2 : vector<1x16x16xf32> to vector<1x16x16x1xf32>
    %4 = vector.broadcast %3 : vector<1x16x16x1xf32> to vector<1x16x16x8xf32>
    %5 = arith.subf %1, %4 : vector<1x16x16x8xf32>
    %6 = math.exp %5 : vector<1x16x16x8xf32>
    %cst_3 = arith.constant dense<0.000000e+00> : vector<1x16x16xf32>
    %7 = vector.multi_reduction <add>, %6, %cst_3 [3] : vector<1x16x16x8xf32> to vector<1x16x16xf32>
    %8 = vector.shape_cast %7 : vector<1x16x16xf32> to vector<1x16x16x1xf32>
    %9 = vector.broadcast %3 : vector<1x16x16x1xf32> to vector<1x16x16x8xf32>
    %10 = arith.subf %1, %9 : vector<1x16x16x8xf32>
    %11 = math.log %8 : vector<1x16x16x1xf32>
    %12 = vector.broadcast %11 : vector<1x16x16x1xf32> to vector<1x16x16x8xf32>
    %13 = arith.subf %10, %12 : vector<1x16x16x8xf32>
    %c0_4 = arith.constant 0 : index
    %c0_5 = arith.constant 0 : index
    %c0_6 = arith.constant 0 : index
    %c0_7 = arith.constant 0 : index
    %14 = vector.load %arg3[%c0_4, %c0_5, %c0_6, %c0_7] : memref<1x16x16x8xf32, #tpu.memory_space<vmem>>, vector<1x16x16x8xf32>
    tpu.vector_store %arg3[%c0_4, %c0_5, %c0_6, %c0_7], %13 {strides = array<i32>} : memref<1x16x16x8xf32, #tpu.memory_space<vmem>>, vector<1x16x16x8xf32>,
    return
  }
  func.func @transform_0(%arg0: i32, %arg1: i32) -> (i32, i32, i32, i32) {
    %c0_i32 = arith.constant 0 : i32
    %c0_i32_0 = arith.constant 0 : i32
    %c0_i32_1 = arith.constant 0 : i32
    return %arg0, %arg1, %c0_i32, %c0_i32_0 : i32, i32, i32, i32
  }
  func.func @transform_1(%arg0: i32, %arg1: i32) -> (i32, i32, i32, i32) {
    %c0_i32 = arith.constant 0 : i32
    %c0_i32_0 = arith.constant 0 : i32
    %c0_i32_1 = arith.constant 0 : i32
    return %arg0, %arg1, %c0_i32, %c0_i32_0 : i32, i32, i32, i32
  }
}

</mosaic_0001>

<llo_original>
// kernel: _lambda_.8
$region0: #{_lambda_.8}
  #allocation0 [shape = 'u32[]', space=smem, size = 0x4, offset = 0x4, fixed_abs, tag = 'smem constant byte address 0x4 - core index']
  #allocation1 [shape = 'u32[144,128]{1,0:T(1,128)}', space=vmem, size = 0x12000, scoped, tag = 'internal scratch']
  #allocation2 [shape = 'bf16[1,10,11,32]{3,2,1,0:T(8,128)(2,1)}', space=vmem, size = 0xa000, scoped, tag = 'scratch operand']
  #allocation3 [shape = 'f32[64,32]{1,0:T(8,128)}', space=vmem, size = 0x8000, scoped, tag = 'scratch operand']
  #allocation4 [shape = 'f32[64,128]{1,0:T(8,128)}', space=vmem, size = 0x8000, scoped, tag = 'scratch operand']
  %s0 = inlined_call_operand.hbm [shape: bf16[2,8,8,32], index: 0, kind: input, shape index: {}]
  %s1 = inlined_call_operand.hbm [shape: bf16[9,32,32], index: 1, kind: input, shape index: {}]
  %s2 = inlined_call_operand.hbm [shape: f32[1,32], index: 2, kind: input, shape index: {}]
  %s3 = inlined_call_operand.hbm [shape: f32[1,32], index: 3, kind: input, shape index: {}]
  %s4 = inlined_call_operand.hbm [shape: bf16[32,128], index: 4, kind: input, shape index: {}]
  %s5 = inlined_call_operand.hbm [shape: bf16[2,8,8,8], index: 5, kind: output, shape index: {}]
  %s6 = sld [smem:[#allocation0]]
  $region89: #{_lambda_.8} parent=0
    _
  %s8 = ssub.s32 1, %s6
  %s9 = scalar_select 0, %s8, %s6
  $region1: #{_lambda_.8} parent=0
    #allocation5 [shape = 'u8[32768]{0}', space=vmem, size = 0x8000, scoped, tag = 'input window, operand 0']
    #allocation6 [shape = 's32[2]{0}', space=sflag, size = 0x8, scoped, tag = 'scoped memory for _lambda_.8']
    #allocation7 [shape = 's32[2]{0}', space=sflag, size = 0x8, scoped, tag = 'scoped memory for _lambda_.8']
    #allocation8 [shape = 'u8[73728]{0}', space=vmem, size = 0x12000, scoped, tag = 'input window, operand 1, single buffered']
    #allocation9 [shape = 's32[1]{0}', space=sflag, size = 0x4, scoped, tag = 'scoped memory for _lambda_.8']
    #allocation10 [shape = 'u8[512]{0}', space=vmem, size = 0x400, scoped, tag = 'input window, operand 2, single buffered']
    #allocation11 [shape = 'u8[512]{0}', space=vmem, size = 0x400, scoped, tag = 'input window, operand 3, single buffered']
    #allocation12 [shape = 's32[1]{0}', space=sflag, size = 0x4, scoped, tag = 'scoped memory for _lambda_.8']
    #allocation13 [shape = 'u8[8192]{0}', space=vmem, size = 0x2000, scoped, tag = 'input window, operand 4, single buffered']
    #allocation14 [shape = 'u8[32768]{0}', space=vmem, size = 0x8000, scoped, tag = 'output window, operand 0']
    %10 = vsyncpa [#allocation6], 0
    %s11 = scalar_lea.sflag [#allocation6], 1
    %12 = vsyncpa %s11, 0
    %13 = vsyncpa [#allocation9], 0
    %14 = vsyncpa [#allocation12], 0
    %15 = vsyncpa [#allocation7], 0
    %s16 = scalar_lea.sflag [#allocation7], 1
    %17 = vsyncpa %s16, 0
    loop: start=0, step=1, limit=4
    $region2: #{_lambda_.8} parent=1 // loop_pre_header
      _
    $region3: #{_lambda_.8} parent=1 // loop_header
      %s19 = sphi 0, %s23
      %p20 = scmp.ge.s32.totalorder %s19, 4
      %s26 = sphi 0, %s45
      %s27 = sphi 0, %s41
      %s28 = sphi 0, %s37
      %s29 = sphi 0, %s26
      %s30 = sphi 0, %s27
      %s31 = sphi 0, %s28
      %s32 = sphi 0, %s29
      %s33 = sphi 0, %s30
      %s34 = sphi 0, %s31
      %s50 = sphi 0, %s52
      %s53 = sphi 0, %s50
      %s54 = sphi 0, %s53
      %s70 = sphi 0, %s54
      %s78 = sphi 0, %s80
      %s81 = sphi 0, %s78
      %s82 = sphi 0, %s81
      %s98 = sphi 0, %s82
      %s104 = sphi 0, %s106
      %s107 = sphi 0, %s104
      %s108 = sphi 0, %s107
      %s124 = sphi 0, %s108
      %s130 = sphi 0, %s132
      %s133 = sphi 0, %s130
      %s134 = sphi 0, %s133
      %s150 = sphi 0, %s134
      %s156 = sphi 0, %s158
      %s159 = sphi 0, %s156
      %s160 = sphi 0, %s159
      %s176 = sphi 0, %s160
      %s182 = sphi 0, %s184
      %s185 = sphi 0, %s182
      %s186 = sphi 0, %s185
      %s202 = sphi 0, %s186
    $region4: #{_lambda_.8} parent=1 // loop_header_branch
      %22 = sbr.rel (%p20) target = $region8
    $region5: #{_lambda_.8} parent=1 // loop_body
      %s24 = ssub.s32 %s19, 1
      %s25 = ssub.s32 %s19, 2
      %s35 = sadd.s32 1, %s28
      %p36 = scmp.ge.s32.totalorder %s35, 1
      %s37 = scalar_select %p36, 0, %s35
      %s38 = sadd.s32 1, %s27
      %s39 = scalar_select %p36, %s38, %s27
      %p40 = scmp.ge.s32.totalorder %s39, 1
      %s41 = scalar_select %p40, 0, %s39
      %s42 = sadd.s32 1, %s26
      %s43 = scalar_select %p40, %s42, %s26
      %p44 = scmp.ge.s32.totalorder %s43, 2
      %s45 = scalar_select %p44, 0, %s43
      %s46 = ssub.s32 %s26, %s45
      %s47 = ssub.s32 %s28, %s37
      %s48 = sor.u32 %s46, %s47
      %p49 = scmp.eq.s32.totalorder %s48, 0
      %s51 = sadd.s32 %s50, 1
      %s52 = scalar_select %p49, %s50, %s51
      %p55 = pneg %p49
      %p56 = scmp.eq.s32.totalorder %s19, 1
      %p57 = por %p55, %p56
      %p58 = scmp.ne.s32.totalorder %s50, %s53
      %p59 = scmp.eq.s32.totalorder %s19, 0
      %p60 = por %p58, %p59
      %p61 = scmp.ne.s32.totalorder %s50, %s53
      %p62 = scmp.eq.s32.totalorder %s24, 1
      %p63 = por %p61, %p62
      %p64 = scmp.ne.s32.totalorder %s53, %s54
      %p65 = scmp.eq.s32.totalorder %s24, 0
      %p66 = por %p64, %p65
      %p67 = scmp.ne.s32.totalorder %s53, %s54
      %p68 = scmp.eq.s32.totalorder %s25, 1
      %p69 = por %p67, %p68
      %p71 = scmp.ne.s32.totalorder %s54, %s70
      %p72 = scmp.eq.s32.totalorder %s25, 0
      %p73 = por %p71, %p72
      %s74 = ssub.s32 %s28, %s37
      %s75 = ssub.s32 %s27, %s41
      %s76 = sor.u32 %s74, %s75
      %p77 = scmp.eq.s32.totalorder %s76, 0
      %s79 = sadd.s32 %s78, 1
      %s80 = scalar_select %p77, %s78, %s79
      %p83 = pneg %p77
      %p84 = scmp.eq.s32.totalorder %s19, 1
      %p85 = por %p83, %p84
      %p86 = scmp.ne.s32.totalorder %s78, %s81
      %p87 = scmp.eq.s32.totalorder %s19, 0
      %p88 = por %p86, %p87
      %p89 = scmp.ne.s32.totalorder %s78, %s81
      %p90 = scmp.eq.s32.totalorder %s24, 1
      %p91 = por %p89, %p90
      %p92 = scmp.ne.s32.totalorder %s81, %s82
      %p93 = scmp.eq.s32.totalorder %s24, 0
      %p94 = por %p92, %p93
      %p95 = scmp.ne.s32.totalorder %s81, %s82
      %p96 = scmp.eq.s32.totalorder %s25, 1
      %p97 = por %p95, %p96
      %p99 = scmp.ne.s32.totalorder %s82, %s98
      %p100 = scmp.eq.s32.totalorder %s25, 0
      %p101 = por %p99, %p100
      %s102 = ssub.s32 %s27, %s41
      %p103 = scmp.eq.s32.totalorder %s102, 0
      %s105 = sadd.s32 %s104, 1
      %s106 = scalar_select %p103, %s104, %s105
      %p109 = pneg %p103
      %p110 = scmp.eq.s32.totalorder %s19, 1
      %p111 = por %p109, %p110
      %p112 = scmp.ne.s32.totalorder %s104, %s107
      %p113 = scmp.eq.s32.totalorder %s19, 0
      %p114 = por %p112, %p113
      %p115 = scmp.ne.s32.totalorder %s104, %s107
      %p116 = scmp.eq.s32.totalorder %s24, 1
      %p117 = por %p115, %p116
      %p118 = scmp.ne.s32.totalorder %s107, %s108
      %p119 = scmp.eq.s32.totalorder %s24, 0
      %p120 = por %p118, %p119
      %p121 = scmp.ne.s32.totalorder %s107, %s108
      %p122 = scmp.eq.s32.totalorder %s25, 1
      %p123 = por %p121, %p122
      %p125 = scmp.ne.s32.totalorder %s108, %s124
      %p126 = scmp.eq.s32.totalorder %s25, 0
      %p127 = por %p125, %p126
      %s128 = ssub.s32 %s27, %s41
      %p129 = scmp.eq.s32.totalorder %s128, 0
      %s131 = sadd.s32 %s130, 1
      %s132 = scalar_select %p129, %s130, %s131
      %p135 = pneg %p129
      %p136 = scmp.eq.s32.totalorder %s19, 1
      %p137 = por %p135, %p136
      %p138 = scmp.ne.s32.totalorder %s130, %s133
      %p139 = scmp.eq.s32.totalorder %s19, 0
      %p140 = por %p138, %p139
      %p141 = scmp.ne.s32.totalorder %s130, %s133
      %p142 = scmp.eq.s32.totalorder %s24, 1
      %p143 = por %p141, %p142
      %p144 = scmp.ne.s32.totalorder %s133, %s134
      %p145 = scmp.eq.s32.totalorder %s24, 0
      %p146 = por %p144, %p145
      %p147 = scmp.ne.s32.totalorder %s133, %s134
      %p148 = scmp.eq.s32.totalorder %s25, 1
      %p149 = por %p147, %p148
      %p151 = scmp.ne.s32.totalorder %s134, %s150
      %p152 = scmp.eq.s32.totalorder %s25, 0
      %p153 = por %p151, %p152
      %s154 = ssub.s32 %s27, %s41
      %p155 = scmp.eq.s32.totalorder %s154, 0
      %s157 = sadd.s32 %s156, 1
      %s158 = scalar_select %p155, %s156, %s157
      %p161 = pneg %p155
      %p162 = scmp.eq.s32.totalorder %s19, 1
      %p163 = por %p161, %p162
      %p164 = scmp.ne.s32.totalorder %s156, %s159
      %p165 = scmp.eq.s32.totalorder %s19, 0
      %p166 = por %p164, %p165
      %p167 = scmp.ne.s32.totalorder %s156, %s159
      %p168 = scmp.eq.s32.totalorder %s24, 1
      %p169 = por %p167, %p168
      %p170 = scmp.ne.s32.totalorder %s159, %s160
      %p171 = scmp.eq.s32.totalorder %s24, 0
      %p172 = por %p170, %p171
      %p173 = scmp.ne.s32.totalorder %s159, %s160
      %p174 = scmp.eq.s32.totalorder %s25, 1
      %p175 = por %p173, %p174
      %p177 = scmp.ne.s32.totalorder %s160, %s176
      %p178 = scmp.eq.s32.totalorder %s25, 0
      %p179 = por %p177, %p178
      %s180 = ssub.s32 %s26, %s45
      %p181 = scmp.eq.s32.totalorder %s180, 0
      %s183 = sadd.s32 %s182, 1
      %s184 = scalar_select %p181, %s182, %s183
      %p187 = pneg %p181
      %p188 = scmp.eq.s32.totalorder %s19, 1
      %p189 = por %p187, %p188
      %p190 = scmp.ne.s32.totalorder %s182, %s185
      %p191 = scmp.eq.s32.totalorder %s19, 0
      %p192 = por %p190, %p191
      %p193 = scmp.ne.s32.totalorder %s182, %s185
      %p194 = scmp.eq.s32.totalorder %s24, 1
      %p195 = por %p193, %p194
      %p196 = scmp.ne.s32.totalorder %s185, %s186
      %p197 = scmp.eq.s32.totalorder %s24, 0
      %p198 = por %p196, %p197
      %p199 = scmp.ne.s32.totalorder %s185, %s186
      %p200 = scmp.eq.s32.totalorder %s25, 1
      %p201 = por %p199, %p200
      %p203 = scmp.ne.s32.totalorder %s186, %s202
      %p204 = scmp.eq.s32.totalorder %s25, 0
      %p205 = por %p203, %p204
      %p206 = scmp.le.s32.totalorder 1, %s19
      %p207 = scmp.lt.s32.totalorder %s19, 3
      %p208 = pnand %p206, %p207
      %p209 = pneg %p208
      // Predicated region
      $region9: #{_lambda_.8} parent=5 // pred_check
        _
      $region10: #{_lambda_.8} parent=5 // pred_check_branch
        %211 = sbr.rel (%p208) target = $region12
      $region11: #{_lambda_.8} parent=5 // pred_region
        %s212 = ssub.s32 %s19, 1
        // Predicated region
        $region13: #{_lambda_.8} parent=11 // pred_check
          %p213 = pneg %p94
        $region14: #{_lambda_.8} parent=11 // pred_check_branch
          %215 = sbr.rel (%p213) target = $region16
        $region15: #{_lambda_.8} parent=11 // pred_region
          %s216 = smul.u32 4, %s31
          %s218 = ssub.s32 2304, 2304
          %219 = vsyncadd [#allocation9], %s218
          %s220 = sadd.s32 %s30, %s216
          %s221 = smul.addr %s220, 64
          %s222 = scalar_lea.hbm %s1, %s221
          %s223 = sshll.u32 [#allocation8], 4
          %s224 = int_to_ptr.vmem [resolvable:$true] %s223
          %229 = dma.hbm_to_vmem [thread:$0]  %s222, 2304, %s224, [#allocation9], 64, 64, 4
        $region16: #{_lambda_.8} parent=11 // pred_fallthru
          _
        // Predicated region
        $region17: #{_lambda_.8} parent=11 // pred_check
          %p230 = pneg %p120
        $region18: #{_lambda_.8} parent=11 // pred_check_branch
          %232 = sbr.rel (%p230) target = $region20
        $region19: #{_lambda_.8} parent=11 // pred_region
          %s234 = ssub.s32 16, 16
          %235 = vsyncadd [#allocation9], %s234
          %s236 = smul.addr %s30, 16
          %s237 = scalar_lea.hbm %s2, %s236
          %s239 = sshll.u32 [#allocation10], 4
          %s240 = int_to_ptr.vmem [resolvable:$true] %s239
          %242 = dma.hbm_to_vmem [thread:$0]  %s237, 16, %s240, [#allocation9]
        $region20: #{_lambda_.8} parent=11 // pred_fallthru
          _
        // Predicated region
        $region21: #{_lambda_.8} parent=11 // pred_check
          %p243 = pneg %p146
        $region22: #{_lambda_.8} parent=11 // pred_check_branch
          %245 = sbr.rel (%p243) target = $region24
        $region23: #{_lambda_.8} parent=11 // pred_region
          %s247 = ssub.s32 16, 16
          %248 = vsyncadd [#allocation12], %s247
          %s249 = smul.addr %s30, 16
          %s250 = scalar_lea.hbm %s3, %s249
          %s252 = sshll.u32 [#allocation11], 4
          %s253 = int_to_ptr.vmem [resolvable:$true] %s252
          %255 = dma.hbm_to_vmem [thread:$0]  %s250, 16, %s253, [#allocation12]
        $region24: #{_lambda_.8} parent=11 // pred_fallthru
          _
        // Predicated region
        $region25: #{_lambda_.8} parent=11 // pred_check
          %p256 = pneg %p172
        $region26: #{_lambda_.8} parent=11 // pred_check_branch
          %258 = sbr.rel (%p256) target = $region28
        $region27: #{_lambda_.8} parent=11 // pred_region
          %s259 = smul.u32 4, %s30
          %s261 = ssub.s32 256, 256
          %262 = vsyncadd [#allocation12], %s261
          %s263 = smul.addr %s259, 64
          %s264 = scalar_lea.hbm %s4, %s263
          %s265 = sshll.u32 [#allocation13], 4
          %s266 = int_to_ptr.vmem [resolvable:$true] %s265
          %271 = dma.hbm_to_vmem [thread:$0]  %s264, 256, %s266, [#allocation12], 64, 64, 4
        $region28: #{_lambda_.8} parent=11 // pred_fallthru
          _
      $region12: #{_lambda_.8} parent=5 // pred_fallthru
        _
      %p272 = scmp.lt.s32.totalorder %s19, 2
      // Predicated region
      $region29: #{_lambda_.8} parent=5 // pred_check
        %p273 = pneg %p272
      $region30: #{_lambda_.8} parent=5 // pred_check_branch
        %275 = sbr.rel (%p273) target = $region32
      $region31: #{_lambda_.8} parent=5 // pred_region
        // Predicated region
        $region33: #{_lambda_.8} parent=31 // pred_check
          %p276 = pneg %p60
        $region34: #{_lambda_.8} parent=31 // pred_check_branch
          %278 = sbr.rel (%p276) target = $region36
        $region35: #{_lambda_.8} parent=31 // pred_region
          %s279 = sand.u32 %s50, 1
          %s280 = scalar_lea.sflag [#allocation6], %s279
          %s281 = sand.u32 %s50, 1
          %s282 = smul.addr %s281, 32
          %s283 = scalar_lea.vmem [#allocation5], %s282
          %s285 = ssub.s32 512, 512
          %286 = vsyncadd %s280, %s285
          %s287 = smul.addr %s26, 8
          %s288 = sadd.s32 %s28, %s287
          %s289 = smul.addr %s288, 64
          %s290 = scalar_lea.hbm %s0, %s289
          %s291 = sshll.u32 %s283, 4
          %s292 = int_to_ptr.vmem [resolvable:$true] %s291
          %297 = dma.hbm_to_vmem [thread:$0]  %s290, 512, %s292, %s280, 64, 64, 4
        $region36: #{_lambda_.8} parent=31 // pred_fallthru
          _
      $region32: #{_lambda_.8} parent=5 // pred_fallthru
        _
      %p298 = scmp.le.s32.totalorder 1, %s19
      %p299 = scmp.lt.s32.totalorder %s19, 3
      %p300 = pnand %p298, %p299
      %p301 = pneg %p300
      // Predicated region
      $region37: #{_lambda_.8} parent=5 // pred_check
        _
      $region38: #{_lambda_.8} parent=5 // pred_check_branch
        %303 = sbr.rel (%p300) target = $region40
      $region39: #{_lambda_.8} parent=5 // pred_region
        %s304 = ssub.s32 %s19, 1
        %s305 = sand.u32 %s53, 1
        %s306 = scalar_lea.sflag [#allocation6], %s305
        %s307 = sand.u32 %s53, 1
        %s308 = smul.addr %s307, 32
        %s309 = scalar_lea.vmem [#allocation5], %s308
        // Predicated region
        $region41: #{_lambda_.8} parent=39 // pred_check
          %p310 = pneg %p66
        $region42: #{_lambda_.8} parent=39 // pred_check_branch
          %312 = sbr.rel (%p310) target = $region44
        $region43: #{_lambda_.8} parent=39 // pred_region
          %313 = dma.done %s306, 512
        $region44: #{_lambda_.8} parent=39 // pred_fallthru
          _
        // Predicated region
        $region45: #{_lambda_.8} parent=39 // pred_check
          %p314 = pneg %p94
        $region46: #{_lambda_.8} parent=39 // pred_check_branch
          %316 = sbr.rel (%p314) target = $region48
        $region47: #{_lambda_.8} parent=39 // pred_region
          %317 = dma.done [#allocation9], 2304
        $region48: #{_lambda_.8} parent=39 // pred_fallthru
          _
        // Predicated region
        $region49: #{_lambda_.8} parent=39 // pred_check
          %p318 = pneg %p120
        $region50: #{_lambda_.8} parent=39 // pred_check_branch
          %320 = sbr.rel (%p318) target = $region52
        $region51: #{_lambda_.8} parent=39 // pred_region
          %321 = dma.done [#allocation9], 16
        $region52: #{_lambda_.8} parent=39 // pred_fallthru
          _
        // Predicated region
        $region53: #{_lambda_.8} parent=39 // pred_check
          %p322 = pneg %p146
        $region54: #{_lambda_.8} parent=39 // pred_check_branch
          %324 = sbr.rel (%p322) target = $region56
        $region55: #{_lambda_.8} parent=39 // pred_region
          %325 = dma.done [#allocation12], 16
        $region56: #{_lambda_.8} parent=39 // pred_fallthru
          _
        // Predicated region
        $region57: #{_lambda_.8} parent=39 // pred_check
          %p326 = pneg %p172
        $region58: #{_lambda_.8} parent=39 // pred_check_branch
          %328 = sbr.rel (%p326) target = $region60
        $region59: #{_lambda_.8} parent=39 // pred_region
          %329 = dma.done [#allocation12], 256
        $region60: #{_lambda_.8} parent=39 // pred_fallthru
          _
        %s330 = sand.u32 %s53, 1
        %s331 = scalar_lea.sflag [#allocation6], %s330
        %s332 = sand.u32 %s53, 1
        %s333 = smul.addr %s332, 32
        %s334 = scalar_lea.vmem [#allocation5], %s333
        %p335 = pneg %p66
        %p336 = pneg %p63
        %p337 = pneg %p94
        %p338 = pneg %p91
        %p339 = pneg %p120
        %p340 = pneg %p117
        %p341 = pneg %p146
        %p342 = pneg %p143
        %p343 = pneg %p172
        %p344 = pneg %p169
        %p345 = pneg %p198
        %p346 = pneg %p195
        %s347 = sand.u32 %s185, 1
        %s348 = scalar_lea.sflag [#allocation7], %s347
        %s349 = sand.u32 %s185, 1
        %s350 = smul.addr %s349, 32
        %s351 = scalar_lea.vmem [#allocation14], %s350
        %s352 = smul.u32 4, %s31
        %s353 = smul.u32 4, %s30
        %p355 = scmp.eq.s32.totalorder %s31, 0
        // Predicated region
        $region61: #{_lambda_.8} parent=39 // pred_check
          %p356 = pneg %p355
        $region62: #{_lambda_.8} parent=39 // pred_check_branch
          %358 = sbr.rel (%p356) target = $region64
        $region63: #{_lambda_.8} parent=39 // pred_region
          %vm359 = vcmask 261120
          %360 = vst.msk [vmem:[#allocation3] sm:$0xff] %vm359, 0.0
          %361 = vst.msk [vmem:[#allocation3 + $0x8] sm:$0xff] %vm359, 0.0
          %362 = vst.msk [vmem:[#allocation3 + $0x10] sm:$0xff] %vm359, 0.0
          %363 = vst.msk [vmem:[#allocation3 + $0x18] sm:$0xff] %vm359, 0.0
          %364 = vst.msk [vmem:[#allocation3 + $0x20] sm:$0xff] %vm359, 0.0
          %365 = vst.msk [vmem:[#allocation3 + $0x28] sm:$0xff] %vm359, 0.0
          %366 = vst.msk [vmem:[#allocation3 + $0x30] sm:$0xff] %vm359, 0.0
          %367 = vst.msk [vmem:[#allocation3 + $0x38] sm:$0xff] %vm359, 0.0
          %vm368 = vcmask 257024
          %369 = vst.msk [vmem:[#allocation2] sm:$0xf] %vm368, 0
          %vm370 = vcmask 254976
          %vm371 = vsmask.f32 1280
          %vm372 = vmand %vm370, %vm371
          %v373 = vld [vmem:[#allocation2 + $0x4] sm:$0x3]
          %v374 = vsel %vm372, 0, %v373
          %375 = vst [vmem:[#allocation2 + $0x4] sm:$0x3] %v374
          %376 = vst.msk [vmem:[#allocation2 + $0x8] sm:$0xf] %vm368, 0
          %v377 = vld [vmem:[#allocation2 + $0xc] sm:$0x3]
          %v378 = vsel %vm372, 0, %v377
          %379 = vst [vmem:[#allocation2 + $0xc] sm:$0x3] %v378
          %380 = vst.msk [vmem:[#allocation2 + $0x10] sm:$0xf] %vm368, 0
          %v381 = vld [vmem:[#allocation2 + $0x14] sm:$0x3]
          %v382 = vsel %vm372, 0, %v381
          %383 = vst [vmem:[#allocation2 + $0x14] sm:$0x3] %v382
          %384 = vst.msk [vmem:[#allocation2 + $0x18] sm:$0xf] %vm368, 0
          %v385 = vld [vmem:[#allocation2 + $0x1c] sm:$0x3]
          %v386 = vsel %vm372, 0, %v385
          %387 = vst [vmem:[#allocation2 + $0x1c] sm:$0x3] %v386
          %388 = vst.msk [vmem:[#allocation2 + $0x20] sm:$0xf] %vm368, 0
          %v389 = vld [vmem:[#allocation2 + $0x24] sm:$0x3]
          %v390 = vsel %vm372, 0, %v389
          %391 = vst [vmem:[#allocation2 + $0x24] sm:$0x3] %v390
          %392 = vst.msk [vmem:[#allocation2 + $0x28] sm:$0xf] %vm368, 0
          %v393 = vld [vmem:[#allocation2 + $0x2c] sm:$0x3]
          %v394 = vsel %vm372, 0, %v393
          %395 = vst [vmem:[#allocation2 + $0x2c] sm:$0x3] %v394
          %396 = vst.msk [vmem:[#allocation2 + $0x30] sm:$0xf] %vm368, 0
          %v397 = vld [vmem:[#allocation2 + $0x34] sm:$0x3]
          %v398 = vsel %vm372, 0, %v397
          %399 = vst [vmem:[#allocation2 + $0x34] sm:$0x3] %v398
          %400 = vst.msk [vmem:[#allocation2 + $0x38] sm:$0xf] %vm368, 0
          %v401 = vld [vmem:[#allocation2 + $0x3c] sm:$0x3]
          %v402 = vsel %vm372, 0, %v401
          %403 = vst [vmem:[#allocation2 + $0x3c] sm:$0x3] %v402
          %404 = vst.msk [vmem:[#allocation2 + $0x40] sm:$0xf] %vm368, 0
          %v405 = vld [vmem:[#allocation2 + $0x44] sm:$0x3]
          %v406 = vsel %vm372, 0, %v405
          %407 = vst [vmem:[#allocation2 + $0x44] sm:$0x3] %v406
          %408 = vst.msk [vmem:[#allocation2 + $0x48] sm:$0xf] %vm368, 0
          %v409 = vld [vmem:[#allocation2 + $0x4c] sm:$0x3]
          %v410 = vsel %vm372, 0, %v409
          %411 = vst [vmem:[#allocation2 + $0x4c] sm:$0x3] %v410
        $region64: #{_lambda_.8} parent=39 // pred_fallthru
          _
        %p412 = scmp.eq.s32.totalorder %s30, 0
        %p413 = pnand %p412, %p355
        %p414 = pneg %p413
        // Predicated region
        $region65: #{_lambda_.8} parent=39 // pred_check
          _
        $region66: #{_lambda_.8} parent=39 // pred_check_branch
          %416 = sbr.rel (%p413) target = $region68
        $region67: #{_lambda_.8} parent=39 // pred_region
          %417 = vst [vmem:[#allocation4] sm:$0xff] 0.0
          %418 = vst [vmem:[#allocation4 + $0x8] sm:$0xff] 0.0
          %419 = vst [vmem:[#allocation4 + $0x10] sm:$0xff] 0.0
          %420 = vst [vmem:[#allocation4 + $0x18] sm:$0xff] 0.0
          %421 = vst [vmem:[#allocation4 + $0x20] sm:$0xff] 0.0
          %422 = vst [vmem:[#allocation4 + $0x28] sm:$0xff] 0.0
          %423 = vst [vmem:[#allocation4 + $0x30] sm:$0xff] 0.0
          %424 = vst [vmem:[#allocation4 + $0x38] sm:$0xff] 0.0
        $region68: #{_lambda_.8} parent=39 // pred_fallthru
          _
        %v425 = vld [vmem:[%s309] sm:$0xf]
        %v426 = vld [vmem:[%s309 + $0x4] sm:$0xf]
        %v427 = vld [vmem:[%s309 + $0x8] sm:$0xf]
        %v428 = vld [vmem:[%s309 + $0xc] sm:$0xf]
        %v429 = vld [vmem:[%s309 + $0x10] sm:$0xf]
        %v430 = vld [vmem:[%s309 + $0x14] sm:$0xf]
        %v431 = vld [vmem:[%s309 + $0x18] sm:$0xf]
        %v432 = vld [vmem:[%s309 + $0x1c] sm:$0xf]
        %v441 = vrot.slane %v425, 7
        %v442 = vrot.slane %v441, 4
        %v443 = vrot.slane %v426, 7
        %v444 = vrot.slane %v443, 4
        %v445 = vrot.slane %v427, 7
        %v446 = vrot.slane %v445, 4
        %v447 = vrot.slane %v428, 7
        %v448 = vrot.slane %v447, 4
        %v449 = vrot.slane %v429, 7
        %v450 = vrot.slane %v449, 4
        %v451 = vrot.slane %v430, 7
        %v452 = vrot.slane %v451, 4
        %v453 = vrot.slane %v431, 7
        %v454 = vrot.slane %v453, 4
        %v455 = vrot.slane %v432, 7
        %v456 = vrot.slane %v455, 4
        %s473 = scalar_lea.vmem [#allocation2], 8
        %vm474 = vcmask 257025
        %475 = vst.msk [vmem:[%s473] sm:$0xe] %vm474, %v441
        %vm476 = vcmask 253952
        %477 = vst.msk [vmem:[%s473 + $0x4] sm:$0x1] %vm476, %v442
        %478 = vst.msk [vmem:[%s473 + $0x8] sm:$0xe] %vm474, %v443
        %479 = vst.msk [vmem:[%s473 + $0xc] sm:$0x1] %vm476, %v444
        %480 = vst.msk [vmem:[%s473 + $0x10] sm:$0xe] %vm474, %v445
        %481 = vst.msk [vmem:[%s473 + $0x14] sm:$0x1] %vm476, %v446
        %482 = vst.msk [vmem:[%s473 + $0x18] sm:$0xe] %vm474, %v447
        %483 = vst.msk [vmem:[%s473 + $0x1c] sm:$0x1] %vm476, %v448
        %484 = vst.msk [vmem:[%s473 + $0x20] sm:$0xe] %vm474, %v449
        %485 = vst.msk [vmem:[%s473 + $0x24] sm:$0x1] %vm476, %v450
        %486 = vst.msk [vmem:[%s473 + $0x28] sm:$0xe] %vm474, %v451
        %487 = vst.msk [vmem:[%s473 + $0x2c] sm:$0x1] %vm476, %v452
        %488 = vst.msk [vmem:[%s473 + $0x30] sm:$0xe] %vm474, %v453
        %489 = vst.msk [vmem:[%s473 + $0x34] sm:$0x1] %vm476, %v454
        %490 = vst.msk [vmem:[%s473 + $0x38] sm:$0xe] %vm474, %v455
        %491 = vst.msk [vmem:[%s473 + $0x3c] sm:$0x1] %vm476, %v456
        %v492 = vld [vmem:[#allocation2] sm:$0xf]
        %v493 = vld [vmem:[#allocation2 + $0x4] sm:$0x1]
        %v494 = vld [vmem:[#allocation2 + $0x8] sm:$0xf]
        %v495 = vld [vmem:[#allocation2 + $0xc] sm:$0x1]
        %v496 = vld [vmem:[#allocation2 + $0x10] sm:$0xf]
        %v497 = vld [vmem:[#allocation2 + $0x14] sm:$0x1]
        %v498 = vld [vmem:[#allocation2 + $0x18] sm:$0xf]
        %v499 = vld [vmem:[#allocation2 + $0x1c] sm:$0x1]
        %v500 = vld [vmem:[#allocation2 + $0x20] sm:$0xf]
        %v501 = vld [vmem:[#allocation2 + $0x24] sm:$0x1]
        %v502 = vld [vmem:[#allocation2 + $0x28] sm:$0xf]
        %v503 = vld [vmem:[#allocation2 + $0x2c] sm:$0x1]
        %v504 = vld [vmem:[#allocation2 + $0x30] sm:$0xf]
        %v505 = vld [vmem:[#allocation2 + $0x34] sm:$0x1]
        %v506 = vld [vmem:[#allocation2 + $0x38] sm:$0xf]
        %v507 = vld [vmem:[#allocation2 + $0x3c] sm:$0x1]
        %v508 = vld [vmem:[#allocation2] sm:$0xe]
        %v509 = vld [vmem:[#allocation2 + $0x8] sm:$0xe]
        %v510 = vld [vmem:[#allocation2 + $0x10] sm:$0xe]
        %v511 = vld [vmem:[#allocation2 + $0x18] sm:$0xe]
        %v512 = vld [vmem:[#allocation2 + $0x20] sm:$0xe]
        %v513 = vld [vmem:[#allocation2 + $0x28] sm:$0xe]
        %v514 = vld [vmem:[#allocation2 + $0x30] sm:$0xe]
        %v515 = vld [vmem:[#allocation2 + $0x38] sm:$0xe]
        %v516 = vld [vmem:[#allocation2 + $0x4] sm:$0x3]
        %v517 = vld [vmem:[#allocation2 + $0xc] sm:$0x3]
        %v518 = vld [vmem:[#allocation2 + $0x14] sm:$0x3]
        %v519 = vld [vmem:[#allocation2 + $0x1c] sm:$0x3]
        %v520 = vld [vmem:[#allocation2 + $0x24] sm:$0x3]
        %v521 = vld [vmem:[#allocation2 + $0x2c] sm:$0x3]
        %v522 = vld [vmem:[#allocation2 + $0x34] sm:$0x3]
        %v523 = vld [vmem:[#allocation2 + $0x3c] sm:$0x3]
        %v524 = vld [vmem:[%s473] sm:$0xf]
        %v525 = vld [vmem:[%s473 + $0x4] sm:$0x1]
        %v526 = vld [vmem:[%s473 + $0x8] sm:$0xf]
        %v527 = vld [vmem:[%s473 + $0xc] sm:$0x1]
        %v528 = vld [vmem:[%s473 + $0x10] sm:$0xf]
        %v529 = vld [vmem:[%s473 + $0x14] sm:$0x1]
        %v530 = vld [vmem:[%s473 + $0x18] sm:$0xf]
        %v531 = vld [vmem:[%s473 + $0x1c] sm:$0x1]
        %v532 = vld [vmem:[%s473 + $0x20] sm:$0xf]
        %v533 = vld [vmem:[%s473 + $0x24] sm:$0x1]
        %v534 = vld [vmem:[%s473 + $0x28] sm:$0xf]
        %v535 = vld [vmem:[%s473 + $0x2c] sm:$0x1]
        %v536 = vld [vmem:[%s473 + $0x30] sm:$0xf]
        %v537 = vld [vmem:[%s473 + $0x34] sm:$0x1]
        %v538 = vld [vmem:[%s473 + $0x38] sm:$0xf]
        %v539 = vld [vmem:[%s473 + $0x3c] sm:$0x1]
        %v540 = vld [vmem:[%s473] sm:$0xe]
        %v541 = vld [vmem:[%s473 + $0x8] sm:$0xe]
        %v542 = vld [vmem:[%s473 + $0x10] sm:$0xe]
        %v543 = vld [vmem:[%s473 + $0x18] sm:$0xe]
        %v544 = vld [vmem:[%s473 + $0x20] sm:$0xe]
        %v545 = vld [vmem:[%s473 + $0x28] sm:$0xe]
        %v546 = vld [vmem:[%s473 + $0x30] sm:$0xe]
        %v547 = vld [vmem:[%s473 + $0x38] sm:$0xe]
        %v548 = vld [vmem:[%s473 + $0x4] sm:$0x3]
        %v549 = vld [vmem:[%s473 + $0xc] sm:$0x3]
        %v550 = vld [vmem:[%s473 + $0x14] sm:$0x3]
        %v551 = vld [vmem:[%s473 + $0x1c] sm:$0x3]
        %v552 = vld [vmem:[%s473 + $0x24] sm:$0x3]
        %v553 = vld [vmem:[%s473 + $0x2c] sm:$0x3]
        %v554 = vld [vmem:[%s473 + $0x34] sm:$0x3]
        %v555 = vld [vmem:[%s473 + $0x3c] sm:$0x3]
        %s556 = scalar_lea.vmem [#allocation2], 16
        %v557 = vld [vmem:[%s556] sm:$0xf]
        %v558 = vld [vmem:[%s556 + $0x4] sm:$0x1]
        %v559 = vld [vmem:[%s556 + $0x8] sm:$0xf]
        %v560 = vld [vmem:[%s556 + $0xc] sm:$0x1]
        %v561 = vld [vmem:[%s556 + $0x10] sm:$0xf]
        %v562 = vld [vmem:[%s556 + $0x14] sm:$0x1]
        %v563 = vld [vmem:[%s556 + $0x18] sm:$0xf]
        %v564 = vld [vmem:[%s556 + $0x1c] sm:$0x1]
        %v565 = vld [vmem:[%s556 + $0x20] sm:$0xf]
        %v566 = vld [vmem:[%s556 + $0x24] sm:$0x1]
        %v567 = vld [vmem:[%s556 + $0x28] sm:$0xf]
        %v568 = vld [vmem:[%s556 + $0x2c] sm:$0x1]
        %v569 = vld [vmem:[%s556 + $0x30] sm:$0xf]
        %v570 = vld [vmem:[%s556 + $0x34] sm:$0x1]
        %v571 = vld [vmem:[%s556 + $0x38] sm:$0xf]
        %v572 = vld [vmem:[%s556 + $0x3c] sm:$0x1]
        %v573 = vld [vmem:[%s556] sm:$0xe]
        %v574 = vld [vmem:[%s556 + $0x8] sm:$0xe]
        %v575 = vld [vmem:[%s556 + $0x10] sm:$0xe]
        %v576 = vld [vmem:[%s556 + $0x18] sm:$0xe]
        %v577 = vld [vmem:[%s556 + $0x20] sm:$0xe]
        %v578 = vld [vmem:[%s556 + $0x28] sm:$0xe]
        %v579 = vld [vmem:[%s556 + $0x30] sm:$0xe]
        %v580 = vld [vmem:[%s556 + $0x38] sm:$0xe]
        %v581 = vld [vmem:[%s556 + $0x4] sm:$0x3]
        %v582 = vld [vmem:[%s556 + $0xc] sm:$0x3]
        %v583 = vld [vmem:[%s556 + $0x14] sm:$0x3]
        %v584 = vld [vmem:[%s556 + $0x1c] sm:$0x3]
        %v585 = vld [vmem:[%s556 + $0x24] sm:$0x3]
        %v586 = vld [vmem:[%s556 + $0x2c] sm:$0x3]
        %v587 = vld [vmem:[%s556 + $0x34] sm:$0x3]
        %v588 = vld [vmem:[%s556 + $0x3c] sm:$0x3]
        %v605 = vunpack.c.l.b16 %v492
        %v606 = vunpack.c.l.b16 %v493
        %v607 = vunpack.c.l.b16 %v494
        %v608 = vunpack.c.l.b16 %v495
        %v609 = vunpack.c.l.b16 %v496
        %v610 = vunpack.c.l.b16 %v497
        %v611 = vunpack.c.l.b16 %v498
        %v612 = vunpack.c.l.b16 %v499
        %v613 = vunpack.c.l.b16 %v500
        %v614 = vunpack.c.l.b16 %v501
        %v615 = vunpack.c.l.b16 %v502
        %v616 = vunpack.c.l.b16 %v503
        %v617 = vunpack.c.l.b16 %v504
        %v618 = vunpack.c.l.b16 %v505
        %v619 = vunpack.c.l.b16 %v506
        %v620 = vunpack.c.l.b16 %v507
        %v621 = vpack.c.b16 %v606, %v605
        %v622 = vpack.c.b16 %v608, %v607
        %v623 = vpack.c.b16 %v610, %v609
        %v624 = vpack.c.b16 %v612, %v611
        %v625 = vpack.c.b16 %v614, %v613
        %v626 = vpack.c.b16 %v616, %v615
        %v627 = vpack.c.b16 %v618, %v617
        %v628 = vpack.c.b16 %v620, %v619
        %v637 = vunpack.c.l.b16 %v508
        %v638 = vunpack.c.l.b16 %v509
        %v639 = vunpack.c.l.b16 %v510
        %v640 = vunpack.c.l.b16 %v511
        %v641 = vunpack.c.l.b16 %v512
        %v642 = vunpack.c.l.b16 %v513
        %v643 = vunpack.c.l.b16 %v514
        %v644 = vunpack.c.l.b16 %v515
        %v645 = vpack.c.b16 %v606, %v637
        %v646 = vpack.c.b16 %v608, %v638
        %v647 = vpack.c.b16 %v610, %v639
        %v648 = vpack.c.b16 %v612, %v640
        %v649 = vpack.c.b16 %v614, %v641
        %v650 = vpack.c.b16 %v616, %v642
        %v651 = vpack.c.b16 %v618, %v643
        %v652 = vpack.c.b16 %v620, %v644
        %v654 = vshrl.u32 %v645, 16
        %v656 = vshll.u32 %v645, 16
        %v658 = vrot.slane %v656, 1
        %v659 = vor.u32 %v654, %v658
        %v661 = vshrl.u32 %v646, 16
        %v663 = vshll.u32 %v646, 16
        %v665 = vrot.slane %v663, 1
        %v666 = vor.u32 %v661, %v665
        %v668 = vshrl.u32 %v647, 16
        %v670 = vshll.u32 %v647, 16
        %v672 = vrot.slane %v670, 1
        %v673 = vor.u32 %v668, %v672
        %v675 = vshrl.u32 %v648, 16
        %v677 = vshll.u32 %v648, 16
        %v679 = vrot.slane %v677, 1
        %v680 = vor.u32 %v675, %v679
        %v682 = vshrl.u32 %v649, 16
        %v684 = vshll.u32 %v649, 16
        %v686 = vrot.slane %v684, 1
        %v687 = vor.u32 %v682, %v686
        %v689 = vshrl.u32 %v650, 16
        %v691 = vshll.u32 %v650, 16
        %v693 = vrot.slane %v691, 1
        %v694 = vor.u32 %v689, %v693
        %v696 = vshrl.u32 %v651, 16
        %v698 = vshll.u32 %v651, 16
        %v700 = vrot.slane %v698, 1
        %v701 = vor.u32 %v696, %v700
        %v703 = vshrl.u32 %v652, 16
        %v705 = vshll.u32 %v652, 16
        %v707 = vrot.slane %v705, 1
        %v708 = vor.u32 %v703, %v707
        %709 = vrot.lane.b32.xlu0 %v659, 32
        %v710 = vpop.permute.xlu0 %709
        %711 = vrot.lane.b32.xlu0 %v666, 32
        %v712 = vpop.permute.xlu0 %711
        %713 = vrot.lane.b32.xlu0 %v673, 32
        %v714 = vpop.permute.xlu0 %713
        %715 = vrot.lane.b32.xlu0 %v680, 32
        %v716 = vpop.permute.xlu0 %715
        %717 = vrot.lane.b32.xlu0 %v687, 32
        %v718 = vpop.permute.xlu0 %717
        %719 = vrot.lane.b32.xlu0 %v694, 32
        %v720 = vpop.permute.xlu0 %719
        %721 = vrot.lane.b32.xlu0 %v701, 32
        %v722 = vpop.permute.xlu0 %721
        %723 = vrot.lane.b32.xlu0 %v708, 32
        %v724 = vpop.permute.xlu0 %723
        %v733 = vunpack.c.l.b16 %v516
        %v734 = vunpack.c.l.b16 %v517
        %v735 = vunpack.c.l.b16 %v518
        %v736 = vunpack.c.l.b16 %v519
        %v737 = vunpack.c.l.b16 %v520
        %v738 = vunpack.c.l.b16 %v521
        %v739 = vunpack.c.l.b16 %v522
        %v740 = vunpack.c.l.b16 %v523
        %v741 = vpack.c.b16 %v733, %v637
        %v742 = vpack.c.b16 %v734, %v638
        %v743 = vpack.c.b16 %v735, %v639
        %v744 = vpack.c.b16 %v736, %v640
        %v745 = vpack.c.b16 %v737, %v641
        %v746 = vpack.c.b16 %v738, %v642
        %v747 = vpack.c.b16 %v739, %v643
        %v748 = vpack.c.b16 %v740, %v644
        %v749 = vrot.slane %v741, 1
        %v750 = vrot.slane %v742, 1
        %v751 = vrot.slane %v743, 1
        %v752 = vrot.slane %v744, 1
        %v753 = vrot.slane %v745, 1
        %v754 = vrot.slane %v746, 1
        %v755 = vrot.slane %v747, 1
        %v756 = vrot.slane %v748, 1
        %757 = vrot.lane.b32.xlu0 %v749, 64
        %v758 = vpop.permute.xlu0 %757
        %759 = vrot.lane.b32.xlu0 %v750, 64
        %v760 = vpop.permute.xlu0 %759
        %761 = vrot.lane.b32.xlu0 %v751, 64
        %v762 = vpop.permute.xlu0 %761
        %763 = vrot.lane.b32.xlu0 %v752, 64
        %v764 = vpop.permute.xlu0 %763
        %765 = vrot.lane.b32.xlu0 %v753, 64
        %v766 = vpop.permute.xlu0 %765
        %767 = vrot.lane.b32.xlu0 %v754, 64
        %v768 = vpop.permute.xlu0 %767
        %769 = vrot.lane.b32.xlu0 %v755, 64
        %v770 = vpop.permute.xlu0 %769
        %771 = vrot.lane.b32.xlu0 %v756, 64
        %v772 = vpop.permute.xlu0 %771
        %v789 = vunpack.c.l.b16 %v524
        %v790 = vunpack.c.l.b16 %v525
        %v791 = vunpack.c.l.b16 %v526
        %v792 = vunpack.c.l.b16 %v527
        %v793 = vunpack.c.l.b16 %v528
        %v794 = vunpack.c.l.b16 %v529
        %v795 = vunpack.c.l.b16 %v530
        %v796 = vunpack.c.l.b16 %v531
        %v797 = vunpack.c.l.b16 %v532
        %v798 = vunpack.c.l.b16 %v533
        %v799 = vunpack.c.l.b16 %v534
        %v800 = vunpack.c.l.b16 %v535
        %v801 = vunpack.c.l.b16 %v536
        %v802 = vunpack.c.l.b16 %v537
        %v803 = vunpack.c.l.b16 %v538
        %v804 = vunpack.c.l.b16 %v539
        %v805 = vpack.c.b16 %v790, %v789
        %v806 = vpack.c.b16 %v792, %v791
        %v807 = vpack.c.b16 %v794, %v793
        %v808 = vpack.c.b16 %v796, %v795
        %v809 = vpack.c.b16 %v798, %v797
        %v810 = vpack.c.b16 %v800, %v799
        %v811 = vpack.c.b16 %v802, %v801
        %v812 = vpack.c.b16 %v804, %v803
        %813 = vrot.lane.b32.xlu0 %v805, 96
        %v814 = vpop.permute.xlu0 %813
        %815 = vrot.lane.b32.xlu0 %v806, 96
        %v816 = vpop.permute.xlu0 %815
        %817 = vrot.lane.b32.xlu0 %v807, 96
        %v818 = vpop.permute.xlu0 %817
        %819 = vrot.lane.b32.xlu0 %v808, 96
        %v820 = vpop.permute.xlu0 %819
        %821 = vrot.lane.b32.xlu0 %v809, 96
        %v822 = vpop.permute.xlu0 %821
        %823 = vrot.lane.b32.xlu0 %v810, 96
        %v824 = vpop.permute.xlu0 %823
        %825 = vrot.lane.b32.xlu0 %v811, 96
        %v826 = vpop.permute.xlu0 %825
        %827 = vrot.lane.b32.xlu0 %v812, 96
        %v828 = vpop.permute.xlu0 %827
        %v837 = vunpack.c.l.b16 %v540
        %v838 = vunpack.c.l.b16 %v541
        %v839 = vunpack.c.l.b16 %v542
        %v840 = vunpack.c.l.b16 %v543
        %v841 = vunpack.c.l.b16 %v544
        %v842 = vunpack.c.l.b16 %v545
        %v843 = vunpack.c.l.b16 %v546
        %v844 = vunpack.c.l.b16 %v547
        %v845 = vpack.c.b16 %v790, %v837
        %v846 = vpack.c.b16 %v792, %v838
        %v847 = vpack.c.b16 %v794, %v839
        %v848 = vpack.c.b16 %v796, %v840
        %v849 = vpack.c.b16 %v798, %v841
        %v850 = vpack.c.b16 %v800, %v842
        %v851 = vpack.c.b16 %v802, %v843
        %v852 = vpack.c.b16 %v804, %v844
        %v854 = vshrl.u32 %v845, 16
        %v856 = vshll.u32 %v845, 16
        %v858 = vrot.slane %v856, 1
        %v859 = vor.u32 %v854, %v858
        %v861 = vshrl.u32 %v846, 16
        %v863 = vshll.u32 %v846, 16
        %v865 = vrot.slane %v863, 1
        %v866 = vor.u32 %v861, %v865
        %v868 = vshrl.u32 %v847, 16
        %v870 = vshll.u32 %v847, 16
        %v872 = vrot.slane %v870, 1
        %v873 = vor.u32 %v868, %v872
        %v875 = vshrl.u32 %v848, 16
        %v877 = vshll.u32 %v848, 16
        %v879 = vrot.slane %v877, 1
        %v880 = vor.u32 %v875, %v879
        %v882 = vshrl.u32 %v849, 16
        %v884 = vshll.u32 %v849, 16
        %v886 = vrot.slane %v884, 1
        %v887 = vor.u32 %v882, %v886
        %v889 = vshrl.u32 %v850, 16
        %v891 = vshll.u32 %v850, 16
        %v893 = vrot.slane %v891, 1
        %v894 = vor.u32 %v889, %v893
        %v896 = vshrl.u32 %v851, 16
        %v898 = vshll.u32 %v851, 16
        %v900 = vrot.slane %v898, 1
        %v901 = vor.u32 %v896, %v900
        %v903 = vshrl.u32 %v852, 16
        %v905 = vshll.u32 %v852, 16
        %v907 = vrot.slane %v905, 1
        %v908 = vor.u32 %v903, %v907
        %v917 = vunpack.c.l.b16 %v548
        %v918 = vunpack.c.l.b16 %v549
        %v919 = vunpack.c.l.b16 %v550
        %v920 = vunpack.c.l.b16 %v551
        %v921 = vunpack.c.l.b16 %v552
        %v922 = vunpack.c.l.b16 %v553
        %v923 = vunpack.c.l.b16 %v554
        %v924 = vunpack.c.l.b16 %v555
        %v925 = vpack.c.b16 %v917, %v837
        %v926 = vpack.c.b16 %v918, %v838
        %v927 = vpack.c.b16 %v919, %v839
        %v928 = vpack.c.b16 %v920, %v840
        %v929 = vpack.c.b16 %v921, %v841
        %v930 = vpack.c.b16 %v922, %v842
        %v931 = vpack.c.b16 %v923, %v843
        %v932 = vpack.c.b16 %v924, %v844
        %v933 = vrot.slane %v925, 1
        %v934 = vrot.slane %v926, 1
        %v935 = vrot.slane %v927, 1
        %v936 = vrot.slane %v928, 1
        %v937 = vrot.slane %v929, 1
        %v938 = vrot.slane %v930, 1
        %v939 = vrot.slane %v931, 1
        %v940 = vrot.slane %v932, 1
        %941 = vrot.lane.b32.xlu0 %v933, 32
        %v942 = vpop.permute.xlu0 %941
        %943 = vrot.lane.b32.xlu0 %v934, 32
        %v944 = vpop.permute.xlu0 %943
        %945 = vrot.lane.b32.xlu0 %v935, 32
        %v946 = vpop.permute.xlu0 %945
        %947 = vrot.lane.b32.xlu0 %v936, 32
        %v948 = vpop.permute.xlu0 %947
        %949 = vrot.lane.b32.xlu0 %v937, 32
        %v950 = vpop.permute.xlu0 %949
        %951 = vrot.lane.b32.xlu0 %v938, 32
        %v952 = vpop.permute.xlu0 %951
        %953 = vrot.lane.b32.xlu0 %v939, 32
        %v954 = vpop.permute.xlu0 %953
        %955 = vrot.lane.b32.xlu0 %v940, 32
        %v956 = vpop.permute.xlu0 %955
        %v973 = vunpack.c.l.b16 %v557
        %v974 = vunpack.c.l.b16 %v558
        %v975 = vunpack.c.l.b16 %v559
        %v976 = vunpack.c.l.b16 %v560
        %v977 = vunpack.c.l.b16 %v561
        %v978 = vunpack.c.l.b16 %v562
        %v979 = vunpack.c.l.b16 %v563
        %v980 = vunpack.c.l.b16 %v564
        %v981 = vunpack.c.l.b16 %v565
        %v982 = vunpack.c.l.b16 %v566
        %v983 = vunpack.c.l.b16 %v567
        %v984 = vunpack.c.l.b16 %v568
        %v985 = vunpack.c.l.b16 %v569
        %v986 = vunpack.c.l.b16 %v570
        %v987 = vunpack.c.l.b16 %v571
        %v988 = vunpack.c.l.b16 %v572
        %v989 = vpack.c.b16 %v974, %v973
        %v990 = vpack.c.b16 %v976, %v975
        %v991 = vpack.c.b16 %v978, %v977
        %v992 = vpack.c.b16 %v980, %v979
        %v993 = vpack.c.b16 %v982, %v981
        %v994 = vpack.c.b16 %v984, %v983
        %v995 = vpack.c.b16 %v986, %v985
        %v996 = vpack.c.b16 %v988, %v987
        %997 = vrot.lane.b32.xlu0 %v989, 64
        %v998 = vpop.permute.xlu0 %997
        %999 = vrot.lane.b32.xlu0 %v990, 64
        %v1000 = vpop.permute.xlu0 %999
        %1001 = vrot.lane.b32.xlu0 %v991, 64
        %v1002 = vpop.permute.xlu0 %1001
        %1003 = vrot.lane.b32.xlu0 %v992, 64
        %v1004 = vpop.permute.xlu0 %1003
        %1005 = vrot.lane.b32.xlu0 %v993, 64
        %v1006 = vpop.permute.xlu0 %1005
        %1007 = vrot.lane.b32.xlu0 %v994, 64
        %v1008 = vpop.permute.xlu0 %1007
        %1009 = vrot.lane.b32.xlu0 %v995, 64
        %v1010 = vpop.permute.xlu0 %1009
        %1011 = vrot.lane.b32.xlu0 %v996, 64
        %v1012 = vpop.permute.xlu0 %1011
        %v1021 = vunpack.c.l.b16 %v573
        %v1022 = vunpack.c.l.b16 %v574
        %v1023 = vunpack.c.l.b16 %v575
        %v1024 = vunpack.c.l.b16 %v576
        %v1025 = vunpack.c.l.b16 %v577
        %v1026 = vunpack.c.l.b16 %v578
        %v1027 = vunpack.c.l.b16 %v579
        %v1028 = vunpack.c.l.b16 %v580
        %v1029 = vpack.c.b16 %v974, %v1021
        %v1030 = vpack.c.b16 %v976, %v1022
        %v1031 = vpack.c.b16 %v978, %v1023
        %v1032 = vpack.c.b16 %v980, %v1024
        %v1033 = vpack.c.b16 %v982, %v1025
        %v1034 = vpack.c.b16 %v984, %v1026
        %v1035 = vpack.c.b16 %v986, %v1027
        %v1036 = vpack.c.b16 %v988, %v1028
        %v1038 = vshrl.u32 %v1029, 16
        %v1040 = vshll.u32 %v1029, 16
        %v1042 = vrot.slane %v1040, 1
        %v1043 = vor.u32 %v1038, %v1042
        %v1045 = vshrl.u32 %v1030, 16
        %v1047 = vshll.u32 %v1030, 16
        %v1049 = vrot.slane %v1047, 1
        %v1050 = vor.u32 %v1045, %v1049
        %v1052 = vshrl.u32 %v1031, 16
        %v1054 = vshll.u32 %v1031, 16
        %v1056 = vrot.slane %v1054, 1
        %v1057 = vor.u32 %v1052, %v1056
        %v1059 = vshrl.u32 %v1032, 16
        %v1061 = vshll.u32 %v1032, 16
        %v1063 = vrot.slane %v1061, 1
        %v1064 = vor.u32 %v1059, %v1063
        %v1066 = vshrl.u32 %v1033, 16
        %v1068 = vshll.u32 %v1033, 16
        %v1070 = vrot.slane %v1068, 1
        %v1071 = vor.u32 %v1066, %v1070
        %v1073 = vshrl.u32 %v1034, 16
        %v1075 = vshll.u32 %v1034, 16
        %v1077 = vrot.slane %v1075, 1
        %v1078 = vor.u32 %v1073, %v1077
        %v1080 = vshrl.u32 %v1035, 16
        %v1082 = vshll.u32 %v1035, 16
        %v1084 = vrot.slane %v1082, 1
        %v1085 = vor.u32 %v1080, %v1084
        %v1087 = vshrl.u32 %v1036, 16
        %v1089 = vshll.u32 %v1036, 16
        %v1091 = vrot.slane %v1089, 1
        %v1092 = vor.u32 %v1087, %v1091
        %1093 = vrot.lane.b32.xlu0 %v1043, 96
        %v1094 = vpop.permute.xlu0 %1093
        %1095 = vrot.lane.b32.xlu0 %v1050, 96
        %v1096 = vpop.permute.xlu0 %1095
        %1097 = vrot.lane.b32.xlu0 %v1057, 96
        %v1098 = vpop.permute.xlu0 %1097
        %1099 = vrot.lane.b32.xlu0 %v1064, 96
        %v1100 = vpop.permute.xlu0 %1099
        %1101 = vrot.lane.b32.xlu0 %v1071, 96
        %v1102 = vpop.permute.xlu0 %1101
        %1103 = vrot.lane.b32.xlu0 %v1078, 96
        %v1104 = vpop.permute.xlu0 %1103
        %1105 = vrot.lane.b32.xlu0 %v1085, 96
        %v1106 = vpop.permute.xlu0 %1105
        %1107 = vrot.lane.b32.xlu0 %v1092, 96
        %v1108 = vpop.permute.xlu0 %1107
        %v1117 = vunpack.c.l.b16 %v581
        %v1118 = vunpack.c.l.b16 %v582
        %v1119 = vunpack.c.l.b16 %v583
        %v1120 = vunpack.c.l.b16 %v584
        %v1121 = vunpack.c.l.b16 %v585
        %v1122 = vunpack.c.l.b16 %v586
        %v1123 = vunpack.c.l.b16 %v587
        %v1124 = vunpack.c.l.b16 %v588
        %v1125 = vpack.c.b16 %v1117, %v1021
        %v1126 = vpack.c.b16 %v1118, %v1022
        %v1127 = vpack.c.b16 %v1119, %v1023
        %v1128 = vpack.c.b16 %v1120, %v1024
        %v1129 = vpack.c.b16 %v1121, %v1025
        %v1130 = vpack.c.b16 %v1122, %v1026
        %v1131 = vpack.c.b16 %v1123, %v1027
        %v1132 = vpack.c.b16 %v1124, %v1028
        %v1133 = vrot.slane %v1125, 1
        %v1134 = vrot.slane %v1126, 1
        %v1135 = vrot.slane %v1127, 1
        %v1136 = vrot.slane %v1128, 1
        %v1137 = vrot.slane %v1129, 1
        %v1138 = vrot.slane %v1130, 1
        %v1139 = vrot.slane %v1131, 1
        %v1140 = vrot.slane %v1132, 1
        %vm1141 = vcmask 261120
        %v1144 = vsel %vm1141, %v621, %v710
        %v1147 = vsel %vm1141, %v622, %v712
        %v1150 = vsel %vm1141, %v623, %v714
        %v1153 = vsel %vm1141, %v624, %v716
        %v1156 = vsel %vm1141, %v625, %v718
        %v1159 = vsel %vm1141, %v626, %v720
        %v1162 = vsel %vm1141, %v627, %v722
        %v1165 = vsel %vm1141, %v628, %v724
        %vm1166 = vcmask 523264
        %v1168 = vsel %vm1166, %v1144, %v758
        %v1170 = vsel %vm1166, %v1147, %v760
        %v1172 = vsel %vm1166, %v1150, %v762
        %v1174 = vsel %vm1166, %v1153, %v764
        %v1176 = vsel %vm1166, %v1156, %v766
        %v1178 = vsel %vm1166, %v1159, %v768
        %v1180 = vsel %vm1166, %v1162, %v770
        %v1182 = vsel %vm1166, %v1165, %v772
        %vm1183 = vcmask 785408
        %v1185 = vsel %vm1183, %v1168, %v814
        %v1187 = vsel %vm1183, %v1170, %v816
        %v1189 = vsel %vm1183, %v1172, %v818
        %v1191 = vsel %vm1183, %v1174, %v820
        %v1193 = vsel %vm1183, %v1176, %v822
        %v1195 = vsel %vm1183, %v1178, %v824
        %v1197 = vsel %vm1183, %v1180, %v826
        %v1199 = vsel %vm1183, %v1182, %v828
        %v1202 = vsel %vm1141, %v859, %v942
        %v1205 = vsel %vm1141, %v866, %v944
        %v1208 = vsel %vm1141, %v873, %v946
        %v1211 = vsel %vm1141, %v880, %v948
        %v1214 = vsel %vm1141, %v887, %v950
        %v1217 = vsel %vm1141, %v894, %v952
        %v1220 = vsel %vm1141, %v901, %v954
        %v1223 = vsel %vm1141, %v908, %v956
        %v1225 = vsel %vm1166, %v1202, %v998
        %v1227 = vsel %vm1166, %v1205, %v1000
        %v1229 = vsel %vm1166, %v1208, %v1002
        %v1231 = vsel %vm1166, %v1211, %v1004
        %v1233 = vsel %vm1166, %v1214, %v1006
        %v1235 = vsel %vm1166, %v1217, %v1008
        %v1237 = vsel %vm1166, %v1220, %v1010
        %v1239 = vsel %vm1166, %v1223, %v1012
        %v1241 = vsel %vm1183, %v1225, %v1094
        %v1243 = vsel %vm1183, %v1227, %v1096
        %v1245 = vsel %vm1183, %v1229, %v1098
        %v1247 = vsel %vm1183, %v1231, %v1100
        %v1249 = vsel %vm1183, %v1233, %v1102
        %v1251 = vsel %vm1183, %v1235, %v1104
        %v1253 = vsel %vm1183, %v1237, %v1106
        %v1255 = vsel %vm1183, %v1239, %v1108
        %v1272 = vunpack.c.l.b16 %v1185
        %v1273 = vunpack.c.l.b16 %v1241
        %v1274 = vunpack.c.l.b16 %v1133
        %v1275 = vunpack.c.h.b16 %v1185
        %v1276 = vunpack.c.h.b16 %v1241
        %v1277 = vunpack.c.h.b16 %v1133
        %v1278 = vunpack.c.l.b16 %v1187
        %v1279 = vunpack.c.l.b16 %v1243
        %v1280 = vunpack.c.l.b16 %v1134
        %v1281 = vunpack.c.h.b16 %v1187
        %v1282 = vunpack.c.h.b16 %v1243
        %v1283 = vunpack.c.h.b16 %v1134
        %v1284 = vunpack.c.l.b16 %v1189
        %v1285 = vunpack.c.l.b16 %v1245
        %v1286 = vunpack.c.l.b16 %v1135
        %v1287 = vunpack.c.h.b16 %v1189
        %v1288 = vunpack.c.h.b16 %v1245
        %v1289 = vunpack.c.h.b16 %v1135
        %v1290 = vunpack.c.l.b16 %v1191
        %v1291 = vunpack.c.l.b16 %v1247
        %v1292 = vunpack.c.l.b16 %v1136
        %v1293 = vunpack.c.h.b16 %v1191
        %v1294 = vunpack.c.h.b16 %v1247
        %v1295 = vunpack.c.h.b16 %v1136
        %v1296 = vunpack.c.l.b16 %v1193
        %v1297 = vunpack.c.l.b16 %v1249
        %v1298 = vunpack.c.l.b16 %v1137
        %v1299 = vunpack.c.h.b16 %v1193
        %v1300 = vunpack.c.h.b16 %v1249
        %v1301 = vunpack.c.h.b16 %v1137
        %v1302 = vunpack.c.l.b16 %v1195
        %v1303 = vunpack.c.l.b16 %v1251
        %v1304 = vunpack.c.l.b16 %v1138
        %v1305 = vunpack.c.h.b16 %v1195
        %v1306 = vunpack.c.h.b16 %v1251
        %v1307 = vunpack.c.h.b16 %v1138
        %v1308 = vunpack.c.l.b16 %v1197
        %v1309 = vunpack.c.l.b16 %v1253
        %v1310 = vunpack.c.l.b16 %v1139
        %v1311 = vunpack.c.h.b16 %v1197
        %v1312 = vunpack.c.h.b16 %v1253
        %v1313 = vunpack.c.h.b16 %v1139
        %v1314 = vunpack.c.l.b16 %v1199
        %v1315 = vunpack.c.l.b16 %v1255
        %v1316 = vunpack.c.l.b16 %v1140
        %v1317 = vunpack.c.h.b16 %v1199
        %v1318 = vunpack.c.h.b16 %v1255
        %v1319 = vunpack.c.h.b16 %v1140
        %v1320 = vpack.c.b16 %v1273, %v1272
        %v1321 = vpack.c.b16 %v1274, %v1274
        %v1322 = vpack.c.b16 %v1276, %v1275
        %v1323 = vpack.c.b16 %v1277, %v1277
        %v1324 = vpack.c.b16 %v1279, %v1278
        %v1325 = vpack.c.b16 %v1280, %v1280
        %v1326 = vpack.c.b16 %v1282, %v1281
        %v1327 = vpack.c.b16 %v1283, %v1283
        %v1328 = vpack.c.b16 %v1285, %v1284
        %v1329 = vpack.c.b16 %v1286, %v1286
        %v1330 = vpack.c.b16 %v1288, %v1287
        %v1331 = vpack.c.b16 %v1289, %v1289
        %v1332 = vpack.c.b16 %v1291, %v1290
        %v1333 = vpack.c.b16 %v1292, %v1292
        %v1334 = vpack.c.b16 %v1294, %v1293
        %v1335 = vpack.c.b16 %v1295, %v1295
        %v1336 = vpack.c.b16 %v1297, %v1296
        %v1337 = vpack.c.b16 %v1298, %v1298
        %v1338 = vpack.c.b16 %v1300, %v1299
        %v1339 = vpack.c.b16 %v1301, %v1301
        %v1340 = vpack.c.b16 %v1303, %v1302
        %v1341 = vpack.c.b16 %v1304, %v1304
        %v1342 = vpack.c.b16 %v1306, %v1305
        %v1343 = vpack.c.b16 %v1307, %v1307
        %v1344 = vpack.c.b16 %v1309, %v1308
        %v1345 = vpack.c.b16 %v1310, %v1310
        %v1346 = vpack.c.b16 %v1312, %v1311
        %v1347 = vpack.c.b16 %v1313, %v1313
        %v1348 = vpack.c.b16 %v1315, %v1314
        %v1349 = vpack.c.b16 %v1316, %v1316
        %v1350 = vpack.c.b16 %v1318, %v1317
        %v1351 = vpack.c.b16 %v1319, %v1319
        %vm1352 = vsmask.f32 3328
        %vm1353 = vsmask.f32 7440
        %vm1354 = vmor %vm1352, %vm1353
        %v1356 = vshrl.u32 %v1320, 16
        %v1358 = vrot.slane %v1356, 4
        %v1359 = vshll.u32 %v1320, 16
        %v1361 = vrot.slane %v1359, 5
        %v1362 = vor.u32 %v1358, %v1361
        %v1363 = vrot.slane %v1362, 4
        %v1365 = vshll.u32 %v1322, 16
        %v1367 = vrot.slane %v1365, 5
        %v1368 = vsel %vm1354, %v1363, %v1367
        %v1370 = vshrl.u32 %v1321, 16
        %v1372 = vrot.slane %v1370, 4
        %v1373 = vshll.u32 %v1321, 16
        %v1375 = vrot.slane %v1373, 5
        %v1376 = vor.u32 %v1372, %v1375
        %v1377 = vrot.slane %v1376, 4
        %v1379 = vshll.u32 %v1323, 16
        %v1381 = vrot.slane %v1379, 5
        %v1382 = vsel %vm1354, %v1377, %v1381
        %v1384 = vshrl.u32 %v1324, 16
        %v1386 = vrot.slane %v1384, 4
        %v1387 = vshll.u32 %v1324, 16
        %v1389 = vrot.slane %v1387, 5
        %v1390 = vor.u32 %v1386, %v1389
        %v1391 = vrot.slane %v1390, 4
        %v1393 = vshll.u32 %v1326, 16
        %v1395 = vrot.slane %v1393, 5
        %v1396 = vsel %vm1354, %v1391, %v1395
        %v1398 = vshrl.u32 %v1325, 16
        %v1400 = vrot.slane %v1398, 4
        %v1401 = vshll.u32 %v1325, 16
        %v1403 = vrot.slane %v1401, 5
        %v1404 = vor.u32 %v1400, %v1403
        %v1405 = vrot.slane %v1404, 4
        %v1407 = vshll.u32 %v1327, 16
        %v1409 = vrot.slane %v1407, 5
        %v1410 = vsel %vm1354, %v1405, %v1409
        %v1412 = vshrl.u32 %v1328, 16
        %v1414 = vrot.slane %v1412, 4
        %v1415 = vshll.u32 %v1328, 16
        %v1417 = vrot.slane %v1415, 5
        %v1418 = vor.u32 %v1414, %v1417
        %v1419 = vrot.slane %v1418, 4
        %v1421 = vshll.u32 %v1330, 16
        %v1423 = vrot.slane %v1421, 5
        %v1424 = vsel %vm1354, %v1419, %v1423
        %v1426 = vshrl.u32 %v1329, 16
        %v1428 = vrot.slane %v1426, 4
        %v1429 = vshll.u32 %v1329, 16
        %v1431 = vrot.slane %v1429, 5
        %v1432 = vor.u32 %v1428, %v1431
        %v1433 = vrot.slane %v1432, 4
        %v1435 = vshll.u32 %v1331, 16
        %v1437 = vrot.slane %v1435, 5
        %v1438 = vsel %vm1354, %v1433, %v1437
        %v1440 = vshrl.u32 %v1332, 16
        %v1442 = vrot.slane %v1440, 4
        %v1443 = vshll.u32 %v1332, 16
        %v1445 = vrot.slane %v1443, 5
        %v1446 = vor.u32 %v1442, %v1445
        %v1447 = vrot.slane %v1446, 4
        %v1449 = vshll.u32 %v1334, 16
        %v1451 = vrot.slane %v1449, 5
        %v1452 = vsel %vm1354, %v1447, %v1451
        %v1454 = vshrl.u32 %v1333, 16
        %v1456 = vrot.slane %v1454, 4
        %v1457 = vshll.u32 %v1333, 16
        %v1459 = vrot.slane %v1457, 5
        %v1460 = vor.u32 %v1456, %v1459
        %v1461 = vrot.slane %v1460, 4
        %v1463 = vshll.u32 %v1335, 16
        %v1465 = vrot.slane %v1463, 5
        %v1466 = vsel %vm1354, %v1461, %v1465
        %v1468 = vshrl.u32 %v1336, 16
        %v1470 = vrot.slane %v1468, 4
        %v1471 = vshll.u32 %v1336, 16
        %v1473 = vrot.slane %v1471, 5
        %v1474 = vor.u32 %v1470, %v1473
        %v1475 = vrot.slane %v1474, 4
        %v1477 = vshll.u32 %v1338, 16
        %v1479 = vrot.slane %v1477, 5
        %v1480 = vsel %vm1354, %v1475, %v1479
        %v1482 = vshrl.u32 %v1337, 16
        %v1484 = vrot.slane %v1482, 4
        %v1485 = vshll.u32 %v1337, 16
        %v1487 = vrot.slane %v1485, 5
        %v1488 = vor.u32 %v1484, %v1487
        %v1489 = vrot.slane %v1488, 4
        %v1491 = vshll.u32 %v1339, 16
        %v1493 = vrot.slane %v1491, 5
        %v1494 = vsel %vm1354, %v1489, %v1493
        %v1496 = vshrl.u32 %v1340, 16
        %v1498 = vrot.slane %v1496, 4
        %v1499 = vshll.u32 %v1340, 16
        %v1501 = vrot.slane %v1499, 5
        %v1502 = vor.u32 %v1498, %v1501
        %v1503 = vrot.slane %v1502, 4
        %v1505 = vshll.u32 %v1342, 16
        %v1507 = vrot.slane %v1505, 5
        %v1508 = vsel %vm1354, %v1503, %v1507
        %v1510 = vshrl.u32 %v1341, 16
        %v1512 = vrot.slane %v1510, 4
        %v1513 = vshll.u32 %v1341, 16
        %v1515 = vrot.slane %v1513, 5
        %v1516 = vor.u32 %v1512, %v1515
        %v1517 = vrot.slane %v1516, 4
        %v1519 = vshll.u32 %v1343, 16
        %v1521 = vrot.slane %v1519, 5
        %v1522 = vsel %vm1354, %v1517, %v1521
        %v1524 = vshrl.u32 %v1344, 16
        %v1526 = vrot.slane %v1524, 4
        %v1527 = vshll.u32 %v1344, 16
        %v1529 = vrot.slane %v1527, 5
        %v1530 = vor.u32 %v1526, %v1529
        %v1531 = vrot.slane %v1530, 4
        %v1533 = vshll.u32 %v1346, 16
        %v1535 = vrot.slane %v1533, 5
        %v1536 = vsel %vm1354, %v1531, %v1535
        %v1538 = vshrl.u32 %v1345, 16
        %v1540 = vrot.slane %v1538, 4
        %v1541 = vshll.u32 %v1345, 16
        %v1543 = vrot.slane %v1541, 5
        %v1544 = vor.u32 %v1540, %v1543
        %v1545 = vrot.slane %v1544, 4
        %v1547 = vshll.u32 %v1347, 16
        %v1549 = vrot.slane %v1547, 5
        %v1550 = vsel %vm1354, %v1545, %v1549
        %v1552 = vshrl.u32 %v1348, 16
        %v1554 = vrot.slane %v1552, 4
        %v1555 = vshll.u32 %v1348, 16
        %v1557 = vrot.slane %v1555, 5
        %v1558 = vor.u32 %v1554, %v1557
        %v1559 = vrot.slane %v1558, 4
        %v1561 = vshll.u32 %v1350, 16
        %v1563 = vrot.slane %v1561, 5
        %v1564 = vsel %vm1354, %v1559, %v1563
        %v1566 = vshrl.u32 %v1349, 16
        %v1568 = vrot.slane %v1566, 4
        %v1569 = vshll.u32 %v1349, 16
        %v1571 = vrot.slane %v1569, 5
        %v1572 = vor.u32 %v1568, %v1571
        %v1573 = vrot.slane %v1572, 4
        %v1575 = vshll.u32 %v1351, 16
        %v1577 = vrot.slane %v1575, 5
        %v1578 = vsel %vm1354, %v1573, %v1577
        %v1579 = vld [vmem:[#allocation3] sm:$0xff]
        %v1580 = vld [vmem:[#allocation3 + $0x8] sm:$0xff]
        %v1581 = vld [vmem:[#allocation3 + $0x10] sm:$0xff]
        %v1582 = vld [vmem:[#allocation3 + $0x18] sm:$0xff]
        %v1583 = vld [vmem:[#allocation3 + $0x20] sm:$0xff]
        %v1584 = vld [vmem:[#allocation3 + $0x28] sm:$0xff]
        %v1585 = vld [vmem:[#allocation3 + $0x30] sm:$0xff]
        %v1586 = vld [vmem:[#allocation3 + $0x38] sm:$0xff]
        %v1587 = vld [vmem:[#allocation8] sm:$0xf]
        %v1588 = vld [vmem:[#allocation8 + $0x4] sm:$0xf]
        %v1589 = vld [vmem:[#allocation8 + $0x8] sm:$0xf]
        %v1590 = vld [vmem:[#allocation8 + $0xc] sm:$0xf]
        %v1591 = vld [vmem:[#allocation8 + $0x10] sm:$0xf]
        %v1592 = vld [vmem:[#allocation8 + $0x14] sm:$0xf]
        %v1593 = vld [vmem:[#allocation8 + $0x18] sm:$0xf]
        %v1594 = vld [vmem:[#allocation8 + $0x1c] sm:$0xf]
        %v1595 = vld [vmem:[#allocation8 + $0x20] sm:$0xf]
        %v1596 = vld [vmem:[#allocation8 + $0x24] sm:$0xf]
        %v1597 = vld [vmem:[#allocation8 + $0x28] sm:$0xf]
        %v1598 = vld [vmem:[#allocation8 + $0x2c] sm:$0xf]
        %v1599 = vld [vmem:[#allocation8 + $0x30] sm:$0xf]
        %v1600 = vld [vmem:[#allocation8 + $0x34] sm:$0xf]
        %v1601 = vld [vmem:[#allocation8 + $0x38] sm:$0xf]
        %v1602 = vld [vmem:[#allocation8 + $0x3c] sm:$0xf]
        %v1603 = vld [vmem:[#allocation8 + $0x40] sm:$0xf]
        %v1604 = vld [vmem:[#allocation8 + $0x44] sm:$0xf]
        %v1605 = vld [vmem:[#allocation8 + $0x48] sm:$0xf]
        %v1606 = vld [vmem:[#allocation8 + $0x4c] sm:$0xf]
        %v1607 = vld [vmem:[#allocation8 + $0x50] sm:$0xf]
        %v1608 = vld [vmem:[#allocation8 + $0x54] sm:$0xf]
        %v1609 = vld [vmem:[#allocation8 + $0x58] sm:$0xf]
        %v1610 = vld [vmem:[#allocation8 + $0x5c] sm:$0xf]
        %v1611 = vld [vmem:[#allocation8 + $0x60] sm:$0xf]
        %v1612 = vld [vmem:[#allocation8 + $0x64] sm:$0xf]
        %v1613 = vld [vmem:[#allocation8 + $0x68] sm:$0xf]
        %v1614 = vld [vmem:[#allocation8 + $0x6c] sm:$0xf]
        %v1615 = vld [vmem:[#allocation8 + $0x70] sm:$0xf]
        %v1616 = vld [vmem:[#allocation8 + $0x74] sm:$0xf]
        %v1617 = vld [vmem:[#allocation8 + $0x78] sm:$0xf]
        %v1618 = vld [vmem:[#allocation8 + $0x7c] sm:$0xf]
        %v1619 = vld [vmem:[#allocation8 + $0x80] sm:$0xf]
        %v1620 = vld [vmem:[#allocation8 + $0x84] sm:$0xf]
        %v1621 = vld [vmem:[#allocation8 + $0x88] sm:$0xf]
        %v1622 = vld [vmem:[#allocation8 + $0x8c] sm:$0xf]
        %v1623 = vunpack.c.l.b16 %v1368
        %v1624 = vunpack.c.h.b16 %v1368
        %v1625 = vunpack.c.l.b16 %v1382
        %v1626 = vunpack.c.l.b16 %v1396
        %v1627 = vunpack.c.h.b16 %v1396
        %v1628 = vunpack.c.l.b16 %v1410
        %v1629 = vunpack.c.l.b16 %v1424
        %v1630 = vunpack.c.h.b16 %v1424
        %v1631 = vunpack.c.l.b16 %v1438
        %v1632 = vunpack.c.l.b16 %v1452
        %v1633 = vunpack.c.h.b16 %v1452
        %v1634 = vunpack.c.l.b16 %v1466
        %v1635 = vunpack.c.l.b16 %v1480
        %v1636 = vunpack.c.h.b16 %v1480
        %v1637 = vunpack.c.l.b16 %v1494
        %v1638 = vunpack.c.l.b16 %v1508
        %v1639 = vunpack.c.h.b16 %v1508
        %v1640 = vunpack.c.l.b16 %v1522
        %v1641 = vunpack.c.l.b16 %v1536
        %v1642 = vunpack.c.h.b16 %v1536
        %v1643 = vunpack.c.l.b16 %v1550
        %v1644 = vunpack.c.l.b16 %v1564
        %v1645 = vunpack.c.h.b16 %v1564
        %v1646 = vunpack.c.l.b16 %v1578
        %v1647 = vpack.c.b16 %v1626, %v1623
        %v1648 = vpack.c.b16 %v1627, %v1624
        %v1649 = vpack.c.b16 %v1628, %v1625
        %v1650 = vpack.c.b16 %v1632, %v1629
        %v1651 = vpack.c.b16 %v1633, %v1630
        %v1652 = vpack.c.b16 %v1634, %v1631
        %v1653 = vpack.c.b16 %v1638, %v1635
        %v1654 = vpack.c.b16 %v1639, %v1636
        %v1655 = vpack.c.b16 %v1640, %v1637
        %v1656 = vpack.c.b16 %v1644, %v1641
        %v1657 = vpack.c.b16 %v1645, %v1642
        %v1658 = vpack.c.b16 %v1646, %v1643
        %v1703 = vunpack.c.l.b16 %v1587
        %v1704 = vunpack.c.l.b16 %v1588
        %v1705 = vunpack.c.l.b16 %v1589
        %v1706 = vunpack.c.l.b16 %v1590
        %v1707 = vunpack.c.l.b16 %v1591
        %v1708 = vunpack.c.l.b16 %v1592
        %v1709 = vunpack.c.l.b16 %v1593
        %v1710 = vunpack.c.l.b16 %v1594
        %v1711 = vunpack.c.l.b16 %v1595
        %v1712 = vunpack.c.l.b16 %v1596
        %v1713 = vunpack.c.l.b16 %v1597
        %v1714 = vunpack.c.l.b16 %v1598
        %v1715 = vunpack.c.l.b16 %v1599
        %v1716 = vunpack.c.l.b16 %v1600
        %v1717 = vunpack.c.l.b16 %v1601
        %v1718 = vunpack.c.l.b16 %v1602
        %v1719 = vunpack.c.l.b16 %v1603
        %v1720 = vunpack.c.l.b16 %v1604
        %v1721 = vunpack.c.l.b16 %v1605
        %v1722 = vunpack.c.l.b16 %v1606
        %v1723 = vunpack.c.l.b16 %v1607
        %v1724 = vunpack.c.l.b16 %v1608
        %v1725 = vunpack.c.l.b16 %v1609
        %v1726 = vunpack.c.l.b16 %v1610
        %v1727 = vunpack.c.l.b16 %v1611
        %v1728 = vunpack.c.l.b16 %v1612
        %v1729 = vunpack.c.l.b16 %v1613
        %v1730 = vunpack.c.l.b16 %v1614
        %v1731 = vunpack.c.l.b16 %v1615
        %v1732 = vunpack.c.l.b16 %v1616
        %v1733 = vunpack.c.l.b16 %v1617
        %v1734 = vunpack.c.l.b16 %v1618
        %v1735 = vunpack.c.l.b16 %v1619
        %v1736 = vunpack.c.l.b16 %v1620
        %v1737 = vunpack.c.l.b16 %v1621
        %v1738 = vunpack.c.l.b16 %v1622
        %v1739 = vpack.c.b16 %v1704, %v1703
        %v1740 = vpack.c.b16 %v1706, %v1705
        %v1741 = vpack.c.b16 %v1708, %v1707
        %v1742 = vpack.c.b16 %v1710, %v1709
        %v1743 = vpack.c.b16 %v1712, %v1711
        %v1744 = vpack.c.b16 %v1714, %v1713
        %v1745 = vpack.c.b16 %v1716, %v1715
        %v1746 = vpack.c.b16 %v1718, %v1717
        %v1747 = vpack.c.b16 %v1720, %v1719
        %v1748 = vpack.c.b16 %v1722, %v1721
        %v1749 = vpack.c.b16 %v1724, %v1723
        %v1750 = vpack.c.b16 %v1726, %v1725
        %v1751 = vpack.c.b16 %v1728, %v1727
        %v1752 = vpack.c.b16 %v1730, %v1729
        %v1753 = vpack.c.b16 %v1732, %v1731
        %v1754 = vpack.c.b16 %v1734, %v1733
        %v1755 = vpack.c.b16 %v1736, %v1735
        %v1756 = vpack.c.b16 %v1738, %v1737
        %v1776 = vsel %vm1141, %v1649, 0
        %v1779 = vsel %vm1141, %v1652, 0
        %v1782 = vsel %vm1141, %v1655, 0
        %v1785 = vsel %vm1141, %v1658, 0
        %1787 = vmatprep.subr.bf16.mxu0 0
        %1788 = vmatpush1.bf16.msra.mxu0 %v1739
        %1789 = vmatprep.subr.bf16.mxu0 0
        %1790 = vmatpush1.bf16.msra.mxu0 %v1740
        %1791 = vmatprep.subr.bf16.mxu0 0
        %1792 = vmatpush1.bf16.msra.mxu0 %v1741
        %1793 = vmatprep.subr.bf16.mxu0 0
        %1794 = vmatpush1.bf16.msra.mxu0 %v1742
        %1795 = vmatprep.subr.bf16.mxu0 0
        %1796 = vmatpush1.bf16.msra.mxu0 %v1743
        %1797 = vmatprep.subr.bf16.mxu0 0
        %1798 = vmatpush1.bf16.msra.mxu0 %v1744
        %1799 = vmatprep.subr.bf16.mxu0 0
        %1800 = vmatpush1.bf16.msra.mxu0 %v1745
        %1801 = vmatprep.subr.bf16.mxu0 0
        %1802 = vmatpush1.bf16.msra.mxu0 %v1746
        %1803 = vmatprep.subr.bf16.mxu0 0
        %1804 = vmatpush1.bf16.msra.mxu0 %v1747
        %1805 = vmatprep.subr.bf16.mxu0 0
        %1806 = vmatpush1.bf16.msra.mxu0 %v1748
        %1807 = vmatprep.subr.bf16.mxu0 0
        %1808 = vmatpush1.bf16.msra.mxu0 %v1749
        %1809 = vmatprep.subr.bf16.mxu0 0
        %1810 = vmatpush1.bf16.msra.mxu0 %v1750
        %1811 = vmatprep.subr.bf16.mxu0 0
        %1812 = vmatpush1.bf16.msra.mxu0 %v1751
        %1813 = vmatprep.subr.bf16.mxu0 0
        %1814 = vmatpush1.bf16.msra.mxu0 %v1752
        %1815 = vmatprep.subr.bf16.mxu0 0
        %1816 = vmatpush1.bf16.msra.mxu0 %v1753
        %1817 = vmatprep.subr.bf16.mxu0 0
        %1818 = vmatpush1.bf16.msra.mxu0 %v1754
        %1819 = vmatprep.mubr.bf16.mxu0 %v1648
        %1820 = vmatmul.mubr.bf16.gmra.mrb[0].mxu0 %v1647
        %v1821 = vpop.f32.mrb[0].mxu0
        %v1822 = vadd.f32 0.0, %v1821
        %v1823 = vpop.f32.mrb[0].mxu0
        %v1824 = vpop.f32.mrb[0].mxu0
        %v1825 = vadd.f32 0.0, %v1824
        %v1826 = vpop.f32.mrb[0].mxu0
        %1827 = vmatprep.mubr.bf16.mxu0 %v1651
        %1828 = vmatmul.mubr.bf16.gmra.mrb[0].mxu0 %v1650
        %v1829 = vpop.f32.mrb[0].mxu0
        %v1830 = vadd.f32 0.0, %v1829
        %v1831 = vpop.f32.mrb[0].mxu0
        %v1832 = vpop.f32.mrb[0].mxu0
        %v1833 = vadd.f32 0.0, %v1832
        %v1834 = vpop.f32.mrb[0].mxu0
        %1835 = vmatprep.mubr.bf16.mxu0 %v1654
        %1836 = vmatmul.mubr.bf16.gmra.mrb[0].mxu0 %v1653
        %v1837 = vpop.f32.mrb[0].mxu0
        %v1838 = vadd.f32 0.0, %v1837
        %v1839 = vpop.f32.mrb[0].mxu0
        %v1840 = vpop.f32.mrb[0].mxu0
        %v1841 = vadd.f32 0.0, %v1840
        %v1842 = vpop.f32.mrb[0].mxu0
        %1843 = vmatprep.mubr.bf16.mxu0 %v1657
        %1844 = vmatmul.mubr.bf16.gmra.mrb[0].mxu0 %v1656
        %v1845 = vpop.f32.mrb[0].mxu0
        %v1846 = vadd.f32 0.0, %v1845
        %v1847 = vpop.f32.mrb[0].mxu0
        %v1848 = vpop.f32.mrb[0].mxu0
        %v1849 = vadd.f32 0.0, %v1848
        %v1850 = vpop.f32.mrb[0].mxu0
        %1851 = vdwg.mxu0
        %1852 = vmatprep.subr.bf16.mxu0 0
        %1853 = vmatpush1.bf16.msra.mxu0 %v1755
        %1854 = vmatprep.subr.bf16.mxu0 0
        %1855 = vmatpush1.bf16.msra.mxu0 %v1756
        %1856 = vmatprep.subr.bf16.mxu0 0
        %1857 = vmatpush1.bf16.msra.mxu0 0
        %1858 = vmatprep.subr.bf16.mxu0 0
        %1859 = vmatpush1.bf16.msra.mxu0 0
        %1860 = vmatprep.subr.bf16.mxu0 0
        %1861 = vmatpush1.bf16.msra.mxu0 0
        %1862 = vmatprep.subr.bf16.mxu0 0
        %1863 = vmatpush1.bf16.msra.mxu0 0
        %1864 = vmatprep.subr.bf16.mxu0 0
        %1865 = vmatpush1.bf16.msra.mxu0 0
        %1866 = vmatprep.subr.bf16.mxu0 0
        %1867 = vmatpush1.bf16.msra.mxu0 0
        %1868 = vmatprep.subr.bf16.mxu0 0
        %1869 = vmatpush1.bf16.msra.mxu0 0
        %1870 = vmatprep.subr.bf16.mxu0 0
        %1871 = vmatpush1.bf16.msra.mxu0 0
        %1872 = vmatprep.subr.bf16.mxu0 0
        %1873 = vmatpush1.bf16.msra.mxu0 0
        %1874 = vmatprep.subr.bf16.mxu0 0
        %1875 = vmatpush1.bf16.msra.mxu0 0
        %1876 = vmatprep.subr.bf16.mxu0 0
        %1877 = vmatpush1.bf16.msra.mxu0 0
        %1878 = vmatprep.subr.bf16.mxu0 0
        %1879 = vmatpush1.bf16.msra.mxu0 0
        %1880 = vmatprep.subr.bf16.mxu0 0
        %1881 = vmatpush1.bf16.msra.mxu0 0
        %1882 = vmatprep.subr.bf16.mxu0 0
        %1883 = vmatpush1.bf16.msra.mxu0 0
        %1884 = vmatprep.mubr.bf16.mxu0 0
        %1885 = vmatmul.mubr.bf16.gmra.mrb[0].mxu0 %v1776
        %v1886 = vpop.f32.mrb[0].mxu0
        %v1887 = vadd.f32 %v1822, %v1886
        %v1888 = vpop.f32.mrb[0].mxu0
        %v1889 = vpop.f32.mrb[0].mxu0
        %v1890 = vadd.f32 %v1825, %v1889
        %v1891 = vpop.f32.mrb[0].mxu0
        %1892 = vmatprep.mubr.bf16.mxu0 0
        %1893 = vmatmul.mubr.bf16.gmra.mrb[0].mxu0 %v1779
        %v1894 = vpop.f32.mrb[0].mxu0
        %v1895 = vadd.f32 %v1830, %v1894
        %v1896 = vpop.f32.mrb[0].mxu0
        %v1897 = vpop.f32.mrb[0].mxu0
        %v1898 = vadd.f32 %v1833, %v1897
        %v1899 = vpop.f32.mrb[0].mxu0
        %1900 = vmatprep.mubr.bf16.mxu0 0
        %1901 = vmatmul.mubr.bf16.gmra.mrb[0].mxu0 %v1782
        %v1902 = vpop.f32.mrb[0].mxu0
        %v1903 = vadd.f32 %v1838, %v1902
        %v1904 = vpop.f32.mrb[0].mxu0
        %v1905 = vpop.f32.mrb[0].mxu0
        %v1906 = vadd.f32 %v1841, %v1905
        %v1907 = vpop.f32.mrb[0].mxu0
        %1908 = vmatprep.mubr.bf16.mxu0 0
        %1909 = vmatmul.mubr.bf16.gmra.mrb[0].mxu0 %v1785
        %v1910 = vpop.f32.mrb[0].mxu0
        %v1911 = vadd.f32 %v1846, %v1910
        %v1912 = vpop.f32.mrb[0].mxu0
        %v1913 = vpop.f32.mrb[0].mxu0
        %v1914 = vadd.f32 %v1849, %v1913
        %v1915 = vpop.f32.mrb[0].mxu0
        %1916 = vdwg.mxu0
        %v1917 = vadd.f32 %v1579, %v1887
        %v1918 = vadd.f32 %v1580, %v1890
        %v1919 = vadd.f32 %v1581, %v1895
        %v1920 = vadd.f32 %v1582, %v1898
        %v1921 = vadd.f32 %v1583, %v1903
        %v1922 = vadd.f32 %v1584, %v1906
        %v1923 = vadd.f32 %v1585, %v1911
        %v1924 = vadd.f32 %v1586, %v1914
        %1925 = vst.msk [vmem:[#allocation3] sm:$0xff] %vm1141, %v1917
        %1926 = vst.msk [vmem:[#allocation3 + $0x8] sm:$0xff] %vm1141, %v1918
        %1927 = vst.msk [vmem:[#allocation3 + $0x10] sm:$0xff] %vm1141, %v1919
        %1928 = vst.msk [vmem:[#allocation3 + $0x18] sm:$0xff] %vm1141, %v1920
        %1929 = vst.msk [vmem:[#allocation3 + $0x20] sm:$0xff] %vm1141, %v1921
        %1930 = vst.msk [vmem:[#allocation3 + $0x28] sm:$0xff] %vm1141, %v1922
        %1931 = vst.msk [vmem:[#allocation3 + $0x30] sm:$0xff] %vm1141, %v1923
        %1932 = vst.msk [vmem:[#allocation3 + $0x38] sm:$0xff] %vm1141, %v1924
        // Predicated region
        $region69: #{_lambda_.8} parent=39 // pred_check
          %p1933 = pneg %p355
        $region70: #{_lambda_.8} parent=39 // pred_check_branch
          %1935 = sbr.rel (%p1933) target = $region72
        $region71: #{_lambda_.8} parent=39 // pred_region
          %v1936 = vld [vmem:[#allocation3] sm:$0xff]
          %v1937 = vld [vmem:[#allocation3 + $0x8] sm:$0xff]
          %v1938 = vld [vmem:[#allocation3 + $0x10] sm:$0xff]
          %v1939 = vld [vmem:[#allocation3 + $0x18] sm:$0xff]
          %v1940 = vld [vmem:[#allocation3 + $0x20] sm:$0xff]
          %v1941 = vld [vmem:[#allocation3 + $0x28] sm:$0xff]
          %v1942 = vld [vmem:[#allocation3 + $0x30] sm:$0xff]
          %v1943 = vld [vmem:[#allocation3 + $0x38] sm:$0xff]
          %v1944 = vld [vmem:[#allocation10] sm:$0x1]
          %v1946 = vlaneseq
          %v1947 = vshrl.u32 %v1946, 7
          %v1948 = vsub.s32 0, %v1947
          %v1949 = vrot.slane %v1944, %v1948
          %v1951 = vmul.f32 %v1936, %v1949
          %v1952 = vmul.f32 %v1937, %v1949
          %v1953 = vmul.f32 %v1938, %v1949
          %v1954 = vmul.f32 %v1939, %v1949
          %v1955 = vmul.f32 %v1940, %v1949
          %v1956 = vmul.f32 %v1941, %v1949
          %v1957 = vmul.f32 %v1942, %v1949
          %v1958 = vmul.f32 %v1943, %v1949
          %v1959 = vld [vmem:[#allocation11] sm:$0x1]
          %v1961 = vlaneseq
          %v1962 = vshrl.u32 %v1961, 7
          %v1963 = vsub.s32 0, %v1962
          %v1964 = vrot.slane %v1959, %v1963
          %v1966 = vadd.f32 %v1951, %v1964
          %v1967 = vadd.f32 %v1952, %v1964
          %v1968 = vadd.f32 %v1953, %v1964
          %v1969 = vadd.f32 %v1954, %v1964
          %v1970 = vadd.f32 %v1955, %v1964
          %v1971 = vadd.f32 %v1956, %v1964
          %v1972 = vadd.f32 %v1957, %v1964
          %v1973 = vadd.f32 %v1958, %v1964
          %v1974 = vmax.f32 %v1966, 0.0
          %v1975 = vmax.f32 %v1967, 0.0
          %v1976 = vmax.f32 %v1968, 0.0
          %v1977 = vmax.f32 %v1969, 0.0
          %v1978 = vmax.f32 %v1970, 0.0
          %v1979 = vmax.f32 %v1971, 0.0
          %v1980 = vmax.f32 %v1972, 0.0
          %v1981 = vmax.f32 %v1973, 0.0
          %v1982 = vld [vmem:[#allocation4] sm:$0xff]
          %v1983 = vld [vmem:[#allocation4 + $0x8] sm:$0xff]
          %v1984 = vld [vmem:[#allocation4 + $0x10] sm:$0xff]
          %v1985 = vld [vmem:[#allocation4 + $0x18] sm:$0xff]
          %v1986 = vld [vmem:[#allocation4 + $0x20] sm:$0xff]
          %v1987 = vld [vmem:[#allocation4 + $0x28] sm:$0xff]
          %v1988 = vld [vmem:[#allocation4 + $0x30] sm:$0xff]
          %v1989 = vld [vmem:[#allocation4 + $0x38] sm:$0xff]
          %v1990 = vpack.c.bf16 %v1975, %v1974
          %v1991 = vpack.c.bf16 %v1977, %v1976
          %v1992 = vpack.c.bf16 %v1979, %v1978
          %v1993 = vpack.c.bf16 %v1981, %v1980
          %v1994 = vld [vmem:[#allocation13] sm:$0xf]
          %v1995 = vld [vmem:[#allocation13 + $0x4] sm:$0xf]
          %v1996 = vld [vmem:[#allocation13 + $0x8] sm:$0xf]
          %v1997 = vld [vmem:[#allocation13 + $0xc] sm:$0xf]
          %v2002 = vunpack.c.l.b16 %v1994
          %v2003 = vunpack.c.l.b16 %v1995
          %v2004 = vunpack.c.l.b16 %v1996
          %v2005 = vunpack.c.l.b16 %v1997
          %v2006 = vpack.c.b16 %v2003, %v2002
          %v2007 = vpack.c.b16 %v2005, %v2004
          %v2011 = vsel %vm1141, %v1990, 0
          %v2014 = vsel %vm1141, %v1991, 0
          %v2017 = vsel %vm1141, %v1992, 0
          %v2020 = vsel %vm1141, %v1993, 0
          %2022 = vmatprep.subr.bf16.mxu0 0
          %2023 = vmatpush1.bf16.msra.mxu0 %v2006
          %2024 = vmatprep.subr.bf16.mxu0 0
          %2025 = vmatpush1.bf16.msra.mxu0 %v2007
          %2026 = vmatprep.subr.bf16.mxu0 0
          %2027 = vmatpush1.bf16.msra.mxu0 0
          %2028 = vmatprep.subr.bf16.mxu0 0
          %2029 = vmatpush1.bf16.msra.mxu0 0
          %2030 = vmatprep.subr.bf16.mxu0 0
          %2031 = vmatpush1.bf16.msra.mxu0 0
          %2032 = vmatprep.subr.bf16.mxu0 0
          %2033 = vmatpush1.bf16.msra.mxu0 0
          %2034 = vmatprep.subr.bf16.mxu0 0
          %2035 = vmatpush1.bf16.msra.mxu0 0
          %2036 = vmatprep.subr.bf16.mxu0 0
          %2037 = vmatpush1.bf16.msra.mxu0 0
          %2038 = vmatprep.subr.bf16.mxu0 0
          %2039 = vmatpush1.bf16.msra.mxu0 0
          %2040 = vmatprep.subr.bf16.mxu0 0
          %2041 = vmatpush1.bf16.msra.mxu0 0
          %2042 = vmatprep.subr.bf16.mxu0 0
          %2043 = vmatpush1.bf16.msra.mxu0 0
          %2044 = vmatprep.subr.bf16.mxu0 0
          %2045 = vmatpush1.bf16.msra.mxu0 0
          %2046 = vmatprep.subr.bf16.mxu0 0
          %2047 = vmatpush1.bf16.msra.mxu0 0
          %2048 = vmatprep.subr.bf16.mxu0 0
          %2049 = vmatpush1.bf16.msra.mxu0 0
          %2050 = vmatprep.subr.bf16.mxu0 0
          %2051 = vmatpush1.bf16.msra.mxu0 0
          %2052 = vmatprep.subr.bf16.mxu0 0
          %2053 = vmatpush1.bf16.msra.mxu0 0
          %2054 = vmatprep.mubr.bf16.mxu0 0
          %2055 = vmatmul.mubr.bf16.gmra.mrb[0].mxu0 %v2011
          %v2056 = vpop.f32.mrb[0].mxu0
          %v2057 = vadd.f32 0.0, %v2056
          %v2058 = vpop.f32.mrb[0].mxu0
          %v2059 = vpop.f32.mrb[0].mxu0
          %v2060 = vadd.f32 0.0, %v2059
          %v2061 = vpop.f32.mrb[0].mxu0
          %2062 = vmatprep.mubr.bf16.mxu0 0
          %2063 = vmatmul.mubr.bf16.gmra.mrb[0].mxu0 %v2014
          %v2064 = vpop.f32.mrb[0].mxu0
          %v2065 = vadd.f32 0.0, %v2064
          %v2066 = vpop.f32.mrb[0].mxu0
          %v2067 = vpop.f32.mrb[0].mxu0
          %v2068 = vadd.f32 0.0, %v2067
          %v2069 = vpop.f32.mrb[0].mxu0
          %2070 = vmatprep.mubr.bf16.mxu0 0
          %2071 = vmatmul.mubr.bf16.gmra.mrb[0].mxu0 %v2017
          %v2072 = vpop.f32.mrb[0].mxu0
          %v2073 = vadd.f32 0.0, %v2072
          %v2074 = vpop.f32.mrb[0].mxu0
          %v2075 = vpop.f32.mrb[0].mxu0
          %v2076 = vadd.f32 0.0, %v2075
          %v2077 = vpop.f32.mrb[0].mxu0
          %2078 = vmatprep.mubr.bf16.mxu0 0
          %2079 = vmatmul.mubr.bf16.gmra.mrb[0].mxu0 %v2020
          %v2080 = vpop.f32.mrb[0].mxu0
          %v2081 = vadd.f32 0.0, %v2080
          %v2082 = vpop.f32.mrb[0].mxu0
          %v2083 = vpop.f32.mrb[0].mxu0
          %v2084 = vadd.f32 0.0, %v2083
          %v2085 = vpop.f32.mrb[0].mxu0
          %2086 = vdwg.mxu0
          %v2087 = vadd.f32 %v1982, %v2057
          %v2088 = vadd.f32 %v1983, %v2060
          %v2089 = vadd.f32 %v1984, %v2065
          %v2090 = vadd.f32 %v1985, %v2068
          %v2091 = vadd.f32 %v1986, %v2073
          %v2092 = vadd.f32 %v1987, %v2076
          %v2093 = vadd.f32 %v1988, %v2081
          %v2094 = vadd.f32 %v1989, %v2084
          %2095 = vst [vmem:[#allocation4] sm:$0xff] %v2087
          %2096 = vst [vmem:[#allocation4 + $0x8] sm:$0xff] %v2088
          %2097 = vst [vmem:[#allocation4 + $0x10] sm:$0xff] %v2089
          %2098 = vst [vmem:[#allocation4 + $0x18] sm:$0xff] %v2090
          %2099 = vst [vmem:[#allocation4 + $0x20] sm:$0xff] %v2091
          %2100 = vst [vmem:[#allocation4 + $0x28] sm:$0xff] %v2092
          %2101 = vst [vmem:[#allocation4 + $0x30] sm:$0xff] %v2093
          %2102 = vst [vmem:[#allocation4 + $0x38] sm:$0xff] %v2094
        $region72: #{_lambda_.8} parent=39 // pred_fallthru
          _
        // Predicated region
        $region73: #{_lambda_.8} parent=39 // pred_check
          _
        $region74: #{_lambda_.8} parent=39 // pred_check_branch
          %2104 = sbr.rel (%p413) target = $region76
        $region75: #{_lambda_.8} parent=39 // pred_region
          %v2105 = vld [vmem:[#allocation4] sm:$0xff]
          %v2106 = vld [vmem:[#allocation4 + $0x8] sm:$0xff]
          %v2107 = vld [vmem:[#allocation4 + $0x10] sm:$0xff]
          %v2108 = vld [vmem:[#allocation4 + $0x18] sm:$0xff]
          %v2109 = vld [vmem:[#allocation4 + $0x20] sm:$0xff]
          %v2110 = vld [vmem:[#allocation4 + $0x28] sm:$0xff]
          %v2111 = vld [vmem:[#allocation4 + $0x30] sm:$0xff]
          %v2112 = vld [vmem:[#allocation4 + $0x38] sm:$0xff]
          %v2113 = vpack.c.bf16 %v2105, %v2105
          %v2114 = vpack.c.bf16 %v2106, %v2106
          %v2115 = vpack.c.bf16 %v2107, %v2107
          %v2116 = vpack.c.bf16 %v2108, %v2108
          %v2117 = vpack.c.bf16 %v2109, %v2109
          %v2118 = vpack.c.bf16 %v2110, %v2110
          %v2119 = vpack.c.bf16 %v2111, %v2111
          %v2120 = vpack.c.bf16 %v2112, %v2112
          %vm2121 = vcmask 60416
          %2122 = vst.msk [vmem:[%s351] sm:$0xf] %vm2121, %v2113
          %2123 = vst.msk [vmem:[%s351 + $0x4] sm:$0xf] %vm2121, %v2114
          %2124 = vst.msk [vmem:[%s351 + $0x8] sm:$0xf] %vm2121, %v2115
          %2125 = vst.msk [vmem:[%s351 + $0xc] sm:$0xf] %vm2121, %v2116
          %2126 = vst.msk [vmem:[%s351 + $0x10] sm:$0xf] %vm2121, %v2117
          %2127 = vst.msk [vmem:[%s351 + $0x14] sm:$0xf] %vm2121, %v2118
          %2128 = vst.msk [vmem:[%s351 + $0x18] sm:$0xf] %vm2121, %v2119
          %2129 = vst.msk [vmem:[%s351 + $0x1c] sm:$0xf] %vm2121, %v2120
        $region76: #{_lambda_.8} parent=39 // pred_fallthru
          _
        %s2130 = sand.u32 %s185, 1
        %s2131 = scalar_lea.sflag [#allocation7], %s2130
        %s2132 = sand.u32 %s185, 1
        %s2133 = smul.addr %s2132, 32
        %s2134 = scalar_lea.vmem [#allocation14], %s2133
        // Predicated region
        $region77: #{_lambda_.8} parent=39 // pred_check
          %p2135 = pneg %p195
        $region78: #{_lambda_.8} parent=39 // pred_check_branch
          %2137 = sbr.rel (%p2135) target = $region80
        $region79: #{_lambda_.8} parent=39 // pred_region
          %s2139 = ssub.s32 512, 512
          %2140 = vsyncadd %s2131, %s2139
          %s2141 = smul.addr %s29, 8
          %s2142 = smul.addr %s2141, 64
          %s2143 = scalar_lea.hbm %s5, %s2142
          %s2144 = sshll.u32 %s2134, 4
          %s2145 = int_to_ptr.vmem [resolvable:$true] %s2144
          %2150 = dma.vmem_to_hbm [thread:$0]  %s2145, 512, %s2143, %s2131, 64, 64, 4
        $region80: #{_lambda_.8} parent=39 // pred_fallthru
          _
      $region40: #{_lambda_.8} parent=5 // pred_fallthru
        _
      %p2151 = scmp.le.s32.totalorder 2, %s19
      // Predicated region
      $region81: #{_lambda_.8} parent=5 // pred_check
        %p2152 = pneg %p2151
      $region82: #{_lambda_.8} parent=5 // pred_check_branch
        %2154 = sbr.rel (%p2152) target = $region84
      $region83: #{_lambda_.8} parent=5 // pred_region
        %s2155 = ssub.s32 %s19, 2
        // Predicated region
        $region85: #{_lambda_.8} parent=83 // pred_check
          %p2156 = pneg %p201
        $region86: #{_lambda_.8} parent=83 // pred_check_branch
          %2158 = sbr.rel (%p2156) target = $region88
        $region87: #{_lambda_.8} parent=83 // pred_region
          %s2159 = sand.u32 %s186, 1
          %s2160 = scalar_lea.sflag [#allocation7], %s2159
          %s2161 = sand.u32 %s186, 1
          %s2162 = smul.addr %s2161, 32
          %s2163 = scalar_lea.vmem [#allocation14], %s2162
          %2164 = dma.done %s2160, 512
        $region88: #{_lambda_.8} parent=83 // pred_fallthru
          _
      $region84: #{_lambda_.8} parent=5 // pred_fallthru
        _
    $region6: #{_lambda_.8} parent=1 // loop_footer
      %s23 = sadd.s32 1, %s19
    $region7: #{_lambda_.8} parent=1 // loop_footer_branch
      %18 = sbr.rel target = $region3
    $region8: #{_lambda_.8} parent=1 // loop_exit
      _
    %2165 = vsyncpa [#allocation6], 1
    %s2166 = scalar_lea.sflag [#allocation6], 1
    %2167 = vsyncpa %s2166, 1
    %2168 = vsyncpa [#allocation9], 1
    %2169 = vsyncpa [#allocation12], 1
    %2170 = vsyncpa [#allocation7], 1
    %s2171 = scalar_lea.sflag [#allocation7], 1
    %2172 = vsyncpa %s2171, 1

// kernel: _lambda_.5
$region0: #{_lambda_.5}
  #allocation0 [shape = 'u32[]', space=smem, size = 0x4, offset = 0x4, fixed_abs, tag = 'smem constant byte address 0x4 - core index']
  #allocation1 [shape = 'u32[144,128]{1,0:T(1,128)}', space=vmem, size = 0x12000, scoped, tag = 'internal scratch']
  #allocation2 [shape = 'bf16[2,12,12,32]{3,2,1,0:T(8,128)(2,1)}', space=vmem, size = 0x18000, scoped, tag = 'scratch operand']
  #allocation3 [shape = 'f32[128,32]{1,0:T(8,128)}', space=vmem, size = 0x10000, scoped, tag = 'scratch operand']
  %s0 = inlined_call_operand.hbm [shape: bf16[2,8,8,32], index: 0, kind: input, shape index: {}]
  %s1 = inlined_call_operand.hbm [shape: bf16[9,32,32], index: 1, kind: input, shape index: {}]
  %s2 = inlined_call_operand.hbm [shape: f32[1,32], index: 2, kind: input, shape index: {}]
  %s3 = inlined_call_operand.hbm [shape: f32[1,32], index: 3, kind: input, shape index: {}]
  %s4 = inlined_call_operand.hbm [shape: bf16[2,8,8,32], index: 4, kind: output, shape index: {}]
  %s5 = sld [smem:[#allocation0]]
  $region50: #{_lambda_.5} parent=0
    _
  %s7 = ssub.s32 1, %s5
  %s8 = scalar_select 0, %s7, %s5
  $region1: #{_lambda_.5} parent=0
    #allocation4 [shape = 'u8[32768]{0}', space=vmem, size = 0x8000, scoped, tag = 'input window, operand 0, single buffered']
    #allocation5 [shape = 's32[1]{0}', space=sflag, size = 0x4, scoped, tag = 'scoped memory for _lambda_.5']
    #allocation6 [shape = 's32[1]{0}', space=sflag, size = 0x4, scoped, tag = 'scoped memory for _lambda_.5']
    #allocation7 [shape = 'u8[73728]{0}', space=vmem, size = 0x12000, scoped, tag = 'input window, operand 1, single buffered']
    #allocation8 [shape = 's32[1]{0}', space=sflag, size = 0x4, scoped, tag = 'scoped memory for _lambda_.5']
    #allocation9 [shape = 'u8[512]{0}', space=vmem, size = 0x400, scoped, tag = 'input window, operand 2, single buffered']
    #allocation10 [shape = 'u8[512]{0}', space=vmem, size = 0x400, scoped, tag = 'input window, operand 3, single buffered']
    #allocation11 [shape = 's32[1]{0}', space=sflag, size = 0x4, scoped, tag = 'scoped memory for _lambda_.5']
    #allocation12 [shape = 'u8[32768]{0}', space=vmem, size = 0x8000, scoped, tag = 'output window, operand 0, single buffered']
    %9 = vsyncpa [#allocation5], 0
    %10 = vsyncpa [#allocation8], 0
    %11 = vsyncpa [#allocation11], 0
    %12 = vsyncpa [#allocation6], 0
    // Predicated region
    $region2: #{_lambda_.5} parent=1 // pred_check
      _
    $region3: #{_lambda_.5} parent=1 // pred_check_branch
      %14 = sbr.rel (0) target = $region5
    $region4: #{_lambda_.5} parent=1 // pred_region
      %s16 = ssub.s32 1024, 1024
      %17 = vsyncadd [#allocation5], %s16
      %s18 = sshll.u32 [#allocation4], 4
      %s19 = int_to_ptr.vmem [resolvable:$true] %s18
      %24 = dma.hbm_to_vmem [thread:$0]  %s0, 1024, %s19, [#allocation5], 64, 64, 4
    $region5: #{_lambda_.5} parent=1 // pred_fallthru
      _
    // Predicated region
    $region6: #{_lambda_.5} parent=1 // pred_check
      _
    $region7: #{_lambda_.5} parent=1 // pred_check_branch
      %26 = sbr.rel (0) target = $region9
    $region8: #{_lambda_.5} parent=1 // pred_region
      %s28 = ssub.s32 2304, 2304
      %29 = vsyncadd [#allocation8], %s28
      %s30 = sshll.u32 [#allocation7], 4
      %s31 = int_to_ptr.vmem [resolvable:$true] %s30
      %36 = dma.hbm_to_vmem [thread:$0]  %s1, 2304, %s31, [#allocation8], 64, 64, 4
    $region9: #{_lambda_.5} parent=1 // pred_fallthru
      _
    // Predicated region
    $region10: #{_lambda_.5} parent=1 // pred_check
      _
    $region11: #{_lambda_.5} parent=1 // pred_check_branch
      %38 = sbr.rel (0) target = $region13
    $region12: #{_lambda_.5} parent=1 // pred_region
      %s40 = ssub.s32 16, 16
      %41 = vsyncadd [#allocation8], %s40
      %s43 = sshll.u32 [#allocation9], 4
      %s44 = int_to_ptr.vmem [resolvable:$true] %s43
      %46 = dma.hbm_to_vmem [thread:$0]  %s2, 16, %s44, [#allocation8]
    $region13: #{_lambda_.5} parent=1 // pred_fallthru
      _
    // Predicated region
    $region14: #{_lambda_.5} parent=1 // pred_check
      _
    $region15: #{_lambda_.5} parent=1 // pred_check_branch
      %48 = sbr.rel (0) target = $region17
    $region16: #{_lambda_.5} parent=1 // pred_region
      %s50 = ssub.s32 16, 16
      %51 = vsyncadd [#allocation11], %s50
      %s53 = sshll.u32 [#allocation10], 4
      %s54 = int_to_ptr.vmem [resolvable:$true] %s53
      %56 = dma.hbm_to_vmem [thread:$0]  %s3, 16, %s54, [#allocation11]
    $region17: #{_lambda_.5} parent=1 // pred_fallthru
      _
    // Predicated region
    $region18: #{_lambda_.5} parent=1 // pred_check
      _
    $region19: #{_lambda_.5} parent=1 // pred_check_branch
      %58 = sbr.rel (0) target = $region21
    $region20: #{_lambda_.5} parent=1 // pred_region
      %59 = dma.done [#allocation5], 1024
    $region21: #{_lambda_.5} parent=1 // pred_fallthru
      _
    // Predicated region
    $region22: #{_lambda_.5} parent=1 // pred_check
      _
    $region23: #{_lambda_.5} parent=1 // pred_check_branch
      %61 = sbr.rel (0) target = $region25
    $region24: #{_lambda_.5} parent=1 // pred_region
      %62 = dma.done [#allocation8], 2304
    $region25: #{_lambda_.5} parent=1 // pred_fallthru
      _
    // Predicated region
    $region26: #{_lambda_.5} parent=1 // pred_check
      _
    $region27: #{_lambda_.5} parent=1 // pred_check_branch
      %64 = sbr.rel (0) target = $region29
    $region28: #{_lambda_.5} parent=1 // pred_region
      %65 = dma.done [#allocation8], 16
    $region29: #{_lambda_.5} parent=1 // pred_fallthru
      _
    // Predicated region
    $region30: #{_lambda_.5} parent=1 // pred_check
      _
    $region31: #{_lambda_.5} parent=1 // pred_check_branch
      %67 = sbr.rel (0) target = $region33
    $region32: #{_lambda_.5} parent=1 // pred_region
      %68 = dma.done [#allocation11], 16
    $region33: #{_lambda_.5} parent=1 // pred_fallthru
      _
    %p70 = scmp.eq.s32.totalorder 0, 0
    // Predicated region
    $region34: #{_lambda_.5} parent=1 // pred_check
      %p71 = pneg %p70
    $region35: #{_lambda_.5} parent=1 // pred_check_branch
      %73 = sbr.rel (%p71) target = $region37
    $region36: #{_lambda_.5} parent=1 // pred_region
      %vm74 = vcmask 261120
      %75 = vst.msk [vmem:[#allocation3] sm:$0xff] %vm74, 0.0
      %76 = vst.msk [vmem:[#allocation3 + $0x8] sm:$0xff] %vm74, 0.0
      %77 = vst.msk [vmem:[#allocation3 + $0x10] sm:$0xff] %vm74, 0.0
      %78 = vst.msk [vmem:[#allocation3 + $0x18] sm:$0xff] %vm74, 0.0
      %79 = vst.msk [vmem:[#allocation3 + $0x20] sm:$0xff] %vm74, 0.0
      %80 = vst.msk [vmem:[#allocation3 + $0x28] sm:$0xff] %vm74, 0.0
      %81 = vst.msk [vmem:[#allocation3 + $0x30] sm:$0xff] %vm74, 0.0
      %82 = vst.msk [vmem:[#allocation3 + $0x38] sm:$0xff] %vm74, 0.0
      %83 = vst.msk [vmem:[#allocation3 + $0x40] sm:$0xff] %vm74, 0.0
      %84 = vst.msk [vmem:[#allocation3 + $0x48] sm:$0xff] %vm74, 0.0
      %85 = vst.msk [vmem:[#allocation3 + $0x50] sm:$0xff] %vm74, 0.0
      %86 = vst.msk [vmem:[#allocation3 + $0x58] sm:$0xff] %vm74, 0.0
      %87 = vst.msk [vmem:[#allocation3 + $0x60] sm:$0xff] %vm74, 0.0
      %88 = vst.msk [vmem:[#allocation3 + $0x68] sm:$0xff] %vm74, 0.0
      %89 = vst.msk [vmem:[#allocation3 + $0x70] sm:$0xff] %vm74, 0.0
      %90 = vst.msk [vmem:[#allocation3 + $0x78] sm:$0xff] %vm74, 0.0
      %vm91 = vcmask 257024
      %92 = vst.msk [vmem:[#allocation2] sm:$0xf] %vm91, 0
      %vm93 = vcmask 254976
      %94 = vst.msk [vmem:[#allocation2 + $0x4] sm:$0x3] %vm93, 0
      %95 = vst.msk [vmem:[#allocation2 + $0x8] sm:$0xf] %vm91, 0
      %96 = vst.msk [vmem:[#allocation2 + $0xc] sm:$0x3] %vm93, 0
      %97 = vst.msk [vmem:[#allocation2 + $0x10] sm:$0xf] %vm91, 0
      %98 = vst.msk [vmem:[#allocation2 + $0x14] sm:$0x3] %vm93, 0
      %99 = vst.msk [vmem:[#allocation2 + $0x18] sm:$0xf] %vm91, 0
      %100 = vst.msk [vmem:[#allocation2 + $0x1c] sm:$0x3] %vm93, 0
      %101 = vst.msk [vmem:[#allocation2 + $0x20] sm:$0xf] %vm91, 0
      %102 = vst.msk [vmem:[#allocation2 + $0x24] sm:$0x3] %vm93, 0
      %103 = vst.msk [vmem:[#allocation2 + $0x28] sm:$0xf] %vm91, 0
      %104 = vst.msk [vmem:[#allocation2 + $0x2c] sm:$0x3] %vm93, 0
      %105 = vst.msk [vmem:[#allocation2 + $0x30] sm:$0xf] %vm91, 0
      %106 = vst.msk [vmem:[#allocation2 + $0x34] sm:$0x3] %vm93, 0
      %107 = vst.msk [vmem:[#allocation2 + $0x38] sm:$0xf] %vm91, 0
      %108 = vst.msk [vmem:[#allocation2 + $0x3c] sm:$0x3] %vm93, 0
      %109 = vst.msk [vmem:[#allocation2 + $0x40] sm:$0xf] %vm91, 0
      %110 = vst.msk [vmem:[#allocation2 + $0x44] sm:$0x3] %vm93, 0
      %111 = vst.msk [vmem:[#allocation2 + $0x48] sm:$0xf] %vm91, 0
      %112 = vst.msk [vmem:[#allocation2 + $0x4c] sm:$0x3] %vm93, 0
      %113 = vst.msk [vmem:[#allocation2 + $0x50] sm:$0xf] %vm91, 0
      %114 = vst.msk [vmem:[#allocation2 + $0x54] sm:$0x3] %vm93, 0
      %115 = vst.msk [vmem:[#allocation2 + $0x58] sm:$0xf] %vm91, 0
      %116 = vst.msk [vmem:[#allocation2 + $0x5c] sm:$0x3] %vm93, 0
      %117 = vst.msk [vmem:[#allocation2 + $0x60] sm:$0xf] %vm91, 0
      %118 = vst.msk [vmem:[#allocation2 + $0x64] sm:$0x3] %vm93, 0
      %119 = vst.msk [vmem:[#allocation2 + $0x68] sm:$0xf] %vm91, 0
      %120 = vst.msk [vmem:[#allocation2 + $0x6c] sm:$0x3] %vm93, 0
      %121 = vst.msk [vmem:[#allocation2 + $0x70] sm:$0xf] %vm91, 0
      %122 = vst.msk [vmem:[#allocation2 + $0x74] sm:$0x3] %vm93, 0
      %123 = vst.msk [vmem:[#allocation2 + $0x78] sm:$0xf] %vm91, 0
      %124 = vst.msk [vmem:[#allocation2 + $0x7c] sm:$0x3] %vm93, 0
      %125 = vst.msk [vmem:[#allocation2 + $0x80] sm:$0xf] %vm91, 0
      %126 = vst.msk [vmem:[#allocation2 + $0x84] sm:$0x3] %vm93, 0
      %127 = vst.msk [vmem:[#allocation2 + $0x88] sm:$0xf] %vm91, 0
      %128 = vst.msk [vmem:[#allocation2 + $0x8c] sm:$0x3] %vm93, 0
      %129 = vst.msk [vmem:[#allocation2 + $0x90] sm:$0xf] %vm91, 0
      %130 = vst.msk [vmem:[#allocation2 + $0x94] sm:$0x3] %vm93, 0
      %131 = vst.msk [vmem:[#allocation2 + $0x98] sm:$0xf] %vm91, 0
      %132 = vst.msk [vmem:[#allocation2 + $0x9c] sm:$0x3] %vm93, 0
      %133 = vst.msk [vmem:[#allocation2 + $0xa0] sm:$0xf] %vm91, 0
      %134 = vst.msk [vmem:[#allocation2 + $0xa4] sm:$0x3] %vm93, 0
      %135 = vst.msk [vmem:[#allocation2 + $0xa8] sm:$0xf] %vm91, 0
      %136 = vst.msk [vmem:[#allocation2 + $0xac] sm:$0x3] %vm93, 0
      %137 = vst.msk [vmem:[#allocation2 + $0xb0] sm:$0xf] %vm91, 0
      %138 = vst.msk [vmem:[#allocation2 + $0xb4] sm:$0x3] %vm93, 0
      %139 = vst.msk [vmem:[#allocation2 + $0xb8] sm:$0xf] %vm91, 0
      %140 = vst.msk [vmem:[#allocation2 + $0xbc] sm:$0x3] %vm93, 0
    $region37: #{_lambda_.5} parent=1 // pred_fallthru
      _
    %v141 = vld [vmem:[#allocation4] sm:$0xf]
    %v142 = vld [vmem:[#allocation4 + $0x4] sm:$0xf]
    %v143 = vld [vmem:[#allocation4 + $0x8] sm:$0xf]
    %v144 = vld [vmem:[#allocation4 + $0xc] sm:$0xf]
    %v145 = vld [vmem:[#allocation4 + $0x10] sm:$0xf]
    %v146 = vld [vmem:[#allocation4 + $0x14] sm:$0xf]
    %v147 = vld [vmem:[#allocation4 + $0x18] sm:$0xf]
    %v148 = vld [vmem:[#allocation4 + $0x1c] sm:$0xf]
    %v149 = vld [vmem:[#allocation4 + $0x20] sm:$0xf]
    %v150 = vld [vmem:[#allocation4 + $0x24] sm:$0xf]
    %v151 = vld [vmem:[#allocation4 + $0x28] sm:$0xf]
    %v152 = vld [vmem:[#allocation4 + $0x2c] sm:$0xf]
    %v153 = vld [vmem:[#allocation4 + $0x30] sm:$0xf]
    %v154 = vld [vmem:[#allocation4 + $0x34] sm:$0xf]
    %v155 = vld [vmem:[#allocation4 + $0x38] sm:$0xf]
    %v156 = vld [vmem:[#allocation4 + $0x3c] sm:$0xf]
    %v173 = vrot.slane %v141, 7
    %v174 = vrot.slane %v173, 4
    %v175 = vrot.slane %v142, 7
    %v176 = vrot.slane %v175, 4
    %v177 = vrot.slane %v143, 7
    %v178 = vrot.slane %v177, 4
    %v179 = vrot.slane %v144, 7
    %v180 = vrot.slane %v179, 4
    %v181 = vrot.slane %v145, 7
    %v182 = vrot.slane %v181, 4
    %v183 = vrot.slane %v146, 7
    %v184 = vrot.slane %v183, 4
    %v185 = vrot.slane %v147, 7
    %v186 = vrot.slane %v185, 4
    %v187 = vrot.slane %v148, 7
    %v188 = vrot.slane %v187, 4
    %v189 = vrot.slane %v149, 7
    %v190 = vrot.slane %v189, 4
    %v191 = vrot.slane %v150, 7
    %v192 = vrot.slane %v191, 4
    %v193 = vrot.slane %v151, 7
    %v194 = vrot.slane %v193, 4
    %v195 = vrot.slane %v152, 7
    %v196 = vrot.slane %v195, 4
    %v197 = vrot.slane %v153, 7
    %v198 = vrot.slane %v197, 4
    %v199 = vrot.slane %v154, 7
    %v200 = vrot.slane %v199, 4
    %v201 = vrot.slane %v155, 7
    %v202 = vrot.slane %v201, 4
    %v203 = vrot.slane %v156, 7
    %v204 = vrot.slane %v203, 4
    %s237 = scalar_lea.vmem [#allocation2], 16
    %vm238 = vcmask 257025
    %239 = vst.msk [vmem:[%s237] sm:$0xe] %vm238, %v173
    %vm240 = vcmask 253952
    %241 = vst.msk [vmem:[%s237 + $0x4] sm:$0x1] %vm240, %v174
    %242 = vst.msk [vmem:[%s237 + $0x8] sm:$0xe] %vm238, %v175
    %243 = vst.msk [vmem:[%s237 + $0xc] sm:$0x1] %vm240, %v176
    %244 = vst.msk [vmem:[%s237 + $0x10] sm:$0xe] %vm238, %v177
    %245 = vst.msk [vmem:[%s237 + $0x14] sm:$0x1] %vm240, %v178
    %246 = vst.msk [vmem:[%s237 + $0x18] sm:$0xe] %vm238, %v179
    %247 = vst.msk [vmem:[%s237 + $0x1c] sm:$0x1] %vm240, %v180
    %248 = vst.msk [vmem:[%s237 + $0x20] sm:$0xe] %vm238, %v181
    %249 = vst.msk [vmem:[%s237 + $0x24] sm:$0x1] %vm240, %v182
    %250 = vst.msk [vmem:[%s237 + $0x28] sm:$0xe] %vm238, %v183
    %251 = vst.msk [vmem:[%s237 + $0x2c] sm:$0x1] %vm240, %v184
    %252 = vst.msk [vmem:[%s237 + $0x30] sm:$0xe] %vm238, %v185
    %253 = vst.msk [vmem:[%s237 + $0x34] sm:$0x1] %vm240, %v186
    %254 = vst.msk [vmem:[%s237 + $0x38] sm:$0xe] %vm238, %v187
    %255 = vst.msk [vmem:[%s237 + $0x3c] sm:$0x1] %vm240, %v188
    %256 = vst.msk [vmem:[%s237 + $0x60] sm:$0xe] %vm238, %v189
    %257 = vst.msk [vmem:[%s237 + $0x64] sm:$0x1] %vm240, %v190
    %258 = vst.msk [vmem:[%s237 + $0x68] sm:$0xe] %vm238, %v191
    %259 = vst.msk [vmem:[%s237 + $0x6c] sm:$0x1] %vm240, %v192
    %260 = vst.msk [vmem:[%s237 + $0x70] sm:$0xe] %vm238, %v193
    %261 = vst.msk [vmem:[%s237 + $0x74] sm:$0x1] %vm240, %v194
    %262 = vst.msk [vmem:[%s237 + $0x78] sm:$0xe] %vm238, %v195
    %263 = vst.msk [vmem:[%s237 + $0x7c] sm:$0x1] %vm240, %v196
    %264 = vst.msk [vmem:[%s237 + $0x80] sm:$0xe] %vm238, %v197
    %265 = vst.msk [vmem:[%s237 + $0x84] sm:$0x1] %vm240, %v198
    %266 = vst.msk [vmem:[%s237 + $0x88] sm:$0xe] %vm238, %v199
    %267 = vst.msk [vmem:[%s237 + $0x8c] sm:$0x1] %vm240, %v200
    %268 = vst.msk [vmem:[%s237 + $0x90] sm:$0xe] %vm238, %v201
    %269 = vst.msk [vmem:[%s237 + $0x94] sm:$0x1] %vm240, %v202
    %270 = vst.msk [vmem:[%s237 + $0x98] sm:$0xe] %vm238, %v203
    %271 = vst.msk [vmem:[%s237 + $0x9c] sm:$0x1] %vm240, %v204
    %v272 = vld [vmem:[#allocation2] sm:$0xf]
    %v273 = vld [vmem:[#allocation2 + $0x8] sm:$0xf]
    %v274 = vld [vmem:[#allocation2 + $0x10] sm:$0xf]
    %v275 = vld [vmem:[#allocation2 + $0x18] sm:$0xf]
    %v276 = vld [vmem:[#allocation2 + $0x20] sm:$0xf]
    %v277 = vld [vmem:[#allocation2 + $0x28] sm:$0xf]
    %v278 = vld [vmem:[#allocation2 + $0x30] sm:$0xf]
    %v279 = vld [vmem:[#allocation2 + $0x38] sm:$0xf]
    %v280 = vld [vmem:[#allocation2 + $0x60] sm:$0xf]
    %v281 = vld [vmem:[#allocation2 + $0x68] sm:$0xf]
    %v282 = vld [vmem:[#allocation2 + $0x70] sm:$0xf]
    %v283 = vld [vmem:[#allocation2 + $0x78] sm:$0xf]
    %v284 = vld [vmem:[#allocation2 + $0x80] sm:$0xf]
    %v285 = vld [vmem:[#allocation2 + $0x88] sm:$0xf]
    %v286 = vld [vmem:[#allocation2 + $0x90] sm:$0xf]
    %v287 = vld [vmem:[#allocation2 + $0x98] sm:$0xf]
    %v288 = vld [vmem:[#allocation2] sm:$0xe]
    %v289 = vld [vmem:[#allocation2 + $0x4] sm:$0x1]
    %v290 = vld [vmem:[#allocation2 + $0x8] sm:$0xe]
    %v291 = vld [vmem:[#allocation2 + $0xc] sm:$0x1]
    %v292 = vld [vmem:[#allocation2 + $0x10] sm:$0xe]
    %v293 = vld [vmem:[#allocation2 + $0x14] sm:$0x1]
    %v294 = vld [vmem:[#allocation2 + $0x18] sm:$0xe]
    %v295 = vld [vmem:[#allocation2 + $0x1c] sm:$0x1]
    %v296 = vld [vmem:[#allocation2 + $0x20] sm:$0xe]
    %v297 = vld [vmem:[#allocation2 + $0x24] sm:$0x1]
    %v298 = vld [vmem:[#allocation2 + $0x28] sm:$0xe]
    %v299 = vld [vmem:[#allocation2 + $0x2c] sm:$0x1]
    %v300 = vld [vmem:[#allocation2 + $0x30] sm:$0xe]
    %v301 = vld [vmem:[#allocation2 + $0x34] sm:$0x1]
    %v302 = vld [vmem:[#allocation2 + $0x38] sm:$0xe]
    %v303 = vld [vmem:[#allocation2 + $0x3c] sm:$0x1]
    %v304 = vld [vmem:[#allocation2 + $0x60] sm:$0xe]
    %v305 = vld [vmem:[#allocation2 + $0x64] sm:$0x1]
    %v306 = vld [vmem:[#allocation2 + $0x68] sm:$0xe]
    %v307 = vld [vmem:[#allocation2 + $0x6c] sm:$0x1]
    %v308 = vld [vmem:[#allocation2 + $0x70] sm:$0xe]
    %v309 = vld [vmem:[#allocation2 + $0x74] sm:$0x1]
    %v310 = vld [vmem:[#allocation2 + $0x78] sm:$0xe]
    %v311 = vld [vmem:[#allocation2 + $0x7c] sm:$0x1]
    %v312 = vld [vmem:[#allocation2 + $0x80] sm:$0xe]
    %v313 = vld [vmem:[#allocation2 + $0x84] sm:$0x1]
    %v314 = vld [vmem:[#allocation2 + $0x88] sm:$0xe]
    %v315 = vld [vmem:[#allocation2 + $0x8c] sm:$0x1]
    %v316 = vld [vmem:[#allocation2 + $0x90] sm:$0xe]
    %v317 = vld [vmem:[#allocation2 + $0x94] sm:$0x1]
    %v318 = vld [vmem:[#allocation2 + $0x98] sm:$0xe]
    %v319 = vld [vmem:[#allocation2 + $0x9c] sm:$0x1]
    %v320 = vld [vmem:[#allocation2] sm:$0xc]
    %v321 = vld [vmem:[#allocation2 + $0x4] sm:$0x3]
    %v322 = vld [vmem:[#allocation2 + $0x8] sm:$0xc]
    %v323 = vld [vmem:[#allocation2 + $0xc] sm:$0x3]
    %v324 = vld [vmem:[#allocation2 + $0x10] sm:$0xc]
    %v325 = vld [vmem:[#allocation2 + $0x14] sm:$0x3]
    %v326 = vld [vmem:[#allocation2 + $0x18] sm:$0xc]
    %v327 = vld [vmem:[#allocation2 + $0x1c] sm:$0x3]
    %v328 = vld [vmem:[#allocation2 + $0x20] sm:$0xc]
    %v329 = vld [vmem:[#allocation2 + $0x24] sm:$0x3]
    %v330 = vld [vmem:[#allocation2 + $0x28] sm:$0xc]
    %v331 = vld [vmem:[#allocation2 + $0x2c] sm:$0x3]
    %v332 = vld [vmem:[#allocation2 + $0x30] sm:$0xc]
    %v333 = vld [vmem:[#allocation2 + $0x34] sm:$0x3]
    %v334 = vld [vmem:[#allocation2 + $0x38] sm:$0xc]
    %v335 = vld [vmem:[#allocation2 + $0x3c] sm:$0x3]
    %v336 = vld [vmem:[#allocation2 + $0x60] sm:$0xc]
    %v337 = vld [vmem:[#allocation2 + $0x64] sm:$0x3]
    %v338 = vld [vmem:[#allocation2 + $0x68] sm:$0xc]
    %v339 = vld [vmem:[#allocation2 + $0x6c] sm:$0x3]
    %v340 = vld [vmem:[#allocation2 + $0x70] sm:$0xc]
    %v341 = vld [vmem:[#allocation2 + $0x74] sm:$0x3]
    %v342 = vld [vmem:[#allocation2 + $0x78] sm:$0xc]
    %v343 = vld [vmem:[#allocation2 + $0x7c] sm:$0x3]
    %v344 = vld [vmem:[#allocation2 + $0x80] sm:$0xc]
    %v345 = vld [vmem:[#allocation2 + $0x84] sm:$0x3]
    %v346 = vld [vmem:[#allocation2 + $0x88] sm:$0xc]
    %v347 = vld [vmem:[#allocation2 + $0x8c] sm:$0x3]
    %v348 = vld [vmem:[#allocation2 + $0x90] sm:$0xc]
    %v349 = vld [vmem:[#allocation2 + $0x94] sm:$0x3]
    %v350 = vld [vmem:[#allocation2 + $0x98] sm:$0xc]
    %v351 = vld [vmem:[#allocation2 + $0x9c] sm:$0x3]
    %v352 = vld [vmem:[%s237] sm:$0xf]
    %v353 = vld [vmem:[%s237 + $0x8] sm:$0xf]
    %v354 = vld [vmem:[%s237 + $0x10] sm:$0xf]
    %v355 = vld [vmem:[%s237 + $0x18] sm:$0xf]
    %v356 = vld [vmem:[%s237 + $0x20] sm:$0xf]
    %v357 = vld [vmem:[%s237 + $0x28] sm:$0xf]
    %v358 = vld [vmem:[%s237 + $0x30] sm:$0xf]
    %v359 = vld [vmem:[%s237 + $0x38] sm:$0xf]
    %v360 = vld [vmem:[%s237 + $0x60] sm:$0xf]
    %v361 = vld [vmem:[%s237 + $0x68] sm:$0xf]
    %v362 = vld [vmem:[%s237 + $0x70] sm:$0xf]
    %v363 = vld [vmem:[%s237 + $0x78] sm:$0xf]
    %v364 = vld [vmem:[%s237 + $0x80] sm:$0xf]
    %v365 = vld [vmem:[%s237 + $0x88] sm:$0xf]
    %v366 = vld [vmem:[%s237 + $0x90] sm:$0xf]
    %v367 = vld [vmem:[%s237 + $0x98] sm:$0xf]
    %v368 = vld [vmem:[%s237] sm:$0xe]
    %v369 = vld [vmem:[%s237 + $0x4] sm:$0x1]
    %v370 = vld [vmem:[%s237 + $0x8] sm:$0xe]
    %v371 = vld [vmem:[%s237 + $0xc] sm:$0x1]
    %v372 = vld [vmem:[%s237 + $0x10] sm:$0xe]
    %v373 = vld [vmem:[%s237 + $0x14] sm:$0x1]
    %v374 = vld [vmem:[%s237 + $0x18] sm:$0xe]
    %v375 = vld [vmem:[%s237 + $0x1c] sm:$0x1]
    %v376 = vld [vmem:[%s237 + $0x20] sm:$0xe]
    %v377 = vld [vmem:[%s237 + $0x24] sm:$0x1]
    %v378 = vld [vmem:[%s237 + $0x28] sm:$0xe]
    %v379 = vld [vmem:[%s237 + $0x2c] sm:$0x1]
    %v380 = vld [vmem:[%s237 + $0x30] sm:$0xe]
    %v381 = vld [vmem:[%s237 + $0x34] sm:$0x1]
    %v382 = vld [vmem:[%s237 + $0x38] sm:$0xe]
    %v383 = vld [vmem:[%s237 + $0x3c] sm:$0x1]
    %v384 = vld [vmem:[%s237 + $0x60] sm:$0xe]
    %v385 = vld [vmem:[%s237 + $0x64] sm:$0x1]
    %v386 = vld [vmem:[%s237 + $0x68] sm:$0xe]
    %v387 = vld [vmem:[%s237 + $0x6c] sm:$0x1]
    %v388 = vld [vmem:[%s237 + $0x70] sm:$0xe]
    %v389 = vld [vmem:[%s237 + $0x74] sm:$0x1]
    %v390 = vld [vmem:[%s237 + $0x78] sm:$0xe]
    %v391 = vld [vmem:[%s237 + $0x7c] sm:$0x1]
    %v392 = vld [vmem:[%s237 + $0x80] sm:$0xe]
    %v393 = vld [vmem:[%s237 + $0x84] sm:$0x1]
    %v394 = vld [vmem:[%s237 + $0x88] sm:$0xe]
    %v395 = vld [vmem:[%s237 + $0x8c] sm:$0x1]
    %v396 = vld [vmem:[%s237 + $0x90] sm:$0xe]
    %v397 = vld [vmem:[%s237 + $0x94] sm:$0x1]
    %v398 = vld [vmem:[%s237 + $0x98] sm:$0xe]
    %v399 = vld [vmem:[%s237 + $0x9c] sm:$0x1]
    %v400 = vld [vmem:[%s237] sm:$0xc]
    %v401 = vld [vmem:[%s237 + $0x4] sm:$0x3]
    %v402 = vld [vmem:[%s237 + $0x8] sm:$0xc]
    %v403 = vld [vmem:[%s237 + $0xc] sm:$0x3]
    %v404 = vld [vmem:[%s237 + $0x10] sm:$0xc]
    %v405 = vld [vmem:[%s237 + $0x14] sm:$0x3]
    %v406 = vld [vmem:[%s237 + $0x18] sm:$0xc]
    %v407 = vld [vmem:[%s237 + $0x1c] sm:$0x3]
    %v408 = vld [vmem:[%s237 + $0x20] sm:$0xc]
    %v409 = vld [vmem:[%s237 + $0x24] sm:$0x3]
    %v410 = vld [vmem:[%s237 + $0x28] sm:$0xc]
    %v411 = vld [vmem:[%s237 + $0x2c] sm:$0x3]
    %v412 = vld [vmem:[%s237 + $0x30] sm:$0xc]
    %v413 = vld [vmem:[%s237 + $0x34] sm:$0x3]
    %v414 = vld [vmem:[%s237 + $0x38] sm:$0xc]
    %v415 = vld [vmem:[%s237 + $0x3c] sm:$0x3]
    %v416 = vld [vmem:[%s237 + $0x60] sm:$0xc]
    %v417 = vld [vmem:[%s237 + $0x64] sm:$0x3]
    %v418 = vld [vmem:[%s237 + $0x68] sm:$0xc]
    %v419 = vld [vmem:[%s237 + $0x6c] sm:$0x3]
    %v420 = vld [vmem:[%s237 + $0x70] sm:$0xc]
    %v421 = vld [vmem:[%s237 + $0x74] sm:$0x3]
    %v422 = vld [vmem:[%s237 + $0x78] sm:$0xc]
    %v423 = vld [vmem:[%s237 + $0x7c] sm:$0x3]
    %v424 = vld [vmem:[%s237 + $0x80] sm:$0xc]
    %v425 = vld [vmem:[%s237 + $0x84] sm:$0x3]
    %v426 = vld [vmem:[%s237 + $0x88] sm:$0xc]
    %v427 = vld [vmem:[%s237 + $0x8c] sm:$0x3]
    %v428 = vld [vmem:[%s237 + $0x90] sm:$0xc]
    %v429 = vld [vmem:[%s237 + $0x94] sm:$0x3]
    %v430 = vld [vmem:[%s237 + $0x98] sm:$0xc]
    %v431 = vld [vmem:[%s237 + $0x9c] sm:$0x3]
    %s432 = scalar_lea.vmem [#allocation2], 32
    %v433 = vld [vmem:[%s432] sm:$0xf]
    %v434 = vld [vmem:[%s432 + $0x8] sm:$0xf]
    %v435 = vld [vmem:[%s432 + $0x10] sm:$0xf]
    %v436 = vld [vmem:[%s432 + $0x18] sm:$0xf]
    %v437 = vld [vmem:[%s432 + $0x20] sm:$0xf]
    %v438 = vld [vmem:[%s432 + $0x28] sm:$0xf]
    %v439 = vld [vmem:[%s432 + $0x30] sm:$0xf]
    %v440 = vld [vmem:[%s432 + $0x38] sm:$0xf]
    %v441 = vld [vmem:[%s432 + $0x60] sm:$0xf]
    %v442 = vld [vmem:[%s432 + $0x68] sm:$0xf]
    %v443 = vld [vmem:[%s432 + $0x70] sm:$0xf]
    %v444 = vld [vmem:[%s432 + $0x78] sm:$0xf]
    %v445 = vld [vmem:[%s432 + $0x80] sm:$0xf]
    %v446 = vld [vmem:[%s432 + $0x88] sm:$0xf]
    %v447 = vld [vmem:[%s432 + $0x90] sm:$0xf]
    %v448 = vld [vmem:[%s432 + $0x98] sm:$0xf]
    %v449 = vld [vmem:[%s432] sm:$0xe]
    %v450 = vld [vmem:[%s432 + $0x4] sm:$0x1]
    %v451 = vld [vmem:[%s432 + $0x8] sm:$0xe]
    %v452 = vld [vmem:[%s432 + $0xc] sm:$0x1]
    %v453 = vld [vmem:[%s432 + $0x10] sm:$0xe]
    %v454 = vld [vmem:[%s432 + $0x14] sm:$0x1]
    %v455 = vld [vmem:[%s432 + $0x18] sm:$0xe]
    %v456 = vld [vmem:[%s432 + $0x1c] sm:$0x1]
    %v457 = vld [vmem:[%s432 + $0x20] sm:$0xe]
    %v458 = vld [vmem:[%s432 + $0x24] sm:$0x1]
    %v459 = vld [vmem:[%s432 + $0x28] sm:$0xe]
    %v460 = vld [vmem:[%s432 + $0x2c] sm:$0x1]
    %v461 = vld [vmem:[%s432 + $0x30] sm:$0xe]
    %v462 = vld [vmem:[%s432 + $0x34] sm:$0x1]
    %v463 = vld [vmem:[%s432 + $0x38] sm:$0xe]
    %v464 = vld [vmem:[%s432 + $0x3c] sm:$0x1]
    %v465 = vld [vmem:[%s432 + $0x60] sm:$0xe]
    %v466 = vld [vmem:[%s432 + $0x64] sm:$0x1]
    %v467 = vld [vmem:[%s432 + $0x68] sm:$0xe]
    %v468 = vld [vmem:[%s432 + $0x6c] sm:$0x1]
    %v469 = vld [vmem:[%s432 + $0x70] sm:$0xe]
    %v470 = vld [vmem:[%s432 + $0x74] sm:$0x1]
    %v471 = vld [vmem:[%s432 + $0x78] sm:$0xe]
    %v472 = vld [vmem:[%s432 + $0x7c] sm:$0x1]
    %v473 = vld [vmem:[%s432 + $0x80] sm:$0xe]
    %v474 = vld [vmem:[%s432 + $0x84] sm:$0x1]
    %v475 = vld [vmem:[%s432 + $0x88] sm:$0xe]
    %v476 = vld [vmem:[%s432 + $0x8c] sm:$0x1]
    %v477 = vld [vmem:[%s432 + $0x90] sm:$0xe]
    %v478 = vld [vmem:[%s432 + $0x94] sm:$0x1]
    %v479 = vld [vmem:[%s432 + $0x98] sm:$0xe]
    %v480 = vld [vmem:[%s432 + $0x9c] sm:$0x1]
    %v481 = vld [vmem:[%s432] sm:$0xc]
    %v482 = vld [vmem:[%s432 + $0x4] sm:$0x3]
    %v483 = vld [vmem:[%s432 + $0x8] sm:$0xc]
    %v484 = vld [vmem:[%s432 + $0xc] sm:$0x3]
    %v485 = vld [vmem:[%s432 + $0x10] sm:$0xc]
    %v486 = vld [vmem:[%s432 + $0x14] sm:$0x3]
    %v487 = vld [vmem:[%s432 + $0x18] sm:$0xc]
    %v488 = vld [vmem:[%s432 + $0x1c] sm:$0x3]
    %v489 = vld [vmem:[%s432 + $0x20] sm:$0xc]
    %v490 = vld [vmem:[%s432 + $0x24] sm:$0x3]
    %v491 = vld [vmem:[%s432 + $0x28] sm:$0xc]
    %v492 = vld [vmem:[%s432 + $0x2c] sm:$0x3]
    %v493 = vld [vmem:[%s432 + $0x30] sm:$0xc]
    %v494 = vld [vmem:[%s432 + $0x34] sm:$0x3]
    %v495 = vld [vmem:[%s432 + $0x38] sm:$0xc]
    %v496 = vld [vmem:[%s432 + $0x3c] sm:$0x3]
    %v497 = vld [vmem:[%s432 + $0x60] sm:$0xc]
    %v498 = vld [vmem:[%s432 + $0x64] sm:$0x3]
    %v499 = vld [vmem:[%s432 + $0x68] sm:$0xc]
    %v500 = vld [vmem:[%s432 + $0x6c] sm:$0x3]
    %v501 = vld [vmem:[%s432 + $0x70] sm:$0xc]
    %v502 = vld [vmem:[%s432 + $0x74] sm:$0x3]
    %v503 = vld [vmem:[%s432 + $0x78] sm:$0xc]
    %v504 = vld [vmem:[%s432 + $0x7c] sm:$0x3]
    %v505 = vld [vmem:[%s432 + $0x80] sm:$0xc]
    %v506 = vld [vmem:[%s432 + $0x84] sm:$0x3]
    %v507 = vld [vmem:[%s432 + $0x88] sm:$0xc]
    %v508 = vld [vmem:[%s432 + $0x8c] sm:$0x3]
    %v509 = vld [vmem:[%s432 + $0x90] sm:$0xc]
    %v510 = vld [vmem:[%s432 + $0x94] sm:$0x3]
    %v511 = vld [vmem:[%s432 + $0x98] sm:$0xc]
    %v512 = vld [vmem:[%s432 + $0x9c] sm:$0x3]
    %v545 = vunpack.c.l.b16 %v288
    %v546 = vunpack.c.l.b16 %v289
    %v547 = vunpack.c.l.b16 %v290
    %v548 = vunpack.c.l.b16 %v291
    %v549 = vunpack.c.l.b16 %v292
    %v550 = vunpack.c.l.b16 %v293
    %v551 = vunpack.c.l.b16 %v294
    %v552 = vunpack.c.l.b16 %v295
    %v553 = vunpack.c.l.b16 %v296
    %v554 = vunpack.c.l.b16 %v297
    %v555 = vunpack.c.l.b16 %v298
    %v556 = vunpack.c.l.b16 %v299
    %v557 = vunpack.c.l.b16 %v300
    %v558 = vunpack.c.l.b16 %v301
    %v559 = vunpack.c.l.b16 %v302
    %v560 = vunpack.c.l.b16 %v303
    %v561 = vunpack.c.l.b16 %v304
    %v562 = vunpack.c.l.b16 %v305
    %v563 = vunpack.c.l.b16 %v306
    %v564 = vunpack.c.l.b16 %v307
    %v565 = vunpack.c.l.b16 %v308
    %v566 = vunpack.c.l.b16 %v309
    %v567 = vunpack.c.l.b16 %v310
    %v568 = vunpack.c.l.b16 %v311
    %v569 = vunpack.c.l.b16 %v312
    %v570 = vunpack.c.l.b16 %v313
    %v571 = vunpack.c.l.b16 %v314
    %v572 = vunpack.c.l.b16 %v315
    %v573 = vunpack.c.l.b16 %v316
    %v574 = vunpack.c.l.b16 %v317
    %v575 = vunpack.c.l.b16 %v318
    %v576 = vunpack.c.l.b16 %v319
    %v577 = vpack.c.b16 %v546, %v545
    %v578 = vpack.c.b16 %v548, %v547
    %v579 = vpack.c.b16 %v550, %v549
    %v580 = vpack.c.b16 %v552, %v551
    %v581 = vpack.c.b16 %v554, %v553
    %v582 = vpack.c.b16 %v556, %v555
    %v583 = vpack.c.b16 %v558, %v557
    %v584 = vpack.c.b16 %v560, %v559
    %v585 = vpack.c.b16 %v562, %v561
    %v586 = vpack.c.b16 %v564, %v563
    %v587 = vpack.c.b16 %v566, %v565
    %v588 = vpack.c.b16 %v568, %v567
    %v589 = vpack.c.b16 %v570, %v569
    %v590 = vpack.c.b16 %v572, %v571
    %v591 = vpack.c.b16 %v574, %v573
    %v592 = vpack.c.b16 %v576, %v575
    %v593 = vrot.slane %v577, 1
    %v594 = vrot.slane %v578, 1
    %v595 = vrot.slane %v579, 1
    %v596 = vrot.slane %v580, 1
    %v597 = vrot.slane %v581, 1
    %v598 = vrot.slane %v582, 1
    %v599 = vrot.slane %v583, 1
    %v600 = vrot.slane %v584, 1
    %v601 = vrot.slane %v585, 1
    %v602 = vrot.slane %v586, 1
    %v603 = vrot.slane %v587, 1
    %v604 = vrot.slane %v588, 1
    %v605 = vrot.slane %v589, 1
    %v606 = vrot.slane %v590, 1
    %v607 = vrot.slane %v591, 1
    %v608 = vrot.slane %v592, 1
    %609 = vrot.lane.b32.xlu0 %v593, 32
    %v610 = vpop.permute.xlu0 %609
    %611 = vrot.lane.b32.xlu0 %v594, 32
    %v612 = vpop.permute.xlu0 %611
    %613 = vrot.lane.b32.xlu0 %v595, 32
    %v614 = vpop.permute.xlu0 %613
    %615 = vrot.lane.b32.xlu0 %v596, 32
    %v616 = vpop.permute.xlu0 %615
    %617 = vrot.lane.b32.xlu0 %v597, 32
    %v618 = vpop.permute.xlu0 %617
    %619 = vrot.lane.b32.xlu0 %v598, 32
    %v620 = vpop.permute.xlu0 %619
    %621 = vrot.lane.b32.xlu0 %v599, 32
    %v622 = vpop.permute.xlu0 %621
    %623 = vrot.lane.b32.xlu0 %v600, 32
    %v624 = vpop.permute.xlu0 %623
    %625 = vrot.lane.b32.xlu0 %v601, 32
    %v626 = vpop.permute.xlu0 %625
    %627 = vrot.lane.b32.xlu0 %v602, 32
    %v628 = vpop.permute.xlu0 %627
    %629 = vrot.lane.b32.xlu0 %v603, 32
    %v630 = vpop.permute.xlu0 %629
    %631 = vrot.lane.b32.xlu0 %v604, 32
    %v632 = vpop.permute.xlu0 %631
    %633 = vrot.lane.b32.xlu0 %v605, 32
    %v634 = vpop.permute.xlu0 %633
    %635 = vrot.lane.b32.xlu0 %v606, 32
    %v636 = vpop.permute.xlu0 %635
    %637 = vrot.lane.b32.xlu0 %v607, 32
    %v638 = vpop.permute.xlu0 %637
    %639 = vrot.lane.b32.xlu0 %v608, 32
    %v640 = vpop.permute.xlu0 %639
    %v673 = vunpack.c.l.b16 %v320
    %v674 = vunpack.c.l.b16 %v321
    %v675 = vunpack.c.l.b16 %v322
    %v676 = vunpack.c.l.b16 %v323
    %v677 = vunpack.c.l.b16 %v324
    %v678 = vunpack.c.l.b16 %v325
    %v679 = vunpack.c.l.b16 %v326
    %v680 = vunpack.c.l.b16 %v327
    %v681 = vunpack.c.l.b16 %v328
    %v682 = vunpack.c.l.b16 %v329
    %v683 = vunpack.c.l.b16 %v330
    %v684 = vunpack.c.l.b16 %v331
    %v685 = vunpack.c.l.b16 %v332
    %v686 = vunpack.c.l.b16 %v333
    %v687 = vunpack.c.l.b16 %v334
    %v688 = vunpack.c.l.b16 %v335
    %v689 = vunpack.c.l.b16 %v336
    %v690 = vunpack.c.l.b16 %v337
    %v691 = vunpack.c.l.b16 %v338
    %v692 = vunpack.c.l.b16 %v339
    %v693 = vunpack.c.l.b16 %v340
    %v694 = vunpack.c.l.b16 %v341
    %v695 = vunpack.c.l.b16 %v342
    %v696 = vunpack.c.l.b16 %v343
    %v697 = vunpack.c.l.b16 %v344
    %v698 = vunpack.c.l.b16 %v345
    %v699 = vunpack.c.l.b16 %v346
    %v700 = vunpack.c.l.b16 %v347
    %v701 = vunpack.c.l.b16 %v348
    %v702 = vunpack.c.l.b16 %v349
    %v703 = vunpack.c.l.b16 %v350
    %v704 = vunpack.c.l.b16 %v351
    %v705 = vpack.c.b16 %v674, %v673
    %v706 = vpack.c.b16 %v676, %v675
    %v707 = vpack.c.b16 %v678, %v677
    %v708 = vpack.c.b16 %v680, %v679
    %v709 = vpack.c.b16 %v682, %v681
    %v710 = vpack.c.b16 %v684, %v683
    %v711 = vpack.c.b16 %v686, %v685
    %v712 = vpack.c.b16 %v688, %v687
    %v713 = vpack.c.b16 %v690, %v689
    %v714 = vpack.c.b16 %v692, %v691
    %v715 = vpack.c.b16 %v694, %v693
    %v716 = vpack.c.b16 %v696, %v695
    %v717 = vpack.c.b16 %v698, %v697
    %v718 = vpack.c.b16 %v700, %v699
    %v719 = vpack.c.b16 %v702, %v701
    %v720 = vpack.c.b16 %v704, %v703
    %v721 = vrot.slane %v705, 2
    %v722 = vrot.slane %v706, 2
    %v723 = vrot.slane %v707, 2
    %v724 = vrot.slane %v708, 2
    %v725 = vrot.slane %v709, 2
    %v726 = vrot.slane %v710, 2
    %v727 = vrot.slane %v711, 2
    %v728 = vrot.slane %v712, 2
    %v729 = vrot.slane %v713, 2
    %v730 = vrot.slane %v714, 2
    %v731 = vrot.slane %v715, 2
    %v732 = vrot.slane %v716, 2
    %v733 = vrot.slane %v717, 2
    %v734 = vrot.slane %v718, 2
    %v735 = vrot.slane %v719, 2
    %v736 = vrot.slane %v720, 2
    %737 = vrot.lane.b32.xlu0 %v721, 64
    %v738 = vpop.permute.xlu0 %737
    %739 = vrot.lane.b32.xlu0 %v722, 64
    %v740 = vpop.permute.xlu0 %739
    %741 = vrot.lane.b32.xlu0 %v723, 64
    %v742 = vpop.permute.xlu0 %741
    %743 = vrot.lane.b32.xlu0 %v724, 64
    %v744 = vpop.permute.xlu0 %743
    %745 = vrot.lane.b32.xlu0 %v725, 64
    %v746 = vpop.permute.xlu0 %745
    %747 = vrot.lane.b32.xlu0 %v726, 64
    %v748 = vpop.permute.xlu0 %747
    %749 = vrot.lane.b32.xlu0 %v727, 64
    %v750 = vpop.permute.xlu0 %749
    %751 = vrot.lane.b32.xlu0 %v728, 64
    %v752 = vpop.permute.xlu0 %751
    %753 = vrot.lane.b32.xlu0 %v729, 64
    %v754 = vpop.permute.xlu0 %753
    %755 = vrot.lane.b32.xlu0 %v730, 64
    %v756 = vpop.permute.xlu0 %755
    %757 = vrot.lane.b32.xlu0 %v731, 64
    %v758 = vpop.permute.xlu0 %757
    %759 = vrot.lane.b32.xlu0 %v732, 64
    %v760 = vpop.permute.xlu0 %759
    %761 = vrot.lane.b32.xlu0 %v733, 64
    %v762 = vpop.permute.xlu0 %761
    %763 = vrot.lane.b32.xlu0 %v734, 64
    %v764 = vpop.permute.xlu0 %763
    %765 = vrot.lane.b32.xlu0 %v735, 64
    %v766 = vpop.permute.xlu0 %765
    %767 = vrot.lane.b32.xlu0 %v736, 64
    %v768 = vpop.permute.xlu0 %767
    %v785 = vunpack.c.l.b16 %v352
    %v786 = vunpack.c.l.b16 %v353
    %v787 = vunpack.c.l.b16 %v354
    %v788 = vunpack.c.l.b16 %v355
    %v789 = vunpack.c.l.b16 %v356
    %v790 = vunpack.c.l.b16 %v357
    %v791 = vunpack.c.l.b16 %v358
    %v792 = vunpack.c.l.b16 %v359
    %v793 = vunpack.c.l.b16 %v360
    %v794 = vunpack.c.l.b16 %v361
    %v795 = vunpack.c.l.b16 %v362
    %v796 = vunpack.c.l.b16 %v363
    %v797 = vunpack.c.l.b16 %v364
    %v798 = vunpack.c.l.b16 %v365
    %v799 = vunpack.c.l.b16 %v366
    %v800 = vunpack.c.l.b16 %v367
    %v801 = vpack.c.b16 %v785, %v785
    %v802 = vpack.c.b16 %v786, %v786
    %v803 = vpack.c.b16 %v787, %v787
    %v804 = vpack.c.b16 %v788, %v788
    %v805 = vpack.c.b16 %v789, %v789
    %v806 = vpack.c.b16 %v790, %v790
    %v807 = vpack.c.b16 %v791, %v791
    %v808 = vpack.c.b16 %v792, %v792
    %v809 = vpack.c.b16 %v793, %v793
    %v810 = vpack.c.b16 %v794, %v794
    %v811 = vpack.c.b16 %v795, %v795
    %v812 = vpack.c.b16 %v796, %v796
    %v813 = vpack.c.b16 %v797, %v797
    %v814 = vpack.c.b16 %v798, %v798
    %v815 = vpack.c.b16 %v799, %v799
    %v816 = vpack.c.b16 %v800, %v800
    %817 = vrot.lane.b32.xlu0 %v801, 96
    %v818 = vpop.permute.xlu0 %817
    %819 = vrot.lane.b32.xlu0 %v802, 96
    %v820 = vpop.permute.xlu0 %819
    %821 = vrot.lane.b32.xlu0 %v803, 96
    %v822 = vpop.permute.xlu0 %821
    %823 = vrot.lane.b32.xlu0 %v804, 96
    %v824 = vpop.permute.xlu0 %823
    %825 = vrot.lane.b32.xlu0 %v805, 96
    %v826 = vpop.permute.xlu0 %825
    %827 = vrot.lane.b32.xlu0 %v806, 96
    %v828 = vpop.permute.xlu0 %827
    %829 = vrot.lane.b32.xlu0 %v807, 96
    %v830 = vpop.permute.xlu0 %829
    %831 = vrot.lane.b32.xlu0 %v808, 96
    %v832 = vpop.permute.xlu0 %831
    %833 = vrot.lane.b32.xlu0 %v809, 96
    %v834 = vpop.permute.xlu0 %833
    %835 = vrot.lane.b32.xlu0 %v810, 96
    %v836 = vpop.permute.xlu0 %835
    %837 = vrot.lane.b32.xlu0 %v811, 96
    %v838 = vpop.permute.xlu0 %837
    %839 = vrot.lane.b32.xlu0 %v812, 96
    %v840 = vpop.permute.xlu0 %839
    %841 = vrot.lane.b32.xlu0 %v813, 96
    %v842 = vpop.permute.xlu0 %841
    %843 = vrot.lane.b32.xlu0 %v814, 96
    %v844 = vpop.permute.xlu0 %843
    %845 = vrot.lane.b32.xlu0 %v815, 96
    %v846 = vpop.permute.xlu0 %845
    %847 = vrot.lane.b32.xlu0 %v816, 96
    %v848 = vpop.permute.xlu0 %847
    %v881 = vunpack.c.l.b16 %v368
    %v882 = vunpack.c.l.b16 %v369
    %v883 = vunpack.c.l.b16 %v370
    %v884 = vunpack.c.l.b16 %v371
    %v885 = vunpack.c.l.b16 %v372
    %v886 = vunpack.c.l.b16 %v373
    %v887 = vunpack.c.l.b16 %v374
    %v888 = vunpack.c.l.b16 %v375
    %v889 = vunpack.c.l.b16 %v376
    %v890 = vunpack.c.l.b16 %v377
    %v891 = vunpack.c.l.b16 %v378
    %v892 = vunpack.c.l.b16 %v379
    %v893 = vunpack.c.l.b16 %v380
    %v894 = vunpack.c.l.b16 %v381
    %v895 = vunpack.c.l.b16 %v382
    %v896 = vunpack.c.l.b16 %v383
    %v897 = vunpack.c.l.b16 %v384
    %v898 = vunpack.c.l.b16 %v385
    %v899 = vunpack.c.l.b16 %v386
    %v900 = vunpack.c.l.b16 %v387
    %v901 = vunpack.c.l.b16 %v388
    %v902 = vunpack.c.l.b16 %v389
    %v903 = vunpack.c.l.b16 %v390
    %v904 = vunpack.c.l.b16 %v391
    %v905 = vunpack.c.l.b16 %v392
    %v906 = vunpack.c.l.b16 %v393
    %v907 = vunpack.c.l.b16 %v394
    %v908 = vunpack.c.l.b16 %v395
    %v909 = vunpack.c.l.b16 %v396
    %v910 = vunpack.c.l.b16 %v397
    %v911 = vunpack.c.l.b16 %v398
    %v912 = vunpack.c.l.b16 %v399
    %v913 = vpack.c.b16 %v882, %v881
    %v914 = vpack.c.b16 %v884, %v883
    %v915 = vpack.c.b16 %v886, %v885
    %v916 = vpack.c.b16 %v888, %v887
    %v917 = vpack.c.b16 %v890, %v889
    %v918 = vpack.c.b16 %v892, %v891
    %v919 = vpack.c.b16 %v894, %v893
    %v920 = vpack.c.b16 %v896, %v895
    %v921 = vpack.c.b16 %v898, %v897
    %v922 = vpack.c.b16 %v900, %v899
    %v923 = vpack.c.b16 %v902, %v901
    %v924 = vpack.c.b16 %v904, %v903
    %v925 = vpack.c.b16 %v906, %v905
    %v926 = vpack.c.b16 %v908, %v907
    %v927 = vpack.c.b16 %v910, %v909
    %v928 = vpack.c.b16 %v912, %v911
    %v929 = vrot.slane %v913, 1
    %v930 = vrot.slane %v914, 1
    %v931 = vrot.slane %v915, 1
    %v932 = vrot.slane %v916, 1
    %v933 = vrot.slane %v917, 1
    %v934 = vrot.slane %v918, 1
    %v935 = vrot.slane %v919, 1
    %v936 = vrot.slane %v920, 1
    %v937 = vrot.slane %v921, 1
    %v938 = vrot.slane %v922, 1
    %v939 = vrot.slane %v923, 1
    %v940 = vrot.slane %v924, 1
    %v941 = vrot.slane %v925, 1
    %v942 = vrot.slane %v926, 1
    %v943 = vrot.slane %v927, 1
    %v944 = vrot.slane %v928, 1
    %v977 = vunpack.c.l.b16 %v400
    %v978 = vunpack.c.l.b16 %v401
    %v979 = vunpack.c.l.b16 %v402
    %v980 = vunpack.c.l.b16 %v403
    %v981 = vunpack.c.l.b16 %v404
    %v982 = vunpack.c.l.b16 %v405
    %v983 = vunpack.c.l.b16 %v406
    %v984 = vunpack.c.l.b16 %v407
    %v985 = vunpack.c.l.b16 %v408
    %v986 = vunpack.c.l.b16 %v409
    %v987 = vunpack.c.l.b16 %v410
    %v988 = vunpack.c.l.b16 %v411
    %v989 = vunpack.c.l.b16 %v412
    %v990 = vunpack.c.l.b16 %v413
    %v991 = vunpack.c.l.b16 %v414
    %v992 = vunpack.c.l.b16 %v415
    %v993 = vunpack.c.l.b16 %v416
    %v994 = vunpack.c.l.b16 %v417
    %v995 = vunpack.c.l.b16 %v418
    %v996 = vunpack.c.l.b16 %v419
    %v997 = vunpack.c.l.b16 %v420
    %v998 = vunpack.c.l.b16 %v421
    %v999 = vunpack.c.l.b16 %v422
    %v1000 = vunpack.c.l.b16 %v423
    %v1001 = vunpack.c.l.b16 %v424
    %v1002 = vunpack.c.l.b16 %v425
    %v1003 = vunpack.c.l.b16 %v426
    %v1004 = vunpack.c.l.b16 %v427
    %v1005 = vunpack.c.l.b16 %v428
    %v1006 = vunpack.c.l.b16 %v429
    %v1007 = vunpack.c.l.b16 %v430
    %v1008 = vunpack.c.l.b16 %v431
    %v1009 = vpack.c.b16 %v978, %v977
    %v1010 = vpack.c.b16 %v980, %v979
    %v1011 = vpack.c.b16 %v982, %v981
    %v1012 = vpack.c.b16 %v984, %v983
    %v1013 = vpack.c.b16 %v986, %v985
    %v1014 = vpack.c.b16 %v988, %v987
    %v1015 = vpack.c.b16 %v990, %v989
    %v1016 = vpack.c.b16 %v992, %v991
    %v1017 = vpack.c.b16 %v994, %v993
    %v1018 = vpack.c.b16 %v996, %v995
    %v1019 = vpack.c.b16 %v998, %v997
    %v1020 = vpack.c.b16 %v1000, %v999
    %v1021 = vpack.c.b16 %v1002, %v1001
    %v1022 = vpack.c.b16 %v1004, %v1003
    %v1023 = vpack.c.b16 %v1006, %v1005
    %v1024 = vpack.c.b16 %v1008, %v1007
    %v1025 = vrot.slane %v1009, 2
    %v1026 = vrot.slane %v1010, 2
    %v1027 = vrot.slane %v1011, 2
    %v1028 = vrot.slane %v1012, 2
    %v1029 = vrot.slane %v1013, 2
    %v1030 = vrot.slane %v1014, 2
    %v1031 = vrot.slane %v1015, 2
    %v1032 = vrot.slane %v1016, 2
    %v1033 = vrot.slane %v1017, 2
    %v1034 = vrot.slane %v1018, 2
    %v1035 = vrot.slane %v1019, 2
    %v1036 = vrot.slane %v1020, 2
    %v1037 = vrot.slane %v1021, 2
    %v1038 = vrot.slane %v1022, 2
    %v1039 = vrot.slane %v1023, 2
    %v1040 = vrot.slane %v1024, 2
    %1041 = vrot.lane.b32.xlu0 %v1025, 32
    %v1042 = vpop.permute.xlu0 %1041
    %1043 = vrot.lane.b32.xlu0 %v1026, 32
    %v1044 = vpop.permute.xlu0 %1043
    %1045 = vrot.lane.b32.xlu0 %v1027, 32
    %v1046 = vpop.permute.xlu0 %1045
    %1047 = vrot.lane.b32.xlu0 %v1028, 32
    %v1048 = vpop.permute.xlu0 %1047
    %1049 = vrot.lane.b32.xlu0 %v1029, 32
    %v1050 = vpop.permute.xlu0 %1049
    %1051 = vrot.lane.b32.xlu0 %v1030, 32
    %v1052 = vpop.permute.xlu0 %1051
    %1053 = vrot.lane.b32.xlu0 %v1031, 32
    %v1054 = vpop.permute.xlu0 %1053
    %1055 = vrot.lane.b32.xlu0 %v1032, 32
    %v1056 = vpop.permute.xlu0 %1055
    %1057 = vrot.lane.b32.xlu0 %v1033, 32
    %v1058 = vpop.permute.xlu0 %1057
    %1059 = vrot.lane.b32.xlu0 %v1034, 32
    %v1060 = vpop.permute.xlu0 %1059
    %1061 = vrot.lane.b32.xlu0 %v1035, 32
    %v1062 = vpop.permute.xlu0 %1061
    %1063 = vrot.lane.b32.xlu0 %v1036, 32
    %v1064 = vpop.permute.xlu0 %1063
    %1065 = vrot.lane.b32.xlu0 %v1037, 32
    %v1066 = vpop.permute.xlu0 %1065
    %1067 = vrot.lane.b32.xlu0 %v1038, 32
    %v1068 = vpop.permute.xlu0 %1067
    %1069 = vrot.lane.b32.xlu0 %v1039, 32
    %v1070 = vpop.permute.xlu0 %1069
    %1071 = vrot.lane.b32.xlu0 %v1040, 32
    %v1072 = vpop.permute.xlu0 %1071
    %v1089 = vunpack.c.l.b16 %v433
    %v1090 = vunpack.c.l.b16 %v434
    %v1091 = vunpack.c.l.b16 %v435
    %v1092 = vunpack.c.l.b16 %v436
    %v1093 = vunpack.c.l.b16 %v437
    %v1094 = vunpack.c.l.b16 %v438
    %v1095 = vunpack.c.l.b16 %v439
    %v1096 = vunpack.c.l.b16 %v440
    %v1097 = vunpack.c.l.b16 %v441
    %v1098 = vunpack.c.l.b16 %v442
    %v1099 = vunpack.c.l.b16 %v443
    %v1100 = vunpack.c.l.b16 %v444
    %v1101 = vunpack.c.l.b16 %v445
    %v1102 = vunpack.c.l.b16 %v446
    %v1103 = vunpack.c.l.b16 %v447
    %v1104 = vunpack.c.l.b16 %v448
    %v1105 = vpack.c.b16 %v1089, %v1089
    %v1106 = vpack.c.b16 %v1090, %v1090
    %v1107 = vpack.c.b16 %v1091, %v1091
    %v1108 = vpack.c.b16 %v1092, %v1092
    %v1109 = vpack.c.b16 %v1093, %v1093
    %v1110 = vpack.c.b16 %v1094, %v1094
    %v1111 = vpack.c.b16 %v1095, %v1095
    %v1112 = vpack.c.b16 %v1096, %v1096
    %v1113 = vpack.c.b16 %v1097, %v1097
    %v1114 = vpack.c.b16 %v1098, %v1098
    %v1115 = vpack.c.b16 %v1099, %v1099
    %v1116 = vpack.c.b16 %v1100, %v1100
    %v1117 = vpack.c.b16 %v1101, %v1101
    %v1118 = vpack.c.b16 %v1102, %v1102
    %v1119 = vpack.c.b16 %v1103, %v1103
    %v1120 = vpack.c.b16 %v1104, %v1104
    %1121 = vrot.lane.b32.xlu0 %v1105, 64
    %v1122 = vpop.permute.xlu0 %1121
    %1123 = vrot.lane.b32.xlu0 %v1106, 64
    %v1124 = vpop.permute.xlu0 %1123
    %1125 = vrot.lane.b32.xlu0 %v1107, 64
    %v1126 = vpop.permute.xlu0 %1125
    %1127 = vrot.lane.b32.xlu0 %v1108, 64
    %v1128 = vpop.permute.xlu0 %1127
    %1129 = vrot.lane.b32.xlu0 %v1109, 64
    %v1130 = vpop.permute.xlu0 %1129
    %1131 = vrot.lane.b32.xlu0 %v1110, 64
    %v1132 = vpop.permute.xlu0 %1131
    %1133 = vrot.lane.b32.xlu0 %v1111, 64
    %v1134 = vpop.permute.xlu0 %1133
    %1135 = vrot.lane.b32.xlu0 %v1112, 64
    %v1136 = vpop.permute.xlu0 %1135
    %1137 = vrot.lane.b32.xlu0 %v1113, 64
    %v1138 = vpop.permute.xlu0 %1137
    %1139 = vrot.lane.b32.xlu0 %v1114, 64
    %v1140 = vpop.permute.xlu0 %1139
    %1141 = vrot.lane.b32.xlu0 %v1115, 64
    %v1142 = vpop.permute.xlu0 %1141
    %1143 = vrot.lane.b32.xlu0 %v1116, 64
    %v1144 = vpop.permute.xlu0 %1143
    %1145 = vrot.lane.b32.xlu0 %v1117, 64
    %v1146 = vpop.permute.xlu0 %1145
    %1147 = vrot.lane.b32.xlu0 %v1118, 64
    %v1148 = vpop.permute.xlu0 %1147
    %1149 = vrot.lane.b32.xlu0 %v1119, 64
    %v1150 = vpop.permute.xlu0 %1149
    %1151 = vrot.lane.b32.xlu0 %v1120, 64
    %v1152 = vpop.permute.xlu0 %1151
    %v1185 = vunpack.c.l.b16 %v449
    %v1186 = vunpack.c.l.b16 %v450
    %v1187 = vunpack.c.l.b16 %v451
    %v1188 = vunpack.c.l.b16 %v452
    %v1189 = vunpack.c.l.b16 %v453
    %v1190 = vunpack.c.l.b16 %v454
    %v1191 = vunpack.c.l.b16 %v455
    %v1192 = vunpack.c.l.b16 %v456
    %v1193 = vunpack.c.l.b16 %v457
    %v1194 = vunpack.c.l.b16 %v458
    %v1195 = vunpack.c.l.b16 %v459
    %v1196 = vunpack.c.l.b16 %v460
    %v1197 = vunpack.c.l.b16 %v461
    %v1198 = vunpack.c.l.b16 %v462
    %v1199 = vunpack.c.l.b16 %v463
    %v1200 = vunpack.c.l.b16 %v464
    %v1201 = vunpack.c.l.b16 %v465
    %v1202 = vunpack.c.l.b16 %v466
    %v1203 = vunpack.c.l.b16 %v467
    %v1204 = vunpack.c.l.b16 %v468
    %v1205 = vunpack.c.l.b16 %v469
    %v1206 = vunpack.c.l.b16 %v470
    %v1207 = vunpack.c.l.b16 %v471
    %v1208 = vunpack.c.l.b16 %v472
    %v1209 = vunpack.c.l.b16 %v473
    %v1210 = vunpack.c.l.b16 %v474
    %v1211 = vunpack.c.l.b16 %v475
    %v1212 = vunpack.c.l.b16 %v476
    %v1213 = vunpack.c.l.b16 %v477
    %v1214 = vunpack.c.l.b16 %v478
    %v1215 = vunpack.c.l.b16 %v479
    %v1216 = vunpack.c.l.b16 %v480
    %v1217 = vpack.c.b16 %v1186, %v1185
    %v1218 = vpack.c.b16 %v1188, %v1187
    %v1219 = vpack.c.b16 %v1190, %v1189
    %v1220 = vpack.c.b16 %v1192, %v1191
    %v1221 = vpack.c.b16 %v1194, %v1193
    %v1222 = vpack.c.b16 %v1196, %v1195
    %v1223 = vpack.c.b16 %v1198, %v1197
    %v1224 = vpack.c.b16 %v1200, %v1199
    %v1225 = vpack.c.b16 %v1202, %v1201
    %v1226 = vpack.c.b16 %v1204, %v1203
    %v1227 = vpack.c.b16 %v1206, %v1205
    %v1228 = vpack.c.b16 %v1208, %v1207
    %v1229 = vpack.c.b16 %v1210, %v1209
    %v1230 = vpack.c.b16 %v1212, %v1211
    %v1231 = vpack.c.b16 %v1214, %v1213
    %v1232 = vpack.c.b16 %v1216, %v1215
    %v1233 = vrot.slane %v1217, 1
    %v1234 = vrot.slane %v1218, 1
    %v1235 = vrot.slane %v1219, 1
    %v1236 = vrot.slane %v1220, 1
    %v1237 = vrot.slane %v1221, 1
    %v1238 = vrot.slane %v1222, 1
    %v1239 = vrot.slane %v1223, 1
    %v1240 = vrot.slane %v1224, 1
    %v1241 = vrot.slane %v1225, 1
    %v1242 = vrot.slane %v1226, 1
    %v1243 = vrot.slane %v1227, 1
    %v1244 = vrot.slane %v1228, 1
    %v1245 = vrot.slane %v1229, 1
    %v1246 = vrot.slane %v1230, 1
    %v1247 = vrot.slane %v1231, 1
    %v1248 = vrot.slane %v1232, 1
    %1249 = vrot.lane.b32.xlu0 %v1233, 96
    %v1250 = vpop.permute.xlu0 %1249
    %1251 = vrot.lane.b32.xlu0 %v1234, 96
    %v1252 = vpop.permute.xlu0 %1251
    %1253 = vrot.lane.b32.xlu0 %v1235, 96
    %v1254 = vpop.permute.xlu0 %1253
    %1255 = vrot.lane.b32.xlu0 %v1236, 96
    %v1256 = vpop.permute.xlu0 %1255
    %1257 = vrot.lane.b32.xlu0 %v1237, 96
    %v1258 = vpop.permute.xlu0 %1257
    %1259 = vrot.lane.b32.xlu0 %v1238, 96
    %v1260 = vpop.permute.xlu0 %1259
    %1261 = vrot.lane.b32.xlu0 %v1239, 96
    %v1262 = vpop.permute.xlu0 %1261
    %1263 = vrot.lane.b32.xlu0 %v1240, 96
    %v1264 = vpop.permute.xlu0 %1263
    %1265 = vrot.lane.b32.xlu0 %v1241, 96
    %v1266 = vpop.permute.xlu0 %1265
    %1267 = vrot.lane.b32.xlu0 %v1242, 96
    %v1268 = vpop.permute.xlu0 %1267
    %1269 = vrot.lane.b32.xlu0 %v1243, 96
    %v1270 = vpop.permute.xlu0 %1269
    %1271 = vrot.lane.b32.xlu0 %v1244, 96
    %v1272 = vpop.permute.xlu0 %1271
    %1273 = vrot.lane.b32.xlu0 %v1245, 96
    %v1274 = vpop.permute.xlu0 %1273
    %1275 = vrot.lane.b32.xlu0 %v1246, 96
    %v1276 = vpop.permute.xlu0 %1275
    %1277 = vrot.lane.b32.xlu0 %v1247, 96
    %v1278 = vpop.permute.xlu0 %1277
    %1279 = vrot.lane.b32.xlu0 %v1248, 96
    %v1280 = vpop.permute.xlu0 %1279
    %v1313 = vunpack.c.l.b16 %v481
    %v1314 = vunpack.c.l.b16 %v482
    %v1315 = vunpack.c.l.b16 %v483
    %v1316 = vunpack.c.l.b16 %v484
    %v1317 = vunpack.c.l.b16 %v485
    %v1318 = vunpack.c.l.b16 %v486
    %v1319 = vunpack.c.l.b16 %v487
    %v1320 = vunpack.c.l.b16 %v488
    %v1321 = vunpack.c.l.b16 %v489
    %v1322 = vunpack.c.l.b16 %v490
    %v1323 = vunpack.c.l.b16 %v491
    %v1324 = vunpack.c.l.b16 %v492
    %v1325 = vunpack.c.l.b16 %v493
    %v1326 = vunpack.c.l.b16 %v494
    %v1327 = vunpack.c.l.b16 %v495
    %v1328 = vunpack.c.l.b16 %v496
    %v1329 = vunpack.c.l.b16 %v497
    %v1330 = vunpack.c.l.b16 %v498
    %v1331 = vunpack.c.l.b16 %v499
    %v1332 = vunpack.c.l.b16 %v500
    %v1333 = vunpack.c.l.b16 %v501
    %v1334 = vunpack.c.l.b16 %v502
    %v1335 = vunpack.c.l.b16 %v503
    %v1336 = vunpack.c.l.b16 %v504
    %v1337 = vunpack.c.l.b16 %v505
    %v1338 = vunpack.c.l.b16 %v506
    %v1339 = vunpack.c.l.b16 %v507
    %v1340 = vunpack.c.l.b16 %v508
    %v1341 = vunpack.c.l.b16 %v509
    %v1342 = vunpack.c.l.b16 %v510
    %v1343 = vunpack.c.l.b16 %v511
    %v1344 = vunpack.c.l.b16 %v512
    %v1345 = vpack.c.b16 %v1314, %v1313
    %v1346 = vpack.c.b16 %v1316, %v1315
    %v1347 = vpack.c.b16 %v1318, %v1317
    %v1348 = vpack.c.b16 %v1320, %v1319
    %v1349 = vpack.c.b16 %v1322, %v1321
    %v1350 = vpack.c.b16 %v1324, %v1323
    %v1351 = vpack.c.b16 %v1326, %v1325
    %v1352 = vpack.c.b16 %v1328, %v1327
    %v1353 = vpack.c.b16 %v1330, %v1329
    %v1354 = vpack.c.b16 %v1332, %v1331
    %v1355 = vpack.c.b16 %v1334, %v1333
    %v1356 = vpack.c.b16 %v1336, %v1335
    %v1357 = vpack.c.b16 %v1338, %v1337
    %v1358 = vpack.c.b16 %v1340, %v1339
    %v1359 = vpack.c.b16 %v1342, %v1341
    %v1360 = vpack.c.b16 %v1344, %v1343
    %v1361 = vrot.slane %v1345, 2
    %v1362 = vrot.slane %v1346, 2
    %v1363 = vrot.slane %v1347, 2
    %v1364 = vrot.slane %v1348, 2
    %v1365 = vrot.slane %v1349, 2
    %v1366 = vrot.slane %v1350, 2
    %v1367 = vrot.slane %v1351, 2
    %v1368 = vrot.slane %v1352, 2
    %v1369 = vrot.slane %v1353, 2
    %v1370 = vrot.slane %v1354, 2
    %v1371 = vrot.slane %v1355, 2
    %v1372 = vrot.slane %v1356, 2
    %v1373 = vrot.slane %v1357, 2
    %v1374 = vrot.slane %v1358, 2
    %v1375 = vrot.slane %v1359, 2
    %v1376 = vrot.slane %v1360, 2
    %vm1377 = vcmask 261120
    %v1380 = vsel %vm1377, %v272, %v610
    %v1383 = vsel %vm1377, %v273, %v612
    %v1386 = vsel %vm1377, %v274, %v614
    %v1389 = vsel %vm1377, %v275, %v616
    %v1392 = vsel %vm1377, %v276, %v618
    %v1395 = vsel %vm1377, %v277, %v620
    %v1398 = vsel %vm1377, %v278, %v622
    %v1401 = vsel %vm1377, %v279, %v624
    %v1404 = vsel %vm1377, %v280, %v626
    %v1407 = vsel %vm1377, %v281, %v628
    %v1410 = vsel %vm1377, %v282, %v630
    %v1413 = vsel %vm1377, %v283, %v632
    %v1416 = vsel %vm1377, %v284, %v634
    %v1419 = vsel %vm1377, %v285, %v636
    %v1422 = vsel %vm1377, %v286, %v638
    %v1425 = vsel %vm1377, %v287, %v640
    %vm1426 = vcmask 523264
    %v1428 = vsel %vm1426, %v1380, %v738
    %v1430 = vsel %vm1426, %v1383, %v740
    %v1432 = vsel %vm1426, %v1386, %v742
    %v1434 = vsel %vm1426, %v1389, %v744
    %v1436 = vsel %vm1426, %v1392, %v746
    %v1438 = vsel %vm1426, %v1395, %v748
    %v1440 = vsel %vm1426, %v1398, %v750
    %v1442 = vsel %vm1426, %v1401, %v752
    %v1444 = vsel %vm1426, %v1404, %v754
    %v1446 = vsel %vm1426, %v1407, %v756
    %v1448 = vsel %vm1426, %v1410, %v758
    %v1450 = vsel %vm1426, %v1413, %v760
    %v1452 = vsel %vm1426, %v1416, %v762
    %v1454 = vsel %vm1426, %v1419, %v764
    %v1456 = vsel %vm1426, %v1422, %v766
    %v1458 = vsel %vm1426, %v1425, %v768
    %vm1459 = vcmask 785408
    %v1461 = vsel %vm1459, %v1428, %v818
    %v1463 = vsel %vm1459, %v1430, %v820
    %v1465 = vsel %vm1459, %v1432, %v822
    %v1467 = vsel %vm1459, %v1434, %v824
    %v1469 = vsel %vm1459, %v1436, %v826
    %v1471 = vsel %vm1459, %v1438, %v828
    %v1473 = vsel %vm1459, %v1440, %v830
    %v1475 = vsel %vm1459, %v1442, %v832
    %v1477 = vsel %vm1459, %v1444, %v834
    %v1479 = vsel %vm1459, %v1446, %v836
    %v1481 = vsel %vm1459, %v1448, %v838
    %v1483 = vsel %vm1459, %v1450, %v840
    %v1485 = vsel %vm1459, %v1452, %v842
    %v1487 = vsel %vm1459, %v1454, %v844
    %v1489 = vsel %vm1459, %v1456, %v846
    %v1491 = vsel %vm1459, %v1458, %v848
    %v1494 = vsel %vm1377, %v929, %v1042
    %v1497 = vsel %vm1377, %v930, %v1044
    %v1500 = vsel %vm1377, %v931, %v1046
    %v1503 = vsel %vm1377, %v932, %v1048
    %v1506 = vsel %vm1377, %v933, %v1050
    %v1509 = vsel %vm1377, %v934, %v1052
    %v1512 = vsel %vm1377, %v935, %v1054
    %v1515 = vsel %vm1377, %v936, %v1056
    %v1518 = vsel %vm1377, %v937, %v1058
    %v1521 = vsel %vm1377, %v938, %v1060
    %v1524 = vsel %vm1377, %v939, %v1062
    %v1527 = vsel %vm1377, %v940, %v1064
    %v1530 = vsel %vm1377, %v941, %v1066
    %v1533 = vsel %vm1377, %v942, %v1068
    %v1536 = vsel %vm1377, %v943, %v1070
    %v1539 = vsel %vm1377, %v944, %v1072
    %v1541 = vsel %vm1426, %v1494, %v1122
    %v1543 = vsel %vm1426, %v1497, %v1124
    %v1545 = vsel %vm1426, %v1500, %v1126
    %v1547 = vsel %vm1426, %v1503, %v1128
    %v1549 = vsel %vm1426, %v1506, %v1130
    %v1551 = vsel %vm1426, %v1509, %v1132
    %v1553 = vsel %vm1426, %v1512, %v1134
    %v1555 = vsel %vm1426, %v1515, %v1136
    %v1557 = vsel %vm1426, %v1518, %v1138
    %v1559 = vsel %vm1426, %v1521, %v1140
    %v1561 = vsel %vm1426, %v1524, %v1142
    %v1563 = vsel %vm1426, %v1527, %v1144
    %v1565 = vsel %vm1426, %v1530, %v1146
    %v1567 = vsel %vm1426, %v1533, %v1148
    %v1569 = vsel %vm1426, %v1536, %v1150
    %v1571 = vsel %vm1426, %v1539, %v1152
    %v1573 = vsel %vm1459, %v1541, %v1250
    %v1575 = vsel %vm1459, %v1543, %v1252
    %v1577 = vsel %vm1459, %v1545, %v1254
    %v1579 = vsel %vm1459, %v1547, %v1256
    %v1581 = vsel %vm1459, %v1549, %v1258
    %v1583 = vsel %vm1459, %v1551, %v1260
    %v1585 = vsel %vm1459, %v1553, %v1262
    %v1587 = vsel %vm1459, %v1555, %v1264
    %v1589 = vsel %vm1459, %v1557, %v1266
    %v1591 = vsel %vm1459, %v1559, %v1268
    %v1593 = vsel %vm1459, %v1561, %v1270
    %v1595 = vsel %vm1459, %v1563, %v1272
    %v1597 = vsel %vm1459, %v1565, %v1274
    %v1599 = vsel %vm1459, %v1567, %v1276
    %v1601 = vsel %vm1459, %v1569, %v1278
    %v1603 = vsel %vm1459, %v1571, %v1280
    %v1636 = vunpack.c.l.b16 %v1461
    %v1637 = vunpack.c.l.b16 %v1573
    %v1638 = vunpack.c.l.b16 %v1361
    %v1639 = vunpack.c.l.b16 %v1463
    %v1640 = vunpack.c.l.b16 %v1575
    %v1641 = vunpack.c.l.b16 %v1362
    %v1642 = vunpack.c.l.b16 %v1465
    %v1643 = vunpack.c.l.b16 %v1577
    %v1644 = vunpack.c.l.b16 %v1363
    %v1645 = vunpack.c.l.b16 %v1467
    %v1646 = vunpack.c.l.b16 %v1579
    %v1647 = vunpack.c.l.b16 %v1364
    %v1648 = vunpack.c.l.b16 %v1469
    %v1649 = vunpack.c.l.b16 %v1581
    %v1650 = vunpack.c.l.b16 %v1365
    %v1651 = vunpack.c.l.b16 %v1471
    %v1652 = vunpack.c.l.b16 %v1583
    %v1653 = vunpack.c.l.b16 %v1366
    %v1654 = vunpack.c.l.b16 %v1473
    %v1655 = vunpack.c.l.b16 %v1585
    %v1656 = vunpack.c.l.b16 %v1367
    %v1657 = vunpack.c.l.b16 %v1475
    %v1658 = vunpack.c.l.b16 %v1587
    %v1659 = vunpack.c.l.b16 %v1368
    %v1660 = vunpack.c.l.b16 %v1477
    %v1661 = vunpack.c.l.b16 %v1589
    %v1662 = vunpack.c.l.b16 %v1369
    %v1663 = vunpack.c.l.b16 %v1479
    %v1664 = vunpack.c.l.b16 %v1591
    %v1665 = vunpack.c.l.b16 %v1370
    %v1666 = vunpack.c.l.b16 %v1481
    %v1667 = vunpack.c.l.b16 %v1593
    %v1668 = vunpack.c.l.b16 %v1371
    %v1669 = vunpack.c.l.b16 %v1483
    %v1670 = vunpack.c.l.b16 %v1595
    %v1671 = vunpack.c.l.b16 %v1372
    %v1672 = vunpack.c.l.b16 %v1485
    %v1673 = vunpack.c.l.b16 %v1597
    %v1674 = vunpack.c.l.b16 %v1373
    %v1675 = vunpack.c.l.b16 %v1487
    %v1676 = vunpack.c.l.b16 %v1599
    %v1677 = vunpack.c.l.b16 %v1374
    %v1678 = vunpack.c.l.b16 %v1489
    %v1679 = vunpack.c.l.b16 %v1601
    %v1680 = vunpack.c.l.b16 %v1375
    %v1681 = vunpack.c.l.b16 %v1491
    %v1682 = vunpack.c.l.b16 %v1603
    %v1683 = vunpack.c.l.b16 %v1376
    %v1684 = vld [vmem:[#allocation3] sm:$0xff]
    %v1685 = vld [vmem:[#allocation3 + $0x8] sm:$0xff]
    %v1686 = vld [vmem:[#allocation3 + $0x10] sm:$0xff]
    %v1687 = vld [vmem:[#allocation3 + $0x18] sm:$0xff]
    %v1688 = vld [vmem:[#allocation3 + $0x20] sm:$0xff]
    %v1689 = vld [vmem:[#allocation3 + $0x28] sm:$0xff]
    %v1690 = vld [vmem:[#allocation3 + $0x30] sm:$0xff]
    %v1691 = vld [vmem:[#allocation3 + $0x38] sm:$0xff]
    %v1692 = vld [vmem:[#allocation3 + $0x40] sm:$0xff]
    %v1693 = vld [vmem:[#allocation3 + $0x48] sm:$0xff]
    %v1694 = vld [vmem:[#allocation3 + $0x50] sm:$0xff]
    %v1695 = vld [vmem:[#allocation3 + $0x58] sm:$0xff]
    %v1696 = vld [vmem:[#allocation3 + $0x60] sm:$0xff]
    %v1697 = vld [vmem:[#allocation3 + $0x68] sm:$0xff]
    %v1698 = vld [vmem:[#allocation3 + $0x70] sm:$0xff]
    %v1699 = vld [vmem:[#allocation3 + $0x78] sm:$0xff]
    %v1700 = vld [vmem:[#allocation7] sm:$0xf]
    %v1701 = vld [vmem:[#allocation7 + $0x4] sm:$0xf]
    %v1702 = vld [vmem:[#allocation7 + $0x8] sm:$0xf]
    %v1703 = vld [vmem:[#allocation7 + $0xc] sm:$0xf]
    %v1704 = vld [vmem:[#allocation7 + $0x10] sm:$0xf]
    %v1705 = vld [vmem:[#allocation7 + $0x14] sm:$0xf]
    %v1706 = vld [vmem:[#allocation7 + $0x18] sm:$0xf]
    %v1707 = vld [vmem:[#allocation7 + $0x1c] sm:$0xf]
    %v1708 = vld [vmem:[#allocation7 + $0x20] sm:$0xf]
    %v1709 = vld [vmem:[#allocation7 + $0x24] sm:$0xf]
    %v1710 = vld [vmem:[#allocation7 + $0x28] sm:$0xf]
    %v1711 = vld [vmem:[#allocation7 + $0x2c] sm:$0xf]
    %v1712 = vld [vmem:[#allocation7 + $0x30] sm:$0xf]
    %v1713 = vld [vmem:[#allocation7 + $0x34] sm:$0xf]
    %v1714 = vld [vmem:[#allocation7 + $0x38] sm:$0xf]
    %v1715 = vld [vmem:[#allocation7 + $0x3c] sm:$0xf]
    %v1716 = vld [vmem:[#allocation7 + $0x40] sm:$0xf]
    %v1717 = vld [vmem:[#allocation7 + $0x44] sm:$0xf]
    %v1718 = vld [vmem:[#allocation7 + $0x48] sm:$0xf]
    %v1719 = vld [vmem:[#allocation7 + $0x4c] sm:$0xf]
    %v1720 = vld [vmem:[#allocation7 + $0x50] sm:$0xf]
    %v1721 = vld [vmem:[#allocation7 + $0x54] sm:$0xf]
    %v1722 = vld [vmem:[#allocation7 + $0x58] sm:$0xf]
    %v1723 = vld [vmem:[#allocation7 + $0x5c] sm:$0xf]
    %v1724 = vld [vmem:[#allocation7 + $0x60] sm:$0xf]
    %v1725 = vld [vmem:[#allocation7 + $0x64] sm:$0xf]
    %v1726 = vld [vmem:[#allocation7 + $0x68] sm:$0xf]
    %v1727 = vld [vmem:[#allocation7 + $0x6c] sm:$0xf]
    %v1728 = vld [vmem:[#allocation7 + $0x70] sm:$0xf]
    %v1729 = vld [vmem:[#allocation7 + $0x74] sm:$0xf]
    %v1730 = vld [vmem:[#allocation7 + $0x78] sm:$0xf]
    %v1731 = vld [vmem:[#allocation7 + $0x7c] sm:$0xf]
    %v1732 = vld [vmem:[#allocation7 + $0x80] sm:$0xf]
    %v1733 = vld [vmem:[#allocation7 + $0x84] sm:$0xf]
    %v1734 = vld [vmem:[#allocation7 + $0x88] sm:$0xf]
    %v1735 = vld [vmem:[#allocation7 + $0x8c] sm:$0xf]
    %v1736 = vpack.c.b16 %v1639, %v1636
    %v1737 = vpack.c.b16 %v1640, %v1637
    %v1738 = vpack.c.b16 %v1641, %v1638
    %v1739 = vpack.c.b16 %v1645, %v1642
    %v1740 = vpack.c.b16 %v1646, %v1643
    %v1741 = vpack.c.b16 %v1647, %v1644
    %v1742 = vpack.c.b16 %v1651, %v1648
    %v1743 = vpack.c.b16 %v1652, %v1649
    %v1744 = vpack.c.b16 %v1653, %v1650
    %v1745 = vpack.c.b16 %v1657, %v1654
    %v1746 = vpack.c.b16 %v1658, %v1655
    %v1747 = vpack.c.b16 %v1659, %v1656
    %v1748 = vpack.c.b16 %v1663, %v1660
    %v1749 = vpack.c.b16 %v1664, %v1661
    %v1750 = vpack.c.b16 %v1665, %v1662
    %v1751 = vpack.c.b16 %v1669, %v1666
    %v1752 = vpack.c.b16 %v1670, %v1667
    %v1753 = vpack.c.b16 %v1671, %v1668
    %v1754 = vpack.c.b16 %v1675, %v1672
    %v1755 = vpack.c.b16 %v1676, %v1673
    %v1756 = vpack.c.b16 %v1677, %v1674
    %v1757 = vpack.c.b16 %v1681, %v1678
    %v1758 = vpack.c.b16 %v1682, %v1679
    %v1759 = vpack.c.b16 %v1683, %v1680
    %v1812 = vunpack.c.l.b16 %v1700
    %v1813 = vunpack.c.l.b16 %v1701
    %v1814 = vunpack.c.l.b16 %v1702
    %v1815 = vunpack.c.l.b16 %v1703
    %v1816 = vunpack.c.l.b16 %v1704
    %v1817 = vunpack.c.l.b16 %v1705
    %v1818 = vunpack.c.l.b16 %v1706
    %v1819 = vunpack.c.l.b16 %v1707
    %v1820 = vunpack.c.l.b16 %v1708
    %v1821 = vunpack.c.l.b16 %v1709
    %v1822 = vunpack.c.l.b16 %v1710
    %v1823 = vunpack.c.l.b16 %v1711
    %v1824 = vunpack.c.l.b16 %v1712
    %v1825 = vunpack.c.l.b16 %v1713
    %v1826 = vunpack.c.l.b16 %v1714
    %v1827 = vunpack.c.l.b16 %v1715
    %v1828 = vunpack.c.l.b16 %v1716
    %v1829 = vunpack.c.l.b16 %v1717
    %v1830 = vunpack.c.l.b16 %v1718
    %v1831 = vunpack.c.l.b16 %v1719
    %v1832 = vunpack.c.l.b16 %v1720
    %v1833 = vunpack.c.l.b16 %v1721
    %v1834 = vunpack.c.l.b16 %v1722
    %v1835 = vunpack.c.l.b16 %v1723
    %v1836 = vunpack.c.l.b16 %v1724
    %v1837 = vunpack.c.l.b16 %v1725
    %v1838 = vunpack.c.l.b16 %v1726
    %v1839 = vunpack.c.l.b16 %v1727
    %v1840 = vunpack.c.l.b16 %v1728
    %v1841 = vunpack.c.l.b16 %v1729
    %v1842 = vunpack.c.l.b16 %v1730
    %v1843 = vunpack.c.l.b16 %v1731
    %v1844 = vunpack.c.l.b16 %v1732
    %v1845 = vunpack.c.l.b16 %v1733
    %v1846 = vunpack.c.l.b16 %v1734
    %v1847 = vunpack.c.l.b16 %v1735
    %v1848 = vpack.c.b16 %v1813, %v1812
    %v1849 = vpack.c.b16 %v1815, %v1814
    %v1850 = vpack.c.b16 %v1817, %v1816
    %v1851 = vpack.c.b16 %v1819, %v1818
    %v1852 = vpack.c.b16 %v1821, %v1820
    %v1853 = vpack.c.b16 %v1823, %v1822
    %v1854 = vpack.c.b16 %v1825, %v1824
    %v1855 = vpack.c.b16 %v1827, %v1826
    %v1856 = vpack.c.b16 %v1829, %v1828
    %v1857 = vpack.c.b16 %v1831, %v1830
    %v1858 = vpack.c.b16 %v1833, %v1832
    %v1859 = vpack.c.b16 %v1835, %v1834
    %v1860 = vpack.c.b16 %v1837, %v1836
    %v1861 = vpack.c.b16 %v1839, %v1838
    %v1862 = vpack.c.b16 %v1841, %v1840
    %v1863 = vpack.c.b16 %v1843, %v1842
    %v1864 = vpack.c.b16 %v1845, %v1844
    %v1865 = vpack.c.b16 %v1847, %v1846
    %v1885 = vsel %vm1377, %v1738, 0
    %v1888 = vsel %vm1377, %v1741, 0
    %v1891 = vsel %vm1377, %v1744, 0
    %v1894 = vsel %vm1377, %v1747, 0
    %v1897 = vsel %vm1377, %v1750, 0
    %v1900 = vsel %vm1377, %v1753, 0
    %v1903 = vsel %vm1377, %v1756, 0
    %v1906 = vsel %vm1377, %v1759, 0
    %1908 = vmatprep.subr.bf16.mxu0 0
    %1909 = vmatpush1.bf16.msra.mxu0 %v1848
    %1910 = vmatprep.subr.bf16.mxu0 0
    %1911 = vmatpush1.bf16.msra.mxu0 %v1849
    %1912 = vmatprep.subr.bf16.mxu0 0
    %1913 = vmatpush1.bf16.msra.mxu0 %v1850
    %1914 = vmatprep.subr.bf16.mxu0 0
    %1915 = vmatpush1.bf16.msra.mxu0 %v1851
    %1916 = vmatprep.subr.bf16.mxu0 0
    %1917 = vmatpush1.bf16.msra.mxu0 %v1852
    %1918 = vmatprep.subr.bf16.mxu0 0
    %1919 = vmatpush1.bf16.msra.mxu0 %v1853
    %1920 = vmatprep.subr.bf16.mxu0 0
    %1921 = vmatpush1.bf16.msra.mxu0 %v1854
    %1922 = vmatprep.subr.bf16.mxu0 0
    %1923 = vmatpush1.bf16.msra.mxu0 %v1855
    %1924 = vmatprep.subr.bf16.mxu0 0
    %1925 = vmatpush1.bf16.msra.mxu0 %v1856
    %1926 = vmatprep.subr.bf16.mxu0 0
    %1927 = vmatpush1.bf16.msra.mxu0 %v1857
    %1928 = vmatprep.subr.bf16.mxu0 0
    %1929 = vmatpush1.bf16.msra.mxu0 %v1858
    %1930 = vmatprep.subr.bf16.mxu0 0
    %1931 = vmatpush1.bf16.msra.mxu0 %v1859
    %1932 = vmatprep.subr.bf16.mxu0 0
    %1933 = vmatpush1.bf16.msra.mxu0 %v1860
    %1934 = vmatprep.subr.bf16.mxu0 0
    %1935 = vmatpush1.bf16.msra.mxu0 %v1861
    %1936 = vmatprep.subr.bf16.mxu0 0
    %1937 = vmatpush1.bf16.msra.mxu0 %v1862
    %1938 = vmatprep.subr.bf16.mxu0 0
    %1939 = vmatpush1.bf16.msra.mxu0 %v1863
    %1940 = vmatprep.mubr.bf16.mxu0 %v1737
    %1941 = vmatmul.mubr.bf16.gmra.mrb[0].mxu0 %v1736
    %v1942 = vpop.f32.mrb[0].mxu0
    %v1943 = vadd.f32 0.0, %v1942
    %v1944 = vpop.f32.mrb[0].mxu0
    %v1945 = vpop.f32.mrb[0].mxu0
    %v1946 = vadd.f32 0.0, %v1945
    %v1947 = vpop.f32.mrb[0].mxu0
    %1948 = vmatprep.mubr.bf16.mxu0 %v1740
    %1949 = vmatmul.mubr.bf16.gmra.mrb[0].mxu0 %v1739
    %v1950 = vpop.f32.mrb[0].mxu0
    %v1951 = vadd.f32 0.0, %v1950
    %v1952 = vpop.f32.mrb[0].mxu0
    %v1953 = vpop.f32.mrb[0].mxu0
    %v1954 = vadd.f32 0.0, %v1953
    %v1955 = vpop.f32.mrb[0].mxu0
    %1956 = vmatprep.mubr.bf16.mxu0 %v1743
    %1957 = vmatmul.mubr.bf16.gmra.mrb[0].mxu0 %v1742
    %v1958 = vpop.f32.mrb[0].mxu0
    %v1959 = vadd.f32 0.0, %v1958
    %v1960 = vpop.f32.mrb[0].mxu0
    %v1961 = vpop.f32.mrb[0].mxu0
    %v1962 = vadd.f32 0.0, %v1961
    %v1963 = vpop.f32.mrb[0].mxu0
    %1964 = vmatprep.mubr.bf16.mxu0 %v1746
    %1965 = vmatmul.mubr.bf16.gmra.mrb[0].mxu0 %v1745
    %v1966 = vpop.f32.mrb[0].mxu0
    %v1967 = vadd.f32 0.0, %v1966
    %v1968 = vpop.f32.mrb[0].mxu0
    %v1969 = vpop.f32.mrb[0].mxu0
    %v1970 = vadd.f32 0.0, %v1969
    %v1971 = vpop.f32.mrb[0].mxu0
    %1972 = vmatprep.mubr.bf16.mxu0 %v1749
    %1973 = vmatmul.mubr.bf16.gmra.mrb[0].mxu0 %v1748
    %v1974 = vpop.f32.mrb[0].mxu0
    %v1975 = vadd.f32 0.0, %v1974
    %v1976 = vpop.f32.mrb[0].mxu0
    %v1977 = vpop.f32.mrb[0].mxu0
    %v1978 = vadd.f32 0.0, %v1977
    %v1979 = vpop.f32.mrb[0].mxu0
    %1980 = vmatprep.mubr.bf16.mxu0 %v1752
    %1981 = vmatmul.mubr.bf16.gmra.mrb[0].mxu0 %v1751
    %v1982 = vpop.f32.mrb[0].mxu0
    %v1983 = vadd.f32 0.0, %v1982
    %v1984 = vpop.f32.mrb[0].mxu0
    %v1985 = vpop.f32.mrb[0].mxu0
    %v1986 = vadd.f32 0.0, %v1985
    %v1987 = vpop.f32.mrb[0].mxu0
    %1988 = vmatprep.mubr.bf16.mxu0 %v1755
    %1989 = vmatmul.mubr.bf16.gmra.mrb[0].mxu0 %v1754
    %v1990 = vpop.f32.mrb[0].mxu0
    %v1991 = vadd.f32 0.0, %v1990
    %v1992 = vpop.f32.mrb[0].mxu0
    %v1993 = vpop.f32.mrb[0].mxu0
    %v1994 = vadd.f32 0.0, %v1993
    %v1995 = vpop.f32.mrb[0].mxu0
    %1996 = vmatprep.mubr.bf16.mxu0 %v1758
    %1997 = vmatmul.mubr.bf16.gmra.mrb[0].mxu0 %v1757
    %v1998 = vpop.f32.mrb[0].mxu0
    %v1999 = vadd.f32 0.0, %v1998
    %v2000 = vpop.f32.mrb[0].mxu0
    %v2001 = vpop.f32.mrb[0].mxu0
    %v2002 = vadd.f32 0.0, %v2001
    %v2003 = vpop.f32.mrb[0].mxu0
    %2004 = vdwg.mxu0
    %2005 = vmatprep.subr.bf16.mxu0 0
    %2006 = vmatpush1.bf16.msra.mxu0 %v1864
    %2007 = vmatprep.subr.bf16.mxu0 0
    %2008 = vmatpush1.bf16.msra.mxu0 %v1865
    %2009 = vmatprep.subr.bf16.mxu0 0
    %2010 = vmatpush1.bf16.msra.mxu0 0
    %2011 = vmatprep.subr.bf16.mxu0 0
    %2012 = vmatpush1.bf16.msra.mxu0 0
    %2013 = vmatprep.subr.bf16.mxu0 0
    %2014 = vmatpush1.bf16.msra.mxu0 0
    %2015 = vmatprep.subr.bf16.mxu0 0
    %2016 = vmatpush1.bf16.msra.mxu0 0
    %2017 = vmatprep.subr.bf16.mxu0 0
    %2018 = vmatpush1.bf16.msra.mxu0 0
    %2019 = vmatprep.subr.bf16.mxu0 0
    %2020 = vmatpush1.bf16.msra.mxu0 0
    %2021 = vmatprep.subr.bf16.mxu0 0
    %2022 = vmatpush1.bf16.msra.mxu0 0
    %2023 = vmatprep.subr.bf16.mxu0 0
    %2024 = vmatpush1.bf16.msra.mxu0 0
    %2025 = vmatprep.subr.bf16.mxu0 0
    %2026 = vmatpush1.bf16.msra.mxu0 0
    %2027 = vmatprep.subr.bf16.mxu0 0
    %2028 = vmatpush1.bf16.msra.mxu0 0
    %2029 = vmatprep.subr.bf16.mxu0 0
    %2030 = vmatpush1.bf16.msra.mxu0 0
    %2031 = vmatprep.subr.bf16.mxu0 0
    %2032 = vmatpush1.bf16.msra.mxu0 0
    %2033 = vmatprep.subr.bf16.mxu0 0
    %2034 = vmatpush1.bf16.msra.mxu0 0
    %2035 = vmatprep.subr.bf16.mxu0 0
    %2036 = vmatpush1.bf16.msra.mxu0 0
    %2037 = vmatprep.mubr.bf16.mxu0 0
    %2038 = vmatmul.mubr.bf16.gmra.mrb[0].mxu0 %v1885
    %v2039 = vpop.f32.mrb[0].mxu0
    %v2040 = vadd.f32 %v1943, %v2039
    %v2041 = vpop.f32.mrb[0].mxu0
    %v2042 = vpop.f32.mrb[0].mxu0
    %v2043 = vadd.f32 %v1946, %v2042
    %v2044 = vpop.f32.mrb[0].mxu0
    %2045 = vmatprep.mubr.bf16.mxu0 0
    %2046 = vmatmul.mubr.bf16.gmra.mrb[0].mxu0 %v1888
    %v2047 = vpop.f32.mrb[0].mxu0
    %v2048 = vadd.f32 %v1951, %v2047
    %v2049 = vpop.f32.mrb[0].mxu0
    %v2050 = vpop.f32.mrb[0].mxu0
    %v2051 = vadd.f32 %v1954, %v2050
    %v2052 = vpop.f32.mrb[0].mxu0
    %2053 = vmatprep.mubr.bf16.mxu0 0
    %2054 = vmatmul.mubr.bf16.gmra.mrb[0].mxu0 %v1891
    %v2055 = vpop.f32.mrb[0].mxu0
    %v2056 = vadd.f32 %v1959, %v2055
    %v2057 = vpop.f32.mrb[0].mxu0
    %v2058 = vpop.f32.mrb[0].mxu0
    %v2059 = vadd.f32 %v1962, %v2058
    %v2060 = vpop.f32.mrb[0].mxu0
    %2061 = vmatprep.mubr.bf16.mxu0 0
    %2062 = vmatmul.mubr.bf16.gmra.mrb[0].mxu0 %v1894
    %v2063 = vpop.f32.mrb[0].mxu0
    %v2064 = vadd.f32 %v1967, %v2063
    %v2065 = vpop.f32.mrb[0].mxu0
    %v2066 = vpop.f32.mrb[0].mxu0
    %v2067 = vadd.f32 %v1970, %v2066
    %v2068 = vpop.f32.mrb[0].mxu0
    %2069 = vmatprep.mubr.bf16.mxu0 0
    %2070 = vmatmul.mubr.bf16.gmra.mrb[0].mxu0 %v1897
    %v2071 = vpop.f32.mrb[0].mxu0
    %v2072 = vadd.f32 %v1975, %v2071
    %v2073 = vpop.f32.mrb[0].mxu0
    %v2074 = vpop.f32.mrb[0].mxu0
    %v2075 = vadd.f32 %v1978, %v2074
    %v2076 = vpop.f32.mrb[0].mxu0
    %2077 = vmatprep.mubr.bf16.mxu0 0
    %2078 = vmatmul.mubr.bf16.gmra.mrb[0].mxu0 %v1900
    %v2079 = vpop.f32.mrb[0].mxu0
    %v2080 = vadd.f32 %v1983, %v2079
    %v2081 = vpop.f32.mrb[0].mxu0
    %v2082 = vpop.f32.mrb[0].mxu0
    %v2083 = vadd.f32 %v1986, %v2082
    %v2084 = vpop.f32.mrb[0].mxu0
    %2085 = vmatprep.mubr.bf16.mxu0 0
    %2086 = vmatmul.mubr.bf16.gmra.mrb[0].mxu0 %v1903
    %v2087 = vpop.f32.mrb[0].mxu0
    %v2088 = vadd.f32 %v1991, %v2087
    %v2089 = vpop.f32.mrb[0].mxu0
    %v2090 = vpop.f32.mrb[0].mxu0
    %v2091 = vadd.f32 %v1994, %v2090
    %v2092 = vpop.f32.mrb[0].mxu0
    %2093 = vmatprep.mubr.bf16.mxu0 0
    %2094 = vmatmul.mubr.bf16.gmra.mrb[0].mxu0 %v1906
    %v2095 = vpop.f32.mrb[0].mxu0
    %v2096 = vadd.f32 %v1999, %v2095
    %v2097 = vpop.f32.mrb[0].mxu0
    %v2098 = vpop.f32.mrb[0].mxu0
    %v2099 = vadd.f32 %v2002, %v2098
    %v2100 = vpop.f32.mrb[0].mxu0
    %2101 = vdwg.mxu0
    %v2102 = vadd.f32 %v1684, %v2040
    %v2103 = vadd.f32 %v1685, %v2043
    %v2104 = vadd.f32 %v1686, %v2048
    %v2105 = vadd.f32 %v1687, %v2051
    %v2106 = vadd.f32 %v1688, %v2056
    %v2107 = vadd.f32 %v1689, %v2059
    %v2108 = vadd.f32 %v1690, %v2064
    %v2109 = vadd.f32 %v1691, %v2067
    %v2110 = vadd.f32 %v1692, %v2072
    %v2111 = vadd.f32 %v1693, %v2075
    %v2112 = vadd.f32 %v1694, %v2080
    %v2113 = vadd.f32 %v1695, %v2083
    %v2114 = vadd.f32 %v1696, %v2088
    %v2115 = vadd.f32 %v1697, %v2091
    %v2116 = vadd.f32 %v1698, %v2096
    %v2117 = vadd.f32 %v1699, %v2099
    %2118 = vst.msk [vmem:[#allocation3] sm:$0xff] %vm1377, %v2102
    %2119 = vst.msk [vmem:[#allocation3 + $0x8] sm:$0xff] %vm1377, %v2103
    %2120 = vst.msk [vmem:[#allocation3 + $0x10] sm:$0xff] %vm1377, %v2104
    %2121 = vst.msk [vmem:[#allocation3 + $0x18] sm:$0xff] %vm1377, %v2105
    %2122 = vst.msk [vmem:[#allocation3 + $0x20] sm:$0xff] %vm1377, %v2106
    %2123 = vst.msk [vmem:[#allocation3 + $0x28] sm:$0xff] %vm1377, %v2107
    %2124 = vst.msk [vmem:[#allocation3 + $0x30] sm:$0xff] %vm1377, %v2108
    %2125 = vst.msk [vmem:[#allocation3 + $0x38] sm:$0xff] %vm1377, %v2109
    %2126 = vst.msk [vmem:[#allocation3 + $0x40] sm:$0xff] %vm1377, %v2110
    %2127 = vst.msk [vmem:[#allocation3 + $0x48] sm:$0xff] %vm1377, %v2111
    %2128 = vst.msk [vmem:[#allocation3 + $0x50] sm:$0xff] %vm1377, %v2112
    %2129 = vst.msk [vmem:[#allocation3 + $0x58] sm:$0xff] %vm1377, %v2113
    %2130 = vst.msk [vmem:[#allocation3 + $0x60] sm:$0xff] %vm1377, %v2114
    %2131 = vst.msk [vmem:[#allocation3 + $0x68] sm:$0xff] %vm1377, %v2115
    %2132 = vst.msk [vmem:[#allocation3 + $0x70] sm:$0xff] %vm1377, %v2116
    %2133 = vst.msk [vmem:[#allocation3 + $0x78] sm:$0xff] %vm1377, %v2117
    // Predicated region
    $region38: #{_lambda_.5} parent=1 // pred_check
      %p2134 = pneg %p70
    $region39: #{_lambda_.5} parent=1 // pred_check_branch
      %2136 = sbr.rel (%p2134) target = $region41
    $region40: #{_lambda_.5} parent=1 // pred_region
      %v2137 = vld [vmem:[#allocation3] sm:$0xff]
      %v2138 = vld [vmem:[#allocation3 + $0x8] sm:$0xff]
      %v2139 = vld [vmem:[#allocation3 + $0x10] sm:$0xff]
      %v2140 = vld [vmem:[#allocation3 + $0x18] sm:$0xff]
      %v2141 = vld [vmem:[#allocation3 + $0x20] sm:$0xff]
      %v2142 = vld [vmem:[#allocation3 + $0x28] sm:$0xff]
      %v2143 = vld [vmem:[#allocation3 + $0x30] sm:$0xff]
      %v2144 = vld [vmem:[#allocation3 + $0x38] sm:$0xff]
      %v2145 = vld [vmem:[#allocation3 + $0x40] sm:$0xff]
      %v2146 = vld [vmem:[#allocation3 + $0x48] sm:$0xff]
      %v2147 = vld [vmem:[#allocation3 + $0x50] sm:$0xff]
      %v2148 = vld [vmem:[#allocation3 + $0x58] sm:$0xff]
      %v2149 = vld [vmem:[#allocation3 + $0x60] sm:$0xff]
      %v2150 = vld [vmem:[#allocation3 + $0x68] sm:$0xff]
      %v2151 = vld [vmem:[#allocation3 + $0x70] sm:$0xff]
      %v2152 = vld [vmem:[#allocation3 + $0x78] sm:$0xff]
      %v2153 = vld [vmem:[#allocation9] sm:$0x1]
      %v2155 = vlaneseq
      %v2156 = vshrl.u32 %v2155, 7
      %v2157 = vsub.s32 0, %v2156
      %v2158 = vrot.slane %v2153, %v2157
      %v2160 = vmul.f32 %v2137, %v2158
      %v2161 = vmul.f32 %v2138, %v2158
      %v2162 = vmul.f32 %v2139, %v2158
      %v2163 = vmul.f32 %v2140, %v2158
      %v2164 = vmul.f32 %v2141, %v2158
      %v2165 = vmul.f32 %v2142, %v2158
      %v2166 = vmul.f32 %v2143, %v2158
      %v2167 = vmul.f32 %v2144, %v2158
      %v2168 = vmul.f32 %v2145, %v2158
      %v2169 = vmul.f32 %v2146, %v2158
      %v2170 = vmul.f32 %v2147, %v2158
      %v2171 = vmul.f32 %v2148, %v2158
      %v2172 = vmul.f32 %v2149, %v2158
      %v2173 = vmul.f32 %v2150, %v2158
      %v2174 = vmul.f32 %v2151, %v2158
      %v2175 = vmul.f32 %v2152, %v2158
      %v2176 = vld [vmem:[#allocation10] sm:$0x1]
      %v2178 = vlaneseq
      %v2179 = vshrl.u32 %v2178, 7
      %v2180 = vsub.s32 0, %v2179
      %v2181 = vrot.slane %v2176, %v2180
      %v2183 = vadd.f32 %v2160, %v2181
      %v2184 = vadd.f32 %v2161, %v2181
      %v2185 = vadd.f32 %v2162, %v2181
      %v2186 = vadd.f32 %v2163, %v2181
      %v2187 = vadd.f32 %v2164, %v2181
      %v2188 = vadd.f32 %v2165, %v2181
      %v2189 = vadd.f32 %v2166, %v2181
      %v2190 = vadd.f32 %v2167, %v2181
      %v2191 = vadd.f32 %v2168, %v2181
      %v2192 = vadd.f32 %v2169, %v2181
      %v2193 = vadd.f32 %v2170, %v2181
      %v2194 = vadd.f32 %v2171, %v2181
      %v2195 = vadd.f32 %v2172, %v2181
      %v2196 = vadd.f32 %v2173, %v2181
      %v2197 = vadd.f32 %v2174, %v2181
      %v2198 = vadd.f32 %v2175, %v2181
      %v2199 = vmax.f32 %v2183, 0.0
      %v2200 = vmax.f32 %v2184, 0.0
      %v2201 = vmax.f32 %v2185, 0.0
      %v2202 = vmax.f32 %v2186, 0.0
      %v2203 = vmax.f32 %v2187, 0.0
      %v2204 = vmax.f32 %v2188, 0.0
      %v2205 = vmax.f32 %v2189, 0.0
      %v2206 = vmax.f32 %v2190, 0.0
      %v2207 = vmax.f32 %v2191, 0.0
      %v2208 = vmax.f32 %v2192, 0.0
      %v2209 = vmax.f32 %v2193, 0.0
      %v2210 = vmax.f32 %v2194, 0.0
      %v2211 = vmax.f32 %v2195, 0.0
      %v2212 = vmax.f32 %v2196, 0.0
      %v2213 = vmax.f32 %v2197, 0.0
      %v2214 = vmax.f32 %v2198, 0.0
      %v2215 = vpack.c.bf16 %v2199, %v2199
      %v2216 = vpack.c.bf16 %v2200, %v2200
      %v2217 = vpack.c.bf16 %v2201, %v2201
      %v2218 = vpack.c.bf16 %v2202, %v2202
      %v2219 = vpack.c.bf16 %v2203, %v2203
      %v2220 = vpack.c.bf16 %v2204, %v2204
      %v2221 = vpack.c.bf16 %v2205, %v2205
      %v2222 = vpack.c.bf16 %v2206, %v2206
      %v2223 = vpack.c.bf16 %v2207, %v2207
      %v2224 = vpack.c.bf16 %v2208, %v2208
      %v2225 = vpack.c.bf16 %v2209, %v2209
      %v2226 = vpack.c.bf16 %v2210, %v2210
      %v2227 = vpack.c.bf16 %v2211, %v2211
      %v2228 = vpack.c.bf16 %v2212, %v2212
      %v2229 = vpack.c.bf16 %v2213, %v2213
      %v2230 = vpack.c.bf16 %v2214, %v2214
      %vm2231 = vcmask 257024
      %2232 = vst.msk [vmem:[#allocation12] sm:$0xf] %vm2231, %v2215
      %2233 = vst.msk [vmem:[#allocation12 + $0x4] sm:$0xf] %vm2231, %v2216
      %2234 = vst.msk [vmem:[#allocation12 + $0x8] sm:$0xf] %vm2231, %v2217
      %2235 = vst.msk [vmem:[#allocation12 + $0xc] sm:$0xf] %vm2231, %v2218
      %2236 = vst.msk [vmem:[#allocation12 + $0x10] sm:$0xf] %vm2231, %v2219
      %2237 = vst.msk [vmem:[#allocation12 + $0x14] sm:$0xf] %vm2231, %v2220
      %2238 = vst.msk [vmem:[#allocation12 + $0x18] sm:$0xf] %vm2231, %v2221
      %2239 = vst.msk [vmem:[#allocation12 + $0x1c] sm:$0xf] %vm2231, %v2222
      %2240 = vst.msk [vmem:[#allocation12 + $0x20] sm:$0xf] %vm2231, %v2223
      %2241 = vst.msk [vmem:[#allocation12 + $0x24] sm:$0xf] %vm2231, %v2224
      %2242 = vst.msk [vmem:[#allocation12 + $0x28] sm:$0xf] %vm2231, %v2225
      %2243 = vst.msk [vmem:[#allocation12 + $0x2c] sm:$0xf] %vm2231, %v2226
      %2244 = vst.msk [vmem:[#allocation12 + $0x30] sm:$0xf] %vm2231, %v2227
      %2245 = vst.msk [vmem:[#allocation12 + $0x34] sm:$0xf] %vm2231, %v2228
      %2246 = vst.msk [vmem:[#allocation12 + $0x38] sm:$0xf] %vm2231, %v2229
      %2247 = vst.msk [vmem:[#allocation12 + $0x3c] sm:$0xf] %vm2231, %v2230
    $region41: #{_lambda_.5} parent=1 // pred_fallthru
      _
    // Predicated region
    $region42: #{_lambda_.5} parent=1 // pred_check
      _
    $region43: #{_lambda_.5} parent=1 // pred_check_branch
      %2249 = sbr.rel (0) target = $region45
    $region44: #{_lambda_.5} parent=1 // pred_region
      %s2251 = ssub.s32 1024, 1024
      %2252 = vsyncadd [#allocation6], %s2251
      %s2253 = sshll.u32 [#allocation12], 4
      %s2254 = int_to_ptr.vmem [resolvable:$true] %s2253
      %2259 = dma.vmem_to_hbm [thread:$0]  %s2254, 1024, %s4, [#allocation6], 64, 64, 4
    $region45: #{_lambda_.5} parent=1 // pred_fallthru
      _
    // Predicated region
    $region46: #{_lambda_.5} parent=1 // pred_check
      _
    $region47: #{_lambda_.5} parent=1 // pred_check_branch
      %2261 = sbr.rel (0) target = $region49
    $region48: #{_lambda_.5} parent=1 // pred_region
      %2262 = dma.done [#allocation6], 1024
    $region49: #{_lambda_.5} parent=1 // pred_fallthru
      _
    %2263 = vsyncpa [#allocation5], 1
    %2264 = vsyncpa [#allocation8], 1
    %2265 = vsyncpa [#allocation11], 1
    %2266 = vsyncpa [#allocation6], 1

// kernel: _lambda_.7
$region0: #{_lambda_.7}
  #allocation0 [shape = 'u32[]', space=smem, size = 0x4, offset = 0x4, fixed_abs, tag = 'smem constant byte address 0x4 - core index']
  #allocation1 [shape = 'u32[144,128]{1,0:T(1,128)}', space=vmem, size = 0x12000, scoped, tag = 'internal scratch']
  #allocation2 [shape = 'bf16[2,10,11,32]{3,2,1,0:T(8,128)(2,1)}', space=vmem, size = 0x14000, scoped, tag = 'scratch operand']
  #allocation3 [shape = 'f32[128,32]{1,0:T(8,128)}', space=vmem, size = 0x10000, scoped, tag = 'scratch operand']
  %s0 = inlined_call_operand.hbm [shape: bf16[2,8,8,32], index: 0, kind: input, shape index: {}]
  %s1 = inlined_call_operand.hbm [shape: bf16[9,32,32], index: 1, kind: input, shape index: {}]
  %s2 = inlined_call_operand.hbm [shape: f32[1,32], index: 2, kind: input, shape index: {}]
  %s3 = inlined_call_operand.hbm [shape: f32[1,32], index: 3, kind: input, shape index: {}]
  %s4 = inlined_call_operand.hbm [shape: bf16[2,8,8,32], index: 4, kind: output, shape index: {}]
  %s5 = sld [smem:[#allocation0]]
  $region50: #{_lambda_.7} parent=0
    _
  %s7 = ssub.s32 1, %s5
  %s8 = scalar_select 0, %s7, %s5
  $region1: #{_lambda_.7} parent=0
    #allocation4 [shape = 'u8[32768]{0}', space=vmem, size = 0x8000, scoped, tag = 'input window, operand 0, single buffered']
    #allocation5 [shape = 's32[1]{0}', space=sflag, size = 0x4, scoped, tag = 'scoped memory for _lambda_.7']
    #allocation6 [shape = 's32[1]{0}', space=sflag, size = 0x4, scoped, tag = 'scoped memory for _lambda_.7']
    #allocation7 [shape = 'u8[73728]{0}', space=vmem, size = 0x12000, scoped, tag = 'input window, operand 1, single buffered']
    #allocation8 [shape = 's32[1]{0}', space=sflag, size = 0x4, scoped, tag = 'scoped memory for _lambda_.7']
    #allocation9 [shape = 'u8[512]{0}', space=vmem, size = 0x400, scoped, tag = 'input window, operand 2, single buffered']
    #allocation10 [shape = 'u8[512]{0}', space=vmem, size = 0x400, scoped, tag = 'input window, operand 3, single buffered']
    #allocation11 [shape = 's32[1]{0}', space=sflag, size = 0x4, scoped, tag = 'scoped memory for _lambda_.7']
    #allocation12 [shape = 'u8[32768]{0}', space=vmem, size = 0x8000, scoped, tag = 'output window, operand 0, single buffered']
    %9 = vsyncpa [#allocation5], 0
    %10 = vsyncpa [#allocation8], 0
    %11 = vsyncpa [#allocation11], 0
    %12 = vsyncpa [#allocation6], 0
    // Predicated region
    $region2: #{_lambda_.7} parent=1 // pred_check
      _
    $region3: #{_lambda_.7} parent=1 // pred_check_branch
      %14 = sbr.rel (0) target = $region5
    $region4: #{_lambda_.7} parent=1 // pred_region
      %s16 = ssub.s32 1024, 1024
      %17 = vsyncadd [#allocation5], %s16
      %s18 = sshll.u32 [#allocation4], 4
      %s19 = int_to_ptr.vmem [resolvable:$true] %s18
      %24 = dma.hbm_to_vmem [thread:$0]  %s0, 1024, %s19, [#allocation5], 64, 64, 4
    $region5: #{_lambda_.7} parent=1 // pred_fallthru
      _
    // Predicated region
    $region6: #{_lambda_.7} parent=1 // pred_check
      _
    $region7: #{_lambda_.7} parent=1 // pred_check_branch
      %26 = sbr.rel (0) target = $region9
    $region8: #{_lambda_.7} parent=1 // pred_region
      %s28 = ssub.s32 2304, 2304
      %29 = vsyncadd [#allocation8], %s28
      %s30 = sshll.u32 [#allocation7], 4
      %s31 = int_to_ptr.vmem [resolvable:$true] %s30
      %36 = dma.hbm_to_vmem [thread:$0]  %s1, 2304, %s31, [#allocation8], 64, 64, 4
    $region9: #{_lambda_.7} parent=1 // pred_fallthru
      _
    // Predicated region
    $region10: #{_lambda_.7} parent=1 // pred_check
      _
    $region11: #{_lambda_.7} parent=1 // pred_check_branch
      %38 = sbr.rel (0) target = $region13
    $region12: #{_lambda_.7} parent=1 // pred_region
      %s40 = ssub.s32 16, 16
      %41 = vsyncadd [#allocation8], %s40
      %s43 = sshll.u32 [#allocation9], 4
      %s44 = int_to_ptr.vmem [resolvable:$true] %s43
      %46 = dma.hbm_to_vmem [thread:$0]  %s2, 16, %s44, [#allocation8]
    $region13: #{_lambda_.7} parent=1 // pred_fallthru
      _
    // Predicated region
    $region14: #{_lambda_.7} parent=1 // pred_check
      _
    $region15: #{_lambda_.7} parent=1 // pred_check_branch
      %48 = sbr.rel (0) target = $region17
    $region16: #{_lambda_.7} parent=1 // pred_region
      %s50 = ssub.s32 16, 16
      %51 = vsyncadd [#allocation11], %s50
      %s53 = sshll.u32 [#allocation10], 4
      %s54 = int_to_ptr.vmem [resolvable:$true] %s53
      %56 = dma.hbm_to_vmem [thread:$0]  %s3, 16, %s54, [#allocation11]
    $region17: #{_lambda_.7} parent=1 // pred_fallthru
      _
    // Predicated region
    $region18: #{_lambda_.7} parent=1 // pred_check
      _
    $region19: #{_lambda_.7} parent=1 // pred_check_branch
      %58 = sbr.rel (0) target = $region21
    $region20: #{_lambda_.7} parent=1 // pred_region
      %59 = dma.done [#allocation5], 1024
    $region21: #{_lambda_.7} parent=1 // pred_fallthru
      _
    // Predicated region
    $region22: #{_lambda_.7} parent=1 // pred_check
      _
    $region23: #{_lambda_.7} parent=1 // pred_check_branch
      %61 = sbr.rel (0) target = $region25
    $region24: #{_lambda_.7} parent=1 // pred_region
      %62 = dma.done [#allocation8], 2304
    $region25: #{_lambda_.7} parent=1 // pred_fallthru
      _
    // Predicated region
    $region26: #{_lambda_.7} parent=1 // pred_check
      _
    $region27: #{_lambda_.7} parent=1 // pred_check_branch
      %64 = sbr.rel (0) target = $region29
    $region28: #{_lambda_.7} parent=1 // pred_region
      %65 = dma.done [#allocation8], 16
    $region29: #{_lambda_.7} parent=1 // pred_fallthru
      _
    // Predicated region
    $region30: #{_lambda_.7} parent=1 // pred_check
      _
    $region31: #{_lambda_.7} parent=1 // pred_check_branch
      %67 = sbr.rel (0) target = $region33
    $region32: #{_lambda_.7} parent=1 // pred_region
      %68 = dma.done [#allocation11], 16
    $region33: #{_lambda_.7} parent=1 // pred_fallthru
      _
    %p70 = scmp.eq.s32.totalorder 0, 0
    // Predicated region
    $region34: #{_lambda_.7} parent=1 // pred_check
      %p71 = pneg %p70
    $region35: #{_lambda_.7} parent=1 // pred_check_branch
      %73 = sbr.rel (%p71) target = $region37
    $region36: #{_lambda_.7} parent=1 // pred_region
      %vm74 = vcmask 261120
      %75 = vst.msk [vmem:[#allocation3] sm:$0xff] %vm74, 0.0
      %76 = vst.msk [vmem:[#allocation3 + $0x8] sm:$0xff] %vm74, 0.0
      %77 = vst.msk [vmem:[#allocation3 + $0x10] sm:$0xff] %vm74, 0.0
      %78 = vst.msk [vmem:[#allocation3 + $0x18] sm:$0xff] %vm74, 0.0
      %79 = vst.msk [vmem:[#allocation3 + $0x20] sm:$0xff] %vm74, 0.0
      %80 = vst.msk [vmem:[#allocation3 + $0x28] sm:$0xff] %vm74, 0.0
      %81 = vst.msk [vmem:[#allocation3 + $0x30] sm:$0xff] %vm74, 0.0
      %82 = vst.msk [vmem:[#allocation3 + $0x38] sm:$0xff] %vm74, 0.0
      %83 = vst.msk [vmem:[#allocation3 + $0x40] sm:$0xff] %vm74, 0.0
      %84 = vst.msk [vmem:[#allocation3 + $0x48] sm:$0xff] %vm74, 0.0
      %85 = vst.msk [vmem:[#allocation3 + $0x50] sm:$0xff] %vm74, 0.0
      %86 = vst.msk [vmem:[#allocation3 + $0x58] sm:$0xff] %vm74, 0.0
      %87 = vst.msk [vmem:[#allocation3 + $0x60] sm:$0xff] %vm74, 0.0
      %88 = vst.msk [vmem:[#allocation3 + $0x68] sm:$0xff] %vm74, 0.0
      %89 = vst.msk [vmem:[#allocation3 + $0x70] sm:$0xff] %vm74, 0.0
      %90 = vst.msk [vmem:[#allocation3 + $0x78] sm:$0xff] %vm74, 0.0
      %vm91 = vcmask 257024
      %92 = vst.msk [vmem:[#allocation2] sm:$0xf] %vm91, 0
      %vm93 = vcmask 254976
      %vm94 = vsmask.f32 1280
      %vm95 = vmand %vm93, %vm94
      %v96 = vld [vmem:[#allocation2 + $0x4] sm:$0x3]
      %v97 = vsel %vm95, 0, %v96
      %98 = vst [vmem:[#allocation2 + $0x4] sm:$0x3] %v97
      %99 = vst.msk [vmem:[#allocation2 + $0x8] sm:$0xf] %vm91, 0
      %v100 = vld [vmem:[#allocation2 + $0xc] sm:$0x3]
      %v101 = vsel %vm95, 0, %v100
      %102 = vst [vmem:[#allocation2 + $0xc] sm:$0x3] %v101
      %103 = vst.msk [vmem:[#allocation2 + $0x10] sm:$0xf] %vm91, 0
      %v104 = vld [vmem:[#allocation2 + $0x14] sm:$0x3]
      %v105 = vsel %vm95, 0, %v104
      %106 = vst [vmem:[#allocation2 + $0x14] sm:$0x3] %v105
      %107 = vst.msk [vmem:[#allocation2 + $0x18] sm:$0xf] %vm91, 0
      %v108 = vld [vmem:[#allocation2 + $0x1c] sm:$0x3]
      %v109 = vsel %vm95, 0, %v108
      %110 = vst [vmem:[#allocation2 + $0x1c] sm:$0x3] %v109
      %111 = vst.msk [vmem:[#allocation2 + $0x20] sm:$0xf] %vm91, 0
      %v112 = vld [vmem:[#allocation2 + $0x24] sm:$0x3]
      %v113 = vsel %vm95, 0, %v112
      %114 = vst [vmem:[#allocation2 + $0x24] sm:$0x3] %v113
      %115 = vst.msk [vmem:[#allocation2 + $0x28] sm:$0xf] %vm91, 0
      %v116 = vld [vmem:[#allocation2 + $0x2c] sm:$0x3]
      %v117 = vsel %vm95, 0, %v116
      %118 = vst [vmem:[#allocation2 + $0x2c] sm:$0x3] %v117
      %119 = vst.msk [vmem:[#allocation2 + $0x30] sm:$0xf] %vm91, 0
      %v120 = vld [vmem:[#allocation2 + $0x34] sm:$0x3]
      %v121 = vsel %vm95, 0, %v120
      %122 = vst [vmem:[#allocation2 + $0x34] sm:$0x3] %v121
      %123 = vst.msk [vmem:[#allocation2 + $0x38] sm:$0xf] %vm91, 0
      %v124 = vld [vmem:[#allocation2 + $0x3c] sm:$0x3]
      %v125 = vsel %vm95, 0, %v124
      %126 = vst [vmem:[#allocation2 + $0x3c] sm:$0x3] %v125
      %127 = vst.msk [vmem:[#allocation2 + $0x40] sm:$0xf] %vm91, 0
      %v128 = vld [vmem:[#allocation2 + $0x44] sm:$0x3]
      %v129 = vsel %vm95, 0, %v128
      %130 = vst [vmem:[#allocation2 + $0x44] sm:$0x3] %v129
      %131 = vst.msk [vmem:[#allocation2 + $0x48] sm:$0xf] %vm91, 0
      %v132 = vld [vmem:[#allocation2 + $0x4c] sm:$0x3]
      %v133 = vsel %vm95, 0, %v132
      %134 = vst [vmem:[#allocation2 + $0x4c] sm:$0x3] %v133
      %135 = vst.msk [vmem:[#allocation2 + $0x50] sm:$0xf] %vm91, 0
      %v136 = vld [vmem:[#allocation2 + $0x54] sm:$0x3]
      %v137 = vsel %vm95, 0, %v136
      %138 = vst [vmem:[#allocation2 + $0x54] sm:$0x3] %v137
      %139 = vst.msk [vmem:[#allocation2 + $0x58] sm:$0xf] %vm91, 0
      %v140 = vld [vmem:[#allocation2 + $0x5c] sm:$0x3]
      %v141 = vsel %vm95, 0, %v140
      %142 = vst [vmem:[#allocation2 + $0x5c] sm:$0x3] %v141
      %143 = vst.msk [vmem:[#allocation2 + $0x60] sm:$0xf] %vm91, 0
      %v144 = vld [vmem:[#allocation2 + $0x64] sm:$0x3]
      %v145 = vsel %vm95, 0, %v144
      %146 = vst [vmem:[#allocation2 + $0x64] sm:$0x3] %v145
      %147 = vst.msk [vmem:[#allocation2 + $0x68] sm:$0xf] %vm91, 0
      %v148 = vld [vmem:[#allocation2 + $0x6c] sm:$0x3]
      %v149 = vsel %vm95, 0, %v148
      %150 = vst [vmem:[#allocation2 + $0x6c] sm:$0x3] %v149
      %151 = vst.msk [vmem:[#allocation2 + $0x70] sm:$0xf] %vm91, 0
      %v152 = vld [vmem:[#allocation2 + $0x74] sm:$0x3]
      %v153 = vsel %vm95, 0, %v152
      %154 = vst [vmem:[#allocation2 + $0x74] sm:$0x3] %v153
      %155 = vst.msk [vmem:[#allocation2 + $0x78] sm:$0xf] %vm91, 0
      %v156 = vld [vmem:[#allocation2 + $0x7c] sm:$0x3]
      %v157 = vsel %vm95, 0, %v156
      %158 = vst [vmem:[#allocation2 + $0x7c] sm:$0x3] %v157
      %159 = vst.msk [vmem:[#allocation2 + $0x80] sm:$0xf] %vm91, 0
      %v160 = vld [vmem:[#allocation2 + $0x84] sm:$0x3]
      %v161 = vsel %vm95, 0, %v160
      %162 = vst [vmem:[#allocation2 + $0x84] sm:$0x3] %v161
      %163 = vst.msk [vmem:[#allocation2 + $0x88] sm:$0xf] %vm91, 0
      %v164 = vld [vmem:[#allocation2 + $0x8c] sm:$0x3]
      %v165 = vsel %vm95, 0, %v164
      %166 = vst [vmem:[#allocation2 + $0x8c] sm:$0x3] %v165
      %167 = vst.msk [vmem:[#allocation2 + $0x90] sm:$0xf] %vm91, 0
      %v168 = vld [vmem:[#allocation2 + $0x94] sm:$0x3]
      %v169 = vsel %vm95, 0, %v168
      %170 = vst [vmem:[#allocation2 + $0x94] sm:$0x3] %v169
      %171 = vst.msk [vmem:[#allocation2 + $0x98] sm:$0xf] %vm91, 0
      %v172 = vld [vmem:[#allocation2 + $0x9c] sm:$0x3]
      %v173 = vsel %vm95, 0, %v172
      %174 = vst [vmem:[#allocation2 + $0x9c] sm:$0x3] %v173
    $region37: #{_lambda_.7} parent=1 // pred_fallthru
      _
    %v175 = vld [vmem:[#allocation4] sm:$0xf]
    %v176 = vld [vmem:[#allocation4 + $0x4] sm:$0xf]
    %v177 = vld [vmem:[#allocation4 + $0x8] sm:$0xf]
    %v178 = vld [vmem:[#allocation4 + $0xc] sm:$0xf]
    %v179 = vld [vmem:[#allocation4 + $0x10] sm:$0xf]
    %v180 = vld [vmem:[#allocation4 + $0x14] sm:$0xf]
    %v181 = vld [vmem:[#allocation4 + $0x18] sm:$0xf]
    %v182 = vld [vmem:[#allocation4 + $0x1c] sm:$0xf]
    %v183 = vld [vmem:[#allocation4 + $0x20] sm:$0xf]
    %v184 = vld [vmem:[#allocation4 + $0x24] sm:$0xf]
    %v185 = vld [vmem:[#allocation4 + $0x28] sm:$0xf]
    %v186 = vld [vmem:[#allocation4 + $0x2c] sm:$0xf]
    %v187 = vld [vmem:[#allocation4 + $0x30] sm:$0xf]
    %v188 = vld [vmem:[#allocation4 + $0x34] sm:$0xf]
    %v189 = vld [vmem:[#allocation4 + $0x38] sm:$0xf]
    %v190 = vld [vmem:[#allocation4 + $0x3c] sm:$0xf]
    %v207 = vrot.slane %v175, 7
    %v208 = vrot.slane %v207, 4
    %v209 = vrot.slane %v176, 7
    %v210 = vrot.slane %v209, 4
    %v211 = vrot.slane %v177, 7
    %v212 = vrot.slane %v211, 4
    %v213 = vrot.slane %v178, 7
    %v214 = vrot.slane %v213, 4
    %v215 = vrot.slane %v179, 7
    %v216 = vrot.slane %v215, 4
    %v217 = vrot.slane %v180, 7
    %v218 = vrot.slane %v217, 4
    %v219 = vrot.slane %v181, 7
    %v220 = vrot.slane %v219, 4
    %v221 = vrot.slane %v182, 7
    %v222 = vrot.slane %v221, 4
    %v223 = vrot.slane %v183, 7
    %v224 = vrot.slane %v223, 4
    %v225 = vrot.slane %v184, 7
    %v226 = vrot.slane %v225, 4
    %v227 = vrot.slane %v185, 7
    %v228 = vrot.slane %v227, 4
    %v229 = vrot.slane %v186, 7
    %v230 = vrot.slane %v229, 4
    %v231 = vrot.slane %v187, 7
    %v232 = vrot.slane %v231, 4
    %v233 = vrot.slane %v188, 7
    %v234 = vrot.slane %v233, 4
    %v235 = vrot.slane %v189, 7
    %v236 = vrot.slane %v235, 4
    %v237 = vrot.slane %v190, 7
    %v238 = vrot.slane %v237, 4
    %s271 = scalar_lea.vmem [#allocation2], 8
    %vm272 = vcmask 257025
    %273 = vst.msk [vmem:[%s271] sm:$0xe] %vm272, %v207
    %vm274 = vcmask 253952
    %275 = vst.msk [vmem:[%s271 + $0x4] sm:$0x1] %vm274, %v208
    %276 = vst.msk [vmem:[%s271 + $0x8] sm:$0xe] %vm272, %v209
    %277 = vst.msk [vmem:[%s271 + $0xc] sm:$0x1] %vm274, %v210
    %278 = vst.msk [vmem:[%s271 + $0x10] sm:$0xe] %vm272, %v211
    %279 = vst.msk [vmem:[%s271 + $0x14] sm:$0x1] %vm274, %v212
    %280 = vst.msk [vmem:[%s271 + $0x18] sm:$0xe] %vm272, %v213
    %281 = vst.msk [vmem:[%s271 + $0x1c] sm:$0x1] %vm274, %v214
    %282 = vst.msk [vmem:[%s271 + $0x20] sm:$0xe] %vm272, %v215
    %283 = vst.msk [vmem:[%s271 + $0x24] sm:$0x1] %vm274, %v216
    %284 = vst.msk [vmem:[%s271 + $0x28] sm:$0xe] %vm272, %v217
    %285 = vst.msk [vmem:[%s271 + $0x2c] sm:$0x1] %vm274, %v218
    %286 = vst.msk [vmem:[%s271 + $0x30] sm:$0xe] %vm272, %v219
    %287 = vst.msk [vmem:[%s271 + $0x34] sm:$0x1] %vm274, %v220
    %288 = vst.msk [vmem:[%s271 + $0x38] sm:$0xe] %vm272, %v221
    %289 = vst.msk [vmem:[%s271 + $0x3c] sm:$0x1] %vm274, %v222
    %290 = vst.msk [vmem:[%s271 + $0x50] sm:$0xe] %vm272, %v223
    %291 = vst.msk [vmem:[%s271 + $0x54] sm:$0x1] %vm274, %v224
    %292 = vst.msk [vmem:[%s271 + $0x58] sm:$0xe] %vm272, %v225
    %293 = vst.msk [vmem:[%s271 + $0x5c] sm:$0x1] %vm274, %v226
    %294 = vst.msk [vmem:[%s271 + $0x60] sm:$0xe] %vm272, %v227
    %295 = vst.msk [vmem:[%s271 + $0x64] sm:$0x1] %vm274, %v228
    %296 = vst.msk [vmem:[%s271 + $0x68] sm:$0xe] %vm272, %v229
    %297 = vst.msk [vmem:[%s271 + $0x6c] sm:$0x1] %vm274, %v230
    %298 = vst.msk [vmem:[%s271 + $0x70] sm:$0xe] %vm272, %v231
    %299 = vst.msk [vmem:[%s271 + $0x74] sm:$0x1] %vm274, %v232
    %300 = vst.msk [vmem:[%s271 + $0x78] sm:$0xe] %vm272, %v233
    %301 = vst.msk [vmem:[%s271 + $0x7c] sm:$0x1] %vm274, %v234
    %302 = vst.msk [vmem:[%s271 + $0x80] sm:$0xe] %vm272, %v235
    %303 = vst.msk [vmem:[%s271 + $0x84] sm:$0x1] %vm274, %v236
    %304 = vst.msk [vmem:[%s271 + $0x88] sm:$0xe] %vm272, %v237
    %305 = vst.msk [vmem:[%s271 + $0x8c] sm:$0x1] %vm274, %v238
    %v306 = vld [vmem:[#allocation2] sm:$0xf]
    %v307 = vld [vmem:[#allocation2 + $0x4] sm:$0x1]
    %v308 = vld [vmem:[#allocation2 + $0x8] sm:$0xf]
    %v309 = vld [vmem:[#allocation2 + $0xc] sm:$0x1]
    %v310 = vld [vmem:[#allocation2 + $0x10] sm:$0xf]
    %v311 = vld [vmem:[#allocation2 + $0x14] sm:$0x1]
    %v312 = vld [vmem:[#allocation2 + $0x18] sm:$0xf]
    %v313 = vld [vmem:[#allocation2 + $0x1c] sm:$0x1]
    %v314 = vld [vmem:[#allocation2 + $0x20] sm:$0xf]
    %v315 = vld [vmem:[#allocation2 + $0x24] sm:$0x1]
    %v316 = vld [vmem:[#allocation2 + $0x28] sm:$0xf]
    %v317 = vld [vmem:[#allocation2 + $0x2c] sm:$0x1]
    %v318 = vld [vmem:[#allocation2 + $0x30] sm:$0xf]
    %v319 = vld [vmem:[#allocation2 + $0x34] sm:$0x1]
    %v320 = vld [vmem:[#allocation2 + $0x38] sm:$0xf]
    %v321 = vld [vmem:[#allocation2 + $0x3c] sm:$0x1]
    %v322 = vld [vmem:[#allocation2 + $0x50] sm:$0xf]
    %v323 = vld [vmem:[#allocation2 + $0x54] sm:$0x1]
    %v324 = vld [vmem:[#allocation2 + $0x58] sm:$0xf]
    %v325 = vld [vmem:[#allocation2 + $0x5c] sm:$0x1]
    %v326 = vld [vmem:[#allocation2 + $0x60] sm:$0xf]
    %v327 = vld [vmem:[#allocation2 + $0x64] sm:$0x1]
    %v328 = vld [vmem:[#allocation2 + $0x68] sm:$0xf]
    %v329 = vld [vmem:[#allocation2 + $0x6c] sm:$0x1]
    %v330 = vld [vmem:[#allocation2 + $0x70] sm:$0xf]
    %v331 = vld [vmem:[#allocation2 + $0x74] sm:$0x1]
    %v332 = vld [vmem:[#allocation2 + $0x78] sm:$0xf]
    %v333 = vld [vmem:[#allocation2 + $0x7c] sm:$0x1]
    %v334 = vld [vmem:[#allocation2 + $0x80] sm:$0xf]
    %v335 = vld [vmem:[#allocation2 + $0x84] sm:$0x1]
    %v336 = vld [vmem:[#allocation2 + $0x88] sm:$0xf]
    %v337 = vld [vmem:[#allocation2 + $0x8c] sm:$0x1]
    %v338 = vld [vmem:[#allocation2] sm:$0xe]
    %v339 = vld [vmem:[#allocation2 + $0x8] sm:$0xe]
    %v340 = vld [vmem:[#allocation2 + $0x10] sm:$0xe]
    %v341 = vld [vmem:[#allocation2 + $0x18] sm:$0xe]
    %v342 = vld [vmem:[#allocation2 + $0x20] sm:$0xe]
    %v343 = vld [vmem:[#allocation2 + $0x28] sm:$0xe]
    %v344 = vld [vmem:[#allocation2 + $0x30] sm:$0xe]
    %v345 = vld [vmem:[#allocation2 + $0x38] sm:$0xe]
    %v346 = vld [vmem:[#allocation2 + $0x50] sm:$0xe]
    %v347 = vld [vmem:[#allocation2 + $0x58] sm:$0xe]
    %v348 = vld [vmem:[#allocation2 + $0x60] sm:$0xe]
    %v349 = vld [vmem:[#allocation2 + $0x68] sm:$0xe]
    %v350 = vld [vmem:[#allocation2 + $0x70] sm:$0xe]
    %v351 = vld [vmem:[#allocation2 + $0x78] sm:$0xe]
    %v352 = vld [vmem:[#allocation2 + $0x80] sm:$0xe]
    %v353 = vld [vmem:[#allocation2 + $0x88] sm:$0xe]
    %v354 = vld [vmem:[#allocation2 + $0x4] sm:$0x3]
    %v355 = vld [vmem:[#allocation2 + $0xc] sm:$0x3]
    %v356 = vld [vmem:[#allocation2 + $0x14] sm:$0x3]
    %v357 = vld [vmem:[#allocation2 + $0x1c] sm:$0x3]
    %v358 = vld [vmem:[#allocation2 + $0x24] sm:$0x3]
    %v359 = vld [vmem:[#allocation2 + $0x2c] sm:$0x3]
    %v360 = vld [vmem:[#allocation2 + $0x34] sm:$0x3]
    %v361 = vld [vmem:[#allocation2 + $0x3c] sm:$0x3]
    %v362 = vld [vmem:[#allocation2 + $0x54] sm:$0x3]
    %v363 = vld [vmem:[#allocation2 + $0x5c] sm:$0x3]
    %v364 = vld [vmem:[#allocation2 + $0x64] sm:$0x3]
    %v365 = vld [vmem:[#allocation2 + $0x6c] sm:$0x3]
    %v366 = vld [vmem:[#allocation2 + $0x74] sm:$0x3]
    %v367 = vld [vmem:[#allocation2 + $0x7c] sm:$0x3]
    %v368 = vld [vmem:[#allocation2 + $0x84] sm:$0x3]
    %v369 = vld [vmem:[#allocation2 + $0x8c] sm:$0x3]
    %v370 = vld [vmem:[%s271] sm:$0xf]
    %v371 = vld [vmem:[%s271 + $0x4] sm:$0x1]
    %v372 = vld [vmem:[%s271 + $0x8] sm:$0xf]
    %v373 = vld [vmem:[%s271 + $0xc] sm:$0x1]
    %v374 = vld [vmem:[%s271 + $0x10] sm:$0xf]
    %v375 = vld [vmem:[%s271 + $0x14] sm:$0x1]
    %v376 = vld [vmem:[%s271 + $0x18] sm:$0xf]
    %v377 = vld [vmem:[%s271 + $0x1c] sm:$0x1]
    %v378 = vld [vmem:[%s271 + $0x20] sm:$0xf]
    %v379 = vld [vmem:[%s271 + $0x24] sm:$0x1]
    %v380 = vld [vmem:[%s271 + $0x28] sm:$0xf]
    %v381 = vld [vmem:[%s271 + $0x2c] sm:$0x1]
    %v382 = vld [vmem:[%s271 + $0x30] sm:$0xf]
    %v383 = vld [vmem:[%s271 + $0x34] sm:$0x1]
    %v384 = vld [vmem:[%s271 + $0x38] sm:$0xf]
    %v385 = vld [vmem:[%s271 + $0x3c] sm:$0x1]
    %v386 = vld [vmem:[%s271 + $0x50] sm:$0xf]
    %v387 = vld [vmem:[%s271 + $0x54] sm:$0x1]
    %v388 = vld [vmem:[%s271 + $0x58] sm:$0xf]
    %v389 = vld [vmem:[%s271 + $0x5c] sm:$0x1]
    %v390 = vld [vmem:[%s271 + $0x60] sm:$0xf]
    %v391 = vld [vmem:[%s271 + $0x64] sm:$0x1]
    %v392 = vld [vmem:[%s271 + $0x68] sm:$0xf]
    %v393 = vld [vmem:[%s271 + $0x6c] sm:$0x1]
    %v394 = vld [vmem:[%s271 + $0x70] sm:$0xf]
    %v395 = vld [vmem:[%s271 + $0x74] sm:$0x1]
    %v396 = vld [vmem:[%s271 + $0x78] sm:$0xf]
    %v397 = vld [vmem:[%s271 + $0x7c] sm:$0x1]
    %v398 = vld [vmem:[%s271 + $0x80] sm:$0xf]
    %v399 = vld [vmem:[%s271 + $0x84] sm:$0x1]
    %v400 = vld [vmem:[%s271 + $0x88] sm:$0xf]
    %v401 = vld [vmem:[%s271 + $0x8c] sm:$0x1]
    %v402 = vld [vmem:[%s271] sm:$0xe]
    %v403 = vld [vmem:[%s271 + $0x8] sm:$0xe]
    %v404 = vld [vmem:[%s271 + $0x10] sm:$0xe]
    %v405 = vld [vmem:[%s271 + $0x18] sm:$0xe]
    %v406 = vld [vmem:[%s271 + $0x20] sm:$0xe]
    %v407 = vld [vmem:[%s271 + $0x28] sm:$0xe]
    %v408 = vld [vmem:[%s271 + $0x30] sm:$0xe]
    %v409 = vld [vmem:[%s271 + $0x38] sm:$0xe]
    %v410 = vld [vmem:[%s271 + $0x50] sm:$0xe]
    %v411 = vld [vmem:[%s271 + $0x58] sm:$0xe]
    %v412 = vld [vmem:[%s271 + $0x60] sm:$0xe]
    %v413 = vld [vmem:[%s271 + $0x68] sm:$0xe]
    %v414 = vld [vmem:[%s271 + $0x70] sm:$0xe]
    %v415 = vld [vmem:[%s271 + $0x78] sm:$0xe]
    %v416 = vld [vmem:[%s271 + $0x80] sm:$0xe]
    %v417 = vld [vmem:[%s271 + $0x88] sm:$0xe]
    %v418 = vld [vmem:[%s271 + $0x4] sm:$0x3]
    %v419 = vld [vmem:[%s271 + $0xc] sm:$0x3]
    %v420 = vld [vmem:[%s271 + $0x14] sm:$0x3]
    %v421 = vld [vmem:[%s271 + $0x1c] sm:$0x3]
    %v422 = vld [vmem:[%s271 + $0x24] sm:$0x3]
    %v423 = vld [vmem:[%s271 + $0x2c] sm:$0x3]
    %v424 = vld [vmem:[%s271 + $0x34] sm:$0x3]
    %v425 = vld [vmem:[%s271 + $0x3c] sm:$0x3]
    %v426 = vld [vmem:[%s271 + $0x54] sm:$0x3]
    %v427 = vld [vmem:[%s271 + $0x5c] sm:$0x3]
    %v428 = vld [vmem:[%s271 + $0x64] sm:$0x3]
    %v429 = vld [vmem:[%s271 + $0x6c] sm:$0x3]
    %v430 = vld [vmem:[%s271 + $0x74] sm:$0x3]
    %v431 = vld [vmem:[%s271 + $0x7c] sm:$0x3]
    %v432 = vld [vmem:[%s271 + $0x84] sm:$0x3]
    %v433 = vld [vmem:[%s271 + $0x8c] sm:$0x3]
    %s434 = scalar_lea.vmem [#allocation2], 16
    %v435 = vld [vmem:[%s434] sm:$0xf]
    %v436 = vld [vmem:[%s434 + $0x4] sm:$0x1]
    %v437 = vld [vmem:[%s434 + $0x8] sm:$0xf]
    %v438 = vld [vmem:[%s434 + $0xc] sm:$0x1]
    %v439 = vld [vmem:[%s434 + $0x10] sm:$0xf]
    %v440 = vld [vmem:[%s434 + $0x14] sm:$0x1]
    %v441 = vld [vmem:[%s434 + $0x18] sm:$0xf]
    %v442 = vld [vmem:[%s434 + $0x1c] sm:$0x1]
    %v443 = vld [vmem:[%s434 + $0x20] sm:$0xf]
    %v444 = vld [vmem:[%s434 + $0x24] sm:$0x1]
    %v445 = vld [vmem:[%s434 + $0x28] sm:$0xf]
    %v446 = vld [vmem:[%s434 + $0x2c] sm:$0x1]
    %v447 = vld [vmem:[%s434 + $0x30] sm:$0xf]
    %v448 = vld [vmem:[%s434 + $0x34] sm:$0x1]
    %v449 = vld [vmem:[%s434 + $0x38] sm:$0xf]
    %v450 = vld [vmem:[%s434 + $0x3c] sm:$0x1]
    %v451 = vld [vmem:[%s434 + $0x50] sm:$0xf]
    %v452 = vld [vmem:[%s434 + $0x54] sm:$0x1]
    %v453 = vld [vmem:[%s434 + $0x58] sm:$0xf]
    %v454 = vld [vmem:[%s434 + $0x5c] sm:$0x1]
    %v455 = vld [vmem:[%s434 + $0x60] sm:$0xf]
    %v456 = vld [vmem:[%s434 + $0x64] sm:$0x1]
    %v457 = vld [vmem:[%s434 + $0x68] sm:$0xf]
    %v458 = vld [vmem:[%s434 + $0x6c] sm:$0x1]
    %v459 = vld [vmem:[%s434 + $0x70] sm:$0xf]
    %v460 = vld [vmem:[%s434 + $0x74] sm:$0x1]
    %v461 = vld [vmem:[%s434 + $0x78] sm:$0xf]
    %v462 = vld [vmem:[%s434 + $0x7c] sm:$0x1]
    %v463 = vld [vmem:[%s434 + $0x80] sm:$0xf]
    %v464 = vld [vmem:[%s434 + $0x84] sm:$0x1]
    %v465 = vld [vmem:[%s434 + $0x88] sm:$0xf]
    %v466 = vld [vmem:[%s434 + $0x8c] sm:$0x1]
    %v467 = vld [vmem:[%s434] sm:$0xe]
    %v468 = vld [vmem:[%s434 + $0x8] sm:$0xe]
    %v469 = vld [vmem:[%s434 + $0x10] sm:$0xe]
    %v470 = vld [vmem:[%s434 + $0x18] sm:$0xe]
    %v471 = vld [vmem:[%s434 + $0x20] sm:$0xe]
    %v472 = vld [vmem:[%s434 + $0x28] sm:$0xe]
    %v473 = vld [vmem:[%s434 + $0x30] sm:$0xe]
    %v474 = vld [vmem:[%s434 + $0x38] sm:$0xe]
    %v475 = vld [vmem:[%s434 + $0x50] sm:$0xe]
    %v476 = vld [vmem:[%s434 + $0x58] sm:$0xe]
    %v477 = vld [vmem:[%s434 + $0x60] sm:$0xe]
    %v478 = vld [vmem:[%s434 + $0x68] sm:$0xe]
    %v479 = vld [vmem:[%s434 + $0x70] sm:$0xe]
    %v480 = vld [vmem:[%s434 + $0x78] sm:$0xe]
    %v481 = vld [vmem:[%s434 + $0x80] sm:$0xe]
    %v482 = vld [vmem:[%s434 + $0x88] sm:$0xe]
    %v483 = vld [vmem:[%s434 + $0x4] sm:$0x3]
    %v484 = vld [vmem:[%s434 + $0xc] sm:$0x3]
    %v485 = vld [vmem:[%s434 + $0x14] sm:$0x3]
    %v486 = vld [vmem:[%s434 + $0x1c] sm:$0x3]
    %v487 = vld [vmem:[%s434 + $0x24] sm:$0x3]
    %v488 = vld [vmem:[%s434 + $0x2c] sm:$0x3]
    %v489 = vld [vmem:[%s434 + $0x34] sm:$0x3]
    %v490 = vld [vmem:[%s434 + $0x3c] sm:$0x3]
    %v491 = vld [vmem:[%s434 + $0x54] sm:$0x3]
    %v492 = vld [vmem:[%s434 + $0x5c] sm:$0x3]
    %v493 = vld [vmem:[%s434 + $0x64] sm:$0x3]
    %v494 = vld [vmem:[%s434 + $0x6c] sm:$0x3]
    %v495 = vld [vmem:[%s434 + $0x74] sm:$0x3]
    %v496 = vld [vmem:[%s434 + $0x7c] sm:$0x3]
    %v497 = vld [vmem:[%s434 + $0x84] sm:$0x3]
    %v498 = vld [vmem:[%s434 + $0x8c] sm:$0x3]
    %v531 = vunpack.c.l.b16 %v306
    %v532 = vunpack.c.l.b16 %v307
    %v533 = vunpack.c.l.b16 %v308
    %v534 = vunpack.c.l.b16 %v309
    %v535 = vunpack.c.l.b16 %v310
    %v536 = vunpack.c.l.b16 %v311
    %v537 = vunpack.c.l.b16 %v312
    %v538 = vunpack.c.l.b16 %v313
    %v539 = vunpack.c.l.b16 %v314
    %v540 = vunpack.c.l.b16 %v315
    %v541 = vunpack.c.l.b16 %v316
    %v542 = vunpack.c.l.b16 %v317
    %v543 = vunpack.c.l.b16 %v318
    %v544 = vunpack.c.l.b16 %v319
    %v545 = vunpack.c.l.b16 %v320
    %v546 = vunpack.c.l.b16 %v321
    %v547 = vunpack.c.l.b16 %v322
    %v548 = vunpack.c.l.b16 %v323
    %v549 = vunpack.c.l.b16 %v324
    %v550 = vunpack.c.l.b16 %v325
    %v551 = vunpack.c.l.b16 %v326
    %v552 = vunpack.c.l.b16 %v327
    %v553 = vunpack.c.l.b16 %v328
    %v554 = vunpack.c.l.b16 %v329
    %v555 = vunpack.c.l.b16 %v330
    %v556 = vunpack.c.l.b16 %v331
    %v557 = vunpack.c.l.b16 %v332
    %v558 = vunpack.c.l.b16 %v333
    %v559 = vunpack.c.l.b16 %v334
    %v560 = vunpack.c.l.b16 %v335
    %v561 = vunpack.c.l.b16 %v336
    %v562 = vunpack.c.l.b16 %v337
    %v563 = vpack.c.b16 %v532, %v531
    %v564 = vpack.c.b16 %v534, %v533
    %v565 = vpack.c.b16 %v536, %v535
    %v566 = vpack.c.b16 %v538, %v537
    %v567 = vpack.c.b16 %v540, %v539
    %v568 = vpack.c.b16 %v542, %v541
    %v569 = vpack.c.b16 %v544, %v543
    %v570 = vpack.c.b16 %v546, %v545
    %v571 = vpack.c.b16 %v548, %v547
    %v572 = vpack.c.b16 %v550, %v549
    %v573 = vpack.c.b16 %v552, %v551
    %v574 = vpack.c.b16 %v554, %v553
    %v575 = vpack.c.b16 %v556, %v555
    %v576 = vpack.c.b16 %v558, %v557
    %v577 = vpack.c.b16 %v560, %v559
    %v578 = vpack.c.b16 %v562, %v561
    %v595 = vunpack.c.l.b16 %v338
    %v596 = vunpack.c.l.b16 %v339
    %v597 = vunpack.c.l.b16 %v340
    %v598 = vunpack.c.l.b16 %v341
    %v599 = vunpack.c.l.b16 %v342
    %v600 = vunpack.c.l.b16 %v343
    %v601 = vunpack.c.l.b16 %v344
    %v602 = vunpack.c.l.b16 %v345
    %v603 = vunpack.c.l.b16 %v346
    %v604 = vunpack.c.l.b16 %v347
    %v605 = vunpack.c.l.b16 %v348
    %v606 = vunpack.c.l.b16 %v349
    %v607 = vunpack.c.l.b16 %v350
    %v608 = vunpack.c.l.b16 %v351
    %v609 = vunpack.c.l.b16 %v352
    %v610 = vunpack.c.l.b16 %v353
    %v611 = vpack.c.b16 %v532, %v595
    %v612 = vpack.c.b16 %v534, %v596
    %v613 = vpack.c.b16 %v536, %v597
    %v614 = vpack.c.b16 %v538, %v598
    %v615 = vpack.c.b16 %v540, %v599
    %v616 = vpack.c.b16 %v542, %v600
    %v617 = vpack.c.b16 %v544, %v601
    %v618 = vpack.c.b16 %v546, %v602
    %v619 = vpack.c.b16 %v548, %v603
    %v620 = vpack.c.b16 %v550, %v604
    %v621 = vpack.c.b16 %v552, %v605
    %v622 = vpack.c.b16 %v554, %v606
    %v623 = vpack.c.b16 %v556, %v607
    %v624 = vpack.c.b16 %v558, %v608
    %v625 = vpack.c.b16 %v560, %v609
    %v626 = vpack.c.b16 %v562, %v610
    %v628 = vshrl.u32 %v611, 16
    %v630 = vshll.u32 %v611, 16
    %v632 = vrot.slane %v630, 1
    %v633 = vor.u32 %v628, %v632
    %v635 = vshrl.u32 %v612, 16
    %v637 = vshll.u32 %v612, 16
    %v639 = vrot.slane %v637, 1
    %v640 = vor.u32 %v635, %v639
    %v642 = vshrl.u32 %v613, 16
    %v644 = vshll.u32 %v613, 16
    %v646 = vrot.slane %v644, 1
    %v647 = vor.u32 %v642, %v646
    %v649 = vshrl.u32 %v614, 16
    %v651 = vshll.u32 %v614, 16
    %v653 = vrot.slane %v651, 1
    %v654 = vor.u32 %v649, %v653
    %v656 = vshrl.u32 %v615, 16
    %v658 = vshll.u32 %v615, 16
    %v660 = vrot.slane %v658, 1
    %v661 = vor.u32 %v656, %v660
    %v663 = vshrl.u32 %v616, 16
    %v665 = vshll.u32 %v616, 16
    %v667 = vrot.slane %v665, 1
    %v668 = vor.u32 %v663, %v667
    %v670 = vshrl.u32 %v617, 16
    %v672 = vshll.u32 %v617, 16
    %v674 = vrot.slane %v672, 1
    %v675 = vor.u32 %v670, %v674
    %v677 = vshrl.u32 %v618, 16
    %v679 = vshll.u32 %v618, 16
    %v681 = vrot.slane %v679, 1
    %v682 = vor.u32 %v677, %v681
    %v684 = vshrl.u32 %v619, 16
    %v686 = vshll.u32 %v619, 16
    %v688 = vrot.slane %v686, 1
    %v689 = vor.u32 %v684, %v688
    %v691 = vshrl.u32 %v620, 16
    %v693 = vshll.u32 %v620, 16
    %v695 = vrot.slane %v693, 1
    %v696 = vor.u32 %v691, %v695
    %v698 = vshrl.u32 %v621, 16
    %v700 = vshll.u32 %v621, 16
    %v702 = vrot.slane %v700, 1
    %v703 = vor.u32 %v698, %v702
    %v705 = vshrl.u32 %v622, 16
    %v707 = vshll.u32 %v622, 16
    %v709 = vrot.slane %v707, 1
    %v710 = vor.u32 %v705, %v709
    %v712 = vshrl.u32 %v623, 16
    %v714 = vshll.u32 %v623, 16
    %v716 = vrot.slane %v714, 1
    %v717 = vor.u32 %v712, %v716
    %v719 = vshrl.u32 %v624, 16
    %v721 = vshll.u32 %v624, 16
    %v723 = vrot.slane %v721, 1
    %v724 = vor.u32 %v719, %v723
    %v726 = vshrl.u32 %v625, 16
    %v728 = vshll.u32 %v625, 16
    %v730 = vrot.slane %v728, 1
    %v731 = vor.u32 %v726, %v730
    %v733 = vshrl.u32 %v626, 16
    %v735 = vshll.u32 %v626, 16
    %v737 = vrot.slane %v735, 1
    %v738 = vor.u32 %v733, %v737
    %739 = vrot.lane.b32.xlu0 %v633, 32
    %v740 = vpop.permute.xlu0 %739
    %741 = vrot.lane.b32.xlu0 %v640, 32
    %v742 = vpop.permute.xlu0 %741
    %743 = vrot.lane.b32.xlu0 %v647, 32
    %v744 = vpop.permute.xlu0 %743
    %745 = vrot.lane.b32.xlu0 %v654, 32
    %v746 = vpop.permute.xlu0 %745
    %747 = vrot.lane.b32.xlu0 %v661, 32
    %v748 = vpop.permute.xlu0 %747
    %749 = vrot.lane.b32.xlu0 %v668, 32
    %v750 = vpop.permute.xlu0 %749
    %751 = vrot.lane.b32.xlu0 %v675, 32
    %v752 = vpop.permute.xlu0 %751
    %753 = vrot.lane.b32.xlu0 %v682, 32
    %v754 = vpop.permute.xlu0 %753
    %755 = vrot.lane.b32.xlu0 %v689, 32
    %v756 = vpop.permute.xlu0 %755
    %757 = vrot.lane.b32.xlu0 %v696, 32
    %v758 = vpop.permute.xlu0 %757
    %759 = vrot.lane.b32.xlu0 %v703, 32
    %v760 = vpop.permute.xlu0 %759
    %761 = vrot.lane.b32.xlu0 %v710, 32
    %v762 = vpop.permute.xlu0 %761
    %763 = vrot.lane.b32.xlu0 %v717, 32
    %v764 = vpop.permute.xlu0 %763
    %765 = vrot.lane.b32.xlu0 %v724, 32
    %v766 = vpop.permute.xlu0 %765
    %767 = vrot.lane.b32.xlu0 %v731, 32
    %v768 = vpop.permute.xlu0 %767
    %769 = vrot.lane.b32.xlu0 %v738, 32
    %v770 = vpop.permute.xlu0 %769
    %v787 = vunpack.c.l.b16 %v354
    %v788 = vunpack.c.l.b16 %v355
    %v789 = vunpack.c.l.b16 %v356
    %v790 = vunpack.c.l.b16 %v357
    %v791 = vunpack.c.l.b16 %v358
    %v792 = vunpack.c.l.b16 %v359
    %v793 = vunpack.c.l.b16 %v360
    %v794 = vunpack.c.l.b16 %v361
    %v795 = vunpack.c.l.b16 %v362
    %v796 = vunpack.c.l.b16 %v363
    %v797 = vunpack.c.l.b16 %v364
    %v798 = vunpack.c.l.b16 %v365
    %v799 = vunpack.c.l.b16 %v366
    %v800 = vunpack.c.l.b16 %v367
    %v801 = vunpack.c.l.b16 %v368
    %v802 = vunpack.c.l.b16 %v369
    %v803 = vpack.c.b16 %v787, %v595
    %v804 = vpack.c.b16 %v788, %v596
    %v805 = vpack.c.b16 %v789, %v597
    %v806 = vpack.c.b16 %v790, %v598
    %v807 = vpack.c.b16 %v791, %v599
    %v808 = vpack.c.b16 %v792, %v600
    %v809 = vpack.c.b16 %v793, %v601
    %v810 = vpack.c.b16 %v794, %v602
    %v811 = vpack.c.b16 %v795, %v603
    %v812 = vpack.c.b16 %v796, %v604
    %v813 = vpack.c.b16 %v797, %v605
    %v814 = vpack.c.b16 %v798, %v606
    %v815 = vpack.c.b16 %v799, %v607
    %v816 = vpack.c.b16 %v800, %v608
    %v817 = vpack.c.b16 %v801, %v609
    %v818 = vpack.c.b16 %v802, %v610
    %v819 = vrot.slane %v803, 1
    %v820 = vrot.slane %v804, 1
    %v821 = vrot.slane %v805, 1
    %v822 = vrot.slane %v806, 1
    %v823 = vrot.slane %v807, 1
    %v824 = vrot.slane %v808, 1
    %v825 = vrot.slane %v809, 1
    %v826 = vrot.slane %v810, 1
    %v827 = vrot.slane %v811, 1
    %v828 = vrot.slane %v812, 1
    %v829 = vrot.slane %v813, 1
    %v830 = vrot.slane %v814, 1
    %v831 = vrot.slane %v815, 1
    %v832 = vrot.slane %v816, 1
    %v833 = vrot.slane %v817, 1
    %v834 = vrot.slane %v818, 1
    %835 = vrot.lane.b32.xlu0 %v819, 64
    %v836 = vpop.permute.xlu0 %835
    %837 = vrot.lane.b32.xlu0 %v820, 64
    %v838 = vpop.permute.xlu0 %837
    %839 = vrot.lane.b32.xlu0 %v821, 64
    %v840 = vpop.permute.xlu0 %839
    %841 = vrot.lane.b32.xlu0 %v822, 64
    %v842 = vpop.permute.xlu0 %841
    %843 = vrot.lane.b32.xlu0 %v823, 64
    %v844 = vpop.permute.xlu0 %843
    %845 = vrot.lane.b32.xlu0 %v824, 64
    %v846 = vpop.permute.xlu0 %845
    %847 = vrot.lane.b32.xlu0 %v825, 64
    %v848 = vpop.permute.xlu0 %847
    %849 = vrot.lane.b32.xlu0 %v826, 64
    %v850 = vpop.permute.xlu0 %849
    %851 = vrot.lane.b32.xlu0 %v827, 64
    %v852 = vpop.permute.xlu0 %851
    %853 = vrot.lane.b32.xlu0 %v828, 64
    %v854 = vpop.permute.xlu0 %853
    %855 = vrot.lane.b32.xlu0 %v829, 64
    %v856 = vpop.permute.xlu0 %855
    %857 = vrot.lane.b32.xlu0 %v830, 64
    %v858 = vpop.permute.xlu0 %857
    %859 = vrot.lane.b32.xlu0 %v831, 64
    %v860 = vpop.permute.xlu0 %859
    %861 = vrot.lane.b32.xlu0 %v832, 64
    %v862 = vpop.permute.xlu0 %861
    %863 = vrot.lane.b32.xlu0 %v833, 64
    %v864 = vpop.permute.xlu0 %863
    %865 = vrot.lane.b32.xlu0 %v834, 64
    %v866 = vpop.permute.xlu0 %865
    %v899 = vunpack.c.l.b16 %v370
    %v900 = vunpack.c.l.b16 %v371
    %v901 = vunpack.c.l.b16 %v372
    %v902 = vunpack.c.l.b16 %v373
    %v903 = vunpack.c.l.b16 %v374
    %v904 = vunpack.c.l.b16 %v375
    %v905 = vunpack.c.l.b16 %v376
    %v906 = vunpack.c.l.b16 %v377
    %v907 = vunpack.c.l.b16 %v378
    %v908 = vunpack.c.l.b16 %v379
    %v909 = vunpack.c.l.b16 %v380
    %v910 = vunpack.c.l.b16 %v381
    %v911 = vunpack.c.l.b16 %v382
    %v912 = vunpack.c.l.b16 %v383
    %v913 = vunpack.c.l.b16 %v384
    %v914 = vunpack.c.l.b16 %v385
    %v915 = vunpack.c.l.b16 %v386
    %v916 = vunpack.c.l.b16 %v387
    %v917 = vunpack.c.l.b16 %v388
    %v918 = vunpack.c.l.b16 %v389
    %v919 = vunpack.c.l.b16 %v390
    %v920 = vunpack.c.l.b16 %v391
    %v921 = vunpack.c.l.b16 %v392
    %v922 = vunpack.c.l.b16 %v393
    %v923 = vunpack.c.l.b16 %v394
    %v924 = vunpack.c.l.b16 %v395
    %v925 = vunpack.c.l.b16 %v396
    %v926 = vunpack.c.l.b16 %v397
    %v927 = vunpack.c.l.b16 %v398
    %v928 = vunpack.c.l.b16 %v399
    %v929 = vunpack.c.l.b16 %v400
    %v930 = vunpack.c.l.b16 %v401
    %v931 = vpack.c.b16 %v900, %v899
    %v932 = vpack.c.b16 %v902, %v901
    %v933 = vpack.c.b16 %v904, %v903
    %v934 = vpack.c.b16 %v906, %v905
    %v935 = vpack.c.b16 %v908, %v907
    %v936 = vpack.c.b16 %v910, %v909
    %v937 = vpack.c.b16 %v912, %v911
    %v938 = vpack.c.b16 %v914, %v913
    %v939 = vpack.c.b16 %v916, %v915
    %v940 = vpack.c.b16 %v918, %v917
    %v941 = vpack.c.b16 %v920, %v919
    %v942 = vpack.c.b16 %v922, %v921
    %v943 = vpack.c.b16 %v924, %v923
    %v944 = vpack.c.b16 %v926, %v925
    %v945 = vpack.c.b16 %v928, %v927
    %v946 = vpack.c.b16 %v930, %v929
    %947 = vrot.lane.b32.xlu0 %v931, 96
    %v948 = vpop.permute.xlu0 %947
    %949 = vrot.lane.b32.xlu0 %v932, 96
    %v950 = vpop.permute.xlu0 %949
    %951 = vrot.lane.b32.xlu0 %v933, 96
    %v952 = vpop.permute.xlu0 %951
    %953 = vrot.lane.b32.xlu0 %v934, 96
    %v954 = vpop.permute.xlu0 %953
    %955 = vrot.lane.b32.xlu0 %v935, 96
    %v956 = vpop.permute.xlu0 %955
    %957 = vrot.lane.b32.xlu0 %v936, 96
    %v958 = vpop.permute.xlu0 %957
    %959 = vrot.lane.b32.xlu0 %v937, 96
    %v960 = vpop.permute.xlu0 %959
    %961 = vrot.lane.b32.xlu0 %v938, 96
    %v962 = vpop.permute.xlu0 %961
    %963 = vrot.lane.b32.xlu0 %v939, 96
    %v964 = vpop.permute.xlu0 %963
    %965 = vrot.lane.b32.xlu0 %v940, 96
    %v966 = vpop.permute.xlu0 %965
    %967 = vrot.lane.b32.xlu0 %v941, 96
    %v968 = vpop.permute.xlu0 %967
    %969 = vrot.lane.b32.xlu0 %v942, 96
    %v970 = vpop.permute.xlu0 %969
    %971 = vrot.lane.b32.xlu0 %v943, 96
    %v972 = vpop.permute.xlu0 %971
    %973 = vrot.lane.b32.xlu0 %v944, 96
    %v974 = vpop.permute.xlu0 %973
    %975 = vrot.lane.b32.xlu0 %v945, 96
    %v976 = vpop.permute.xlu0 %975
    %977 = vrot.lane.b32.xlu0 %v946, 96
    %v978 = vpop.permute.xlu0 %977
    %v995 = vunpack.c.l.b16 %v402
    %v996 = vunpack.c.l.b16 %v403
    %v997 = vunpack.c.l.b16 %v404
    %v998 = vunpack.c.l.b16 %v405
    %v999 = vunpack.c.l.b16 %v406
    %v1000 = vunpack.c.l.b16 %v407
    %v1001 = vunpack.c.l.b16 %v408
    %v1002 = vunpack.c.l.b16 %v409
    %v1003 = vunpack.c.l.b16 %v410
    %v1004 = vunpack.c.l.b16 %v411
    %v1005 = vunpack.c.l.b16 %v412
    %v1006 = vunpack.c.l.b16 %v413
    %v1007 = vunpack.c.l.b16 %v414
    %v1008 = vunpack.c.l.b16 %v415
    %v1009 = vunpack.c.l.b16 %v416
    %v1010 = vunpack.c.l.b16 %v417
    %v1011 = vpack.c.b16 %v900, %v995
    %v1012 = vpack.c.b16 %v902, %v996
    %v1013 = vpack.c.b16 %v904, %v997
    %v1014 = vpack.c.b16 %v906, %v998
    %v1015 = vpack.c.b16 %v908, %v999
    %v1016 = vpack.c.b16 %v910, %v1000
    %v1017 = vpack.c.b16 %v912, %v1001
    %v1018 = vpack.c.b16 %v914, %v1002
    %v1019 = vpack.c.b16 %v916, %v1003
    %v1020 = vpack.c.b16 %v918, %v1004
    %v1021 = vpack.c.b16 %v920, %v1005
    %v1022 = vpack.c.b16 %v922, %v1006
    %v1023 = vpack.c.b16 %v924, %v1007
    %v1024 = vpack.c.b16 %v926, %v1008
    %v1025 = vpack.c.b16 %v928, %v1009
    %v1026 = vpack.c.b16 %v930, %v1010
    %v1028 = vshrl.u32 %v1011, 16
    %v1030 = vshll.u32 %v1011, 16
    %v1032 = vrot.slane %v1030, 1
    %v1033 = vor.u32 %v1028, %v1032
    %v1035 = vshrl.u32 %v1012, 16
    %v1037 = vshll.u32 %v1012, 16
    %v1039 = vrot.slane %v1037, 1
    %v1040 = vor.u32 %v1035, %v1039
    %v1042 = vshrl.u32 %v1013, 16
    %v1044 = vshll.u32 %v1013, 16
    %v1046 = vrot.slane %v1044, 1
    %v1047 = vor.u32 %v1042, %v1046
    %v1049 = vshrl.u32 %v1014, 16
    %v1051 = vshll.u32 %v1014, 16
    %v1053 = vrot.slane %v1051, 1
    %v1054 = vor.u32 %v1049, %v1053
    %v1056 = vshrl.u32 %v1015, 16
    %v1058 = vshll.u32 %v1015, 16
    %v1060 = vrot.slane %v1058, 1
    %v1061 = vor.u32 %v1056, %v1060
    %v1063 = vshrl.u32 %v1016, 16
    %v1065 = vshll.u32 %v1016, 16
    %v1067 = vrot.slane %v1065, 1
    %v1068 = vor.u32 %v1063, %v1067
    %v1070 = vshrl.u32 %v1017, 16
    %v1072 = vshll.u32 %v1017, 16
    %v1074 = vrot.slane %v1072, 1
    %v1075 = vor.u32 %v1070, %v1074
    %v1077 = vshrl.u32 %v1018, 16
    %v1079 = vshll.u32 %v1018, 16
    %v1081 = vrot.slane %v1079, 1
    %v1082 = vor.u32 %v1077, %v1081
    %v1084 = vshrl.u32 %v1019, 16
    %v1086 = vshll.u32 %v1019, 16
    %v1088 = vrot.slane %v1086, 1
    %v1089 = vor.u32 %v1084, %v1088
    %v1091 = vshrl.u32 %v1020, 16
    %v1093 = vshll.u32 %v1020, 16
    %v1095 = vrot.slane %v1093, 1
    %v1096 = vor.u32 %v1091, %v1095
    %v1098 = vshrl.u32 %v1021, 16
    %v1100 = vshll.u32 %v1021, 16
    %v1102 = vrot.slane %v1100, 1
    %v1103 = vor.u32 %v1098, %v1102
    %v1105 = vshrl.u32 %v1022, 16
    %v1107 = vshll.u32 %v1022, 16
    %v1109 = vrot.slane %v1107, 1
    %v1110 = vor.u32 %v1105, %v1109
    %v1112 = vshrl.u32 %v1023, 16
    %v1114 = vshll.u32 %v1023, 16
    %v1116 = vrot.slane %v1114, 1
    %v1117 = vor.u32 %v1112, %v1116
    %v1119 = vshrl.u32 %v1024, 16
    %v1121 = vshll.u32 %v1024, 16
    %v1123 = vrot.slane %v1121, 1
    %v1124 = vor.u32 %v1119, %v1123
    %v1126 = vshrl.u32 %v1025, 16
    %v1128 = vshll.u32 %v1025, 16
    %v1130 = vrot.slane %v1128, 1
    %v1131 = vor.u32 %v1126, %v1130
    %v1133 = vshrl.u32 %v1026, 16
    %v1135 = vshll.u32 %v1026, 16
    %v1137 = vrot.slane %v1135, 1
    %v1138 = vor.u32 %v1133, %v1137
    %v1155 = vunpack.c.l.b16 %v418
    %v1156 = vunpack.c.l.b16 %v419
    %v1157 = vunpack.c.l.b16 %v420
    %v1158 = vunpack.c.l.b16 %v421
    %v1159 = vunpack.c.l.b16 %v422
    %v1160 = vunpack.c.l.b16 %v423
    %v1161 = vunpack.c.l.b16 %v424
    %v1162 = vunpack.c.l.b16 %v425
    %v1163 = vunpack.c.l.b16 %v426
    %v1164 = vunpack.c.l.b16 %v427
    %v1165 = vunpack.c.l.b16 %v428
    %v1166 = vunpack.c.l.b16 %v429
    %v1167 = vunpack.c.l.b16 %v430
    %v1168 = vunpack.c.l.b16 %v431
    %v1169 = vunpack.c.l.b16 %v432
    %v1170 = vunpack.c.l.b16 %v433
    %v1171 = vpack.c.b16 %v1155, %v995
    %v1172 = vpack.c.b16 %v1156, %v996
    %v1173 = vpack.c.b16 %v1157, %v997
    %v1174 = vpack.c.b16 %v1158, %v998
    %v1175 = vpack.c.b16 %v1159, %v999
    %v1176 = vpack.c.b16 %v1160, %v1000
    %v1177 = vpack.c.b16 %v1161, %v1001
    %v1178 = vpack.c.b16 %v1162, %v1002
    %v1179 = vpack.c.b16 %v1163, %v1003
    %v1180 = vpack.c.b16 %v1164, %v1004
    %v1181 = vpack.c.b16 %v1165, %v1005
    %v1182 = vpack.c.b16 %v1166, %v1006
    %v1183 = vpack.c.b16 %v1167, %v1007
    %v1184 = vpack.c.b16 %v1168, %v1008
    %v1185 = vpack.c.b16 %v1169, %v1009
    %v1186 = vpack.c.b16 %v1170, %v1010
    %v1187 = vrot.slane %v1171, 1
    %v1188 = vrot.slane %v1172, 1
    %v1189 = vrot.slane %v1173, 1
    %v1190 = vrot.slane %v1174, 1
    %v1191 = vrot.slane %v1175, 1
    %v1192 = vrot.slane %v1176, 1
    %v1193 = vrot.slane %v1177, 1
    %v1194 = vrot.slane %v1178, 1
    %v1195 = vrot.slane %v1179, 1
    %v1196 = vrot.slane %v1180, 1
    %v1197 = vrot.slane %v1181, 1
    %v1198 = vrot.slane %v1182, 1
    %v1199 = vrot.slane %v1183, 1
    %v1200 = vrot.slane %v1184, 1
    %v1201 = vrot.slane %v1185, 1
    %v1202 = vrot.slane %v1186, 1
    %1203 = vrot.lane.b32.xlu0 %v1187, 32
    %v1204 = vpop.permute.xlu0 %1203
    %1205 = vrot.lane.b32.xlu0 %v1188, 32
    %v1206 = vpop.permute.xlu0 %1205
    %1207 = vrot.lane.b32.xlu0 %v1189, 32
    %v1208 = vpop.permute.xlu0 %1207
    %1209 = vrot.lane.b32.xlu0 %v1190, 32
    %v1210 = vpop.permute.xlu0 %1209
    %1211 = vrot.lane.b32.xlu0 %v1191, 32
    %v1212 = vpop.permute.xlu0 %1211
    %1213 = vrot.lane.b32.xlu0 %v1192, 32
    %v1214 = vpop.permute.xlu0 %1213
    %1215 = vrot.lane.b32.xlu0 %v1193, 32
    %v1216 = vpop.permute.xlu0 %1215
    %1217 = vrot.lane.b32.xlu0 %v1194, 32
    %v1218 = vpop.permute.xlu0 %1217
    %1219 = vrot.lane.b32.xlu0 %v1195, 32
    %v1220 = vpop.permute.xlu0 %1219
    %1221 = vrot.lane.b32.xlu0 %v1196, 32
    %v1222 = vpop.permute.xlu0 %1221
    %1223 = vrot.lane.b32.xlu0 %v1197, 32
    %v1224 = vpop.permute.xlu0 %1223
    %1225 = vrot.lane.b32.xlu0 %v1198, 32
    %v1226 = vpop.permute.xlu0 %1225
    %1227 = vrot.lane.b32.xlu0 %v1199, 32
    %v1228 = vpop.permute.xlu0 %1227
    %1229 = vrot.lane.b32.xlu0 %v1200, 32
    %v1230 = vpop.permute.xlu0 %1229
    %1231 = vrot.lane.b32.xlu0 %v1201, 32
    %v1232 = vpop.permute.xlu0 %1231
    %1233 = vrot.lane.b32.xlu0 %v1202, 32
    %v1234 = vpop.permute.xlu0 %1233
    %v1267 = vunpack.c.l.b16 %v435
    %v1268 = vunpack.c.l.b16 %v436
    %v1269 = vunpack.c.l.b16 %v437
    %v1270 = vunpack.c.l.b16 %v438
    %v1271 = vunpack.c.l.b16 %v439
    %v1272 = vunpack.c.l.b16 %v440
    %v1273 = vunpack.c.l.b16 %v441
    %v1274 = vunpack.c.l.b16 %v442
    %v1275 = vunpack.c.l.b16 %v443
    %v1276 = vunpack.c.l.b16 %v444
    %v1277 = vunpack.c.l.b16 %v445
    %v1278 = vunpack.c.l.b16 %v446
    %v1279 = vunpack.c.l.b16 %v447
    %v1280 = vunpack.c.l.b16 %v448
    %v1281 = vunpack.c.l.b16 %v449
    %v1282 = vunpack.c.l.b16 %v450
    %v1283 = vunpack.c.l.b16 %v451
    %v1284 = vunpack.c.l.b16 %v452
    %v1285 = vunpack.c.l.b16 %v453
    %v1286 = vunpack.c.l.b16 %v454
    %v1287 = vunpack.c.l.b16 %v455
    %v1288 = vunpack.c.l.b16 %v456
    %v1289 = vunpack.c.l.b16 %v457
    %v1290 = vunpack.c.l.b16 %v458
    %v1291 = vunpack.c.l.b16 %v459
    %v1292 = vunpack.c.l.b16 %v460
    %v1293 = vunpack.c.l.b16 %v461
    %v1294 = vunpack.c.l.b16 %v462
    %v1295 = vunpack.c.l.b16 %v463
    %v1296 = vunpack.c.l.b16 %v464
    %v1297 = vunpack.c.l.b16 %v465
    %v1298 = vunpack.c.l.b16 %v466
    %v1299 = vpack.c.b16 %v1268, %v1267
    %v1300 = vpack.c.b16 %v1270, %v1269
    %v1301 = vpack.c.b16 %v1272, %v1271
    %v1302 = vpack.c.b16 %v1274, %v1273
    %v1303 = vpack.c.b16 %v1276, %v1275
    %v1304 = vpack.c.b16 %v1278, %v1277
    %v1305 = vpack.c.b16 %v1280, %v1279
    %v1306 = vpack.c.b16 %v1282, %v1281
    %v1307 = vpack.c.b16 %v1284, %v1283
    %v1308 = vpack.c.b16 %v1286, %v1285
    %v1309 = vpack.c.b16 %v1288, %v1287
    %v1310 = vpack.c.b16 %v1290, %v1289
    %v1311 = vpack.c.b16 %v1292, %v1291
    %v1312 = vpack.c.b16 %v1294, %v1293
    %v1313 = vpack.c.b16 %v1296, %v1295
    %v1314 = vpack.c.b16 %v1298, %v1297
    %1315 = vrot.lane.b32.xlu0 %v1299, 64
    %v1316 = vpop.permute.xlu0 %1315
    %1317 = vrot.lane.b32.xlu0 %v1300, 64
    %v1318 = vpop.permute.xlu0 %1317
    %1319 = vrot.lane.b32.xlu0 %v1301, 64
    %v1320 = vpop.permute.xlu0 %1319
    %1321 = vrot.lane.b32.xlu0 %v1302, 64
    %v1322 = vpop.permute.xlu0 %1321
    %1323 = vrot.lane.b32.xlu0 %v1303, 64
    %v1324 = vpop.permute.xlu0 %1323
    %1325 = vrot.lane.b32.xlu0 %v1304, 64
    %v1326 = vpop.permute.xlu0 %1325
    %1327 = vrot.lane.b32.xlu0 %v1305, 64
    %v1328 = vpop.permute.xlu0 %1327
    %1329 = vrot.lane.b32.xlu0 %v1306, 64
    %v1330 = vpop.permute.xlu0 %1329
    %1331 = vrot.lane.b32.xlu0 %v1307, 64
    %v1332 = vpop.permute.xlu0 %1331
    %1333 = vrot.lane.b32.xlu0 %v1308, 64
    %v1334 = vpop.permute.xlu0 %1333
    %1335 = vrot.lane.b32.xlu0 %v1309, 64
    %v1336 = vpop.permute.xlu0 %1335
    %1337 = vrot.lane.b32.xlu0 %v1310, 64
    %v1338 = vpop.permute.xlu0 %1337
    %1339 = vrot.lane.b32.xlu0 %v1311, 64
    %v1340 = vpop.permute.xlu0 %1339
    %1341 = vrot.lane.b32.xlu0 %v1312, 64
    %v1342 = vpop.permute.xlu0 %1341
    %1343 = vrot.lane.b32.xlu0 %v1313, 64
    %v1344 = vpop.permute.xlu0 %1343
    %1345 = vrot.lane.b32.xlu0 %v1314, 64
    %v1346 = vpop.permute.xlu0 %1345
    %v1363 = vunpack.c.l.b16 %v467
    %v1364 = vunpack.c.l.b16 %v468
    %v1365 = vunpack.c.l.b16 %v469
    %v1366 = vunpack.c.l.b16 %v470
    %v1367 = vunpack.c.l.b16 %v471
    %v1368 = vunpack.c.l.b16 %v472
    %v1369 = vunpack.c.l.b16 %v473
    %v1370 = vunpack.c.l.b16 %v474
    %v1371 = vunpack.c.l.b16 %v475
    %v1372 = vunpack.c.l.b16 %v476
    %v1373 = vunpack.c.l.b16 %v477
    %v1374 = vunpack.c.l.b16 %v478
    %v1375 = vunpack.c.l.b16 %v479
    %v1376 = vunpack.c.l.b16 %v480
    %v1377 = vunpack.c.l.b16 %v481
    %v1378 = vunpack.c.l.b16 %v482
    %v1379 = vpack.c.b16 %v1268, %v1363
    %v1380 = vpack.c.b16 %v1270, %v1364
    %v1381 = vpack.c.b16 %v1272, %v1365
    %v1382 = vpack.c.b16 %v1274, %v1366
    %v1383 = vpack.c.b16 %v1276, %v1367
    %v1384 = vpack.c.b16 %v1278, %v1368
    %v1385 = vpack.c.b16 %v1280, %v1369
    %v1386 = vpack.c.b16 %v1282, %v1370
    %v1387 = vpack.c.b16 %v1284, %v1371
    %v1388 = vpack.c.b16 %v1286, %v1372
    %v1389 = vpack.c.b16 %v1288, %v1373
    %v1390 = vpack.c.b16 %v1290, %v1374
    %v1391 = vpack.c.b16 %v1292, %v1375
    %v1392 = vpack.c.b16 %v1294, %v1376
    %v1393 = vpack.c.b16 %v1296, %v1377
    %v1394 = vpack.c.b16 %v1298, %v1378
    %v1396 = vshrl.u32 %v1379, 16
    %v1398 = vshll.u32 %v1379, 16
    %v1400 = vrot.slane %v1398, 1
    %v1401 = vor.u32 %v1396, %v1400
    %v1403 = vshrl.u32 %v1380, 16
    %v1405 = vshll.u32 %v1380, 16
    %v1407 = vrot.slane %v1405, 1
    %v1408 = vor.u32 %v1403, %v1407
    %v1410 = vshrl.u32 %v1381, 16
    %v1412 = vshll.u32 %v1381, 16
    %v1414 = vrot.slane %v1412, 1
    %v1415 = vor.u32 %v1410, %v1414
    %v1417 = vshrl.u32 %v1382, 16
    %v1419 = vshll.u32 %v1382, 16
    %v1421 = vrot.slane %v1419, 1
    %v1422 = vor.u32 %v1417, %v1421
    %v1424 = vshrl.u32 %v1383, 16
    %v1426 = vshll.u32 %v1383, 16
    %v1428 = vrot.slane %v1426, 1
    %v1429 = vor.u32 %v1424, %v1428
    %v1431 = vshrl.u32 %v1384, 16
    %v1433 = vshll.u32 %v1384, 16
    %v1435 = vrot.slane %v1433, 1
    %v1436 = vor.u32 %v1431, %v1435
    %v1438 = vshrl.u32 %v1385, 16
    %v1440 = vshll.u32 %v1385, 16
    %v1442 = vrot.slane %v1440, 1
    %v1443 = vor.u32 %v1438, %v1442
    %v1445 = vshrl.u32 %v1386, 16
    %v1447 = vshll.u32 %v1386, 16
    %v1449 = vrot.slane %v1447, 1
    %v1450 = vor.u32 %v1445, %v1449
    %v1452 = vshrl.u32 %v1387, 16
    %v1454 = vshll.u32 %v1387, 16
    %v1456 = vrot.slane %v1454, 1
    %v1457 = vor.u32 %v1452, %v1456
    %v1459 = vshrl.u32 %v1388, 16
    %v1461 = vshll.u32 %v1388, 16
    %v1463 = vrot.slane %v1461, 1
    %v1464 = vor.u32 %v1459, %v1463
    %v1466 = vshrl.u32 %v1389, 16
    %v1468 = vshll.u32 %v1389, 16
    %v1470 = vrot.slane %v1468, 1
    %v1471 = vor.u32 %v1466, %v1470
    %v1473 = vshrl.u32 %v1390, 16
    %v1475 = vshll.u32 %v1390, 16
    %v1477 = vrot.slane %v1475, 1
    %v1478 = vor.u32 %v1473, %v1477
    %v1480 = vshrl.u32 %v1391, 16
    %v1482 = vshll.u32 %v1391, 16
    %v1484 = vrot.slane %v1482, 1
    %v1485 = vor.u32 %v1480, %v1484
    %v1487 = vshrl.u32 %v1392, 16
    %v1489 = vshll.u32 %v1392, 16
    %v1491 = vrot.slane %v1489, 1
    %v1492 = vor.u32 %v1487, %v1491
    %v1494 = vshrl.u32 %v1393, 16
    %v1496 = vshll.u32 %v1393, 16
    %v1498 = vrot.slane %v1496, 1
    %v1499 = vor.u32 %v1494, %v1498
    %v1501 = vshrl.u32 %v1394, 16
    %v1503 = vshll.u32 %v1394, 16
    %v1505 = vrot.slane %v1503, 1
    %v1506 = vor.u32 %v1501, %v1505
    %1507 = vrot.lane.b32.xlu0 %v1401, 96
    %v1508 = vpop.permute.xlu0 %1507
    %1509 = vrot.lane.b32.xlu0 %v1408, 96
    %v1510 = vpop.permute.xlu0 %1509
    %1511 = vrot.lane.b32.xlu0 %v1415, 96
    %v1512 = vpop.permute.xlu0 %1511
    %1513 = vrot.lane.b32.xlu0 %v1422, 96
    %v1514 = vpop.permute.xlu0 %1513
    %1515 = vrot.lane.b32.xlu0 %v1429, 96
    %v1516 = vpop.permute.xlu0 %1515
    %1517 = vrot.lane.b32.xlu0 %v1436, 96
    %v1518 = vpop.permute.xlu0 %1517
    %1519 = vrot.lane.b32.xlu0 %v1443, 96
    %v1520 = vpop.permute.xlu0 %1519
    %1521 = vrot.lane.b32.xlu0 %v1450, 96
    %v1522 = vpop.permute.xlu0 %1521
    %1523 = vrot.lane.b32.xlu0 %v1457, 96
    %v1524 = vpop.permute.xlu0 %1523
    %1525 = vrot.lane.b32.xlu0 %v1464, 96
    %v1526 = vpop.permute.xlu0 %1525
    %1527 = vrot.lane.b32.xlu0 %v1471, 96
    %v1528 = vpop.permute.xlu0 %1527
    %1529 = vrot.lane.b32.xlu0 %v1478, 96
    %v1530 = vpop.permute.xlu0 %1529
    %1531 = vrot.lane.b32.xlu0 %v1485, 96
    %v1532 = vpop.permute.xlu0 %1531
    %1533 = vrot.lane.b32.xlu0 %v1492, 96
    %v1534 = vpop.permute.xlu0 %1533
    %1535 = vrot.lane.b32.xlu0 %v1499, 96
    %v1536 = vpop.permute.xlu0 %1535
    %1537 = vrot.lane.b32.xlu0 %v1506, 96
    %v1538 = vpop.permute.xlu0 %1537
    %v1555 = vunpack.c.l.b16 %v483
    %v1556 = vunpack.c.l.b16 %v484
    %v1557 = vunpack.c.l.b16 %v485
    %v1558 = vunpack.c.l.b16 %v486
    %v1559 = vunpack.c.l.b16 %v487
    %v1560 = vunpack.c.l.b16 %v488
    %v1561 = vunpack.c.l.b16 %v489
    %v1562 = vunpack.c.l.b16 %v490
    %v1563 = vunpack.c.l.b16 %v491
    %v1564 = vunpack.c.l.b16 %v492
    %v1565 = vunpack.c.l.b16 %v493
    %v1566 = vunpack.c.l.b16 %v494
    %v1567 = vunpack.c.l.b16 %v495
    %v1568 = vunpack.c.l.b16 %v496
    %v1569 = vunpack.c.l.b16 %v497
    %v1570 = vunpack.c.l.b16 %v498
    %v1571 = vpack.c.b16 %v1555, %v1363
    %v1572 = vpack.c.b16 %v1556, %v1364
    %v1573 = vpack.c.b16 %v1557, %v1365
    %v1574 = vpack.c.b16 %v1558, %v1366
    %v1575 = vpack.c.b16 %v1559, %v1367
    %v1576 = vpack.c.b16 %v1560, %v1368
    %v1577 = vpack.c.b16 %v1561, %v1369
    %v1578 = vpack.c.b16 %v1562, %v1370
    %v1579 = vpack.c.b16 %v1563, %v1371
    %v1580 = vpack.c.b16 %v1564, %v1372
    %v1581 = vpack.c.b16 %v1565, %v1373
    %v1582 = vpack.c.b16 %v1566, %v1374
    %v1583 = vpack.c.b16 %v1567, %v1375
    %v1584 = vpack.c.b16 %v1568, %v1376
    %v1585 = vpack.c.b16 %v1569, %v1377
    %v1586 = vpack.c.b16 %v1570, %v1378
    %v1587 = vrot.slane %v1571, 1
    %v1588 = vrot.slane %v1572, 1
    %v1589 = vrot.slane %v1573, 1
    %v1590 = vrot.slane %v1574, 1
    %v1591 = vrot.slane %v1575, 1
    %v1592 = vrot.slane %v1576, 1
    %v1593 = vrot.slane %v1577, 1
    %v1594 = vrot.slane %v1578, 1
    %v1595 = vrot.slane %v1579, 1
    %v1596 = vrot.slane %v1580, 1
    %v1597 = vrot.slane %v1581, 1
    %v1598 = vrot.slane %v1582, 1
    %v1599 = vrot.slane %v1583, 1
    %v1600 = vrot.slane %v1584, 1
    %v1601 = vrot.slane %v1585, 1
    %v1602 = vrot.slane %v1586, 1
    %vm1603 = vcmask 261120
    %v1606 = vsel %vm1603, %v563, %v740
    %v1609 = vsel %vm1603, %v564, %v742
    %v1612 = vsel %vm1603, %v565, %v744
    %v1615 = vsel %vm1603, %v566, %v746
    %v1618 = vsel %vm1603, %v567, %v748
    %v1621 = vsel %vm1603, %v568, %v750
    %v1624 = vsel %vm1603, %v569, %v752
    %v1627 = vsel %vm1603, %v570, %v754
    %v1630 = vsel %vm1603, %v571, %v756
    %v1633 = vsel %vm1603, %v572, %v758
    %v1636 = vsel %vm1603, %v573, %v760
    %v1639 = vsel %vm1603, %v574, %v762
    %v1642 = vsel %vm1603, %v575, %v764
    %v1645 = vsel %vm1603, %v576, %v766
    %v1648 = vsel %vm1603, %v577, %v768
    %v1651 = vsel %vm1603, %v578, %v770
    %vm1652 = vcmask 523264
    %v1654 = vsel %vm1652, %v1606, %v836
    %v1656 = vsel %vm1652, %v1609, %v838
    %v1658 = vsel %vm1652, %v1612, %v840
    %v1660 = vsel %vm1652, %v1615, %v842
    %v1662 = vsel %vm1652, %v1618, %v844
    %v1664 = vsel %vm1652, %v1621, %v846
    %v1666 = vsel %vm1652, %v1624, %v848
    %v1668 = vsel %vm1652, %v1627, %v850
    %v1670 = vsel %vm1652, %v1630, %v852
    %v1672 = vsel %vm1652, %v1633, %v854
    %v1674 = vsel %vm1652, %v1636, %v856
    %v1676 = vsel %vm1652, %v1639, %v858
    %v1678 = vsel %vm1652, %v1642, %v860
    %v1680 = vsel %vm1652, %v1645, %v862
    %v1682 = vsel %vm1652, %v1648, %v864
    %v1684 = vsel %vm1652, %v1651, %v866
    %vm1685 = vcmask 785408
    %v1687 = vsel %vm1685, %v1654, %v948
    %v1689 = vsel %vm1685, %v1656, %v950
    %v1691 = vsel %vm1685, %v1658, %v952
    %v1693 = vsel %vm1685, %v1660, %v954
    %v1695 = vsel %vm1685, %v1662, %v956
    %v1697 = vsel %vm1685, %v1664, %v958
    %v1699 = vsel %vm1685, %v1666, %v960
    %v1701 = vsel %vm1685, %v1668, %v962
    %v1703 = vsel %vm1685, %v1670, %v964
    %v1705 = vsel %vm1685, %v1672, %v966
    %v1707 = vsel %vm1685, %v1674, %v968
    %v1709 = vsel %vm1685, %v1676, %v970
    %v1711 = vsel %vm1685, %v1678, %v972
    %v1713 = vsel %vm1685, %v1680, %v974
    %v1715 = vsel %vm1685, %v1682, %v976
    %v1717 = vsel %vm1685, %v1684, %v978
    %v1720 = vsel %vm1603, %v1033, %v1204
    %v1723 = vsel %vm1603, %v1040, %v1206
    %v1726 = vsel %vm1603, %v1047, %v1208
    %v1729 = vsel %vm1603, %v1054, %v1210
    %v1732 = vsel %vm1603, %v1061, %v1212
    %v1735 = vsel %vm1603, %v1068, %v1214
    %v1738 = vsel %vm1603, %v1075, %v1216
    %v1741 = vsel %vm1603, %v1082, %v1218
    %v1744 = vsel %vm1603, %v1089, %v1220
    %v1747 = vsel %vm1603, %v1096, %v1222
    %v1750 = vsel %vm1603, %v1103, %v1224
    %v1753 = vsel %vm1603, %v1110, %v1226
    %v1756 = vsel %vm1603, %v1117, %v1228
    %v1759 = vsel %vm1603, %v1124, %v1230
    %v1762 = vsel %vm1603, %v1131, %v1232
    %v1765 = vsel %vm1603, %v1138, %v1234
    %v1767 = vsel %vm1652, %v1720, %v1316
    %v1769 = vsel %vm1652, %v1723, %v1318
    %v1771 = vsel %vm1652, %v1726, %v1320
    %v1773 = vsel %vm1652, %v1729, %v1322
    %v1775 = vsel %vm1652, %v1732, %v1324
    %v1777 = vsel %vm1652, %v1735, %v1326
    %v1779 = vsel %vm1652, %v1738, %v1328
    %v1781 = vsel %vm1652, %v1741, %v1330
    %v1783 = vsel %vm1652, %v1744, %v1332
    %v1785 = vsel %vm1652, %v1747, %v1334
    %v1787 = vsel %vm1652, %v1750, %v1336
    %v1789 = vsel %vm1652, %v1753, %v1338
    %v1791 = vsel %vm1652, %v1756, %v1340
    %v1793 = vsel %vm1652, %v1759, %v1342
    %v1795 = vsel %vm1652, %v1762, %v1344
    %v1797 = vsel %vm1652, %v1765, %v1346
    %v1799 = vsel %vm1685, %v1767, %v1508
    %v1801 = vsel %vm1685, %v1769, %v1510
    %v1803 = vsel %vm1685, %v1771, %v1512
    %v1805 = vsel %vm1685, %v1773, %v1514
    %v1807 = vsel %vm1685, %v1775, %v1516
    %v1809 = vsel %vm1685, %v1777, %v1518
    %v1811 = vsel %vm1685, %v1779, %v1520
    %v1813 = vsel %vm1685, %v1781, %v1522
    %v1815 = vsel %vm1685, %v1783, %v1524
    %v1817 = vsel %vm1685, %v1785, %v1526
    %v1819 = vsel %vm1685, %v1787, %v1528
    %v1821 = vsel %vm1685, %v1789, %v1530
    %v1823 = vsel %vm1685, %v1791, %v1532
    %v1825 = vsel %vm1685, %v1793, %v1534
    %v1827 = vsel %vm1685, %v1795, %v1536
    %v1829 = vsel %vm1685, %v1797, %v1538
    %v1862 = vunpack.c.l.b16 %v1687
    %v1863 = vunpack.c.l.b16 %v1799
    %v1864 = vunpack.c.l.b16 %v1587
    %v1865 = vunpack.c.h.b16 %v1687
    %v1866 = vunpack.c.h.b16 %v1799
    %v1867 = vunpack.c.h.b16 %v1587
    %v1868 = vunpack.c.l.b16 %v1689
    %v1869 = vunpack.c.l.b16 %v1801
    %v1870 = vunpack.c.l.b16 %v1588
    %v1871 = vunpack.c.h.b16 %v1689
    %v1872 = vunpack.c.h.b16 %v1801
    %v1873 = vunpack.c.h.b16 %v1588
    %v1874 = vunpack.c.l.b16 %v1691
    %v1875 = vunpack.c.l.b16 %v1803
    %v1876 = vunpack.c.l.b16 %v1589
    %v1877 = vunpack.c.h.b16 %v1691
    %v1878 = vunpack.c.h.b16 %v1803
    %v1879 = vunpack.c.h.b16 %v1589
    %v1880 = vunpack.c.l.b16 %v1693
    %v1881 = vunpack.c.l.b16 %v1805
    %v1882 = vunpack.c.l.b16 %v1590
    %v1883 = vunpack.c.h.b16 %v1693
    %v1884 = vunpack.c.h.b16 %v1805
    %v1885 = vunpack.c.h.b16 %v1590
    %v1886 = vunpack.c.l.b16 %v1695
    %v1887 = vunpack.c.l.b16 %v1807
    %v1888 = vunpack.c.l.b16 %v1591
    %v1889 = vunpack.c.h.b16 %v1695
    %v1890 = vunpack.c.h.b16 %v1807
    %v1891 = vunpack.c.h.b16 %v1591
    %v1892 = vunpack.c.l.b16 %v1697
    %v1893 = vunpack.c.l.b16 %v1809
    %v1894 = vunpack.c.l.b16 %v1592
    %v1895 = vunpack.c.h.b16 %v1697
    %v1896 = vunpack.c.h.b16 %v1809
    %v1897 = vunpack.c.h.b16 %v1592
    %v1898 = vunpack.c.l.b16 %v1699
    %v1899 = vunpack.c.l.b16 %v1811
    %v1900 = vunpack.c.l.b16 %v1593
    %v1901 = vunpack.c.h.b16 %v1699
    %v1902 = vunpack.c.h.b16 %v1811
    %v1903 = vunpack.c.h.b16 %v1593
    %v1904 = vunpack.c.l.b16 %v1701
    %v1905 = vunpack.c.l.b16 %v1813
    %v1906 = vunpack.c.l.b16 %v1594
    %v1907 = vunpack.c.h.b16 %v1701
    %v1908 = vunpack.c.h.b16 %v1813
    %v1909 = vunpack.c.h.b16 %v1594
    %v1910 = vunpack.c.l.b16 %v1703
    %v1911 = vunpack.c.l.b16 %v1815
    %v1912 = vunpack.c.l.b16 %v1595
    %v1913 = vunpack.c.h.b16 %v1703
    %v1914 = vunpack.c.h.b16 %v1815
    %v1915 = vunpack.c.h.b16 %v1595
    %v1916 = vunpack.c.l.b16 %v1705
    %v1917 = vunpack.c.l.b16 %v1817
    %v1918 = vunpack.c.l.b16 %v1596
    %v1919 = vunpack.c.h.b16 %v1705
    %v1920 = vunpack.c.h.b16 %v1817
    %v1921 = vunpack.c.h.b16 %v1596
    %v1922 = vunpack.c.l.b16 %v1707
    %v1923 = vunpack.c.l.b16 %v1819
    %v1924 = vunpack.c.l.b16 %v1597
    %v1925 = vunpack.c.h.b16 %v1707
    %v1926 = vunpack.c.h.b16 %v1819
    %v1927 = vunpack.c.h.b16 %v1597
    %v1928 = vunpack.c.l.b16 %v1709
    %v1929 = vunpack.c.l.b16 %v1821
    %v1930 = vunpack.c.l.b16 %v1598
    %v1931 = vunpack.c.h.b16 %v1709
    %v1932 = vunpack.c.h.b16 %v1821
    %v1933 = vunpack.c.h.b16 %v1598
    %v1934 = vunpack.c.l.b16 %v1711
    %v1935 = vunpack.c.l.b16 %v1823
    %v1936 = vunpack.c.l.b16 %v1599
    %v1937 = vunpack.c.h.b16 %v1711
    %v1938 = vunpack.c.h.b16 %v1823
    %v1939 = vunpack.c.h.b16 %v1599
    %v1940 = vunpack.c.l.b16 %v1713
    %v1941 = vunpack.c.l.b16 %v1825
    %v1942 = vunpack.c.l.b16 %v1600
    %v1943 = vunpack.c.h.b16 %v1713
    %v1944 = vunpack.c.h.b16 %v1825
    %v1945 = vunpack.c.h.b16 %v1600
    %v1946 = vunpack.c.l.b16 %v1715
    %v1947 = vunpack.c.l.b16 %v1827
    %v1948 = vunpack.c.l.b16 %v1601
    %v1949 = vunpack.c.h.b16 %v1715
    %v1950 = vunpack.c.h.b16 %v1827
    %v1951 = vunpack.c.h.b16 %v1601
    %v1952 = vunpack.c.l.b16 %v1717
    %v1953 = vunpack.c.l.b16 %v1829
    %v1954 = vunpack.c.l.b16 %v1602
    %v1955 = vunpack.c.h.b16 %v1717
    %v1956 = vunpack.c.h.b16 %v1829
    %v1957 = vunpack.c.h.b16 %v1602
    %v1958 = vpack.c.b16 %v1863, %v1862
    %v1959 = vpack.c.b16 %v1864, %v1864
    %v1960 = vpack.c.b16 %v1866, %v1865
    %v1961 = vpack.c.b16 %v1867, %v1867
    %v1962 = vpack.c.b16 %v1869, %v1868
    %v1963 = vpack.c.b16 %v1870, %v1870
    %v1964 = vpack.c.b16 %v1872, %v1871
    %v1965 = vpack.c.b16 %v1873, %v1873
    %v1966 = vpack.c.b16 %v1875, %v1874
    %v1967 = vpack.c.b16 %v1876, %v1876
    %v1968 = vpack.c.b16 %v1878, %v1877
    %v1969 = vpack.c.b16 %v1879, %v1879
    %v1970 = vpack.c.b16 %v1881, %v1880
    %v1971 = vpack.c.b16 %v1882, %v1882
    %v1972 = vpack.c.b16 %v1884, %v1883
    %v1973 = vpack.c.b16 %v1885, %v1885
    %v1974 = vpack.c.b16 %v1887, %v1886
    %v1975 = vpack.c.b16 %v1888, %v1888
    %v1976 = vpack.c.b16 %v1890, %v1889
    %v1977 = vpack.c.b16 %v1891, %v1891
    %v1978 = vpack.c.b16 %v1893, %v1892
    %v1979 = vpack.c.b16 %v1894, %v1894
    %v1980 = vpack.c.b16 %v1896, %v1895
    %v1981 = vpack.c.b16 %v1897, %v1897
    %v1982 = vpack.c.b16 %v1899, %v1898
    %v1983 = vpack.c.b16 %v1900, %v1900
    %v1984 = vpack.c.b16 %v1902, %v1901
    %v1985 = vpack.c.b16 %v1903, %v1903
    %v1986 = vpack.c.b16 %v1905, %v1904
    %v1987 = vpack.c.b16 %v1906, %v1906
    %v1988 = vpack.c.b16 %v1908, %v1907
    %v1989 = vpack.c.b16 %v1909, %v1909
    %v1990 = vpack.c.b16 %v1911, %v1910
    %v1991 = vpack.c.b16 %v1912, %v1912
    %v1992 = vpack.c.b16 %v1914, %v1913
    %v1993 = vpack.c.b16 %v1915, %v1915
    %v1994 = vpack.c.b16 %v1917, %v1916
    %v1995 = vpack.c.b16 %v1918, %v1918
    %v1996 = vpack.c.b16 %v1920, %v1919
    %v1997 = vpack.c.b16 %v1921, %v1921
    %v1998 = vpack.c.b16 %v1923, %v1922
    %v1999 = vpack.c.b16 %v1924, %v1924
    %v2000 = vpack.c.b16 %v1926, %v1925
    %v2001 = vpack.c.b16 %v1927, %v1927
    %v2002 = vpack.c.b16 %v1929, %v1928
    %v2003 = vpack.c.b16 %v1930, %v1930
    %v2004 = vpack.c.b16 %v1932, %v1931
    %v2005 = vpack.c.b16 %v1933, %v1933
    %v2006 = vpack.c.b16 %v1935, %v1934
    %v2007 = vpack.c.b16 %v1936, %v1936
    %v2008 = vpack.c.b16 %v1938, %v1937
    %v2009 = vpack.c.b16 %v1939, %v1939
    %v2010 = vpack.c.b16 %v1941, %v1940
    %v2011 = vpack.c.b16 %v1942, %v1942
    %v2012 = vpack.c.b16 %v1944, %v1943
    %v2013 = vpack.c.b16 %v1945, %v1945
    %v2014 = vpack.c.b16 %v1947, %v1946
    %v2015 = vpack.c.b16 %v1948, %v1948
    %v2016 = vpack.c.b16 %v1950, %v1949
    %v2017 = vpack.c.b16 %v1951, %v1951
    %v2018 = vpack.c.b16 %v1953, %v1952
    %v2019 = vpack.c.b16 %v1954, %v1954
    %v2020 = vpack.c.b16 %v1956, %v1955
    %v2021 = vpack.c.b16 %v1957, %v1957
    %vm2022 = vsmask.f32 3328
    %vm2023 = vsmask.f32 7440
    %vm2024 = vmor %vm2022, %vm2023
    %v2026 = vshrl.u32 %v1958, 16
    %v2028 = vrot.slane %v2026, 4
    %v2029 = vshll.u32 %v1958, 16
    %v2031 = vrot.slane %v2029, 5
    %v2032 = vor.u32 %v2028, %v2031
    %v2033 = vrot.slane %v2032, 4
    %v2035 = vshll.u32 %v1960, 16
    %v2037 = vrot.slane %v2035, 5
    %v2038 = vsel %vm2024, %v2033, %v2037
    %v2040 = vshrl.u32 %v1959, 16
    %v2042 = vrot.slane %v2040, 4
    %v2043 = vshll.u32 %v1959, 16
    %v2045 = vrot.slane %v2043, 5
    %v2046 = vor.u32 %v2042, %v2045
    %v2047 = vrot.slane %v2046, 4
    %v2049 = vshll.u32 %v1961, 16
    %v2051 = vrot.slane %v2049, 5
    %v2052 = vsel %vm2024, %v2047, %v2051
    %v2054 = vshrl.u32 %v1962, 16
    %v2056 = vrot.slane %v2054, 4
    %v2057 = vshll.u32 %v1962, 16
    %v2059 = vrot.slane %v2057, 5
    %v2060 = vor.u32 %v2056, %v2059
    %v2061 = vrot.slane %v2060, 4
    %v2063 = vshll.u32 %v1964, 16
    %v2065 = vrot.slane %v2063, 5
    %v2066 = vsel %vm2024, %v2061, %v2065
    %v2068 = vshrl.u32 %v1963, 16
    %v2070 = vrot.slane %v2068, 4
    %v2071 = vshll.u32 %v1963, 16
    %v2073 = vrot.slane %v2071, 5
    %v2074 = vor.u32 %v2070, %v2073
    %v2075 = vrot.slane %v2074, 4
    %v2077 = vshll.u32 %v1965, 16
    %v2079 = vrot.slane %v2077, 5
    %v2080 = vsel %vm2024, %v2075, %v2079
    %v2082 = vshrl.u32 %v1966, 16
    %v2084 = vrot.slane %v2082, 4
    %v2085 = vshll.u32 %v1966, 16
    %v2087 = vrot.slane %v2085, 5
    %v2088 = vor.u32 %v2084, %v2087
    %v2089 = vrot.slane %v2088, 4
    %v2091 = vshll.u32 %v1968, 16
    %v2093 = vrot.slane %v2091, 5
    %v2094 = vsel %vm2024, %v2089, %v2093
    %v2096 = vshrl.u32 %v1967, 16
    %v2098 = vrot.slane %v2096, 4
    %v2099 = vshll.u32 %v1967, 16
    %v2101 = vrot.slane %v2099, 5
    %v2102 = vor.u32 %v2098, %v2101
    %v2103 = vrot.slane %v2102, 4
    %v2105 = vshll.u32 %v1969, 16
    %v2107 = vrot.slane %v2105, 5
    %v2108 = vsel %vm2024, %v2103, %v2107
    %v2110 = vshrl.u32 %v1970, 16
    %v2112 = vrot.slane %v2110, 4
    %v2113 = vshll.u32 %v1970, 16
    %v2115 = vrot.slane %v2113, 5
    %v2116 = vor.u32 %v2112, %v2115
    %v2117 = vrot.slane %v2116, 4
    %v2119 = vshll.u32 %v1972, 16
    %v2121 = vrot.slane %v2119, 5
    %v2122 = vsel %vm2024, %v2117, %v2121
    %v2124 = vshrl.u32 %v1971, 16
    %v2126 = vrot.slane %v2124, 4
    %v2127 = vshll.u32 %v1971, 16
    %v2129 = vrot.slane %v2127, 5
    %v2130 = vor.u32 %v2126, %v2129
    %v2131 = vrot.slane %v2130, 4
    %v2133 = vshll.u32 %v1973, 16
    %v2135 = vrot.slane %v2133, 5
    %v2136 = vsel %vm2024, %v2131, %v2135
    %v2138 = vshrl.u32 %v1974, 16
    %v2140 = vrot.slane %v2138, 4
    %v2141 = vshll.u32 %v1974, 16
    %v2143 = vrot.slane %v2141, 5
    %v2144 = vor.u32 %v2140, %v2143
    %v2145 = vrot.slane %v2144, 4
    %v2147 = vshll.u32 %v1976, 16
    %v2149 = vrot.slane %v2147, 5
    %v2150 = vsel %vm2024, %v2145, %v2149
    %v2152 = vshrl.u32 %v1975, 16
    %v2154 = vrot.slane %v2152, 4
    %v2155 = vshll.u32 %v1975, 16
    %v2157 = vrot.slane %v2155, 5
    %v2158 = vor.u32 %v2154, %v2157
    %v2159 = vrot.slane %v2158, 4
    %v2161 = vshll.u32 %v1977, 16
    %v2163 = vrot.slane %v2161, 5
    %v2164 = vsel %vm2024, %v2159, %v2163
    %v2166 = vshrl.u32 %v1978, 16
    %v2168 = vrot.slane %v2166, 4
    %v2169 = vshll.u32 %v1978, 16
    %v2171 = vrot.slane %v2169, 5
    %v2172 = vor.u32 %v2168, %v2171
    %v2173 = vrot.slane %v2172, 4
    %v2175 = vshll.u32 %v1980, 16
    %v2177 = vrot.slane %v2175, 5
    %v2178 = vsel %vm2024, %v2173, %v2177
    %v2180 = vshrl.u32 %v1979, 16
    %v2182 = vrot.slane %v2180, 4
    %v2183 = vshll.u32 %v1979, 16
    %v2185 = vrot.slane %v2183, 5
    %v2186 = vor.u32 %v2182, %v2185
    %v2187 = vrot.slane %v2186, 4
    %v2189 = vshll.u32 %v1981, 16
    %v2191 = vrot.slane %v2189, 5
    %v2192 = vsel %vm2024, %v2187, %v2191
    %v2194 = vshrl.u32 %v1982, 16
    %v2196 = vrot.slane %v2194, 4
    %v2197 = vshll.u32 %v1982, 16
    %v2199 = vrot.slane %v2197, 5
    %v2200 = vor.u32 %v2196, %v2199
    %v2201 = vrot.slane %v2200, 4
    %v2203 = vshll.u32 %v1984, 16
    %v2205 = vrot.slane %v2203, 5
    %v2206 = vsel %vm2024, %v2201, %v2205
    %v2208 = vshrl.u32 %v1983, 16
    %v2210 = vrot.slane %v2208, 4
    %v2211 = vshll.u32 %v1983, 16
    %v2213 = vrot.slane %v2211, 5
    %v2214 = vor.u32 %v2210, %v2213
    %v2215 = vrot.slane %v2214, 4
    %v2217 = vshll.u32 %v1985, 16
    %v2219 = vrot.slane %v2217, 5
    %v2220 = vsel %vm2024, %v2215, %v2219
    %v2222 = vshrl.u32 %v1986, 16
    %v2224 = vrot.slane %v2222, 4
    %v2225 = vshll.u32 %v1986, 16
    %v2227 = vrot.slane %v2225, 5
    %v2228 = vor.u32 %v2224, %v2227
    %v2229 = vrot.slane %v2228, 4
    %v2231 = vshll.u32 %v1988, 16
    %v2233 = vrot.slane %v2231, 5
    %v2234 = vsel %vm2024, %v2229, %v2233
    %v2236 = vshrl.u32 %v1987, 16
    %v2238 = vrot.slane %v2236, 4
    %v2239 = vshll.u32 %v1987, 16
    %v2241 = vrot.slane %v2239, 5
    %v2242 = vor.u32 %v2238, %v2241
    %v2243 = vrot.slane %v2242, 4
    %v2245 = vshll.u32 %v1989, 16
    %v2247 = vrot.slane %v2245, 5
    %v2248 = vsel %vm2024, %v2243, %v2247
    %v2250 = vshrl.u32 %v1990, 16
    %v2252 = vrot.slane %v2250, 4
    %v2253 = vshll.u32 %v1990, 16
    %v2255 = vrot.slane %v2253, 5
    %v2256 = vor.u32 %v2252, %v2255
    %v2257 = vrot.slane %v2256, 4
    %v2259 = vshll.u32 %v1992, 16
    %v2261 = vrot.slane %v2259, 5
    %v2262 = vsel %vm2024, %v2257, %v2261
    %v2264 = vshrl.u32 %v1991, 16
    %v2266 = vrot.slane %v2264, 4
    %v2267 = vshll.u32 %v1991, 16
    %v2269 = vrot.slane %v2267, 5
    %v2270 = vor.u32 %v2266, %v2269
    %v2271 = vrot.slane %v2270, 4
    %v2273 = vshll.u32 %v1993, 16
    %v2275 = vrot.slane %v2273, 5
    %v2276 = vsel %vm2024, %v2271, %v2275
    %v2278 = vshrl.u32 %v1994, 16
    %v2280 = vrot.slane %v2278, 4
    %v2281 = vshll.u32 %v1994, 16
    %v2283 = vrot.slane %v2281, 5
    %v2284 = vor.u32 %v2280, %v2283
    %v2285 = vrot.slane %v2284, 4
    %v2287 = vshll.u32 %v1996, 16
    %v2289 = vrot.slane %v2287, 5
    %v2290 = vsel %vm2024, %v2285, %v2289
    %v2292 = vshrl.u32 %v1995, 16
    %v2294 = vrot.slane %v2292, 4
    %v2295 = vshll.u32 %v1995, 16
    %v2297 = vrot.slane %v2295, 5
    %v2298 = vor.u32 %v2294, %v2297
    %v2299 = vrot.slane %v2298, 4
    %v2301 = vshll.u32 %v1997, 16
    %v2303 = vrot.slane %v2301, 5
    %v2304 = vsel %vm2024, %v2299, %v2303
    %v2306 = vshrl.u32 %v1998, 16
    %v2308 = vrot.slane %v2306, 4
    %v2309 = vshll.u32 %v1998, 16
    %v2311 = vrot.slane %v2309, 5
    %v2312 = vor.u32 %v2308, %v2311
    %v2313 = vrot.slane %v2312, 4
    %v2315 = vshll.u32 %v2000, 16
    %v2317 = vrot.slane %v2315, 5
    %v2318 = vsel %vm2024, %v2313, %v2317
    %v2320 = vshrl.u32 %v1999, 16
    %v2322 = vrot.slane %v2320, 4
    %v2323 = vshll.u32 %v1999, 16
    %v2325 = vrot.slane %v2323, 5
    %v2326 = vor.u32 %v2322, %v2325
    %v2327 = vrot.slane %v2326, 4
    %v2329 = vshll.u32 %v2001, 16
    %v2331 = vrot.slane %v2329, 5
    %v2332 = vsel %vm2024, %v2327, %v2331
    %v2334 = vshrl.u32 %v2002, 16
    %v2336 = vrot.slane %v2334, 4
    %v2337 = vshll.u32 %v2002, 16
    %v2339 = vrot.slane %v2337, 5
    %v2340 = vor.u32 %v2336, %v2339
    %v2341 = vrot.slane %v2340, 4
    %v2343 = vshll.u32 %v2004, 16
    %v2345 = vrot.slane %v2343, 5
    %v2346 = vsel %vm2024, %v2341, %v2345
    %v2348 = vshrl.u32 %v2003, 16
    %v2350 = vrot.slane %v2348, 4
    %v2351 = vshll.u32 %v2003, 16
    %v2353 = vrot.slane %v2351, 5
    %v2354 = vor.u32 %v2350, %v2353
    %v2355 = vrot.slane %v2354, 4
    %v2357 = vshll.u32 %v2005, 16
    %v2359 = vrot.slane %v2357, 5
    %v2360 = vsel %vm2024, %v2355, %v2359
    %v2362 = vshrl.u32 %v2006, 16
    %v2364 = vrot.slane %v2362, 4
    %v2365 = vshll.u32 %v2006, 16
    %v2367 = vrot.slane %v2365, 5
    %v2368 = vor.u32 %v2364, %v2367
    %v2369 = vrot.slane %v2368, 4
    %v2371 = vshll.u32 %v2008, 16
    %v2373 = vrot.slane %v2371, 5
    %v2374 = vsel %vm2024, %v2369, %v2373
    %v2376 = vshrl.u32 %v2007, 16
    %v2378 = vrot.slane %v2376, 4
    %v2379 = vshll.u32 %v2007, 16
    %v2381 = vrot.slane %v2379, 5
    %v2382 = vor.u32 %v2378, %v2381
    %v2383 = vrot.slane %v2382, 4
    %v2385 = vshll.u32 %v2009, 16
    %v2387 = vrot.slane %v2385, 5
    %v2388 = vsel %vm2024, %v2383, %v2387
    %v2390 = vshrl.u32 %v2010, 16
    %v2392 = vrot.slane %v2390, 4
    %v2393 = vshll.u32 %v2010, 16
    %v2395 = vrot.slane %v2393, 5
    %v2396 = vor.u32 %v2392, %v2395
    %v2397 = vrot.slane %v2396, 4
    %v2399 = vshll.u32 %v2012, 16
    %v2401 = vrot.slane %v2399, 5
    %v2402 = vsel %vm2024, %v2397, %v2401
    %v2404 = vshrl.u32 %v2011, 16
    %v2406 = vrot.slane %v2404, 4
    %v2407 = vshll.u32 %v2011, 16
    %v2409 = vrot.slane %v2407, 5
    %v2410 = vor.u32 %v2406, %v2409
    %v2411 = vrot.slane %v2410, 4
    %v2413 = vshll.u32 %v2013, 16
    %v2415 = vrot.slane %v2413, 5
    %v2416 = vsel %vm2024, %v2411, %v2415
    %v2418 = vshrl.u32 %v2014, 16
    %v2420 = vrot.slane %v2418, 4
    %v2421 = vshll.u32 %v2014, 16
    %v2423 = vrot.slane %v2421, 5
    %v2424 = vor.u32 %v2420, %v2423
    %v2425 = vrot.slane %v2424, 4
    %v2427 = vshll.u32 %v2016, 16
    %v2429 = vrot.slane %v2427, 5
    %v2430 = vsel %vm2024, %v2425, %v2429
    %v2432 = vshrl.u32 %v2015, 16
    %v2434 = vrot.slane %v2432, 4
    %v2435 = vshll.u32 %v2015, 16
    %v2437 = vrot.slane %v2435, 5
    %v2438 = vor.u32 %v2434, %v2437
    %v2439 = vrot.slane %v2438, 4
    %v2441 = vshll.u32 %v2017, 16
    %v2443 = vrot.slane %v2441, 5
    %v2444 = vsel %vm2024, %v2439, %v2443
    %v2446 = vshrl.u32 %v2018, 16
    %v2448 = vrot.slane %v2446, 4
    %v2449 = vshll.u32 %v2018, 16
    %v2451 = vrot.slane %v2449, 5
    %v2452 = vor.u32 %v2448, %v2451
    %v2453 = vrot.slane %v2452, 4
    %v2455 = vshll.u32 %v2020, 16
    %v2457 = vrot.slane %v2455, 5
    %v2458 = vsel %vm2024, %v2453, %v2457
    %v2460 = vshrl.u32 %v2019, 16
    %v2462 = vrot.slane %v2460, 4
    %v2463 = vshll.u32 %v2019, 16
    %v2465 = vrot.slane %v2463, 5
    %v2466 = vor.u32 %v2462, %v2465
    %v2467 = vrot.slane %v2466, 4
    %v2469 = vshll.u32 %v2021, 16
    %v2471 = vrot.slane %v2469, 5
    %v2472 = vsel %vm2024, %v2467, %v2471
    %v2473 = vld [vmem:[#allocation3] sm:$0xff]
    %v2474 = vld [vmem:[#allocation3 + $0x8] sm:$0xff]
    %v2475 = vld [vmem:[#allocation3 + $0x10] sm:$0xff]
    %v2476 = vld [vmem:[#allocation3 + $0x18] sm:$0xff]
    %v2477 = vld [vmem:[#allocation3 + $0x20] sm:$0xff]
    %v2478 = vld [vmem:[#allocation3 + $0x28] sm:$0xff]
    %v2479 = vld [vmem:[#allocation3 + $0x30] sm:$0xff]
    %v2480 = vld [vmem:[#allocation3 + $0x38] sm:$0xff]
    %v2481 = vld [vmem:[#allocation3 + $0x40] sm:$0xff]
    %v2482 = vld [vmem:[#allocation3 + $0x48] sm:$0xff]
    %v2483 = vld [vmem:[#allocation3 + $0x50] sm:$0xff]
    %v2484 = vld [vmem:[#allocation3 + $0x58] sm:$0xff]
    %v2485 = vld [vmem:[#allocation3 + $0x60] sm:$0xff]
    %v2486 = vld [vmem:[#allocation3 + $0x68] sm:$0xff]
    %v2487 = vld [vmem:[#allocation3 + $0x70] sm:$0xff]
    %v2488 = vld [vmem:[#allocation3 + $0x78] sm:$0xff]
    %v2489 = vld [vmem:[#allocation7] sm:$0xf]
    %v2490 = vld [vmem:[#allocation7 + $0x4] sm:$0xf]
    %v2491 = vld [vmem:[#allocation7 + $0x8] sm:$0xf]
    %v2492 = vld [vmem:[#allocation7 + $0xc] sm:$0xf]
    %v2493 = vld [vmem:[#allocation7 + $0x10] sm:$0xf]
    %v2494 = vld [vmem:[#allocation7 + $0x14] sm:$0xf]
    %v2495 = vld [vmem:[#allocation7 + $0x18] sm:$0xf]
    %v2496 = vld [vmem:[#allocation7 + $0x1c] sm:$0xf]
    %v2497 = vld [vmem:[#allocation7 + $0x20] sm:$0xf]
    %v2498 = vld [vmem:[#allocation7 + $0x24] sm:$0xf]
    %v2499 = vld [vmem:[#allocation7 + $0x28] sm:$0xf]
    %v2500 = vld [vmem:[#allocation7 + $0x2c] sm:$0xf]
    %v2501 = vld [vmem:[#allocation7 + $0x30] sm:$0xf]
    %v2502 = vld [vmem:[#allocation7 + $0x34] sm:$0xf]
    %v2503 = vld [vmem:[#allocation7 + $0x38] sm:$0xf]
    %v2504 = vld [vmem:[#allocation7 + $0x3c] sm:$0xf]
    %v2505 = vld [vmem:[#allocation7 + $0x40] sm:$0xf]
    %v2506 = vld [vmem:[#allocation7 + $0x44] sm:$0xf]
    %v2507 = vld [vmem:[#allocation7 + $0x48] sm:$0xf]
    %v2508 = vld [vmem:[#allocation7 + $0x4c] sm:$0xf]
    %v2509 = vld [vmem:[#allocation7 + $0x50] sm:$0xf]
    %v2510 = vld [vmem:[#allocation7 + $0x54] sm:$0xf]
    %v2511 = vld [vmem:[#allocation7 + $0x58] sm:$0xf]
    %v2512 = vld [vmem:[#allocation7 + $0x5c] sm:$0xf]
    %v2513 = vld [vmem:[#allocation7 + $0x60] sm:$0xf]
    %v2514 = vld [vmem:[#allocation7 + $0x64] sm:$0xf]
    %v2515 = vld [vmem:[#allocation7 + $0x68] sm:$0xf]
    %v2516 = vld [vmem:[#allocation7 + $0x6c] sm:$0xf]
    %v2517 = vld [vmem:[#allocation7 + $0x70] sm:$0xf]
    %v2518 = vld [vmem:[#allocation7 + $0x74] sm:$0xf]
    %v2519 = vld [vmem:[#allocation7 + $0x78] sm:$0xf]
    %v2520 = vld [vmem:[#allocation7 + $0x7c] sm:$0xf]
    %v2521 = vld [vmem:[#allocation7 + $0x80] sm:$0xf]
    %v2522 = vld [vmem:[#allocation7 + $0x84] sm:$0xf]
    %v2523 = vld [vmem:[#allocation7 + $0x88] sm:$0xf]
    %v2524 = vld [vmem:[#allocation7 + $0x8c] sm:$0xf]
    %v2525 = vunpack.c.l.b16 %v2038
    %v2526 = vunpack.c.h.b16 %v2038
    %v2527 = vunpack.c.l.b16 %v2052
    %v2528 = vunpack.c.l.b16 %v2066
    %v2529 = vunpack.c.h.b16 %v2066
    %v2530 = vunpack.c.l.b16 %v2080
    %v2531 = vunpack.c.l.b16 %v2094
    %v2532 = vunpack.c.h.b16 %v2094
    %v2533 = vunpack.c.l.b16 %v2108
    %v2534 = vunpack.c.l.b16 %v2122
    %v2535 = vunpack.c.h.b16 %v2122
    %v2536 = vunpack.c.l.b16 %v2136
    %v2537 = vunpack.c.l.b16 %v2150
    %v2538 = vunpack.c.h.b16 %v2150
    %v2539 = vunpack.c.l.b16 %v2164
    %v2540 = vunpack.c.l.b16 %v2178
    %v2541 = vunpack.c.h.b16 %v2178
    %v2542 = vunpack.c.l.b16 %v2192
    %v2543 = vunpack.c.l.b16 %v2206
    %v2544 = vunpack.c.h.b16 %v2206
    %v2545 = vunpack.c.l.b16 %v2220
    %v2546 = vunpack.c.l.b16 %v2234
    %v2547 = vunpack.c.h.b16 %v2234
    %v2548 = vunpack.c.l.b16 %v2248
    %v2549 = vunpack.c.l.b16 %v2262
    %v2550 = vunpack.c.h.b16 %v2262
    %v2551 = vunpack.c.l.b16 %v2276
    %v2552 = vunpack.c.l.b16 %v2290
    %v2553 = vunpack.c.h.b16 %v2290
    %v2554 = vunpack.c.l.b16 %v2304
    %v2555 = vunpack.c.l.b16 %v2318
    %v2556 = vunpack.c.h.b16 %v2318
    %v2557 = vunpack.c.l.b16 %v2332
    %v2558 = vunpack.c.l.b16 %v2346
    %v2559 = vunpack.c.h.b16 %v2346
    %v2560 = vunpack.c.l.b16 %v2360
    %v2561 = vunpack.c.l.b16 %v2374
    %v2562 = vunpack.c.h.b16 %v2374
    %v2563 = vunpack.c.l.b16 %v2388
    %v2564 = vunpack.c.l.b16 %v2402
    %v2565 = vunpack.c.h.b16 %v2402
    %v2566 = vunpack.c.l.b16 %v2416
    %v2567 = vunpack.c.l.b16 %v2430
    %v2568 = vunpack.c.h.b16 %v2430
    %v2569 = vunpack.c.l.b16 %v2444
    %v2570 = vunpack.c.l.b16 %v2458
    %v2571 = vunpack.c.h.b16 %v2458
    %v2572 = vunpack.c.l.b16 %v2472
    %v2573 = vpack.c.b16 %v2528, %v2525
    %v2574 = vpack.c.b16 %v2529, %v2526
    %v2575 = vpack.c.b16 %v2530, %v2527
    %v2576 = vpack.c.b16 %v2534, %v2531
    %v2577 = vpack.c.b16 %v2535, %v2532
    %v2578 = vpack.c.b16 %v2536, %v2533
    %v2579 = vpack.c.b16 %v2540, %v2537
    %v2580 = vpack.c.b16 %v2541, %v2538
    %v2581 = vpack.c.b16 %v2542, %v2539
    %v2582 = vpack.c.b16 %v2546, %v2543
    %v2583 = vpack.c.b16 %v2547, %v2544
    %v2584 = vpack.c.b16 %v2548, %v2545
    %v2585 = vpack.c.b16 %v2552, %v2549
    %v2586 = vpack.c.b16 %v2553, %v2550
    %v2587 = vpack.c.b16 %v2554, %v2551
    %v2588 = vpack.c.b16 %v2558, %v2555
    %v2589 = vpack.c.b16 %v2559, %v2556
    %v2590 = vpack.c.b16 %v2560, %v2557
    %v2591 = vpack.c.b16 %v2564, %v2561
    %v2592 = vpack.c.b16 %v2565, %v2562
    %v2593 = vpack.c.b16 %v2566, %v2563
    %v2594 = vpack.c.b16 %v2570, %v2567
    %v2595 = vpack.c.b16 %v2571, %v2568
    %v2596 = vpack.c.b16 %v2572, %v2569
    %v2649 = vunpack.c.l.b16 %v2489
    %v2650 = vunpack.c.l.b16 %v2490
    %v2651 = vunpack.c.l.b16 %v2491
    %v2652 = vunpack.c.l.b16 %v2492
    %v2653 = vunpack.c.l.b16 %v2493
    %v2654 = vunpack.c.l.b16 %v2494
    %v2655 = vunpack.c.l.b16 %v2495
    %v2656 = vunpack.c.l.b16 %v2496
    %v2657 = vunpack.c.l.b16 %v2497
    %v2658 = vunpack.c.l.b16 %v2498
    %v2659 = vunpack.c.l.b16 %v2499
    %v2660 = vunpack.c.l.b16 %v2500
    %v2661 = vunpack.c.l.b16 %v2501
    %v2662 = vunpack.c.l.b16 %v2502
    %v2663 = vunpack.c.l.b16 %v2503
    %v2664 = vunpack.c.l.b16 %v2504
    %v2665 = vunpack.c.l.b16 %v2505
    %v2666 = vunpack.c.l.b16 %v2506
    %v2667 = vunpack.c.l.b16 %v2507
    %v2668 = vunpack.c.l.b16 %v2508
    %v2669 = vunpack.c.l.b16 %v2509
    %v2670 = vunpack.c.l.b16 %v2510
    %v2671 = vunpack.c.l.b16 %v2511
    %v2672 = vunpack.c.l.b16 %v2512
    %v2673 = vunpack.c.l.b16 %v2513
    %v2674 = vunpack.c.l.b16 %v2514
    %v2675 = vunpack.c.l.b16 %v2515
    %v2676 = vunpack.c.l.b16 %v2516
    %v2677 = vunpack.c.l.b16 %v2517
    %v2678 = vunpack.c.l.b16 %v2518
    %v2679 = vunpack.c.l.b16 %v2519
    %v2680 = vunpack.c.l.b16 %v2520
    %v2681 = vunpack.c.l.b16 %v2521
    %v2682 = vunpack.c.l.b16 %v2522
    %v2683 = vunpack.c.l.b16 %v2523
    %v2684 = vunpack.c.l.b16 %v2524
    %v2685 = vpack.c.b16 %v2650, %v2649
    %v2686 = vpack.c.b16 %v2652, %v2651
    %v2687 = vpack.c.b16 %v2654, %v2653
    %v2688 = vpack.c.b16 %v2656, %v2655
    %v2689 = vpack.c.b16 %v2658, %v2657
    %v2690 = vpack.c.b16 %v2660, %v2659
    %v2691 = vpack.c.b16 %v2662, %v2661
    %v2692 = vpack.c.b16 %v2664, %v2663
    %v2693 = vpack.c.b16 %v2666, %v2665
    %v2694 = vpack.c.b16 %v2668, %v2667
    %v2695 = vpack.c.b16 %v2670, %v2669
    %v2696 = vpack.c.b16 %v2672, %v2671
    %v2697 = vpack.c.b16 %v2674, %v2673
    %v2698 = vpack.c.b16 %v2676, %v2675
    %v2699 = vpack.c.b16 %v2678, %v2677
    %v2700 = vpack.c.b16 %v2680, %v2679
    %v2701 = vpack.c.b16 %v2682, %v2681
    %v2702 = vpack.c.b16 %v2684, %v2683
    %v2722 = vsel %vm1603, %v2575, 0
    %v2725 = vsel %vm1603, %v2578, 0
    %v2728 = vsel %vm1603, %v2581, 0
    %v2731 = vsel %vm1603, %v2584, 0
    %v2734 = vsel %vm1603, %v2587, 0
    %v2737 = vsel %vm1603, %v2590, 0
    %v2740 = vsel %vm1603, %v2593, 0
    %v2743 = vsel %vm1603, %v2596, 0
    %2745 = vmatprep.subr.bf16.mxu0 0
    %2746 = vmatpush1.bf16.msra.mxu0 %v2685
    %2747 = vmatprep.subr.bf16.mxu0 0
    %2748 = vmatpush1.bf16.msra.mxu0 %v2686
    %2749 = vmatprep.subr.bf16.mxu0 0
    %2750 = vmatpush1.bf16.msra.mxu0 %v2687
    %2751 = vmatprep.subr.bf16.mxu0 0
    %2752 = vmatpush1.bf16.msra.mxu0 %v2688
    %2753 = vmatprep.subr.bf16.mxu0 0
    %2754 = vmatpush1.bf16.msra.mxu0 %v2689
    %2755 = vmatprep.subr.bf16.mxu0 0
    %2756 = vmatpush1.bf16.msra.mxu0 %v2690
    %2757 = vmatprep.subr.bf16.mxu0 0
    %2758 = vmatpush1.bf16.msra.mxu0 %v2691
    %2759 = vmatprep.subr.bf16.mxu0 0
    %2760 = vmatpush1.bf16.msra.mxu0 %v2692
    %2761 = vmatprep.subr.bf16.mxu0 0
    %2762 = vmatpush1.bf16.msra.mxu0 %v2693
    %2763 = vmatprep.subr.bf16.mxu0 0
    %2764 = vmatpush1.bf16.msra.mxu0 %v2694
    %2765 = vmatprep.subr.bf16.mxu0 0
    %2766 = vmatpush1.bf16.msra.mxu0 %v2695
    %2767 = vmatprep.subr.bf16.mxu0 0
    %2768 = vmatpush1.bf16.msra.mxu0 %v2696
    %2769 = vmatprep.subr.bf16.mxu0 0
    %2770 = vmatpush1.bf16.msra.mxu0 %v2697
    %2771 = vmatprep.subr.bf16.mxu0 0
    %2772 = vmatpush1.bf16.msra.mxu0 %v2698
    %2773 = vmatprep.subr.bf16.mxu0 0
    %2774 = vmatpush1.bf16.msra.mxu0 %v2699
    %2775 = vmatprep.subr.bf16.mxu0 0
    %2776 = vmatpush1.bf16.msra.mxu0 %v2700
    %2777 = vmatprep.mubr.bf16.mxu0 %v2574
    %2778 = vmatmul.mubr.bf16.gmra.mrb[0].mxu0 %v2573
    %v2779 = vpop.f32.mrb[0].mxu0
    %v2780 = vadd.f32 0.0, %v2779
    %v2781 = vpop.f32.mrb[0].mxu0
    %v2782 = vpop.f32.mrb[0].mxu0
    %v2783 = vadd.f32 0.0, %v2782
    %v2784 = vpop.f32.mrb[0].mxu0
    %2785 = vmatprep.mubr.bf16.mxu0 %v2577
    %2786 = vmatmul.mubr.bf16.gmra.mrb[0].mxu0 %v2576
    %v2787 = vpop.f32.mrb[0].mxu0
    %v2788 = vadd.f32 0.0, %v2787
    %v2789 = vpop.f32.mrb[0].mxu0
    %v2790 = vpop.f32.mrb[0].mxu0
    %v2791 = vadd.f32 0.0, %v2790
    %v2792 = vpop.f32.mrb[0].mxu0
    %2793 = vmatprep.mubr.bf16.mxu0 %v2580
    %2794 = vmatmul.mubr.bf16.gmra.mrb[0].mxu0 %v2579
    %v2795 = vpop.f32.mrb[0].mxu0
    %v2796 = vadd.f32 0.0, %v2795
    %v2797 = vpop.f32.mrb[0].mxu0
    %v2798 = vpop.f32.mrb[0].mxu0
    %v2799 = vadd.f32 0.0, %v2798
    %v2800 = vpop.f32.mrb[0].mxu0
    %2801 = vmatprep.mubr.bf16.mxu0 %v2583
    %2802 = vmatmul.mubr.bf16.gmra.mrb[0].mxu0 %v2582
    %v2803 = vpop.f32.mrb[0].mxu0
    %v2804 = vadd.f32 0.0, %v2803
    %v2805 = vpop.f32.mrb[0].mxu0
    %v2806 = vpop.f32.mrb[0].mxu0
    %v2807 = vadd.f32 0.0, %v2806
    %v2808 = vpop.f32.mrb[0].mxu0
    %2809 = vmatprep.mubr.bf16.mxu0 %v2586
    %2810 = vmatmul.mubr.bf16.gmra.mrb[0].mxu0 %v2585
    %v2811 = vpop.f32.mrb[0].mxu0
    %v2812 = vadd.f32 0.0, %v2811
    %v2813 = vpop.f32.mrb[0].mxu0
    %v2814 = vpop.f32.mrb[0].mxu0
    %v2815 = vadd.f32 0.0, %v2814
    %v2816 = vpop.f32.mrb[0].mxu0
    %2817 = vmatprep.mubr.bf16.mxu0 %v2589
    %2818 = vmatmul.mubr.bf16.gmra.mrb[0].mxu0 %v2588
    %v2819 = vpop.f32.mrb[0].mxu0
    %v2820 = vadd.f32 0.0, %v2819
    %v2821 = vpop.f32.mrb[0].mxu0
    %v2822 = vpop.f32.mrb[0].mxu0
    %v2823 = vadd.f32 0.0, %v2822
    %v2824 = vpop.f32.mrb[0].mxu0
    %2825 = vmatprep.mubr.bf16.mxu0 %v2592
    %2826 = vmatmul.mubr.bf16.gmra.mrb[0].mxu0 %v2591
    %v2827 = vpop.f32.mrb[0].mxu0
    %v2828 = vadd.f32 0.0, %v2827
    %v2829 = vpop.f32.mrb[0].mxu0
    %v2830 = vpop.f32.mrb[0].mxu0
    %v2831 = vadd.f32 0.0, %v2830
    %v2832 = vpop.f32.mrb[0].mxu0
    %2833 = vmatprep.mubr.bf16.mxu0 %v2595
    %2834 = vmatmul.mubr.bf16.gmra.mrb[0].mxu0 %v2594
    %v2835 = vpop.f32.mrb[0].mxu0
    %v2836 = vadd.f32 0.0, %v2835
    %v2837 = vpop.f32.mrb[0].mxu0
    %v2838 = vpop.f32.mrb[0].mxu0
    %v2839 = vadd.f32 0.0, %v2838
    %v2840 = vpop.f32.mrb[0].mxu0
    %2841 = vdwg.mxu0
    %2842 = vmatprep.subr.bf16.mxu0 0
    %2843 = vmatpush1.bf16.msra.mxu0 %v2701
    %2844 = vmatprep.subr.bf16.mxu0 0
    %2845 = vmatpush1.bf16.msra.mxu0 %v2702
    %2846 = vmatprep.subr.bf16.mxu0 0
    %2847 = vmatpush1.bf16.msra.mxu0 0
    %2848 = vmatprep.subr.bf16.mxu0 0
    %2849 = vmatpush1.bf16.msra.mxu0 0
    %2850 = vmatprep.subr.bf16.mxu0 0
    %2851 = vmatpush1.bf16.msra.mxu0 0
    %2852 = vmatprep.subr.bf16.mxu0 0
    %2853 = vmatpush1.bf16.msra.mxu0 0
    %2854 = vmatprep.subr.bf16.mxu0 0
    %2855 = vmatpush1.bf16.msra.mxu0 0
    %2856 = vmatprep.subr.bf16.mxu0 0
    %2857 = vmatpush1.bf16.msra.mxu0 0
    %2858 = vmatprep.subr.bf16.mxu0 0
    %2859 = vmatpush1.bf16.msra.mxu0 0
    %2860 = vmatprep.subr.bf16.mxu0 0
    %2861 = vmatpush1.bf16.msra.mxu0 0
    %2862 = vmatprep.subr.bf16.mxu0 0
    %2863 = vmatpush1.bf16.msra.mxu0 0
    %2864 = vmatprep.subr.bf16.mxu0 0
    %2865 = vmatpush1.bf16.msra.mxu0 0
    %2866 = vmatprep.subr.bf16.mxu0 0
    %2867 = vmatpush1.bf16.msra.mxu0 0
    %2868 = vmatprep.subr.bf16.mxu0 0
    %2869 = vmatpush1.bf16.msra.mxu0 0
    %2870 = vmatprep.subr.bf16.mxu0 0
    %2871 = vmatpush1.bf16.msra.mxu0 0
    %2872 = vmatprep.subr.bf16.mxu0 0
    %2873 = vmatpush1.bf16.msra.mxu0 0
    %2874 = vmatprep.mubr.bf16.mxu0 0
    %2875 = vmatmul.mubr.bf16.gmra.mrb[0].mxu0 %v2722
    %v2876 = vpop.f32.mrb[0].mxu0
    %v2877 = vadd.f32 %v2780, %v2876
    %v2878 = vpop.f32.mrb[0].mxu0
    %v2879 = vpop.f32.mrb[0].mxu0
    %v2880 = vadd.f32 %v2783, %v2879
    %v2881 = vpop.f32.mrb[0].mxu0
    %2882 = vmatprep.mubr.bf16.mxu0 0
    %2883 = vmatmul.mubr.bf16.gmra.mrb[0].mxu0 %v2725
    %v2884 = vpop.f32.mrb[0].mxu0
    %v2885 = vadd.f32 %v2788, %v2884
    %v2886 = vpop.f32.mrb[0].mxu0
    %v2887 = vpop.f32.mrb[0].mxu0
    %v2888 = vadd.f32 %v2791, %v2887
    %v2889 = vpop.f32.mrb[0].mxu0
    %2890 = vmatprep.mubr.bf16.mxu0 0
    %2891 = vmatmul.mubr.bf16.gmra.mrb[0].mxu0 %v2728
    %v2892 = vpop.f32.mrb[0].mxu0
    %v2893 = vadd.f32 %v2796, %v2892
    %v2894 = vpop.f32.mrb[0].mxu0
    %v2895 = vpop.f32.mrb[0].mxu0
    %v2896 = vadd.f32 %v2799, %v2895
    %v2897 = vpop.f32.mrb[0].mxu0
    %2898 = vmatprep.mubr.bf16.mxu0 0
    %2899 = vmatmul.mubr.bf16.gmra.mrb[0].mxu0 %v2731
    %v2900 = vpop.f32.mrb[0].mxu0
    %v2901 = vadd.f32 %v2804, %v2900
    %v2902 = vpop.f32.mrb[0].mxu0
    %v2903 = vpop.f32.mrb[0].mxu0
    %v2904 = vadd.f32 %v2807, %v2903
    %v2905 = vpop.f32.mrb[0].mxu0
    %2906 = vmatprep.mubr.bf16.mxu0 0
    %2907 = vmatmul.mubr.bf16.gmra.mrb[0].mxu0 %v2734
    %v2908 = vpop.f32.mrb[0].mxu0
    %v2909 = vadd.f32 %v2812, %v2908
    %v2910 = vpop.f32.mrb[0].mxu0
    %v2911 = vpop.f32.mrb[0].mxu0
    %v2912 = vadd.f32 %v2815, %v2911
    %v2913 = vpop.f32.mrb[0].mxu0
    %2914 = vmatprep.mubr.bf16.mxu0 0
    %2915 = vmatmul.mubr.bf16.gmra.mrb[0].mxu0 %v2737
    %v2916 = vpop.f32.mrb[0].mxu0
    %v2917 = vadd.f32 %v2820, %v2916
    %v2918 = vpop.f32.mrb[0].mxu0
    %v2919 = vpop.f32.mrb[0].mxu0
    %v2920 = vadd.f32 %v2823, %v2919
    %v2921 = vpop.f32.mrb[0].mxu0
    %2922 = vmatprep.mubr.bf16.mxu0 0
    %2923 = vmatmul.mubr.bf16.gmra.mrb[0].mxu0 %v2740
    %v2924 = vpop.f32.mrb[0].mxu0
    %v2925 = vadd.f32 %v2828, %v2924
    %v2926 = vpop.f32.mrb[0].mxu0
    %v2927 = vpop.f32.mrb[0].mxu0
    %v2928 = vadd.f32 %v2831, %v2927
    %v2929 = vpop.f32.mrb[0].mxu0
    %2930 = vmatprep.mubr.bf16.mxu0 0
    %2931 = vmatmul.mubr.bf16.gmra.mrb[0].mxu0 %v2743
    %v2932 = vpop.f32.mrb[0].mxu0
    %v2933 = vadd.f32 %v2836, %v2932
    %v2934 = vpop.f32.mrb[0].mxu0
    %v2935 = vpop.f32.mrb[0].mxu0
    %v2936 = vadd.f32 %v2839, %v2935
    %v2937 = vpop.f32.mrb[0].mxu0
    %2938 = vdwg.mxu0
    %v2939 = vadd.f32 %v2473, %v2877
    %v2940 = vadd.f32 %v2474, %v2880
    %v2941 = vadd.f32 %v2475, %v2885
    %v2942 = vadd.f32 %v2476, %v2888
    %v2943 = vadd.f32 %v2477, %v2893
    %v2944 = vadd.f32 %v2478, %v2896
    %v2945 = vadd.f32 %v2479, %v2901
    %v2946 = vadd.f32 %v2480, %v2904
    %v2947 = vadd.f32 %v2481, %v2909
    %v2948 = vadd.f32 %v2482, %v2912
    %v2949 = vadd.f32 %v2483, %v2917
    %v2950 = vadd.f32 %v2484, %v2920
    %v2951 = vadd.f32 %v2485, %v2925
    %v2952 = vadd.f32 %v2486, %v2928
    %v2953 = vadd.f32 %v2487, %v2933
    %v2954 = vadd.f32 %v2488, %v2936
    %2955 = vst.msk [vmem:[#allocation3] sm:$0xff] %vm1603, %v2939
    %2956 = vst.msk [vmem:[#allocation3 + $0x8] sm:$0xff] %vm1603, %v2940
    %2957 = vst.msk [vmem:[#allocation3 + $0x10] sm:$0xff] %vm1603, %v2941
    %2958 = vst.msk [vmem:[#allocation3 + $0x18] sm:$0xff] %vm1603, %v2942
    %2959 = vst.msk [vmem:[#allocation3 + $0x20] sm:$0xff] %vm1603, %v2943
    %2960 = vst.msk [vmem:[#allocation3 + $0x28] sm:$0xff] %vm1603, %v2944
    %2961 = vst.msk [vmem:[#allocation3 + $0x30] sm:$0xff] %vm1603, %v2945
    %2962 = vst.msk [vmem:[#allocation3 + $0x38] sm:$0xff] %vm1603, %v2946
    %2963 = vst.msk [vmem:[#allocation3 + $0x40] sm:$0xff] %vm1603, %v2947
    %2964 = vst.msk [vmem:[#allocation3 + $0x48] sm:$0xff] %vm1603, %v2948
    %2965 = vst.msk [vmem:[#allocation3 + $0x50] sm:$0xff] %vm1603, %v2949
    %2966 = vst.msk [vmem:[#allocation3 + $0x58] sm:$0xff] %vm1603, %v2950
    %2967 = vst.msk [vmem:[#allocation3 + $0x60] sm:$0xff] %vm1603, %v2951
    %2968 = vst.msk [vmem:[#allocation3 + $0x68] sm:$0xff] %vm1603, %v2952
    %2969 = vst.msk [vmem:[#allocation3 + $0x70] sm:$0xff] %vm1603, %v2953
    %2970 = vst.msk [vmem:[#allocation3 + $0x78] sm:$0xff] %vm1603, %v2954
    // Predicated region
    $region38: #{_lambda_.7} parent=1 // pred_check
      %p2971 = pneg %p70
    $region39: #{_lambda_.7} parent=1 // pred_check_branch
      %2973 = sbr.rel (%p2971) target = $region41
    $region40: #{_lambda_.7} parent=1 // pred_region
      %v2974 = vld [vmem:[#allocation3] sm:$0xff]
      %v2975 = vld [vmem:[#allocation3 + $0x8] sm:$0xff]
      %v2976 = vld [vmem:[#allocation3 + $0x10] sm:$0xff]
      %v2977 = vld [vmem:[#allocation3 + $0x18] sm:$0xff]
      %v2978 = vld [vmem:[#allocation3 + $0x20] sm:$0xff]
      %v2979 = vld [vmem:[#allocation3 + $0x28] sm:$0xff]
      %v2980 = vld [vmem:[#allocation3 + $0x30] sm:$0xff]
      %v2981 = vld [vmem:[#allocation3 + $0x38] sm:$0xff]
      %v2982 = vld [vmem:[#allocation3 + $0x40] sm:$0xff]
      %v2983 = vld [vmem:[#allocation3 + $0x48] sm:$0xff]
      %v2984 = vld [vmem:[#allocation3 + $0x50] sm:$0xff]
      %v2985 = vld [vmem:[#allocation3 + $0x58] sm:$0xff]
      %v2986 = vld [vmem:[#allocation3 + $0x60] sm:$0xff]
      %v2987 = vld [vmem:[#allocation3 + $0x68] sm:$0xff]
      %v2988 = vld [vmem:[#allocation3 + $0x70] sm:$0xff]
      %v2989 = vld [vmem:[#allocation3 + $0x78] sm:$0xff]
      %v2990 = vld [vmem:[#allocation9] sm:$0x1]
      %v2992 = vlaneseq
      %v2993 = vshrl.u32 %v2992, 7
      %v2994 = vsub.s32 0, %v2993
      %v2995 = vrot.slane %v2990, %v2994
      %v2997 = vmul.f32 %v2974, %v2995
      %v2998 = vmul.f32 %v2975, %v2995
      %v2999 = vmul.f32 %v2976, %v2995
      %v3000 = vmul.f32 %v2977, %v2995
      %v3001 = vmul.f32 %v2978, %v2995
      %v3002 = vmul.f32 %v2979, %v2995
      %v3003 = vmul.f32 %v2980, %v2995
      %v3004 = vmul.f32 %v2981, %v2995
      %v3005 = vmul.f32 %v2982, %v2995
      %v3006 = vmul.f32 %v2983, %v2995
      %v3007 = vmul.f32 %v2984, %v2995
      %v3008 = vmul.f32 %v2985, %v2995
      %v3009 = vmul.f32 %v2986, %v2995
      %v3010 = vmul.f32 %v2987, %v2995
      %v3011 = vmul.f32 %v2988, %v2995
      %v3012 = vmul.f32 %v2989, %v2995
      %v3013 = vld [vmem:[#allocation10] sm:$0x1]
      %v3015 = vlaneseq
      %v3016 = vshrl.u32 %v3015, 7
      %v3017 = vsub.s32 0, %v3016
      %v3018 = vrot.slane %v3013, %v3017
      %v3020 = vadd.f32 %v2997, %v3018
      %v3021 = vadd.f32 %v2998, %v3018
      %v3022 = vadd.f32 %v2999, %v3018
      %v3023 = vadd.f32 %v3000, %v3018
      %v3024 = vadd.f32 %v3001, %v3018
      %v3025 = vadd.f32 %v3002, %v3018
      %v3026 = vadd.f32 %v3003, %v3018
      %v3027 = vadd.f32 %v3004, %v3018
      %v3028 = vadd.f32 %v3005, %v3018
      %v3029 = vadd.f32 %v3006, %v3018
      %v3030 = vadd.f32 %v3007, %v3018
      %v3031 = vadd.f32 %v3008, %v3018
      %v3032 = vadd.f32 %v3009, %v3018
      %v3033 = vadd.f32 %v3010, %v3018
      %v3034 = vadd.f32 %v3011, %v3018
      %v3035 = vadd.f32 %v3012, %v3018
      %v3036 = vmax.f32 %v3020, 0.0
      %v3037 = vmax.f32 %v3021, 0.0
      %v3038 = vmax.f32 %v3022, 0.0
      %v3039 = vmax.f32 %v3023, 0.0
      %v3040 = vmax.f32 %v3024, 0.0
      %v3041 = vmax.f32 %v3025, 0.0
      %v3042 = vmax.f32 %v3026, 0.0
      %v3043 = vmax.f32 %v3027, 0.0
      %v3044 = vmax.f32 %v3028, 0.0
      %v3045 = vmax.f32 %v3029, 0.0
      %v3046 = vmax.f32 %v3030, 0.0
      %v3047 = vmax.f32 %v3031, 0.0
      %v3048 = vmax.f32 %v3032, 0.0
      %v3049 = vmax.f32 %v3033, 0.0
      %v3050 = vmax.f32 %v3034, 0.0
      %v3051 = vmax.f32 %v3035, 0.0
      %v3052 = vpack.c.bf16 %v3036, %v3036
      %v3053 = vpack.c.bf16 %v3037, %v3037
      %v3054 = vpack.c.bf16 %v3038, %v3038
      %v3055 = vpack.c.bf16 %v3039, %v3039
      %v3056 = vpack.c.bf16 %v3040, %v3040
      %v3057 = vpack.c.bf16 %v3041, %v3041
      %v3058 = vpack.c.bf16 %v3042, %v3042
      %v3059 = vpack.c.bf16 %v3043, %v3043
      %v3060 = vpack.c.bf16 %v3044, %v3044
      %v3061 = vpack.c.bf16 %v3045, %v3045
      %v3062 = vpack.c.bf16 %v3046, %v3046
      %v3063 = vpack.c.bf16 %v3047, %v3047
      %v3064 = vpack.c.bf16 %v3048, %v3048
      %v3065 = vpack.c.bf16 %v3049, %v3049
      %v3066 = vpack.c.bf16 %v3050, %v3050
      %v3067 = vpack.c.bf16 %v3051, %v3051
      %vm3068 = vcmask 257024
      %3069 = vst.msk [vmem:[#allocation12] sm:$0xf] %vm3068, %v3052
      %3070 = vst.msk [vmem:[#allocation12 + $0x4] sm:$0xf] %vm3068, %v3053
      %3071 = vst.msk [vmem:[#allocation12 + $0x8] sm:$0xf] %vm3068, %v3054
      %3072 = vst.msk [vmem:[#allocation12 + $0xc] sm:$0xf] %vm3068, %v3055
      %3073 = vst.msk [vmem:[#allocation12 + $0x10] sm:$0xf] %vm3068, %v3056
      %3074 = vst.msk [vmem:[#allocation12 + $0x14] sm:$0xf] %vm3068, %v3057
      %3075 = vst.msk [vmem:[#allocation12 + $0x18] sm:$0xf] %vm3068, %v3058
      %3076 = vst.msk [vmem:[#allocation12 + $0x1c] sm:$0xf] %vm3068, %v3059
      %3077 = vst.msk [vmem:[#allocation12 + $0x20] sm:$0xf] %vm3068, %v3060
      %3078 = vst.msk [vmem:[#allocation12 + $0x24] sm:$0xf] %vm3068, %v3061
      %3079 = vst.msk [vmem:[#allocation12 + $0x28] sm:$0xf] %vm3068, %v3062
      %3080 = vst.msk [vmem:[#allocation12 + $0x2c] sm:$0xf] %vm3068, %v3063
      %3081 = vst.msk [vmem:[#allocation12 + $0x30] sm:$0xf] %vm3068, %v3064
      %3082 = vst.msk [vmem:[#allocation12 + $0x34] sm:$0xf] %vm3068, %v3065
      %3083 = vst.msk [vmem:[#allocation12 + $0x38] sm:$0xf] %vm3068, %v3066
      %3084 = vst.msk [vmem:[#allocation12 + $0x3c] sm:$0xf] %vm3068, %v3067
    $region41: #{_lambda_.7} parent=1 // pred_fallthru
      _
    // Predicated region
    $region42: #{_lambda_.7} parent=1 // pred_check
      _
    $region43: #{_lambda_.7} parent=1 // pred_check_branch
      %3086 = sbr.rel (0) target = $region45
    $region44: #{_lambda_.7} parent=1 // pred_region
      %s3088 = ssub.s32 1024, 1024
      %3089 = vsyncadd [#allocation6], %s3088
      %s3090 = sshll.u32 [#allocation12], 4
      %s3091 = int_to_ptr.vmem [resolvable:$true] %s3090
      %3096 = dma.vmem_to_hbm [thread:$0]  %s3091, 1024, %s4, [#allocation6], 64, 64, 4
    $region45: #{_lambda_.7} parent=1 // pred_fallthru
      _
    // Predicated region
    $region46: #{_lambda_.7} parent=1 // pred_check
      _
    $region47: #{_lambda_.7} parent=1 // pred_check_branch
      %3098 = sbr.rel (0) target = $region49
    $region48: #{_lambda_.7} parent=1 // pred_region
      %3099 = dma.done [#allocation6], 1024
    $region49: #{_lambda_.7} parent=1 // pred_fallthru
      _
    %3100 = vsyncpa [#allocation5], 1
    %3101 = vsyncpa [#allocation8], 1
    %3102 = vsyncpa [#allocation11], 1
    %3103 = vsyncpa [#allocation6], 1

// kernel: _lambda_.9
$region0: #{_lambda_.9}
  #allocation0 [shape = 'u32[]', space=smem, size = 0x4, offset = 0x4, fixed_abs, tag = 'smem constant byte address 0x4 - core index']
  #allocation1 [shape = 'u32[144,128]{1,0:T(1,128)}', space=vmem, size = 0x12000, scoped, tag = 'internal scratch']
  %s0 = inlined_call_operand.vmem [shape: bf16[2,16,16,8], index: 0, kind: input, shape index: {}]
  %s1 = inlined_call_operand.vmem [shape: f32[2,16,16,8], index: 1, kind: output, shape index: {}]
  %s2 = sld [smem:[#allocation0]]
  $region37: #{_lambda_.9} parent=0
    _
  %s4 = ssub.s32 1, %s2
  %s5 = scalar_select 0, %s4, %s2
  loop: start=0, step=1, limit=4
  $region2: #{_lambda_.9} parent=0 // loop_pre_header
    _
  $region3: #{_lambda_.9} parent=0 // loop_header
    %s7 = sphi 0, %s11
    %p8 = scmp.ge.s32.totalorder %s7, 4
    %s14 = sphi 0, %s26
    %s15 = sphi 0, %s22
    %s16 = sphi 0, %s14
    %s17 = sphi 0, %s15
    %s18 = sphi 0, %s16
    %s19 = sphi 0, %s17
    %s31 = sphi 0, %s33
    %s34 = sphi 0, %s31
    %s35 = sphi 0, %s34
    %s51 = sphi 0, %s35
    %s59 = sphi 0, %s61
    %s62 = sphi 0, %s59
    %s63 = sphi 0, %s62
    %s79 = sphi 0, %s63
  $region4: #{_lambda_.9} parent=0 // loop_header_branch
    %10 = sbr.rel (%p8) target = $region8
  $region5: #{_lambda_.9} parent=0 // loop_body
    %s12 = ssub.s32 %s7, 1
    %s13 = ssub.s32 %s7, 2
    %s20 = sadd.s32 1, %s15
    %p21 = scmp.ge.s32.totalorder %s20, 1
    %s22 = scalar_select %p21, 0, %s20
    %s23 = sadd.s32 1, %s14
    %s24 = scalar_select %p21, %s23, %s14
    %p25 = scmp.ge.s32.totalorder %s24, 2
    %s26 = scalar_select %p25, 0, %s24
    %s27 = ssub.s32 %s14, %s26
    %s28 = ssub.s32 %s15, %s22
    %s29 = sor.u32 %s27, %s28
    %p30 = scmp.eq.s32.totalorder %s29, 0
    %s32 = sadd.s32 %s31, 1
    %s33 = scalar_select %p30, %s31, %s32
    %p36 = pneg %p30
    %p37 = scmp.eq.s32.totalorder %s7, 1
    %p38 = por %p36, %p37
    %p39 = scmp.ne.s32.totalorder %s31, %s34
    %p40 = scmp.eq.s32.totalorder %s7, 0
    %p41 = por %p39, %p40
    %p42 = scmp.ne.s32.totalorder %s31, %s34
    %p43 = scmp.eq.s32.totalorder %s12, 1
    %p44 = por %p42, %p43
    %p45 = scmp.ne.s32.totalorder %s34, %s35
    %p46 = scmp.eq.s32.totalorder %s12, 0
    %p47 = por %p45, %p46
    %p48 = scmp.ne.s32.totalorder %s34, %s35
    %p49 = scmp.eq.s32.totalorder %s13, 1
    %p50 = por %p48, %p49
    %p52 = scmp.ne.s32.totalorder %s35, %s51
    %p53 = scmp.eq.s32.totalorder %s13, 0
    %p54 = por %p52, %p53
    %s55 = ssub.s32 %s14, %s26
    %s56 = ssub.s32 %s15, %s22
    %s57 = sor.u32 %s55, %s56
    %p58 = scmp.eq.s32.totalorder %s57, 0
    %s60 = sadd.s32 %s59, 1
    %s61 = scalar_select %p58, %s59, %s60
    %p64 = pneg %p58
    %p65 = scmp.eq.s32.totalorder %s7, 1
    %p66 = por %p64, %p65
    %p67 = scmp.ne.s32.totalorder %s59, %s62
    %p68 = scmp.eq.s32.totalorder %s7, 0
    %p69 = por %p67, %p68
    %p70 = scmp.ne.s32.totalorder %s59, %s62
    %p71 = scmp.eq.s32.totalorder %s12, 1
    %p72 = por %p70, %p71
    %p73 = scmp.ne.s32.totalorder %s62, %s63
    %p74 = scmp.eq.s32.totalorder %s12, 0
    %p75 = por %p73, %p74
    %p76 = scmp.ne.s32.totalorder %s62, %s63
    %p77 = scmp.eq.s32.totalorder %s13, 1
    %p78 = por %p76, %p77
    %p80 = scmp.ne.s32.totalorder %s63, %s79
    %p81 = scmp.eq.s32.totalorder %s13, 0
    %p82 = por %p80, %p81
    %p83 = scmp.le.s32.totalorder 1, %s7
    %p84 = scmp.lt.s32.totalorder %s7, 3
    %p85 = pnand %p83, %p84
    %p86 = pneg %p85
    // Predicated region
    $region9: #{_lambda_.9} parent=5 // pred_check
      _
    $region10: #{_lambda_.9} parent=5 // pred_check_branch
      %88 = sbr.rel (%p85) target = $region12
    $region11: #{_lambda_.9} parent=5 // pred_region
      %s89 = ssub.s32 %s7, 1
    $region12: #{_lambda_.9} parent=5 // pred_fallthru
      _
    %p90 = scmp.lt.s32.totalorder %s7, 2
    // Predicated region
    $region13: #{_lambda_.9} parent=5 // pred_check
      %p91 = pneg %p90
    $region14: #{_lambda_.9} parent=5 // pred_check_branch
      %93 = sbr.rel (%p91) target = $region16
    $region15: #{_lambda_.9} parent=5 // pred_region
      // Predicated region
      $region17: #{_lambda_.9} parent=15 // pred_check
        %p94 = pneg %p41
      $region18: #{_lambda_.9} parent=15 // pred_check_branch
        %96 = sbr.rel (%p94) target = $region20
      $region19: #{_lambda_.9} parent=15 // pred_region
        %s97 = smul.u32 16, %s15
        %p98 = scmp.lt.s32.totalorder %s14, 1
        %s99 = scalar_select %p98, %s14, 1
        %p100 = scmp.lt.s32.totalorder %s97, 15
        %s101 = scalar_select %p100, %s97, 15
        %s102 = smul.addr %s101, 2
        %s103 = smul.addr %s99, 32
        %s104 = sadd.s32 %s102, %s103
        %s105 = smul.addr %s104, 4
        %s106 = scalar_lea.vmem %s0, %s105
        %s107 = smul.u32 16, %s15
      $region20: #{_lambda_.9} parent=15 // pred_fallthru
        _
    $region16: #{_lambda_.9} parent=5 // pred_fallthru
      _
    %p108 = scmp.le.s32.totalorder 1, %s7
    %p109 = scmp.lt.s32.totalorder %s7, 3
    %p110 = pnand %p108, %p109
    %p111 = pneg %p110
    // Predicated region
    $region21: #{_lambda_.9} parent=5 // pred_check
      _
    $region22: #{_lambda_.9} parent=5 // pred_check_branch
      %113 = sbr.rel (%p110) target = $region24
    $region23: #{_lambda_.9} parent=5 // pred_region
      %s114 = ssub.s32 %s7, 1
      %s115 = smul.u32 16, %s17
      %p116 = scmp.lt.s32.totalorder %s16, 1
      %s117 = scalar_select %p116, %s16, 1
      %p118 = scmp.lt.s32.totalorder %s115, 15
      %s119 = scalar_select %p118, %s115, 15
      %s120 = smul.addr %s119, 2
      %s121 = smul.addr %s117, 32
      %s122 = sadd.s32 %s120, %s121
      %s123 = smul.addr %s122, 4
      %s124 = scalar_lea.vmem %s0, %s123
      %p125 = pneg %p47
      %p126 = pneg %p44
      %p127 = pneg %p75
      %p128 = pneg %p72
      %s129 = smul.u32 16, %s17
      %p130 = scmp.lt.s32.totalorder %s16, 1
      %s131 = scalar_select %p130, %s16, 1
      %p132 = scmp.lt.s32.totalorder %s129, 15
      %s133 = scalar_select %p132, %s129, 15
      %s134 = smul.addr %s133, 2
      %s135 = smul.addr %s131, 32
      %s136 = sadd.s32 %s134, %s135
      %s137 = smul.addr %s136, 8
      %s138 = scalar_lea.vmem %s1, %s137
      %s139 = smul.u32 16, %s17
      %p140 = scmp.lt.s32.totalorder %s16, 1
      %s141 = scalar_select %p140, %s16, 1
      %p142 = scmp.lt.s32.totalorder %s139, 15
      %s143 = scalar_select %p142, %s139, 15
      %s144 = smul.addr %s143, 2
      %s145 = smul.addr %s141, 32
      %s146 = sadd.s32 %s144, %s145
      %s147 = smul.addr %s146, 4
      %s148 = scalar_lea.vmem %s0, %s147
      %s149 = smul.u32 16, %s17
      %s150 = smul.u32 16, %s17
      %p151 = scmp.lt.s32.totalorder %s16, 1
      %s152 = scalar_select %p151, %s16, 1
      %p153 = scmp.lt.s32.totalorder %s150, 15
      %s154 = scalar_select %p153, %s150, 15
      %s155 = smul.addr %s154, 2
      %s156 = smul.addr %s152, 32
      %s157 = sadd.s32 %s155, %s156
      %s158 = smul.addr %s157, 8
      %s159 = scalar_lea.vmem %s1, %s158
      %s160 = smul.u32 16, %s17
      %v161 = vld [vmem:[%s148] sm:$0xf]
      %v162 = vld [vmem:[%s148 + $0x4] sm:$0xf]
      %v163 = vld [vmem:[%s148 + $0x8] sm:$0xf]
      %v164 = vld [vmem:[%s148 + $0xc] sm:$0xf]
      %v165 = vld [vmem:[%s148 + $0x10] sm:$0xf]
      %v166 = vld [vmem:[%s148 + $0x14] sm:$0xf]
      %v167 = vld [vmem:[%s148 + $0x18] sm:$0xf]
      %v168 = vld [vmem:[%s148 + $0x1c] sm:$0xf]
      %v169 = vld [vmem:[%s148 + $0x20] sm:$0xf]
      %v170 = vld [vmem:[%s148 + $0x24] sm:$0xf]
      %v171 = vld [vmem:[%s148 + $0x28] sm:$0xf]
      %v172 = vld [vmem:[%s148 + $0x2c] sm:$0xf]
      %v173 = vld [vmem:[%s148 + $0x30] sm:$0xf]
      %v174 = vld [vmem:[%s148 + $0x34] sm:$0xf]
      %v175 = vld [vmem:[%s148 + $0x38] sm:$0xf]
      %v176 = vld [vmem:[%s148 + $0x3c] sm:$0xf]
      %v177 = vld [vmem:[%s148 + $0x40] sm:$0xf]
      %v178 = vld [vmem:[%s148 + $0x44] sm:$0xf]
      %v179 = vld [vmem:[%s148 + $0x48] sm:$0xf]
      %v180 = vld [vmem:[%s148 + $0x4c] sm:$0xf]
      %v181 = vld [vmem:[%s148 + $0x50] sm:$0xf]
      %v182 = vld [vmem:[%s148 + $0x54] sm:$0xf]
      %v183 = vld [vmem:[%s148 + $0x58] sm:$0xf]
      %v184 = vld [vmem:[%s148 + $0x5c] sm:$0xf]
      %v185 = vld [vmem:[%s148 + $0x60] sm:$0xf]
      %v186 = vld [vmem:[%s148 + $0x64] sm:$0xf]
      %v187 = vld [vmem:[%s148 + $0x68] sm:$0xf]
      %v188 = vld [vmem:[%s148 + $0x6c] sm:$0xf]
      %v189 = vld [vmem:[%s148 + $0x70] sm:$0xf]
      %v190 = vld [vmem:[%s148 + $0x74] sm:$0xf]
      %v191 = vld [vmem:[%s148 + $0x78] sm:$0xf]
      %v192 = vld [vmem:[%s148 + $0x7c] sm:$0xf]
      %v193 = vunpack.c.l.bf16 %v161
      %v194 = vunpack.c.l.bf16 %v162
      %v195 = vunpack.c.l.bf16 %v163
      %v196 = vunpack.c.l.bf16 %v164
      %v197 = vunpack.c.l.bf16 %v165
      %v198 = vunpack.c.l.bf16 %v166
      %v199 = vunpack.c.l.bf16 %v167
      %v200 = vunpack.c.l.bf16 %v168
      %v201 = vunpack.c.l.bf16 %v169
      %v202 = vunpack.c.l.bf16 %v170
      %v203 = vunpack.c.l.bf16 %v171
      %v204 = vunpack.c.l.bf16 %v172
      %v205 = vunpack.c.l.bf16 %v173
      %v206 = vunpack.c.l.bf16 %v174
      %v207 = vunpack.c.l.bf16 %v175
      %v208 = vunpack.c.l.bf16 %v176
      %v209 = vunpack.c.l.bf16 %v177
      %v210 = vunpack.c.l.bf16 %v178
      %v211 = vunpack.c.l.bf16 %v179
      %v212 = vunpack.c.l.bf16 %v180
      %v213 = vunpack.c.l.bf16 %v181
      %v214 = vunpack.c.l.bf16 %v182
      %v215 = vunpack.c.l.bf16 %v183
      %v216 = vunpack.c.l.bf16 %v184
      %v217 = vunpack.c.l.bf16 %v185
      %v218 = vunpack.c.l.bf16 %v186
      %v219 = vunpack.c.l.bf16 %v187
      %v220 = vunpack.c.l.bf16 %v188
      %v221 = vunpack.c.l.bf16 %v189
      %v222 = vunpack.c.l.bf16 %v190
      %v223 = vunpack.c.l.bf16 %v191
      %v224 = vunpack.c.l.bf16 %v192
      %vm225 = vcmask 64512
      %v226 = vsel %vm225, %v193, -inf
      %227 = vmax.xlane.f32.xlu0 %v226
      %v228 = vpop.xlane.xlu0 %227
      %v229 = vsel %vm225, %v194, -inf
      %230 = vmax.xlane.f32.xlu0 %v229
      %v231 = vpop.xlane.xlu0 %230
      %v232 = vsel %vm225, %v195, -inf
      %233 = vmax.xlane.f32.xlu0 %v232
      %v234 = vpop.xlane.xlu0 %233
      %v235 = vsel %vm225, %v196, -inf
      %236 = vmax.xlane.f32.xlu0 %v235
      %v237 = vpop.xlane.xlu0 %236
      %v238 = vsel %vm225, %v197, -inf
      %239 = vmax.xlane.f32.xlu0 %v238
      %v240 = vpop.xlane.xlu0 %239
      %v241 = vsel %vm225, %v198, -inf
      %242 = vmax.xlane.f32.xlu0 %v241
      %v243 = vpop.xlane.xlu0 %242
      %v244 = vsel %vm225, %v199, -inf
      %245 = vmax.xlane.f32.xlu0 %v244
      %v246 = vpop.xlane.xlu0 %245
      %v247 = vsel %vm225, %v200, -inf
      %248 = vmax.xlane.f32.xlu0 %v247
      %v249 = vpop.xlane.xlu0 %248
      %v250 = vsel %vm225, %v201, -inf
      %251 = vmax.xlane.f32.xlu0 %v250
      %v252 = vpop.xlane.xlu0 %251
      %v253 = vsel %vm225, %v202, -inf
      %254 = vmax.xlane.f32.xlu0 %v253
      %v255 = vpop.xlane.xlu0 %254
      %v256 = vsel %vm225, %v203, -inf
      %257 = vmax.xlane.f32.xlu0 %v256
      %v258 = vpop.xlane.xlu0 %257
      %v259 = vsel %vm225, %v204, -inf
      %260 = vmax.xlane.f32.xlu0 %v259
      %v261 = vpop.xlane.xlu0 %260
      %v262 = vsel %vm225, %v205, -inf
      %263 = vmax.xlane.f32.xlu0 %v262
      %v264 = vpop.xlane.xlu0 %263
      %v265 = vsel %vm225, %v206, -inf
      %266 = vmax.xlane.f32.xlu0 %v265
      %v267 = vpop.xlane.xlu0 %266
      %v268 = vsel %vm225, %v207, -inf
      %269 = vmax.xlane.f32.xlu0 %v268
      %v270 = vpop.xlane.xlu0 %269
      %v271 = vsel %vm225, %v208, -inf
      %272 = vmax.xlane.f32.xlu0 %v271
      %v273 = vpop.xlane.xlu0 %272
      %v274 = vsel %vm225, %v209, -inf
      %275 = vmax.xlane.f32.xlu0 %v274
      %v276 = vpop.xlane.xlu0 %275
      %v277 = vsel %vm225, %v210, -inf
      %278 = vmax.xlane.f32.xlu0 %v277
      %v279 = vpop.xlane.xlu0 %278
      %v280 = vsel %vm225, %v211, -inf
      %281 = vmax.xlane.f32.xlu0 %v280
      %v282 = vpop.xlane.xlu0 %281
      %v283 = vsel %vm225, %v212, -inf
      %284 = vmax.xlane.f32.xlu0 %v283
      %v285 = vpop.xlane.xlu0 %284
      %v286 = vsel %vm225, %v213, -inf
      %287 = vmax.xlane.f32.xlu0 %v286
      %v288 = vpop.xlane.xlu0 %287
      %v289 = vsel %vm225, %v214, -inf
      %290 = vmax.xlane.f32.xlu0 %v289
      %v291 = vpop.xlane.xlu0 %290
      %v292 = vsel %vm225, %v215, -inf
      %293 = vmax.xlane.f32.xlu0 %v292
      %v294 = vpop.xlane.xlu0 %293
      %v295 = vsel %vm225, %v216, -inf
      %296 = vmax.xlane.f32.xlu0 %v295
      %v297 = vpop.xlane.xlu0 %296
      %v298 = vsel %vm225, %v217, -inf
      %299 = vmax.xlane.f32.xlu0 %v298
      %v300 = vpop.xlane.xlu0 %299
      %v301 = vsel %vm225, %v218, -inf
      %302 = vmax.xlane.f32.xlu0 %v301
      %v303 = vpop.xlane.xlu0 %302
      %v304 = vsel %vm225, %v219, -inf
      %305 = vmax.xlane.f32.xlu0 %v304
      %v306 = vpop.xlane.xlu0 %305
      %v307 = vsel %vm225, %v220, -inf
      %308 = vmax.xlane.f32.xlu0 %v307
      %v309 = vpop.xlane.xlu0 %308
      %v310 = vsel %vm225, %v221, -inf
      %311 = vmax.xlane.f32.xlu0 %v310
      %v312 = vpop.xlane.xlu0 %311
      %v313 = vsel %vm225, %v222, -inf
      %314 = vmax.xlane.f32.xlu0 %v313
      %v315 = vpop.xlane.xlu0 %314
      %v316 = vsel %vm225, %v223, -inf
      %317 = vmax.xlane.f32.xlu0 %v316
      %v318 = vpop.xlane.xlu0 %317
      %v319 = vsel %vm225, %v224, -inf
      %320 = vmax.xlane.f32.xlu0 %v319
      %v321 = vpop.xlane.xlu0 %320
      %v322 = vsub.f32 %v193, %v228
      %v323 = vsub.f32 %v194, %v231
      %v324 = vsub.f32 %v195, %v234
      %v325 = vsub.f32 %v196, %v237
      %v326 = vsub.f32 %v197, %v240
      %v327 = vsub.f32 %v198, %v243
      %v328 = vsub.f32 %v199, %v246
      %v329 = vsub.f32 %v200, %v249
      %v330 = vsub.f32 %v201, %v252
      %v331 = vsub.f32 %v202, %v255
      %v332 = vsub.f32 %v203, %v258
      %v333 = vsub.f32 %v204, %v261
      %v334 = vsub.f32 %v205, %v264
      %v335 = vsub.f32 %v206, %v267
      %v336 = vsub.f32 %v207, %v270
      %v337 = vsub.f32 %v208, %v273
      %v338 = vsub.f32 %v209, %v276
      %v339 = vsub.f32 %v210, %v279
      %v340 = vsub.f32 %v211, %v282
      %v341 = vsub.f32 %v212, %v285
      %v342 = vsub.f32 %v213, %v288
      %v343 = vsub.f32 %v214, %v291
      %v344 = vsub.f32 %v215, %v294
      %v345 = vsub.f32 %v216, %v297
      %v346 = vsub.f32 %v217, %v300
      %v347 = vsub.f32 %v218, %v303
      %v348 = vsub.f32 %v219, %v306
      %v349 = vsub.f32 %v220, %v309
      %v350 = vsub.f32 %v221, %v312
      %v351 = vsub.f32 %v222, %v315
      %v352 = vsub.f32 %v223, %v318
      %v353 = vsub.f32 %v224, %v321
      %v354 = vmul.f32 %v322, 1.442695
      %v355 = vpow.pop %v354
      %v356 = vmul.f32 %v323, 1.442695
      %v357 = vpow.pop %v356
      %v358 = vmul.f32 %v324, 1.442695
      %v359 = vpow.pop %v358
      %v360 = vmul.f32 %v325, 1.442695
      %v361 = vpow.pop %v360
      %v362 = vmul.f32 %v326, 1.442695
      %v363 = vpow.pop %v362
      %v364 = vmul.f32 %v327, 1.442695
      %v365 = vpow.pop %v364
      %v366 = vmul.f32 %v328, 1.442695
      %v367 = vpow.pop %v366
      %v368 = vmul.f32 %v329, 1.442695
      %v369 = vpow.pop %v368
      %v370 = vmul.f32 %v330, 1.442695
      %v371 = vpow.pop %v370
      %v372 = vmul.f32 %v331, 1.442695
      %v373 = vpow.pop %v372
      %v374 = vmul.f32 %v332, 1.442695
      %v375 = vpow.pop %v374
      %v376 = vmul.f32 %v333, 1.442695
      %v377 = vpow.pop %v376
      %v378 = vmul.f32 %v334, 1.442695
      %v379 = vpow.pop %v378
      %v380 = vmul.f32 %v335, 1.442695
      %v381 = vpow.pop %v380
      %v382 = vmul.f32 %v336, 1.442695
      %v383 = vpow.pop %v382
      %v384 = vmul.f32 %v337, 1.442695
      %v385 = vpow.pop %v384
      %v386 = vmul.f32 %v338, 1.442695
      %v387 = vpow.pop %v386
      %v388 = vmul.f32 %v339, 1.442695
      %v389 = vpow.pop %v388
      %v390 = vmul.f32 %v340, 1.442695
      %v391 = vpow.pop %v390
      %v392 = vmul.f32 %v341, 1.442695
      %v393 = vpow.pop %v392
      %v394 = vmul.f32 %v342, 1.442695
      %v395 = vpow.pop %v394
      %v396 = vmul.f32 %v343, 1.442695
      %v397 = vpow.pop %v396
      %v398 = vmul.f32 %v344, 1.442695
      %v399 = vpow.pop %v398
      %v400 = vmul.f32 %v345, 1.442695
      %v401 = vpow.pop %v400
      %v402 = vmul.f32 %v346, 1.442695
      %v403 = vpow.pop %v402
      %v404 = vmul.f32 %v347, 1.442695
      %v405 = vpow.pop %v404
      %v406 = vmul.f32 %v348, 1.442695
      %v407 = vpow.pop %v406
      %v408 = vmul.f32 %v349, 1.442695
      %v409 = vpow.pop %v408
      %v410 = vmul.f32 %v350, 1.442695
      %v411 = vpow.pop %v410
      %v412 = vmul.f32 %v351, 1.442695
      %v413 = vpow.pop %v412
      %v414 = vmul.f32 %v352, 1.442695
      %v415 = vpow.pop %v414
      %v416 = vmul.f32 %v353, 1.442695
      %v417 = vpow.pop %v416
      %v418 = vsel %vm225, %v355, 0.0
      %419 = vadd.xlane.f32.xlu0 %v418
      %v420 = vpop.xlane.xlu0 %419
      %v421 = vsel %vm225, %v357, 0.0
      %422 = vadd.xlane.f32.xlu0 %v421
      %v423 = vpop.xlane.xlu0 %422
      %v424 = vsel %vm225, %v359, 0.0
      %425 = vadd.xlane.f32.xlu0 %v424
      %v426 = vpop.xlane.xlu0 %425
      %v427 = vsel %vm225, %v361, 0.0
      %428 = vadd.xlane.f32.xlu0 %v427
      %v429 = vpop.xlane.xlu0 %428
      %v430 = vsel %vm225, %v363, 0.0
      %431 = vadd.xlane.f32.xlu0 %v430
      %v432 = vpop.xlane.xlu0 %431
      %v433 = vsel %vm225, %v365, 0.0
      %434 = vadd.xlane.f32.xlu0 %v433
      %v435 = vpop.xlane.xlu0 %434
      %v436 = vsel %vm225, %v367, 0.0
      %437 = vadd.xlane.f32.xlu0 %v436
      %v438 = vpop.xlane.xlu0 %437
      %v439 = vsel %vm225, %v369, 0.0
      %440 = vadd.xlane.f32.xlu0 %v439
      %v441 = vpop.xlane.xlu0 %440
      %v442 = vsel %vm225, %v371, 0.0
      %443 = vadd.xlane.f32.xlu0 %v442
      %v444 = vpop.xlane.xlu0 %443
      %v445 = vsel %vm225, %v373, 0.0
      %446 = vadd.xlane.f32.xlu0 %v445
      %v447 = vpop.xlane.xlu0 %446
      %v448 = vsel %vm225, %v375, 0.0
      %449 = vadd.xlane.f32.xlu0 %v448
      %v450 = vpop.xlane.xlu0 %449
      %v451 = vsel %vm225, %v377, 0.0
      %452 = vadd.xlane.f32.xlu0 %v451
      %v453 = vpop.xlane.xlu0 %452
      %v454 = vsel %vm225, %v379, 0.0
      %455 = vadd.xlane.f32.xlu0 %v454
      %v456 = vpop.xlane.xlu0 %455
      %v457 = vsel %vm225, %v381, 0.0
      %458 = vadd.xlane.f32.xlu0 %v457
      %v459 = vpop.xlane.xlu0 %458
      %v460 = vsel %vm225, %v383, 0.0
      %461 = vadd.xlane.f32.xlu0 %v460
      %v462 = vpop.xlane.xlu0 %461
      %v463 = vsel %vm225, %v385, 0.0
      %464 = vadd.xlane.f32.xlu0 %v463
      %v465 = vpop.xlane.xlu0 %464
      %v466 = vsel %vm225, %v387, 0.0
      %467 = vadd.xlane.f32.xlu0 %v466
      %v468 = vpop.xlane.xlu0 %467
      %v469 = vsel %vm225, %v389, 0.0
      %470 = vadd.xlane.f32.xlu0 %v469
      %v471 = vpop.xlane.xlu0 %470
      %v472 = vsel %vm225, %v391, 0.0
      %473 = vadd.xlane.f32.xlu0 %v472
      %v474 = vpop.xlane.xlu0 %473
      %v475 = vsel %vm225, %v393, 0.0
      %476 = vadd.xlane.f32.xlu0 %v475
      %v477 = vpop.xlane.xlu0 %476
      %v478 = vsel %vm225, %v395, 0.0
      %479 = vadd.xlane.f32.xlu0 %v478
      %v480 = vpop.xlane.xlu0 %479
      %v481 = vsel %vm225, %v397, 0.0
      %482 = vadd.xlane.f32.xlu0 %v481
      %v483 = vpop.xlane.xlu0 %482
      %v484 = vsel %vm225, %v399, 0.0
      %485 = vadd.xlane.f32.xlu0 %v484
      %v486 = vpop.xlane.xlu0 %485
      %v487 = vsel %vm225, %v401, 0.0
      %488 = vadd.xlane.f32.xlu0 %v487
      %v489 = vpop.xlane.xlu0 %488
      %v490 = vsel %vm225, %v403, 0.0
      %491 = vadd.xlane.f32.xlu0 %v490
      %v492 = vpop.xlane.xlu0 %491
      %v493 = vsel %vm225, %v405, 0.0
      %494 = vadd.xlane.f32.xlu0 %v493
      %v495 = vpop.xlane.xlu0 %494
      %v496 = vsel %vm225, %v407, 0.0
      %497 = vadd.xlane.f32.xlu0 %v496
      %v498 = vpop.xlane.xlu0 %497
      %v499 = vsel %vm225, %v409, 0.0
      %500 = vadd.xlane.f32.xlu0 %v499
      %v501 = vpop.xlane.xlu0 %500
      %v502 = vsel %vm225, %v411, 0.0
      %503 = vadd.xlane.f32.xlu0 %v502
      %v504 = vpop.xlane.xlu0 %503
      %v505 = vsel %vm225, %v413, 0.0
      %506 = vadd.xlane.f32.xlu0 %v505
      %v507 = vpop.xlane.xlu0 %506
      %v508 = vsel %vm225, %v415, 0.0
      %509 = vadd.xlane.f32.xlu0 %v508
      %v510 = vpop.xlane.xlu0 %509
      %v511 = vsel %vm225, %v417, 0.0
      %512 = vadd.xlane.f32.xlu0 %v511
      %v513 = vpop.xlane.xlu0 %512
      %v514 = vlog2.pop %v420
      %v515 = vmul.f32 %v514, 0.6931472
      %v516 = vlog2.pop %v423
      %v517 = vmul.f32 %v516, 0.6931472
      %v518 = vlog2.pop %v426
      %v519 = vmul.f32 %v518, 0.6931472
      %v520 = vlog2.pop %v429
      %v521 = vmul.f32 %v520, 0.6931472
      %v522 = vlog2.pop %v432
      %v523 = vmul.f32 %v522, 0.6931472
      %v524 = vlog2.pop %v435
      %v525 = vmul.f32 %v524, 0.6931472
      %v526 = vlog2.pop %v438
      %v527 = vmul.f32 %v526, 0.6931472
      %v528 = vlog2.pop %v441
      %v529 = vmul.f32 %v528, 0.6931472
      %v530 = vlog2.pop %v444
      %v531 = vmul.f32 %v530, 0.6931472
      %v532 = vlog2.pop %v447
      %v533 = vmul.f32 %v532, 0.6931472
      %v534 = vlog2.pop %v450
      %v535 = vmul.f32 %v534, 0.6931472
      %v536 = vlog2.pop %v453
      %v537 = vmul.f32 %v536, 0.6931472
      %v538 = vlog2.pop %v456
      %v539 = vmul.f32 %v538, 0.6931472
      %v540 = vlog2.pop %v459
      %v541 = vmul.f32 %v540, 0.6931472
      %v542 = vlog2.pop %v462
      %v543 = vmul.f32 %v542, 0.6931472
      %v544 = vlog2.pop %v465
      %v545 = vmul.f32 %v544, 0.6931472
      %v546 = vlog2.pop %v468
      %v547 = vmul.f32 %v546, 0.6931472
      %v548 = vlog2.pop %v471
      %v549 = vmul.f32 %v548, 0.6931472
      %v550 = vlog2.pop %v474
      %v551 = vmul.f32 %v550, 0.6931472
      %v552 = vlog2.pop %v477
      %v553 = vmul.f32 %v552, 0.6931472
      %v554 = vlog2.pop %v480
      %v555 = vmul.f32 %v554, 0.6931472
      %v556 = vlog2.pop %v483
      %v557 = vmul.f32 %v556, 0.6931472
      %v558 = vlog2.pop %v486
      %v559 = vmul.f32 %v558, 0.6931472
      %v560 = vlog2.pop %v489
      %v561 = vmul.f32 %v560, 0.6931472
      %v562 = vlog2.pop %v492
      %v563 = vmul.f32 %v562, 0.6931472
      %v564 = vlog2.pop %v495
      %v565 = vmul.f32 %v564, 0.6931472
      %v566 = vlog2.pop %v498
      %v567 = vmul.f32 %v566, 0.6931472
      %v568 = vlog2.pop %v501
      %v569 = vmul.f32 %v568, 0.6931472
      %v570 = vlog2.pop %v504
      %v571 = vmul.f32 %v570, 0.6931472
      %v572 = vlog2.pop %v507
      %v573 = vmul.f32 %v572, 0.6931472
      %v574 = vlog2.pop %v510
      %v575 = vmul.f32 %v574, 0.6931472
      %v576 = vlog2.pop %v513
      %v577 = vmul.f32 %v576, 0.6931472
      %v578 = vsub.f32 %v322, %v515
      %v579 = vsub.f32 %v323, %v517
      %v580 = vsub.f32 %v324, %v519
      %v581 = vsub.f32 %v325, %v521
      %v582 = vsub.f32 %v326, %v523
      %v583 = vsub.f32 %v327, %v525
      %v584 = vsub.f32 %v328, %v527
      %v585 = vsub.f32 %v329, %v529
      %v586 = vsub.f32 %v330, %v531
      %v587 = vsub.f32 %v331, %v533
      %v588 = vsub.f32 %v332, %v535
      %v589 = vsub.f32 %v333, %v537
      %v590 = vsub.f32 %v334, %v539
      %v591 = vsub.f32 %v335, %v541
      %v592 = vsub.f32 %v336, %v543
      %v593 = vsub.f32 %v337, %v545
      %v594 = vsub.f32 %v338, %v547
      %v595 = vsub.f32 %v339, %v549
      %v596 = vsub.f32 %v340, %v551
      %v597 = vsub.f32 %v341, %v553
      %v598 = vsub.f32 %v342, %v555
      %v599 = vsub.f32 %v343, %v557
      %v600 = vsub.f32 %v344, %v559
      %v601 = vsub.f32 %v345, %v561
      %v602 = vsub.f32 %v346, %v563
      %v603 = vsub.f32 %v347, %v565
      %v604 = vsub.f32 %v348, %v567
      %v605 = vsub.f32 %v349, %v569
      %v606 = vsub.f32 %v350, %v571
      %v607 = vsub.f32 %v351, %v573
      %v608 = vsub.f32 %v352, %v575
      %v609 = vsub.f32 %v353, %v577
      %610 = vst.msk [vmem:[%s159] sm:$0xff] %vm225, %v578
      %611 = vst.msk [vmem:[%s159 + $0x8] sm:$0xff] %vm225, %v579
      %612 = vst.msk [vmem:[%s159 + $0x10] sm:$0xff] %vm225, %v580
      %613 = vst.msk [vmem:[%s159 + $0x18] sm:$0xff] %vm225, %v581
      %614 = vst.msk [vmem:[%s159 + $0x20] sm:$0xff] %vm225, %v582
      %615 = vst.msk [vmem:[%s159 + $0x28] sm:$0xff] %vm225, %v583
      %616 = vst.msk [vmem:[%s159 + $0x30] sm:$0xff] %vm225, %v584
      %617 = vst.msk [vmem:[%s159 + $0x38] sm:$0xff] %vm225, %v585
      %618 = vst.msk [vmem:[%s159 + $0x40] sm:$0xff] %vm225, %v586
      %619 = vst.msk [vmem:[%s159 + $0x48] sm:$0xff] %vm225, %v587
      %620 = vst.msk [vmem:[%s159 + $0x50] sm:$0xff] %vm225, %v588
      %621 = vst.msk [vmem:[%s159 + $0x58] sm:$0xff] %vm225, %v589
      %622 = vst.msk [vmem:[%s159 + $0x60] sm:$0xff] %vm225, %v590
      %623 = vst.msk [vmem:[%s159 + $0x68] sm:$0xff] %vm225, %v591
      %624 = vst.msk [vmem:[%s159 + $0x70] sm:$0xff] %vm225, %v592
      %625 = vst.msk [vmem:[%s159 + $0x78] sm:$0xff] %vm225, %v593
      %626 = vst.msk [vmem:[%s159 + $0x80] sm:$0xff] %vm225, %v594
      %627 = vst.msk [vmem:[%s159 + $0x88] sm:$0xff] %vm225, %v595
      %628 = vst.msk [vmem:[%s159 + $0x90] sm:$0xff] %vm225, %v596
      %629 = vst.msk [vmem:[%s159 + $0x98] sm:$0xff] %vm225, %v597
      %630 = vst.msk [vmem:[%s159 + $0xa0] sm:$0xff] %vm225, %v598
      %631 = vst.msk [vmem:[%s159 + $0xa8] sm:$0xff] %vm225, %v599
      %632 = vst.msk [vmem:[%s159 + $0xb0] sm:$0xff] %vm225, %v600
      %633 = vst.msk [vmem:[%s159 + $0xb8] sm:$0xff] %vm225, %v601
      %634 = vst.msk [vmem:[%s159 + $0xc0] sm:$0xff] %vm225, %v602
      %635 = vst.msk [vmem:[%s159 + $0xc8] sm:$0xff] %vm225, %v603
      %636 = vst.msk [vmem:[%s159 + $0xd0] sm:$0xff] %vm225, %v604
      %637 = vst.msk [vmem:[%s159 + $0xd8] sm:$0xff] %vm225, %v605
      %638 = vst.msk [vmem:[%s159 + $0xe0] sm:$0xff] %vm225, %v606
      %639 = vst.msk [vmem:[%s159 + $0xe8] sm:$0xff] %vm225, %v607
      %640 = vst.msk [vmem:[%s159 + $0xf0] sm:$0xff] %vm225, %v608
      %641 = vst.msk [vmem:[%s159 + $0xf8] sm:$0xff] %vm225, %v609
      %s642 = smul.u32 16, %s17
      %p643 = scmp.lt.s32.totalorder %s16, 1
      %s644 = scalar_select %p643, %s16, 1
      %p645 = scmp.lt.s32.totalorder %s642, 15
      %s646 = scalar_select %p645, %s642, 15
      %s647 = smul.addr %s646, 2
      %s648 = smul.addr %s644, 32
      %s649 = sadd.s32 %s647, %s648
      %s650 = smul.addr %s649, 8
      %s651 = scalar_lea.vmem %s1, %s650
      // Predicated region
      $region25: #{_lambda_.9} parent=23 // pred_check
        %p652 = pneg %p72
      $region26: #{_lambda_.9} parent=23 // pred_check_branch
        %654 = sbr.rel (%p652) target = $region28
      $region27: #{_lambda_.9} parent=23 // pred_region
        %s655 = smul.u32 16, %s17
      $region28: #{_lambda_.9} parent=23 // pred_fallthru
        _
    $region24: #{_lambda_.9} parent=5 // pred_fallthru
      _
    %p656 = scmp.le.s32.totalorder 2, %s7
    // Predicated region
    $region29: #{_lambda_.9} parent=5 // pred_check
      %p657 = pneg %p656
    $region30: #{_lambda_.9} parent=5 // pred_check_branch
      %659 = sbr.rel (%p657) target = $region32
    $region31: #{_lambda_.9} parent=5 // pred_region
      %s660 = ssub.s32 %s7, 2
      // Predicated region
      $region33: #{_lambda_.9} parent=31 // pred_check
        %p661 = pneg %p78
      $region34: #{_lambda_.9} parent=31 // pred_check_branch
        %663 = sbr.rel (%p661) target = $region36
      $region35: #{_lambda_.9} parent=31 // pred_region
        %s664 = smul.u32 16, %s19
        %p665 = scmp.lt.s32.totalorder %s18, 1
        %s666 = scalar_select %p665, %s18, 1
        %p667 = scmp.lt.s32.totalorder %s664, 15
        %s668 = scalar_select %p667, %s664, 15
        %s669 = smul.addr %s668, 2
        %s670 = smul.addr %s666, 32
        %s671 = sadd.s32 %s669, %s670
        %s672 = smul.addr %s671, 8
        %s673 = scalar_lea.vmem %s1, %s672
      $region36: #{_lambda_.9} parent=31 // pred_fallthru
        _
    $region32: #{_lambda_.9} parent=5 // pred_fallthru
      _
  $region6: #{_lambda_.9} parent=0 // loop_footer
    %s11 = sadd.s32 1, %s7
  $region7: #{_lambda_.9} parent=0 // loop_footer_branch
    %6 = sbr.rel target = $region3
  $region8: #{_lambda_.9} parent=0 // loop_exit
    _

</llo_original>
